<compile_context>
chip_gen: v7x
topology: tpu7x:2x2x1
jax: 0.10.0
libtpu: 0.0.40
codegen_flags: <defaults>
</compile_context>

<pallas_src>
import jax
import jax.numpy as jnp
from jax.experimental import pallas as pl
from jax.experimental.pallas import tpu as pltpu

# Small deterministic problem size.
B, F, H, W = 2, 32, 8, 8
NR_RESNET = 2
M = H * W                     # rows per image (= rows per grid block) = 64
BM = B * M                    # total rows = 128
F2 = 2 * F
NOUT = 2 * NR_RESNET * F      # packed output lanes = 128 (lane dense)

# Conv taps as (dh, dw) input offsets, (kh, kw) row-major (matches weight packing).
TAPS_DS = tuple((kh - 1, kw - 1) for kh in range(2) for kw in range(3))   # filter (2,3)
TAPS_DRS = tuple((kh - 1, kw - 1) for kh in range(2) for kw in range(2))  # filter (2,2)


# ------------------------------ in-kernel helpers ----------------------------

def _concat_elu(x):
    # [elu(x), elu(-x)] using a single exp per element (halves EUP traffic).
    e = jnp.exp(-jnp.abs(x))
    em1 = e - 1.0
    pos = x > 0
    return jnp.concatenate([jnp.where(pos, x, em1), jnp.where(pos, em1, -x)], axis=-1)


def _make_masks(rows):
    # Hoisted, full-width multiplicative masks (one per non-identity tap).
    # Row m -> (h, w) with m = h*W + w (one image per grid block).  A tap is
    # valid iff (h+dh, w+dw) stays inside the image; this also zeroes every
    # roll wrap-around row for the (dh, dw) set used here.
    row = jax.lax.broadcasted_iota(jnp.int32, (rows, F2), 0)
    w_idx = row & (W - 1)                               # W, H are powers of two
    h_idx = (row >> (W.bit_length() - 1)) & (H - 1)
    masks = {}
    for dh, dw in TAPS_DS:                              # superset of TAPS_DRS
        if (dh, dw) == (0, 0):
            continue
        ok = (h_idx + dh >= 0) & (h_idx + dh < H) & (w_idx + dw >= 0) & (w_idx + dw < W)
        masks[(dh, dw)] = ok.astype(jnp.float32)
    return masks


# --------------------------------- the kernel --------------------------------

def _layer_up_kernel(u_ref, ul_ref,
                     u_w1_ref, u_b1_ref, u_w2_ref, u_b2_ref,
                     ul_w1_ref, ul_nin_ref, ul_b1_ref, ul_w2_ref, ul_b2_ref,
                     out_ref):
    rows = u_ref.shape[0]
    masks = _make_masks(rows)            # built once; reused by every conv below

    def conv(e, taps, w_ref, b_ref, l):
        # Per-tap accumulate dots: shift rows with an XLU roll, zero invalid
        # rows with the precomputed mask, push one small K=2F dot per tap.
        acc = None
        for t, (dh, dw) in enumerate(taps):
            off = dh * W + dw
            if off == 0:
                col = e
            else:
                col = pltpu.roll(e, (-off) % rows, axis=0) * masks[(dh, dw)]
            d = jnp.dot(col.astype(jnp.bfloat16), w_ref[l, t],
                        preferred_element_type=jnp.float32)
            acc = d if acc is None else acc + d
        return acc + b_ref[l]

    def gate(x):
        # a * sigmoid(b) with exp + reciprocal both on the EUP slot.
        return x[:, :F] * pl.reciprocal(1.0 + jnp.exp(-x[:, F:]), approx=True)

    u = u_ref[...]                       # (rows, F) f32
    ul = ul_ref[...]
    eu = _concat_elu(u)
    outs = []
    for l in range(NR_RESNET):           # fully unrolled; all weights VMEM resident
        # ---- u stream: gated_resnet, down_shifted (2,3) conv, no skip -------
        x1 = conv(eu, TAPS_DS, u_w1_ref, u_b1_ref, l)
        x2 = conv(_concat_elu(x1), TAPS_DS, u_w2_ref, u_b2_ref, l)
        u = u + gate(x2)
        eu = _concat_elu(u)              # reused: nin input + next layer's conv input
        # ---- ul stream: down_right_shifted (2,2) conv + nin skip (a = new u) -
        y1 = conv(_concat_elu(ul), TAPS_DRS, ul_w1_ref, ul_b1_ref, l)
        y1 = y1 + jnp.dot(eu.astype(jnp.bfloat16), ul_nin_ref[l],
                          preferred_element_type=jnp.float32)
        y2 = conv(_concat_elu(y1), TAPS_DRS, ul_w2_ref, ul_b2_ref, l)
        ul = ul + gate(y2)
        outs += [u, ul]
    # one lane-dense (rows, 4F) = (64, 128) store; the wrapper splits it back.
    out_ref[...] = jnp.concatenate(outs, axis=-1)


# ---------------------------- params & packing --------------------------------

def init_params(key):
    params = []
    s = 0.05
    for _ in range(NR_RESNET):
        key, *ks = jax.random.split(key, 11)
        layer = {
            'u_w1':  s * jax.random.normal(ks[0], (F, 2 * F, 2, 3), jnp.float32),
            'u_b1':  s * jax.random.normal(ks[1], (F,), jnp.float32),
            'u_w2':  s * jax.random.normal(ks[2], (2 * F, 2 * F, 2, 3), jnp.float32),
            'u_b2':  s * jax.random.normal(ks[3], (2 * F,), jnp.float32),
            'ul_w1': s * jax.random.normal(ks[4], (F, 2 * F, 2, 2), jnp.float32),
            'ul_b1': s * jax.random.normal(ks[5], (F,), jnp.float32),
            'ul_nin_w': s * jax.random.normal(ks[6], (F, 2 * F), jnp.float32),
            'ul_nin_b': s * jax.random.normal(ks[7], (F,), jnp.float32),
            'ul_w2': s * jax.random.normal(ks[8], (2 * F, 2 * F, 2, 2), jnp.float32),
            'ul_b2': s * jax.random.normal(ks[9], (2 * F,), jnp.float32),
        }
        params.append(layer)
    return params


def _pack_conv_taps(w_oihw):
    # PyTorch OIHW (Cout, Cin, KH, KW) -> (KH*KW, Cin, Cout), taps row-major
    # (kh, kw), matching the in-kernel TAPS_* enumeration and the [x | -x]
    # channel order produced by _concat_elu.
    Cout, Cin, KH, KW = w_oihw.shape
    return jnp.transpose(w_oihw, (2, 3, 1, 0)).reshape(KH * KW, Cin, Cout)


def prep_params(params):
    st = lambda fn: jnp.stack([fn(lp) for lp in params], axis=0)
    return {
        'u_w1':  st(lambda lp: _pack_conv_taps(lp['u_w1'])).astype(jnp.bfloat16),   # (L,6,2F,F)
        'u_b1':  st(lambda lp: lp['u_b1'][None, :]),                                # (L,1,F)
        'u_w2':  st(lambda lp: _pack_conv_taps(lp['u_w2'])).astype(jnp.bfloat16),   # (L,6,2F,2F)
        'u_b2':  st(lambda lp: lp['u_b2'][None, :]),                                # (L,1,2F)
        'ul_w1': st(lambda lp: _pack_conv_taps(lp['ul_w1'])).astype(jnp.bfloat16),  # (L,4,2F,F)
        'ul_nin': st(lambda lp: lp['ul_nin_w'].T).astype(jnp.bfloat16),             # (L,2F,F)
        # nin bias folded into the conv1 bias (both add to the same pre-activation)
        'ul_b1': st(lambda lp: (lp['ul_b1'] + lp['ul_nin_b'])[None, :]),            # (L,1,F)
        'ul_w2': st(lambda lp: _pack_conv_taps(lp['ul_w2'])).astype(jnp.bfloat16),  # (L,4,2F,2F)
        'ul_b2': st(lambda lp: lp['ul_b2'][None, :]),                               # (L,1,2F)
    }


# --------------------------------- wrapper ------------------------------------

@jax.jit
def pixelcnn_layer_up(u_nchw, ul_nchw, prepped):
    # NCHW -> packed (B*H*W, F) rows (one transpose+reshape per stream).
    u = jnp.transpose(u_nchw, (0, 2, 3, 1)).reshape(BM, F)
    ul = jnp.transpose(ul_nchw, (0, 2, 3, 1)).reshape(BM, F)

    weight_args = (prepped['u_w1'], prepped['u_b1'], prepped['u_w2'], prepped['u_b2'],
                   prepped['ul_w1'], prepped['ul_nin'], prepped['ul_b1'],
                   prepped['ul_w2'], prepped['ul_b2'])

    def full_spec(a):
        return pl.BlockSpec(a.shape, lambda b, _nd=a.ndim: (0,) * _nd)

    out = pl.pallas_call(
        _layer_up_kernel,
        out_shape=jax.ShapeDtypeStruct((BM, NOUT), jnp.float32),
        grid=(B,),                                   # one image per grid step
        in_specs=[pl.BlockSpec((M, F), lambda b: (b, 0)),
                  pl.BlockSpec((M, F), lambda b: (b, 0))]
                 + [full_spec(a) for a in weight_args],
        out_specs=pl.BlockSpec((M, NOUT), lambda b: (b, 0)),
        compiler_params=pltpu.CompilerParams(
            dimension_semantics=("parallel",)),       # 2 TCs on v7x; 2 cheap steps elsewhere
        cost_estimate=pl.CostEstimate(flops=40_000_000,
                                      transcendentals=120_000,
                                      bytes_accessed=450_000),
    )(u, ul, *weight_args)

    # ONE reshape + ONE transpose rebuilds all NCHW outputs.
    res = jnp.transpose(out.reshape(B, H, W, 2 * NR_RESNET, F), (3, 0, 4, 1, 2))
    u_list = [res[2 * l] for l in range(NR_RESNET)]
    ul_list = [res[2 * l + 1] for l in range(NR_RESNET)]
    return u_list, ul_list


# ------------------------- pure-JAX reference check --------------------------

def _ref_concat_elu(x):
    return jax.nn.elu(jnp.concatenate([x, -x], axis=-1))


def _ref_conv(x, w_oihw, b, pad):
    w = jnp.transpose(w_oihw, (2, 3, 1, 0))  # OIHW -> HWIO
    y = jax.lax.conv_general_dilated(x, w, (1, 1), pad,
                                     dimension_numbers=('NHWC', 'HWIO', 'NHWC'),
                                     precision=jax.lax.Precision.HIGHEST)
    return y + b


def _ref_gated_resnet(og, w1, b1, w2, b2, pad, a=None, nin_w=None, nin_b=None):
    x = _ref_conv(_ref_concat_elu(og), w1, b1, pad)
    if a is not None:
        ca = _ref_concat_elu(a)
        x = x + jnp.einsum('bhwc,oc->bhwo', ca, nin_w,
                           precision=jax.lax.Precision.HIGHEST) + nin_b
    x = _ref_concat_elu(x)
    x = _ref_conv(x, w2, b2, pad)
    aa, bb = jnp.split(x, 2, axis=-1)
    return og + aa * jax.nn.sigmoid(bb)


def pixelcnn_layer_up_ref(u_nchw, ul_nchw, params):
    u = jnp.transpose(u_nchw, (0, 2, 3, 1))
    ul = jnp.transpose(ul_nchw, (0, 2, 3, 1))
    PAD_DS = ((1, 0), (1, 1))
    PAD_DRS = ((1, 0), (1, 0))
    u_list, ul_list = [], []
    for lp in params:
        u = _ref_gated_resnet(u, lp['u_w1'], lp['u_b1'], lp['u_w2'], lp['u_b2'], PAD_DS)
        ul = _ref_gated_resnet(ul, lp['ul_w1'], lp['ul_b1'], lp['ul_w2'], lp['ul_b2'],
                               PAD_DRS, a=u, nin_w=lp['ul_nin_w'], nin_b=lp['ul_nin_b'])
        u_list.append(jnp.transpose(u, (0, 3, 1, 2)))
        ul_list.append(jnp.transpose(ul, (0, 3, 1, 2)))
    return u_list, ul_list


if __name__ == "__main__":
    key = jax.random.PRNGKey(0)
    k1, k2, k3 = jax.random.split(key, 3)
    u0 = jax.random.normal(k1, (B, F, H, W), jnp.float32)
    ul0 = jax.random.normal(k2, (B, F, H, W), jnp.float32)
    params = init_params(k3)
    prepped = prep_params(params)

    u_list, ul_list = pixelcnn_layer_up(u0, ul0, prepped)
    jax.block_until_ready(u_list + ul_list)

    u_refo, ul_refo = pixelcnn_layer_up_ref(u0, ul0, params)
    for got, want in zip(u_list + ul_list, u_refo + ul_refo):
        err = float(jnp.max(jnp.abs(got - want)))
        # bf16 MXU operands (f32 accumulation) + approx reciprocal -> small error.
        assert err < 3e-2, f"max abs err {err}"

    print("KERNEL_OK")
</pallas_src>

<mosaic_0001>
module attributes {stable_mosaic.version = 11 : i64} {
  func.func @_layer_up_kernel(%arg0: i32, %arg1: memref<64x32xf32, #tpu.memory_space<vmem>>, %arg2: memref<64x32xf32, #tpu.memory_space<vmem>>, %arg3: memref<2x6x64x32xbf16, #tpu.memory_space<vmem>>, %arg4: memref<2x1x32xf32, #tpu.memory_space<vmem>>, %arg5: memref<2x6x64x64xbf16, #tpu.memory_space<vmem>>, %arg6: memref<2x1x64xf32, #tpu.memory_space<vmem>>, %arg7: memref<2x4x64x32xbf16, #tpu.memory_space<vmem>>, %arg8: memref<2x64x32xbf16, #tpu.memory_space<vmem>>, %arg9: memref<2x1x32xf32, #tpu.memory_space<vmem>>, %arg10: memref<2x4x64x64xbf16, #tpu.memory_space<vmem>>, %arg11: memref<2x1x64xf32, #tpu.memory_space<vmem>>, %arg12: memref<64x128xf32, #tpu.memory_space<vmem>>) attributes {dimension_semantics = [#tpu.dimension_semantics<parallel>], iteration_bounds = array<i64: 2>, scalar_prefetch = 0 : i64, scratch_operands = 0 : i64, tpu.core_type = #tpu.core_type<tc>, window_params = [{transform_indices = @transform_0, window_bounds = array<i64: 64, 32>}, {transform_indices = @transform_1, window_bounds = array<i64: 64, 32>}, {pipeline_mode = #tpu.pipeline_mode<synchronous>, transform_indices = @transform_2, window_bounds = array<i64: 2, 6, 64, 32>}, {pipeline_mode = #tpu.pipeline_mode<synchronous>, transform_indices = @transform_3, window_bounds = array<i64: 2, 1, 32>}, {pipeline_mode = #tpu.pipeline_mode<synchronous>, transform_indices = @transform_4, window_bounds = array<i64: 2, 6, 64, 64>}, {pipeline_mode = #tpu.pipeline_mode<synchronous>, transform_indices = @transform_5, window_bounds = array<i64: 2, 1, 64>}, {pipeline_mode = #tpu.pipeline_mode<synchronous>, transform_indices = @transform_6, window_bounds = array<i64: 2, 4, 64, 32>}, {pipeline_mode = #tpu.pipeline_mode<synchronous>, transform_indices = @transform_7, window_bounds = array<i64: 2, 64, 32>}, {pipeline_mode = #tpu.pipeline_mode<synchronous>, transform_indices = @transform_8, window_bounds = array<i64: 2, 1, 32>}, {pipeline_mode = #tpu.pipeline_mode<synchronous>, transform_indices = @transform_9, window_bounds = array<i64: 2, 4, 64, 64>}, {pipeline_mode = #tpu.pipeline_mode<synchronous>, transform_indices = @transform_10, window_bounds = array<i64: 2, 1, 64>}, {transform_indices = @transform_11, window_bounds = array<i64: 64, 128>}]} {
    %0 = tpu.iota {dimensions = array<i32: 0>} : vector<64x64xi32>
    %c7_i32 = arith.constant 7 : i32
    %1 = vector.broadcast %c7_i32 : i32 to vector<64x64xi32>
    %2 = arith.andi %0, %1 : vector<64x64xi32>
    %c3_i32 = arith.constant 3 : i32
    %3 = vector.broadcast %c3_i32 : i32 to vector<64x64xi32>
    %4 = arith.shrsi %0, %3 : vector<64x64xi32>
    %c7_i32_0 = arith.constant 7 : i32
    %5 = vector.broadcast %c7_i32_0 : i32 to vector<64x64xi32>
    %6 = arith.andi %4, %5 : vector<64x64xi32>
    %c-1_i32 = arith.constant -1 : i32
    %7 = vector.broadcast %c-1_i32 : i32 to vector<64x64xi32>
    %8 = arith.addi %6, %7 : vector<64x64xi32>
    %c0_i32 = arith.constant 0 : i32
    %9 = vector.broadcast %c0_i32 : i32 to vector<64x64xi32>
    %10 = arith.cmpi sge, %8, %9 : vector<64x64xi32>
    %c-1_i32_1 = arith.constant -1 : i32
    %11 = vector.broadcast %c-1_i32_1 : i32 to vector<64x64xi32>
    %12 = arith.addi %6, %11 : vector<64x64xi32>
    %c8_i32 = arith.constant 8 : i32
    %13 = vector.broadcast %c8_i32 : i32 to vector<64x64xi32>
    %14 = arith.cmpi slt, %12, %13 : vector<64x64xi32>
    %15 = arith.andi %10, %14 : vector<64x64xi1>
    %c-1_i32_2 = arith.constant -1 : i32
    %16 = vector.broadcast %c-1_i32_2 : i32 to vector<64x64xi32>
    %17 = arith.addi %2, %16 : vector<64x64xi32>
    %c0_i32_3 = arith.constant 0 : i32
    %18 = vector.broadcast %c0_i32_3 : i32 to vector<64x64xi32>
    %19 = arith.cmpi sge, %17, %18 : vector<64x64xi32>
    %20 = arith.andi %15, %19 : vector<64x64xi1>
    %c-1_i32_4 = arith.constant -1 : i32
    %21 = vector.broadcast %c-1_i32_4 : i32 to vector<64x64xi32>
    %22 = arith.addi %2, %21 : vector<64x64xi32>
    %c8_i32_5 = arith.constant 8 : i32
    %23 = vector.broadcast %c8_i32_5 : i32 to vector<64x64xi32>
    %24 = arith.cmpi slt, %22, %23 : vector<64x64xi32>
    %25 = arith.andi %20, %24 : vector<64x64xi1>
    %26 = arith.extui %25 : vector<64x64xi1> to vector<64x64xi32>
    %27 = arith.sitofp %26 : vector<64x64xi32> to vector<64x64xf32>
    %c-1_i32_6 = arith.constant -1 : i32
    %28 = vector.broadcast %c-1_i32_6 : i32 to vector<64x64xi32>
    %29 = arith.addi %6, %28 : vector<64x64xi32>
    %c0_i32_7 = arith.constant 0 : i32
    %30 = vector.broadcast %c0_i32_7 : i32 to vector<64x64xi32>
    %31 = arith.cmpi sge, %29, %30 : vector<64x64xi32>
    %c-1_i32_8 = arith.constant -1 : i32
    %32 = vector.broadcast %c-1_i32_8 : i32 to vector<64x64xi32>
    %33 = arith.addi %6, %32 : vector<64x64xi32>
    %c8_i32_9 = arith.constant 8 : i32
    %34 = vector.broadcast %c8_i32_9 : i32 to vector<64x64xi32>
    %35 = arith.cmpi slt, %33, %34 : vector<64x64xi32>
    %36 = arith.andi %31, %35 : vector<64x64xi1>
    %c0_i32_10 = arith.constant 0 : i32
    %37 = vector.broadcast %c0_i32_10 : i32 to vector<64x64xi32>
    %38 = arith.addi %2, %37 : vector<64x64xi32>
    %c0_i32_11 = arith.constant 0 : i32
    %39 = vector.broadcast %c0_i32_11 : i32 to vector<64x64xi32>
    %40 = arith.cmpi sge, %38, %39 : vector<64x64xi32>
    %41 = arith.andi %36, %40 : vector<64x64xi1>
    %c0_i32_12 = arith.constant 0 : i32
    %42 = vector.broadcast %c0_i32_12 : i32 to vector<64x64xi32>
    %43 = arith.addi %2, %42 : vector<64x64xi32>
    %c8_i32_13 = arith.constant 8 : i32
    %44 = vector.broadcast %c8_i32_13 : i32 to vector<64x64xi32>
    %45 = arith.cmpi slt, %43, %44 : vector<64x64xi32>
    %46 = arith.andi %41, %45 : vector<64x64xi1>
    %47 = arith.extui %46 : vector<64x64xi1> to vector<64x64xi32>
    %48 = arith.sitofp %47 : vector<64x64xi32> to vector<64x64xf32>
    %c-1_i32_14 = arith.constant -1 : i32
    %49 = vector.broadcast %c-1_i32_14 : i32 to vector<64x64xi32>
    %50 = arith.addi %6, %49 : vector<64x64xi32>
    %c0_i32_15 = arith.constant 0 : i32
    %51 = vector.broadcast %c0_i32_15 : i32 to vector<64x64xi32>
    %52 = arith.cmpi sge, %50, %51 : vector<64x64xi32>
    %c-1_i32_16 = arith.constant -1 : i32
    %53 = vector.broadcast %c-1_i32_16 : i32 to vector<64x64xi32>
    %54 = arith.addi %6, %53 : vector<64x64xi32>
    %c8_i32_17 = arith.constant 8 : i32
    %55 = vector.broadcast %c8_i32_17 : i32 to vector<64x64xi32>
    %56 = arith.cmpi slt, %54, %55 : vector<64x64xi32>
    %57 = arith.andi %52, %56 : vector<64x64xi1>
    %c1_i32 = arith.constant 1 : i32
    %58 = vector.broadcast %c1_i32 : i32 to vector<64x64xi32>
    %59 = arith.addi %2, %58 : vector<64x64xi32>
    %c0_i32_18 = arith.constant 0 : i32
    %60 = vector.broadcast %c0_i32_18 : i32 to vector<64x64xi32>
    %61 = arith.cmpi sge, %59, %60 : vector<64x64xi32>
    %62 = arith.andi %57, %61 : vector<64x64xi1>
    %c1_i32_19 = arith.constant 1 : i32
    %63 = vector.broadcast %c1_i32_19 : i32 to vector<64x64xi32>
    %64 = arith.addi %2, %63 : vector<64x64xi32>
    %c8_i32_20 = arith.constant 8 : i32
    %65 = vector.broadcast %c8_i32_20 : i32 to vector<64x64xi32>
    %66 = arith.cmpi slt, %64, %65 : vector<64x64xi32>
    %67 = arith.andi %62, %66 : vector<64x64xi1>
    %68 = arith.extui %67 : vector<64x64xi1> to vector<64x64xi32>
    %69 = arith.sitofp %68 : vector<64x64xi32> to vector<64x64xf32>
    %c0_i32_21 = arith.constant 0 : i32
    %70 = vector.broadcast %c0_i32_21 : i32 to vector<64x64xi32>
    %71 = arith.addi %6, %70 : vector<64x64xi32>
    %c0_i32_22 = arith.constant 0 : i32
    %72 = vector.broadcast %c0_i32_22 : i32 to vector<64x64xi32>
    %73 = arith.cmpi sge, %71, %72 : vector<64x64xi32>
    %c0_i32_23 = arith.constant 0 : i32
    %74 = vector.broadcast %c0_i32_23 : i32 to vector<64x64xi32>
    %75 = arith.addi %6, %74 : vector<64x64xi32>
    %c8_i32_24 = arith.constant 8 : i32
    %76 = vector.broadcast %c8_i32_24 : i32 to vector<64x64xi32>
    %77 = arith.cmpi slt, %75, %76 : vector<64x64xi32>
    %78 = arith.andi %73, %77 : vector<64x64xi1>
    %c-1_i32_25 = arith.constant -1 : i32
    %79 = vector.broadcast %c-1_i32_25 : i32 to vector<64x64xi32>
    %80 = arith.addi %2, %79 : vector<64x64xi32>
    %c0_i32_26 = arith.constant 0 : i32
    %81 = vector.broadcast %c0_i32_26 : i32 to vector<64x64xi32>
    %82 = arith.cmpi sge, %80, %81 : vector<64x64xi32>
    %83 = arith.andi %78, %82 : vector<64x64xi1>
    %c-1_i32_27 = arith.constant -1 : i32
    %84 = vector.broadcast %c-1_i32_27 : i32 to vector<64x64xi32>
    %85 = arith.addi %2, %84 : vector<64x64xi32>
    %c8_i32_28 = arith.constant 8 : i32
    %86 = vector.broadcast %c8_i32_28 : i32 to vector<64x64xi32>
    %87 = arith.cmpi slt, %85, %86 : vector<64x64xi32>
    %88 = arith.andi %83, %87 : vector<64x64xi1>
    %89 = arith.extui %88 : vector<64x64xi1> to vector<64x64xi32>
    %90 = arith.sitofp %89 : vector<64x64xi32> to vector<64x64xf32>
    %c0_i32_29 = arith.constant 0 : i32
    %91 = vector.broadcast %c0_i32_29 : i32 to vector<64x64xi32>
    %92 = arith.addi %6, %91 : vector<64x64xi32>
    %c0_i32_30 = arith.constant 0 : i32
    %93 = vector.broadcast %c0_i32_30 : i32 to vector<64x64xi32>
    %94 = arith.cmpi sge, %92, %93 : vector<64x64xi32>
    %c0_i32_31 = arith.constant 0 : i32
    %95 = vector.broadcast %c0_i32_31 : i32 to vector<64x64xi32>
    %96 = arith.addi %6, %95 : vector<64x64xi32>
    %c8_i32_32 = arith.constant 8 : i32
    %97 = vector.broadcast %c8_i32_32 : i32 to vector<64x64xi32>
    %98 = arith.cmpi slt, %96, %97 : vector<64x64xi32>
    %99 = arith.andi %94, %98 : vector<64x64xi1>
    %c1_i32_33 = arith.constant 1 : i32
    %100 = vector.broadcast %c1_i32_33 : i32 to vector<64x64xi32>
    %101 = arith.addi %2, %100 : vector<64x64xi32>
    %c0_i32_34 = arith.constant 0 : i32
    %102 = vector.broadcast %c0_i32_34 : i32 to vector<64x64xi32>
    %103 = arith.cmpi sge, %101, %102 : vector<64x64xi32>
    %104 = arith.andi %99, %103 : vector<64x64xi1>
    %c1_i32_35 = arith.constant 1 : i32
    %105 = vector.broadcast %c1_i32_35 : i32 to vector<64x64xi32>
    %106 = arith.addi %2, %105 : vector<64x64xi32>
    %c8_i32_36 = arith.constant 8 : i32
    %107 = vector.broadcast %c8_i32_36 : i32 to vector<64x64xi32>
    %108 = arith.cmpi slt, %106, %107 : vector<64x64xi32>
    %109 = arith.andi %104, %108 : vector<64x64xi1>
    %110 = arith.extui %109 : vector<64x64xi1> to vector<64x64xi32>
    %111 = arith.sitofp %110 : vector<64x64xi32> to vector<64x64xf32>
    %c0 = arith.constant 0 : index
    %c0_37 = arith.constant 0 : index
    %112 = vector.load %arg1[%c0, %c0_37] : memref<64x32xf32, #tpu.memory_space<vmem>>, vector<64x32xf32>
    %c0_38 = arith.constant 0 : index
    %c0_39 = arith.constant 0 : index
    %113 = vector.load %arg2[%c0_38, %c0_39] : memref<64x32xf32, #tpu.memory_space<vmem>>, vector<64x32xf32>
    %114 = math.absf %112 : vector<64x32xf32>
    %cst = arith.constant 0.000000e+00 : f32
    %115 = vector.broadcast %cst : f32 to vector<64x32xf32>
    %116 = arith.subf %115, %114 : vector<64x32xf32>
    %117 = math.exp %116 : vector<64x32xf32>
    %cst_40 = arith.constant 1.000000e+00 : f32
    %118 = vector.broadcast %cst_40 : f32 to vector<64x32xf32>
    %119 = arith.subf %117, %118 : vector<64x32xf32>
    %cst_41 = arith.constant 0.000000e+00 : f32
    %120 = vector.broadcast %cst_41 : f32 to vector<64x32xf32>
    %121 = arith.cmpf ogt, %112, %120 : vector<64x32xf32>
    %122 = arith.select %121, %112, %119 : vector<64x32xi1>, vector<64x32xf32>
    %cst_42 = arith.constant 0.000000e+00 : f32
    %123 = vector.broadcast %cst_42 : f32 to vector<64x32xf32>
    %124 = arith.subf %123, %112 : vector<64x32xf32>
    %125 = arith.select %121, %119, %124 : vector<64x32xi1>, vector<64x32xf32>
    %126 = tpu.concatenate %122, %125 in 1 : vector<64x32xf32>, vector<64x32xf32> -> vector<64x64xf32>
    %c9_i32 = arith.constant 9 : i32
    %127 = tpu.dynamic_rotate %126 by %c9_i32 dim 0 : vector<64x64xf32>, i32 -> vector<64x64xf32>
    %128 = arith.mulf %127, %27 : vector<64x64xf32>
    %129 = arith.truncf %128 : vector<64x64xf32> to vector<64x64xbf16>
    %c0_43 = arith.constant 0 : index
    %c0_44 = arith.constant 0 : index
    %c0_45 = arith.constant 0 : index
    %c0_46 = arith.constant 0 : index
    %130 = vector.load %arg3[%c0_43, %c0_44, %c0_45, %c0_46] : memref<2x6x64x32xbf16, #tpu.memory_space<vmem>>, vector<1x1x64x32xbf16>
    %131 = vector.shape_cast %130 : vector<1x1x64x32xbf16> to vector<64x32xbf16>
    %cst_47 = arith.constant dense<0.000000e+00> : vector<64x32xf32>
    %132 = tpu.matmul %129, %131, %cst_47 {dimension_numbers = #tpu.dot_dimension_numbers<[1], [0], [0], [1], [0, 0, 1, 1], [], []>} : vector<64x64xbf16>, vector<64x32xbf16>, vector<64x32xf32> -> vector<64x32xf32>
    %c8_i32_48 = arith.constant 8 : i32
    %133 = tpu.dynamic_rotate %126 by %c8_i32_48 dim 0 : vector<64x64xf32>, i32 -> vector<64x64xf32>
    %134 = arith.mulf %133, %48 : vector<64x64xf32>
    %135 = arith.truncf %134 : vector<64x64xf32> to vector<64x64xbf16>
    %c0_49 = arith.constant 0 : index
    %c1 = arith.constant 1 : index
    %c0_50 = arith.constant 0 : index
    %c0_51 = arith.constant 0 : index
    %136 = vector.load %arg3[%c0_49, %c1, %c0_50, %c0_51] : memref<2x6x64x32xbf16, #tpu.memory_space<vmem>>, vector<1x1x64x32xbf16>
    %137 = vector.shape_cast %136 : vector<1x1x64x32xbf16> to vector<64x32xbf16>
    %cst_52 = arith.constant dense<0.000000e+00> : vector<64x32xf32>
    %138 = tpu.matmul %135, %137, %cst_52 {dimension_numbers = #tpu.dot_dimension_numbers<[1], [0], [0], [1], [0, 0, 1, 1], [], []>} : vector<64x64xbf16>, vector<64x32xbf16>, vector<64x32xf32> -> vector<64x32xf32>
    %139 = arith.addf %132, %138 : vector<64x32xf32>
    %c7_i32_53 = arith.constant 7 : i32
    %140 = tpu.dynamic_rotate %126 by %c7_i32_53 dim 0 : vector<64x64xf32>, i32 -> vector<64x64xf32>
    %141 = arith.mulf %140, %69 : vector<64x64xf32>
    %142 = arith.truncf %141 : vector<64x64xf32> to vector<64x64xbf16>
    %c0_54 = arith.constant 0 : index
    %c2 = arith.constant 2 : index
    %c0_55 = arith.constant 0 : index
    %c0_56 = arith.constant 0 : index
    %143 = vector.load %arg3[%c0_54, %c2, %c0_55, %c0_56] : memref<2x6x64x32xbf16, #tpu.memory_space<vmem>>, vector<1x1x64x32xbf16>
    %144 = vector.shape_cast %143 : vector<1x1x64x32xbf16> to vector<64x32xbf16>
    %cst_57 = arith.constant dense<0.000000e+00> : vector<64x32xf32>
    %145 = tpu.matmul %142, %144, %cst_57 {dimension_numbers = #tpu.dot_dimension_numbers<[1], [0], [0], [1], [0, 0, 1, 1], [], []>} : vector<64x64xbf16>, vector<64x32xbf16>, vector<64x32xf32> -> vector<64x32xf32>
    %146 = arith.addf %139, %145 : vector<64x32xf32>
    %c1_i32_58 = arith.constant 1 : i32
    %147 = tpu.dynamic_rotate %126 by %c1_i32_58 dim 0 : vector<64x64xf32>, i32 -> vector<64x64xf32>
    %148 = arith.mulf %147, %90 : vector<64x64xf32>
    %149 = arith.truncf %148 : vector<64x64xf32> to vector<64x64xbf16>
    %c0_59 = arith.constant 0 : index
    %c3 = arith.constant 3 : index
    %c0_60 = arith.constant 0 : index
    %c0_61 = arith.constant 0 : index
    %150 = vector.load %arg3[%c0_59, %c3, %c0_60, %c0_61] : memref<2x6x64x32xbf16, #tpu.memory_space<vmem>>, vector<1x1x64x32xbf16>
    %151 = vector.shape_cast %150 : vector<1x1x64x32xbf16> to vector<64x32xbf16>
    %cst_62 = arith.constant dense<0.000000e+00> : vector<64x32xf32>
    %152 = tpu.matmul %149, %151, %cst_62 {dimension_numbers = #tpu.dot_dimension_numbers<[1], [0], [0], [1], [0, 0, 1, 1], [], []>} : vector<64x64xbf16>, vector<64x32xbf16>, vector<64x32xf32> -> vector<64x32xf32>
    %153 = arith.addf %146, %152 : vector<64x32xf32>
    %154 = arith.truncf %126 : vector<64x64xf32> to vector<64x64xbf16>
    %c0_63 = arith.constant 0 : index
    %c4 = arith.constant 4 : index
    %c0_64 = arith.constant 0 : index
    %c0_65 = arith.constant 0 : index
    %155 = vector.load %arg3[%c0_63, %c4, %c0_64, %c0_65] : memref<2x6x64x32xbf16, #tpu.memory_space<vmem>>, vector<1x1x64x32xbf16>
    %156 = vector.shape_cast %155 : vector<1x1x64x32xbf16> to vector<64x32xbf16>
    %cst_66 = arith.constant dense<0.000000e+00> : vector<64x32xf32>
    %157 = tpu.matmul %154, %156, %cst_66 {dimension_numbers = #tpu.dot_dimension_numbers<[1], [0], [0], [1], [0, 0, 1, 1], [], []>} : vector<64x64xbf16>, vector<64x32xbf16>, vector<64x32xf32> -> vector<64x32xf32>
    %158 = arith.addf %153, %157 : vector<64x32xf32>
    %c63_i32 = arith.constant 63 : i32
    %159 = tpu.dynamic_rotate %126 by %c63_i32 dim 0 : vector<64x64xf32>, i32 -> vector<64x64xf32>
    %160 = arith.mulf %159, %111 : vector<64x64xf32>
    %161 = arith.truncf %160 : vector<64x64xf32> to vector<64x64xbf16>
    %c0_67 = arith.constant 0 : index
    %c5 = arith.constant 5 : index
    %c0_68 = arith.constant 0 : index
    %c0_69 = arith.constant 0 : index
    %162 = vector.load %arg3[%c0_67, %c5, %c0_68, %c0_69] : memref<2x6x64x32xbf16, #tpu.memory_space<vmem>>, vector<1x1x64x32xbf16>
    %163 = vector.shape_cast %162 : vector<1x1x64x32xbf16> to vector<64x32xbf16>
    %cst_70 = arith.constant dense<0.000000e+00> : vector<64x32xf32>
    %164 = tpu.matmul %161, %163, %cst_70 {dimension_numbers = #tpu.dot_dimension_numbers<[1], [0], [0], [1], [0, 0, 1, 1], [], []>} : vector<64x64xbf16>, vector<64x32xbf16>, vector<64x32xf32> -> vector<64x32xf32>
    %165 = arith.addf %158, %164 : vector<64x32xf32>
    %c0_71 = arith.constant 0 : index
    %c0_72 = arith.constant 0 : index
    %c0_73 = arith.constant 0 : index
    %166 = vector.load %arg4[%c0_71, %c0_72, %c0_73] : memref<2x1x32xf32, #tpu.memory_space<vmem>>, vector<1x1x32xf32>
    %167 = vector.shape_cast %166 : vector<1x1x32xf32> to vector<1x32xf32>
    %168 = vector.broadcast %167 : vector<1x32xf32> to vector<64x32xf32>
    %169 = arith.addf %165, %168 : vector<64x32xf32>
    %170 = math.absf %169 : vector<64x32xf32>
    %cst_74 = arith.constant 0.000000e+00 : f32
    %171 = vector.broadcast %cst_74 : f32 to vector<64x32xf32>
    %172 = arith.subf %171, %170 : vector<64x32xf32>
    %173 = math.exp %172 : vector<64x32xf32>
    %cst_75 = arith.constant 1.000000e+00 : f32
    %174 = vector.broadcast %cst_75 : f32 to vector<64x32xf32>
    %175 = arith.subf %173, %174 : vector<64x32xf32>
    %cst_76 = arith.constant 0.000000e+00 : f32
    %176 = vector.broadcast %cst_76 : f32 to vector<64x32xf32>
    %177 = arith.cmpf ogt, %169, %176 : vector<64x32xf32>
    %178 = arith.select %177, %169, %175 : vector<64x32xi1>, vector<64x32xf32>
    %cst_77 = arith.constant 0.000000e+00 : f32
    %179 = vector.broadcast %cst_77 : f32 to vector<64x32xf32>
    %180 = arith.subf %179, %169 : vector<64x32xf32>
    %181 = arith.select %177, %175, %180 : vector<64x32xi1>, vector<64x32xf32>
    %182 = tpu.concatenate %178, %181 in 1 : vector<64x32xf32>, vector<64x32xf32> -> vector<64x64xf32>
    %c9_i32_78 = arith.constant 9 : i32
    %183 = tpu.dynamic_rotate %182 by %c9_i32_78 dim 0 : vector<64x64xf32>, i32 -> vector<64x64xf32>
    %184 = arith.mulf %183, %27 : vector<64x64xf32>
    %185 = arith.truncf %184 : vector<64x64xf32> to vector<64x64xbf16>
    %c0_79 = arith.constant 0 : index
    %c0_80 = arith.constant 0 : index
    %c0_81 = arith.constant 0 : index
    %c0_82 = arith.constant 0 : index
    %186 = vector.load %arg5[%c0_79, %c0_80, %c0_81, %c0_82] : memref<2x6x64x64xbf16, #tpu.memory_space<vmem>>, vector<1x1x64x64xbf16>
    %187 = vector.shape_cast %186 : vector<1x1x64x64xbf16> to vector<64x64xbf16>
    %cst_83 = arith.constant dense<0.000000e+00> : vector<64x64xf32>
    %188 = tpu.matmul %185, %187, %cst_83 {dimension_numbers = #tpu.dot_dimension_numbers<[1], [0], [0], [1], [0, 0, 1, 1], [], []>} : vector<64x64xbf16>, vector<64x64xbf16>, vector<64x64xf32> -> vector<64x64xf32>
    %c8_i32_84 = arith.constant 8 : i32
    %189 = tpu.dynamic_rotate %182 by %c8_i32_84 dim 0 : vector<64x64xf32>, i32 -> vector<64x64xf32>
    %190 = arith.mulf %189, %48 : vector<64x64xf32>
    %191 = arith.truncf %190 : vector<64x64xf32> to vector<64x64xbf16>
    %c0_85 = arith.constant 0 : index
    %c1_86 = arith.constant 1 : index
    %c0_87 = arith.constant 0 : index
    %c0_88 = arith.constant 0 : index
    %192 = vector.load %arg5[%c0_85, %c1_86, %c0_87, %c0_88] : memref<2x6x64x64xbf16, #tpu.memory_space<vmem>>, vector<1x1x64x64xbf16>
    %193 = vector.shape_cast %192 : vector<1x1x64x64xbf16> to vector<64x64xbf16>
    %cst_89 = arith.constant dense<0.000000e+00> : vector<64x64xf32>
    %194 = tpu.matmul %191, %193, %cst_89 {dimension_numbers = #tpu.dot_dimension_numbers<[1], [0], [0], [1], [0, 0, 1, 1], [], []>} : vector<64x64xbf16>, vector<64x64xbf16>, vector<64x64xf32> -> vector<64x64xf32>
    %195 = arith.addf %188, %194 : vector<64x64xf32>
    %c7_i32_90 = arith.constant 7 : i32
    %196 = tpu.dynamic_rotate %182 by %c7_i32_90 dim 0 : vector<64x64xf32>, i32 -> vector<64x64xf32>
    %197 = arith.mulf %196, %69 : vector<64x64xf32>
    %198 = arith.truncf %197 : vector<64x64xf32> to vector<64x64xbf16>
    %c0_91 = arith.constant 0 : index
    %c2_92 = arith.constant 2 : index
    %c0_93 = arith.constant 0 : index
    %c0_94 = arith.constant 0 : index
    %199 = vector.load %arg5[%c0_91, %c2_92, %c0_93, %c0_94] : memref<2x6x64x64xbf16, #tpu.memory_space<vmem>>, vector<1x1x64x64xbf16>
    %200 = vector.shape_cast %199 : vector<1x1x64x64xbf16> to vector<64x64xbf16>
    %cst_95 = arith.constant dense<0.000000e+00> : vector<64x64xf32>
    %201 = tpu.matmul %198, %200, %cst_95 {dimension_numbers = #tpu.dot_dimension_numbers<[1], [0], [0], [1], [0, 0, 1, 1], [], []>} : vector<64x64xbf16>, vector<64x64xbf16>, vector<64x64xf32> -> vector<64x64xf32>
    %202 = arith.addf %195, %201 : vector<64x64xf32>
    %c1_i32_96 = arith.constant 1 : i32
    %203 = tpu.dynamic_rotate %182 by %c1_i32_96 dim 0 : vector<64x64xf32>, i32 -> vector<64x64xf32>
    %204 = arith.mulf %203, %90 : vector<64x64xf32>
    %205 = arith.truncf %204 : vector<64x64xf32> to vector<64x64xbf16>
    %c0_97 = arith.constant 0 : index
    %c3_98 = arith.constant 3 : index
    %c0_99 = arith.constant 0 : index
    %c0_100 = arith.constant 0 : index
    %206 = vector.load %arg5[%c0_97, %c3_98, %c0_99, %c0_100] : memref<2x6x64x64xbf16, #tpu.memory_space<vmem>>, vector<1x1x64x64xbf16>
    %207 = vector.shape_cast %206 : vector<1x1x64x64xbf16> to vector<64x64xbf16>
    %cst_101 = arith.constant dense<0.000000e+00> : vector<64x64xf32>
    %208 = tpu.matmul %205, %207, %cst_101 {dimension_numbers = #tpu.dot_dimension_numbers<[1], [0], [0], [1], [0, 0, 1, 1], [], []>} : vector<64x64xbf16>, vector<64x64xbf16>, vector<64x64xf32> -> vector<64x64xf32>
    %209 = arith.addf %202, %208 : vector<64x64xf32>
    %210 = arith.truncf %182 : vector<64x64xf32> to vector<64x64xbf16>
    %c0_102 = arith.constant 0 : index
    %c4_103 = arith.constant 4 : index
    %c0_104 = arith.constant 0 : index
    %c0_105 = arith.constant 0 : index
    %211 = vector.load %arg5[%c0_102, %c4_103, %c0_104, %c0_105] : memref<2x6x64x64xbf16, #tpu.memory_space<vmem>>, vector<1x1x64x64xbf16>
    %212 = vector.shape_cast %211 : vector<1x1x64x64xbf16> to vector<64x64xbf16>
    %cst_106 = arith.constant dense<0.000000e+00> : vector<64x64xf32>
    %213 = tpu.matmul %210, %212, %cst_106 {dimension_numbers = #tpu.dot_dimension_numbers<[1], [0], [0], [1], [0, 0, 1, 1], [], []>} : vector<64x64xbf16>, vector<64x64xbf16>, vector<64x64xf32> -> vector<64x64xf32>
    %214 = arith.addf %209, %213 : vector<64x64xf32>
    %c63_i32_107 = arith.constant 63 : i32
    %215 = tpu.dynamic_rotate %182 by %c63_i32_107 dim 0 : vector<64x64xf32>, i32 -> vector<64x64xf32>
    %216 = arith.mulf %215, %111 : vector<64x64xf32>
    %217 = arith.truncf %216 : vector<64x64xf32> to vector<64x64xbf16>
    %c0_108 = arith.constant 0 : index
    %c5_109 = arith.constant 5 : index
    %c0_110 = arith.constant 0 : index
    %c0_111 = arith.constant 0 : index
    %218 = vector.load %arg5[%c0_108, %c5_109, %c0_110, %c0_111] : memref<2x6x64x64xbf16, #tpu.memory_space<vmem>>, vector<1x1x64x64xbf16>
    %219 = vector.shape_cast %218 : vector<1x1x64x64xbf16> to vector<64x64xbf16>
    %cst_112 = arith.constant dense<0.000000e+00> : vector<64x64xf32>
    %220 = tpu.matmul %217, %219, %cst_112 {dimension_numbers = #tpu.dot_dimension_numbers<[1], [0], [0], [1], [0, 0, 1, 1], [], []>} : vector<64x64xbf16>, vector<64x64xbf16>, vector<64x64xf32> -> vector<64x64xf32>
    %221 = arith.addf %214, %220 : vector<64x64xf32>
    %c0_113 = arith.constant 0 : index
    %c0_114 = arith.constant 0 : index
    %c0_115 = arith.constant 0 : index
    %222 = vector.load %arg6[%c0_113, %c0_114, %c0_115] : memref<2x1x64xf32, #tpu.memory_space<vmem>>, vector<1x1x64xf32>
    %223 = vector.shape_cast %222 : vector<1x1x64xf32> to vector<1x64xf32>
    %224 = vector.broadcast %223 : vector<1x64xf32> to vector<64x64xf32>
    %225 = arith.addf %221, %224 : vector<64x64xf32>
    %226 = vector.extract_strided_slice %225 {offsets = [0, 0], sizes = [64, 32], strides = [1, 1]} : vector<64x64xf32> to vector<64x32xf32>
    %227 = vector.extract_strided_slice %225 {offsets = [0, 32], sizes = [64, 32], strides = [1, 1]} : vector<64x64xf32> to vector<64x32xf32>
    %cst_116 = arith.constant 0.000000e+00 : f32
    %228 = vector.broadcast %cst_116 : f32 to vector<64x32xf32>
    %229 = arith.subf %228, %227 : vector<64x32xf32>
    %230 = math.exp %229 : vector<64x32xf32>
    %cst_117 = arith.constant 1.000000e+00 : f32
    %231 = vector.broadcast %cst_117 : f32 to vector<64x32xf32>
    %232 = arith.addf %231, %230 : vector<64x32xf32>
    %233 = tpu.reciprocal %232 {approx = true} : vector<64x32xf32> -> vector<64x32xf32>
    %234 = arith.mulf %226, %233 : vector<64x32xf32>
    %235 = arith.addf %112, %234 : vector<64x32xf32>
    %236 = math.absf %235 : vector<64x32xf32>
    %cst_118 = arith.constant 0.000000e+00 : f32
    %237 = vector.broadcast %cst_118 : f32 to vector<64x32xf32>
    %238 = arith.subf %237, %236 : vector<64x32xf32>
    %239 = math.exp %238 : vector<64x32xf32>
    %cst_119 = arith.constant 1.000000e+00 : f32
    %240 = vector.broadcast %cst_119 : f32 to vector<64x32xf32>
    %241 = arith.subf %239, %240 : vector<64x32xf32>
    %cst_120 = arith.constant 0.000000e+00 : f32
    %242 = vector.broadcast %cst_120 : f32 to vector<64x32xf32>
    %243 = arith.cmpf ogt, %235, %242 : vector<64x32xf32>
    %244 = arith.select %243, %235, %241 : vector<64x32xi1>, vector<64x32xf32>
    %cst_121 = arith.constant 0.000000e+00 : f32
    %245 = vector.broadcast %cst_121 : f32 to vector<64x32xf32>
    %246 = arith.subf %245, %235 : vector<64x32xf32>
    %247 = arith.select %243, %241, %246 : vector<64x32xi1>, vector<64x32xf32>
    %248 = tpu.concatenate %244, %247 in 1 : vector<64x32xf32>, vector<64x32xf32> -> vector<64x64xf32>
    %249 = math.absf %113 : vector<64x32xf32>
    %cst_122 = arith.constant 0.000000e+00 : f32
    %250 = vector.broadcast %cst_122 : f32 to vector<64x32xf32>
    %251 = arith.subf %250, %249 : vector<64x32xf32>
    %252 = math.exp %251 : vector<64x32xf32>
    %cst_123 = arith.constant 1.000000e+00 : f32
    %253 = vector.broadcast %cst_123 : f32 to vector<64x32xf32>
    %254 = arith.subf %252, %253 : vector<64x32xf32>
    %cst_124 = arith.constant 0.000000e+00 : f32
    %255 = vector.broadcast %cst_124 : f32 to vector<64x32xf32>
    %256 = arith.cmpf ogt, %113, %255 : vector<64x32xf32>
    %257 = arith.select %256, %113, %254 : vector<64x32xi1>, vector<64x32xf32>
    %cst_125 = arith.constant 0.000000e+00 : f32
    %258 = vector.broadcast %cst_125 : f32 to vector<64x32xf32>
    %259 = arith.subf %258, %113 : vector<64x32xf32>
    %260 = arith.select %256, %254, %259 : vector<64x32xi1>, vector<64x32xf32>
    %261 = tpu.concatenate %257, %260 in 1 : vector<64x32xf32>, vector<64x32xf32> -> vector<64x64xf32>
    %c9_i32_126 = arith.constant 9 : i32
    %262 = tpu.dynamic_rotate %261 by %c9_i32_126 dim 0 : vector<64x64xf32>, i32 -> vector<64x64xf32>
    %263 = arith.mulf %262, %27 : vector<64x64xf32>
    %264 = arith.truncf %263 : vector<64x64xf32> to vector<64x64xbf16>
    %c0_127 = arith.constant 0 : index
    %c0_128 = arith.constant 0 : index
    %c0_129 = arith.constant 0 : index
    %c0_130 = arith.constant 0 : index
    %265 = vector.load %arg7[%c0_127, %c0_128, %c0_129, %c0_130] : memref<2x4x64x32xbf16, #tpu.memory_space<vmem>>, vector<1x1x64x32xbf16>
    %266 = vector.shape_cast %265 : vector<1x1x64x32xbf16> to vector<64x32xbf16>
    %cst_131 = arith.constant dense<0.000000e+00> : vector<64x32xf32>
    %267 = tpu.matmul %264, %266, %cst_131 {dimension_numbers = #tpu.dot_dimension_numbers<[1], [0], [0], [1], [0, 0, 1, 1], [], []>} : vector<64x64xbf16>, vector<64x32xbf16>, vector<64x32xf32> -> vector<64x32xf32>
    %c8_i32_132 = arith.constant 8 : i32
    %268 = tpu.dynamic_rotate %261 by %c8_i32_132 dim 0 : vector<64x64xf32>, i32 -> vector<64x64xf32>
    %269 = arith.mulf %268, %48 : vector<64x64xf32>
    %270 = arith.truncf %269 : vector<64x64xf32> to vector<64x64xbf16>
    %c0_133 = arith.constant 0 : index
    %c1_134 = arith.constant 1 : index
    %c0_135 = arith.constant 0 : index
    %c0_136 = arith.constant 0 : index
    %271 = vector.load %arg7[%c0_133, %c1_134, %c0_135, %c0_136] : memref<2x4x64x32xbf16, #tpu.memory_space<vmem>>, vector<1x1x64x32xbf16>
    %272 = vector.shape_cast %271 : vector<1x1x64x32xbf16> to vector<64x32xbf16>
    %cst_137 = arith.constant dense<0.000000e+00> : vector<64x32xf32>
    %273 = tpu.matmul %270, %272, %cst_137 {dimension_numbers = #tpu.dot_dimension_numbers<[1], [0], [0], [1], [0, 0, 1, 1], [], []>} : vector<64x64xbf16>, vector<64x32xbf16>, vector<64x32xf32> -> vector<64x32xf32>
    %274 = arith.addf %267, %273 : vector<64x32xf32>
    %c1_i32_138 = arith.constant 1 : i32
    %275 = tpu.dynamic_rotate %261 by %c1_i32_138 dim 0 : vector<64x64xf32>, i32 -> vector<64x64xf32>
    %276 = arith.mulf %275, %90 : vector<64x64xf32>
    %277 = arith.truncf %276 : vector<64x64xf32> to vector<64x64xbf16>
    %c0_139 = arith.constant 0 : index
    %c2_140 = arith.constant 2 : index
    %c0_141 = arith.constant 0 : index
    %c0_142 = arith.constant 0 : index
    %278 = vector.load %arg7[%c0_139, %c2_140, %c0_141, %c0_142] : memref<2x4x64x32xbf16, #tpu.memory_space<vmem>>, vector<1x1x64x32xbf16>
    %279 = vector.shape_cast %278 : vector<1x1x64x32xbf16> to vector<64x32xbf16>
    %cst_143 = arith.constant dense<0.000000e+00> : vector<64x32xf32>
    %280 = tpu.matmul %277, %279, %cst_143 {dimension_numbers = #tpu.dot_dimension_numbers<[1], [0], [0], [1], [0, 0, 1, 1], [], []>} : vector<64x64xbf16>, vector<64x32xbf16>, vector<64x32xf32> -> vector<64x32xf32>
    %281 = arith.addf %274, %280 : vector<64x32xf32>
    %282 = arith.truncf %261 : vector<64x64xf32> to vector<64x64xbf16>
    %c0_144 = arith.constant 0 : index
    %c3_145 = arith.constant 3 : index
    %c0_146 = arith.constant 0 : index
    %c0_147 = arith.constant 0 : index
    %283 = vector.load %arg7[%c0_144, %c3_145, %c0_146, %c0_147] : memref<2x4x64x32xbf16, #tpu.memory_space<vmem>>, vector<1x1x64x32xbf16>
    %284 = vector.shape_cast %283 : vector<1x1x64x32xbf16> to vector<64x32xbf16>
    %cst_148 = arith.constant dense<0.000000e+00> : vector<64x32xf32>
    %285 = tpu.matmul %282, %284, %cst_148 {dimension_numbers = #tpu.dot_dimension_numbers<[1], [0], [0], [1], [0, 0, 1, 1], [], []>} : vector<64x64xbf16>, vector<64x32xbf16>, vector<64x32xf32> -> vector<64x32xf32>
    %286 = arith.addf %281, %285 : vector<64x32xf32>
    %c0_149 = arith.constant 0 : index
    %c0_150 = arith.constant 0 : index
    %c0_151 = arith.constant 0 : index
    %287 = vector.load %arg9[%c0_149, %c0_150, %c0_151] : memref<2x1x32xf32, #tpu.memory_space<vmem>>, vector<1x1x32xf32>
    %288 = vector.shape_cast %287 : vector<1x1x32xf32> to vector<1x32xf32>
    %289 = vector.broadcast %288 : vector<1x32xf32> to vector<64x32xf32>
    %290 = arith.addf %286, %289 : vector<64x32xf32>
    %291 = arith.truncf %248 : vector<64x64xf32> to vector<64x64xbf16>
    %c0_152 = arith.constant 0 : index
    %c0_153 = arith.constant 0 : index
    %c0_154 = arith.constant 0 : index
    %292 = vector.load %arg8[%c0_152, %c0_153, %c0_154] : memref<2x64x32xbf16, #tpu.memory_space<vmem>>, vector<1x64x32xbf16>
    %293 = vector.shape_cast %292 : vector<1x64x32xbf16> to vector<64x32xbf16>
    %cst_155 = arith.constant dense<0.000000e+00> : vector<64x32xf32>
    %294 = tpu.matmul %291, %293, %cst_155 {dimension_numbers = #tpu.dot_dimension_numbers<[1], [0], [0], [1], [0, 0, 1, 1], [], []>} : vector<64x64xbf16>, vector<64x32xbf16>, vector<64x32xf32> -> vector<64x32xf32>
    %295 = arith.addf %290, %294 : vector<64x32xf32>
    %296 = math.absf %295 : vector<64x32xf32>
    %cst_156 = arith.constant 0.000000e+00 : f32
    %297 = vector.broadcast %cst_156 : f32 to vector<64x32xf32>
    %298 = arith.subf %297, %296 : vector<64x32xf32>
    %299 = math.exp %298 : vector<64x32xf32>
    %cst_157 = arith.constant 1.000000e+00 : f32
    %300 = vector.broadcast %cst_157 : f32 to vector<64x32xf32>
    %301 = arith.subf %299, %300 : vector<64x32xf32>
    %cst_158 = arith.constant 0.000000e+00 : f32
    %302 = vector.broadcast %cst_158 : f32 to vector<64x32xf32>
    %303 = arith.cmpf ogt, %295, %302 : vector<64x32xf32>
    %304 = arith.select %303, %295, %301 : vector<64x32xi1>, vector<64x32xf32>
    %cst_159 = arith.constant 0.000000e+00 : f32
    %305 = vector.broadcast %cst_159 : f32 to vector<64x32xf32>
    %306 = arith.subf %305, %295 : vector<64x32xf32>
    %307 = arith.select %303, %301, %306 : vector<64x32xi1>, vector<64x32xf32>
    %308 = tpu.concatenate %304, %307 in 1 : vector<64x32xf32>, vector<64x32xf32> -> vector<64x64xf32>
    %c9_i32_160 = arith.constant 9 : i32
    %309 = tpu.dynamic_rotate %308 by %c9_i32_160 dim 0 : vector<64x64xf32>, i32 -> vector<64x64xf32>
    %310 = arith.mulf %309, %27 : vector<64x64xf32>
    %311 = arith.truncf %310 : vector<64x64xf32> to vector<64x64xbf16>
    %c0_161 = arith.constant 0 : index
    %c0_162 = arith.constant 0 : index
    %c0_163 = arith.constant 0 : index
    %c0_164 = arith.constant 0 : index
    %312 = vector.load %arg10[%c0_161, %c0_162, %c0_163, %c0_164] : memref<2x4x64x64xbf16, #tpu.memory_space<vmem>>, vector<1x1x64x64xbf16>
    %313 = vector.shape_cast %312 : vector<1x1x64x64xbf16> to vector<64x64xbf16>
    %cst_165 = arith.constant dense<0.000000e+00> : vector<64x64xf32>
    %314 = tpu.matmul %311, %313, %cst_165 {dimension_numbers = #tpu.dot_dimension_numbers<[1], [0], [0], [1], [0, 0, 1, 1], [], []>} : vector<64x64xbf16>, vector<64x64xbf16>, vector<64x64xf32> -> vector<64x64xf32>
    %c8_i32_166 = arith.constant 8 : i32
    %315 = tpu.dynamic_rotate %308 by %c8_i32_166 dim 0 : vector<64x64xf32>, i32 -> vector<64x64xf32>
    %316 = arith.mulf %315, %48 : vector<64x64xf32>
    %317 = arith.truncf %316 : vector<64x64xf32> to vector<64x64xbf16>
    %c0_167 = arith.constant 0 : index
    %c1_168 = arith.constant 1 : index
    %c0_169 = arith.constant 0 : index
    %c0_170 = arith.constant 0 : index
    %318 = vector.load %arg10[%c0_167, %c1_168, %c0_169, %c0_170] : memref<2x4x64x64xbf16, #tpu.memory_space<vmem>>, vector<1x1x64x64xbf16>
    %319 = vector.shape_cast %318 : vector<1x1x64x64xbf16> to vector<64x64xbf16>
    %cst_171 = arith.constant dense<0.000000e+00> : vector<64x64xf32>
    %320 = tpu.matmul %317, %319, %cst_171 {dimension_numbers = #tpu.dot_dimension_numbers<[1], [0], [0], [1], [0, 0, 1, 1], [], []>} : vector<64x64xbf16>, vector<64x64xbf16>, vector<64x64xf32> -> vector<64x64xf32>
    %321 = arith.addf %314, %320 : vector<64x64xf32>
    %c1_i32_172 = arith.constant 1 : i32
    %322 = tpu.dynamic_rotate %308 by %c1_i32_172 dim 0 : vector<64x64xf32>, i32 -> vector<64x64xf32>
    %323 = arith.mulf %322, %90 : vector<64x64xf32>
    %324 = arith.truncf %323 : vector<64x64xf32> to vector<64x64xbf16>
    %c0_173 = arith.constant 0 : index
    %c2_174 = arith.constant 2 : index
    %c0_175 = arith.constant 0 : index
    %c0_176 = arith.constant 0 : index
    %325 = vector.load %arg10[%c0_173, %c2_174, %c0_175, %c0_176] : memref<2x4x64x64xbf16, #tpu.memory_space<vmem>>, vector<1x1x64x64xbf16>
    %326 = vector.shape_cast %325 : vector<1x1x64x64xbf16> to vector<64x64xbf16>
    %cst_177 = arith.constant dense<0.000000e+00> : vector<64x64xf32>
    %327 = tpu.matmul %324, %326, %cst_177 {dimension_numbers = #tpu.dot_dimension_numbers<[1], [0], [0], [1], [0, 0, 1, 1], [], []>} : vector<64x64xbf16>, vector<64x64xbf16>, vector<64x64xf32> -> vector<64x64xf32>
    %328 = arith.addf %321, %327 : vector<64x64xf32>
    %329 = arith.truncf %308 : vector<64x64xf32> to vector<64x64xbf16>
    %c0_178 = arith.constant 0 : index
    %c3_179 = arith.constant 3 : index
    %c0_180 = arith.constant 0 : index
    %c0_181 = arith.constant 0 : index
    %330 = vector.load %arg10[%c0_178, %c3_179, %c0_180, %c0_181] : memref<2x4x64x64xbf16, #tpu.memory_space<vmem>>, vector<1x1x64x64xbf16>
    %331 = vector.shape_cast %330 : vector<1x1x64x64xbf16> to vector<64x64xbf16>
    %cst_182 = arith.constant dense<0.000000e+00> : vector<64x64xf32>
    %332 = tpu.matmul %329, %331, %cst_182 {dimension_numbers = #tpu.dot_dimension_numbers<[1], [0], [0], [1], [0, 0, 1, 1], [], []>} : vector<64x64xbf16>, vector<64x64xbf16>, vector<64x64xf32> -> vector<64x64xf32>
    %333 = arith.addf %328, %332 : vector<64x64xf32>
    %c0_183 = arith.constant 0 : index
    %c0_184 = arith.constant 0 : index
    %c0_185 = arith.constant 0 : index
    %334 = vector.load %arg11[%c0_183, %c0_184, %c0_185] : memref<2x1x64xf32, #tpu.memory_space<vmem>>, vector<1x1x64xf32>
    %335 = vector.shape_cast %334 : vector<1x1x64xf32> to vector<1x64xf32>
    %336 = vector.broadcast %335 : vector<1x64xf32> to vector<64x64xf32>
    %337 = arith.addf %333, %336 : vector<64x64xf32>
    %338 = vector.extract_strided_slice %337 {offsets = [0, 0], sizes = [64, 32], strides = [1, 1]} : vector<64x64xf32> to vector<64x32xf32>
    %339 = vector.extract_strided_slice %337 {offsets = [0, 32], sizes = [64, 32], strides = [1, 1]} : vector<64x64xf32> to vector<64x32xf32>
    %cst_186 = arith.constant 0.000000e+00 : f32
    %340 = vector.broadcast %cst_186 : f32 to vector<64x32xf32>
    %341 = arith.subf %340, %339 : vector<64x32xf32>
    %342 = math.exp %341 : vector<64x32xf32>
    %cst_187 = arith.constant 1.000000e+00 : f32
    %343 = vector.broadcast %cst_187 : f32 to vector<64x32xf32>
    %344 = arith.addf %343, %342 : vector<64x32xf32>
    %345 = tpu.reciprocal %344 {approx = true} : vector<64x32xf32> -> vector<64x32xf32>
    %346 = arith.mulf %338, %345 : vector<64x32xf32>
    %347 = arith.addf %113, %346 : vector<64x32xf32>
    %c9_i32_188 = arith.constant 9 : i32
    %348 = tpu.dynamic_rotate %248 by %c9_i32_188 dim 0 : vector<64x64xf32>, i32 -> vector<64x64xf32>
    %349 = arith.mulf %348, %27 : vector<64x64xf32>
    %350 = arith.truncf %349 : vector<64x64xf32> to vector<64x64xbf16>
    %c1_189 = arith.constant 1 : index
    %c0_190 = arith.constant 0 : index
    %c0_191 = arith.constant 0 : index
    %c0_192 = arith.constant 0 : index
    %351 = vector.load %arg3[%c1_189, %c0_190, %c0_191, %c0_192] : memref<2x6x64x32xbf16, #tpu.memory_space<vmem>>, vector<1x1x64x32xbf16>
    %352 = vector.shape_cast %351 : vector<1x1x64x32xbf16> to vector<64x32xbf16>
    %cst_193 = arith.constant dense<0.000000e+00> : vector<64x32xf32>
    %353 = tpu.matmul %350, %352, %cst_193 {dimension_numbers = #tpu.dot_dimension_numbers<[1], [0], [0], [1], [0, 0, 1, 1], [], []>} : vector<64x64xbf16>, vector<64x32xbf16>, vector<64x32xf32> -> vector<64x32xf32>
    %c8_i32_194 = arith.constant 8 : i32
    %354 = tpu.dynamic_rotate %248 by %c8_i32_194 dim 0 : vector<64x64xf32>, i32 -> vector<64x64xf32>
    %355 = arith.mulf %354, %48 : vector<64x64xf32>
    %356 = arith.truncf %355 : vector<64x64xf32> to vector<64x64xbf16>
    %c1_195 = arith.constant 1 : index
    %c1_196 = arith.constant 1 : index
    %c0_197 = arith.constant 0 : index
    %c0_198 = arith.constant 0 : index
    %357 = vector.load %arg3[%c1_195, %c1_196, %c0_197, %c0_198] : memref<2x6x64x32xbf16, #tpu.memory_space<vmem>>, vector<1x1x64x32xbf16>
    %358 = vector.shape_cast %357 : vector<1x1x64x32xbf16> to vector<64x32xbf16>
    %cst_199 = arith.constant dense<0.000000e+00> : vector<64x32xf32>
    %359 = tpu.matmul %356, %358, %cst_199 {dimension_numbers = #tpu.dot_dimension_numbers<[1], [0], [0], [1], [0, 0, 1, 1], [], []>} : vector<64x64xbf16>, vector<64x32xbf16>, vector<64x32xf32> -> vector<64x32xf32>
    %360 = arith.addf %353, %359 : vector<64x32xf32>
    %c7_i32_200 = arith.constant 7 : i32
    %361 = tpu.dynamic_rotate %248 by %c7_i32_200 dim 0 : vector<64x64xf32>, i32 -> vector<64x64xf32>
    %362 = arith.mulf %361, %69 : vector<64x64xf32>
    %363 = arith.truncf %362 : vector<64x64xf32> to vector<64x64xbf16>
    %c1_201 = arith.constant 1 : index
    %c2_202 = arith.constant 2 : index
    %c0_203 = arith.constant 0 : index
    %c0_204 = arith.constant 0 : index
    %364 = vector.load %arg3[%c1_201, %c2_202, %c0_203, %c0_204] : memref<2x6x64x32xbf16, #tpu.memory_space<vmem>>, vector<1x1x64x32xbf16>
    %365 = vector.shape_cast %364 : vector<1x1x64x32xbf16> to vector<64x32xbf16>
    %cst_205 = arith.constant dense<0.000000e+00> : vector<64x32xf32>
    %366 = tpu.matmul %363, %365, %cst_205 {dimension_numbers = #tpu.dot_dimension_numbers<[1], [0], [0], [1], [0, 0, 1, 1], [], []>} : vector<64x64xbf16>, vector<64x32xbf16>, vector<64x32xf32> -> vector<64x32xf32>
    %367 = arith.addf %360, %366 : vector<64x32xf32>
    %c1_i32_206 = arith.constant 1 : i32
    %368 = tpu.dynamic_rotate %248 by %c1_i32_206 dim 0 : vector<64x64xf32>, i32 -> vector<64x64xf32>
    %369 = arith.mulf %368, %90 : vector<64x64xf32>
    %370 = arith.truncf %369 : vector<64x64xf32> to vector<64x64xbf16>
    %c1_207 = arith.constant 1 : index
    %c3_208 = arith.constant 3 : index
    %c0_209 = arith.constant 0 : index
    %c0_210 = arith.constant 0 : index
    %371 = vector.load %arg3[%c1_207, %c3_208, %c0_209, %c0_210] : memref<2x6x64x32xbf16, #tpu.memory_space<vmem>>, vector<1x1x64x32xbf16>
    %372 = vector.shape_cast %371 : vector<1x1x64x32xbf16> to vector<64x32xbf16>
    %cst_211 = arith.constant dense<0.000000e+00> : vector<64x32xf32>
    %373 = tpu.matmul %370, %372, %cst_211 {dimension_numbers = #tpu.dot_dimension_numbers<[1], [0], [0], [1], [0, 0, 1, 1], [], []>} : vector<64x64xbf16>, vector<64x32xbf16>, vector<64x32xf32> -> vector<64x32xf32>
    %374 = arith.addf %367, %373 : vector<64x32xf32>
    %375 = arith.truncf %248 : vector<64x64xf32> to vector<64x64xbf16>
    %c1_212 = arith.constant 1 : index
    %c4_213 = arith.constant 4 : index
    %c0_214 = arith.constant 0 : index
    %c0_215 = arith.constant 0 : index
    %376 = vector.load %arg3[%c1_212, %c4_213, %c0_214, %c0_215] : memref<2x6x64x32xbf16, #tpu.memory_space<vmem>>, vector<1x1x64x32xbf16>
    %377 = vector.shape_cast %376 : vector<1x1x64x32xbf16> to vector<64x32xbf16>
    %cst_216 = arith.constant dense<0.000000e+00> : vector<64x32xf32>
    %378 = tpu.matmul %375, %377, %cst_216 {dimension_numbers = #tpu.dot_dimension_numbers<[1], [0], [0], [1], [0, 0, 1, 1], [], []>} : vector<64x64xbf16>, vector<64x32xbf16>, vector<64x32xf32> -> vector<64x32xf32>
    %379 = arith.addf %374, %378 : vector<64x32xf32>
    %c63_i32_217 = arith.constant 63 : i32
    %380 = tpu.dynamic_rotate %248 by %c63_i32_217 dim 0 : vector<64x64xf32>, i32 -> vector<64x64xf32>
    %381 = arith.mulf %380, %111 : vector<64x64xf32>
    %382 = arith.truncf %381 : vector<64x64xf32> to vector<64x64xbf16>
    %c1_218 = arith.constant 1 : index
    %c5_219 = arith.constant 5 : index
    %c0_220 = arith.constant 0 : index
    %c0_221 = arith.constant 0 : index
    %383 = vector.load %arg3[%c1_218, %c5_219, %c0_220, %c0_221] : memref<2x6x64x32xbf16, #tpu.memory_space<vmem>>, vector<1x1x64x32xbf16>
    %384 = vector.shape_cast %383 : vector<1x1x64x32xbf16> to vector<64x32xbf16>
    %cst_222 = arith.constant dense<0.000000e+00> : vector<64x32xf32>
    %385 = tpu.matmul %382, %384, %cst_222 {dimension_numbers = #tpu.dot_dimension_numbers<[1], [0], [0], [1], [0, 0, 1, 1], [], []>} : vector<64x64xbf16>, vector<64x32xbf16>, vector<64x32xf32> -> vector<64x32xf32>
    %386 = arith.addf %379, %385 : vector<64x32xf32>
    %c1_223 = arith.constant 1 : index
    %c0_224 = arith.constant 0 : index
    %c0_225 = arith.constant 0 : index
    %387 = vector.load %arg4[%c1_223, %c0_224, %c0_225] : memref<2x1x32xf32, #tpu.memory_space<vmem>>, vector<1x1x32xf32>
    %388 = vector.shape_cast %387 : vector<1x1x32xf32> to vector<1x32xf32>
    %389 = vector.broadcast %388 : vector<1x32xf32> to vector<64x32xf32>
    %390 = arith.addf %386, %389 : vector<64x32xf32>
    %391 = math.absf %390 : vector<64x32xf32>
    %cst_226 = arith.constant 0.000000e+00 : f32
    %392 = vector.broadcast %cst_226 : f32 to vector<64x32xf32>
    %393 = arith.subf %392, %391 : vector<64x32xf32>
    %394 = math.exp %393 : vector<64x32xf32>
    %cst_227 = arith.constant 1.000000e+00 : f32
    %395 = vector.broadcast %cst_227 : f32 to vector<64x32xf32>
    %396 = arith.subf %394, %395 : vector<64x32xf32>
    %cst_228 = arith.constant 0.000000e+00 : f32
    %397 = vector.broadcast %cst_228 : f32 to vector<64x32xf32>
    %398 = arith.cmpf ogt, %390, %397 : vector<64x32xf32>
    %399 = arith.select %398, %390, %396 : vector<64x32xi1>, vector<64x32xf32>
    %cst_229 = arith.constant 0.000000e+00 : f32
    %400 = vector.broadcast %cst_229 : f32 to vector<64x32xf32>
    %401 = arith.subf %400, %390 : vector<64x32xf32>
    %402 = arith.select %398, %396, %401 : vector<64x32xi1>, vector<64x32xf32>
    %403 = tpu.concatenate %399, %402 in 1 : vector<64x32xf32>, vector<64x32xf32> -> vector<64x64xf32>
    %c9_i32_230 = arith.constant 9 : i32
    %404 = tpu.dynamic_rotate %403 by %c9_i32_230 dim 0 : vector<64x64xf32>, i32 -> vector<64x64xf32>
    %405 = arith.mulf %404, %27 : vector<64x64xf32>
    %406 = arith.truncf %405 : vector<64x64xf32> to vector<64x64xbf16>
    %c1_231 = arith.constant 1 : index
    %c0_232 = arith.constant 0 : index
    %c0_233 = arith.constant 0 : index
    %c0_234 = arith.constant 0 : index
    %407 = vector.load %arg5[%c1_231, %c0_232, %c0_233, %c0_234] : memref<2x6x64x64xbf16, #tpu.memory_space<vmem>>, vector<1x1x64x64xbf16>
    %408 = vector.shape_cast %407 : vector<1x1x64x64xbf16> to vector<64x64xbf16>
    %cst_235 = arith.constant dense<0.000000e+00> : vector<64x64xf32>
    %409 = tpu.matmul %406, %408, %cst_235 {dimension_numbers = #tpu.dot_dimension_numbers<[1], [0], [0], [1], [0, 0, 1, 1], [], []>} : vector<64x64xbf16>, vector<64x64xbf16>, vector<64x64xf32> -> vector<64x64xf32>
    %c8_i32_236 = arith.constant 8 : i32
    %410 = tpu.dynamic_rotate %403 by %c8_i32_236 dim 0 : vector<64x64xf32>, i32 -> vector<64x64xf32>
    %411 = arith.mulf %410, %48 : vector<64x64xf32>
    %412 = arith.truncf %411 : vector<64x64xf32> to vector<64x64xbf16>
    %c1_237 = arith.constant 1 : index
    %c1_238 = arith.constant 1 : index
    %c0_239 = arith.constant 0 : index
    %c0_240 = arith.constant 0 : index
    %413 = vector.load %arg5[%c1_237, %c1_238, %c0_239, %c0_240] : memref<2x6x64x64xbf16, #tpu.memory_space<vmem>>, vector<1x1x64x64xbf16>
    %414 = vector.shape_cast %413 : vector<1x1x64x64xbf16> to vector<64x64xbf16>
    %cst_241 = arith.constant dense<0.000000e+00> : vector<64x64xf32>
    %415 = tpu.matmul %412, %414, %cst_241 {dimension_numbers = #tpu.dot_dimension_numbers<[1], [0], [0], [1], [0, 0, 1, 1], [], []>} : vector<64x64xbf16>, vector<64x64xbf16>, vector<64x64xf32> -> vector<64x64xf32>
    %416 = arith.addf %409, %415 : vector<64x64xf32>
    %c7_i32_242 = arith.constant 7 : i32
    %417 = tpu.dynamic_rotate %403 by %c7_i32_242 dim 0 : vector<64x64xf32>, i32 -> vector<64x64xf32>
    %418 = arith.mulf %417, %69 : vector<64x64xf32>
    %419 = arith.truncf %418 : vector<64x64xf32> to vector<64x64xbf16>
    %c1_243 = arith.constant 1 : index
    %c2_244 = arith.constant 2 : index
    %c0_245 = arith.constant 0 : index
    %c0_246 = arith.constant 0 : index
    %420 = vector.load %arg5[%c1_243, %c2_244, %c0_245, %c0_246] : memref<2x6x64x64xbf16, #tpu.memory_space<vmem>>, vector<1x1x64x64xbf16>
    %421 = vector.shape_cast %420 : vector<1x1x64x64xbf16> to vector<64x64xbf16>
    %cst_247 = arith.constant dense<0.000000e+00> : vector<64x64xf32>
    %422 = tpu.matmul %419, %421, %cst_247 {dimension_numbers = #tpu.dot_dimension_numbers<[1], [0], [0], [1], [0, 0, 1, 1], [], []>} : vector<64x64xbf16>, vector<64x64xbf16>, vector<64x64xf32> -> vector<64x64xf32>
    %423 = arith.addf %416, %422 : vector<64x64xf32>
    %c1_i32_248 = arith.constant 1 : i32
    %424 = tpu.dynamic_rotate %403 by %c1_i32_248 dim 0 : vector<64x64xf32>, i32 -> vector<64x64xf32>
    %425 = arith.mulf %424, %90 : vector<64x64xf32>
    %426 = arith.truncf %425 : vector<64x64xf32> to vector<64x64xbf16>
    %c1_249 = arith.constant 1 : index
    %c3_250 = arith.constant 3 : index
    %c0_251 = arith.constant 0 : index
    %c0_252 = arith.constant 0 : index
    %427 = vector.load %arg5[%c1_249, %c3_250, %c0_251, %c0_252] : memref<2x6x64x64xbf16, #tpu.memory_space<vmem>>, vector<1x1x64x64xbf16>
    %428 = vector.shape_cast %427 : vector<1x1x64x64xbf16> to vector<64x64xbf16>
    %cst_253 = arith.constant dense<0.000000e+00> : vector<64x64xf32>
    %429 = tpu.matmul %426, %428, %cst_253 {dimension_numbers = #tpu.dot_dimension_numbers<[1], [0], [0], [1], [0, 0, 1, 1], [], []>} : vector<64x64xbf16>, vector<64x64xbf16>, vector<64x64xf32> -> vector<64x64xf32>
    %430 = arith.addf %423, %429 : vector<64x64xf32>
    %431 = arith.truncf %403 : vector<64x64xf32> to vector<64x64xbf16>
    %c1_254 = arith.constant 1 : index
    %c4_255 = arith.constant 4 : index
    %c0_256 = arith.constant 0 : index
    %c0_257 = arith.constant 0 : index
    %432 = vector.load %arg5[%c1_254, %c4_255, %c0_256, %c0_257] : memref<2x6x64x64xbf16, #tpu.memory_space<vmem>>, vector<1x1x64x64xbf16>
    %433 = vector.shape_cast %432 : vector<1x1x64x64xbf16> to vector<64x64xbf16>
    %cst_258 = arith.constant dense<0.000000e+00> : vector<64x64xf32>
    %434 = tpu.matmul %431, %433, %cst_258 {dimension_numbers = #tpu.dot_dimension_numbers<[1], [0], [0], [1], [0, 0, 1, 1], [], []>} : vector<64x64xbf16>, vector<64x64xbf16>, vector<64x64xf32> -> vector<64x64xf32>
    %435 = arith.addf %430, %434 : vector<64x64xf32>
    %c63_i32_259 = arith.constant 63 : i32
    %436 = tpu.dynamic_rotate %403 by %c63_i32_259 dim 0 : vector<64x64xf32>, i32 -> vector<64x64xf32>
    %437 = arith.mulf %436, %111 : vector<64x64xf32>
    %438 = arith.truncf %437 : vector<64x64xf32> to vector<64x64xbf16>
    %c1_260 = arith.constant 1 : index
    %c5_261 = arith.constant 5 : index
    %c0_262 = arith.constant 0 : index
    %c0_263 = arith.constant 0 : index
    %439 = vector.load %arg5[%c1_260, %c5_261, %c0_262, %c0_263] : memref<2x6x64x64xbf16, #tpu.memory_space<vmem>>, vector<1x1x64x64xbf16>
    %440 = vector.shape_cast %439 : vector<1x1x64x64xbf16> to vector<64x64xbf16>
    %cst_264 = arith.constant dense<0.000000e+00> : vector<64x64xf32>
    %441 = tpu.matmul %438, %440, %cst_264 {dimension_numbers = #tpu.dot_dimension_numbers<[1], [0], [0], [1], [0, 0, 1, 1], [], []>} : vector<64x64xbf16>, vector<64x64xbf16>, vector<64x64xf32> -> vector<64x64xf32>
    %442 = arith.addf %435, %441 : vector<64x64xf32>
    %c1_265 = arith.constant 1 : index
    %c0_266 = arith.constant 0 : index
    %c0_267 = arith.constant 0 : index
    %443 = vector.load %arg6[%c1_265, %c0_266, %c0_267] : memref<2x1x64xf32, #tpu.memory_space<vmem>>, vector<1x1x64xf32>
    %444 = vector.shape_cast %443 : vector<1x1x64xf32> to vector<1x64xf32>
    %445 = vector.broadcast %444 : vector<1x64xf32> to vector<64x64xf32>
    %446 = arith.addf %442, %445 : vector<64x64xf32>
    %447 = vector.extract_strided_slice %446 {offsets = [0, 0], sizes = [64, 32], strides = [1, 1]} : vector<64x64xf32> to vector<64x32xf32>
    %448 = vector.extract_strided_slice %446 {offsets = [0, 32], sizes = [64, 32], strides = [1, 1]} : vector<64x64xf32> to vector<64x32xf32>
    %cst_268 = arith.constant 0.000000e+00 : f32
    %449 = vector.broadcast %cst_268 : f32 to vector<64x32xf32>
    %450 = arith.subf %449, %448 : vector<64x32xf32>
    %451 = math.exp %450 : vector<64x32xf32>
    %cst_269 = arith.constant 1.000000e+00 : f32
    %452 = vector.broadcast %cst_269 : f32 to vector<64x32xf32>
    %453 = arith.addf %452, %451 : vector<64x32xf32>
    %454 = tpu.reciprocal %453 {approx = true} : vector<64x32xf32> -> vector<64x32xf32>
    %455 = arith.mulf %447, %454 : vector<64x32xf32>
    %456 = arith.addf %235, %455 : vector<64x32xf32>
    %457 = math.absf %456 : vector<64x32xf32>
    %cst_270 = arith.constant 0.000000e+00 : f32
    %458 = vector.broadcast %cst_270 : f32 to vector<64x32xf32>
    %459 = arith.subf %458, %457 : vector<64x32xf32>
    %460 = math.exp %459 : vector<64x32xf32>
    %cst_271 = arith.constant 1.000000e+00 : f32
    %461 = vector.broadcast %cst_271 : f32 to vector<64x32xf32>
    %462 = arith.subf %460, %461 : vector<64x32xf32>
    %cst_272 = arith.constant 0.000000e+00 : f32
    %463 = vector.broadcast %cst_272 : f32 to vector<64x32xf32>
    %464 = arith.cmpf ogt, %456, %463 : vector<64x32xf32>
    %465 = arith.select %464, %456, %462 : vector<64x32xi1>, vector<64x32xf32>
    %cst_273 = arith.constant 0.000000e+00 : f32
    %466 = vector.broadcast %cst_273 : f32 to vector<64x32xf32>
    %467 = arith.subf %466, %456 : vector<64x32xf32>
    %468 = arith.select %464, %462, %467 : vector<64x32xi1>, vector<64x32xf32>
    %469 = tpu.concatenate %465, %468 in 1 : vector<64x32xf32>, vector<64x32xf32> -> vector<64x64xf32>
    %470 = math.absf %347 : vector<64x32xf32>
    %cst_274 = arith.constant 0.000000e+00 : f32
    %471 = vector.broadcast %cst_274 : f32 to vector<64x32xf32>
    %472 = arith.subf %471, %470 : vector<64x32xf32>
    %473 = math.exp %472 : vector<64x32xf32>
    %cst_275 = arith.constant 1.000000e+00 : f32
    %474 = vector.broadcast %cst_275 : f32 to vector<64x32xf32>
    %475 = arith.subf %473, %474 : vector<64x32xf32>
    %cst_276 = arith.constant 0.000000e+00 : f32
    %476 = vector.broadcast %cst_276 : f32 to vector<64x32xf32>
    %477 = arith.cmpf ogt, %347, %476 : vector<64x32xf32>
    %478 = arith.select %477, %347, %475 : vector<64x32xi1>, vector<64x32xf32>
    %cst_277 = arith.constant 0.000000e+00 : f32
    %479 = vector.broadcast %cst_277 : f32 to vector<64x32xf32>
    %480 = arith.subf %479, %347 : vector<64x32xf32>
    %481 = arith.select %477, %475, %480 : vector<64x32xi1>, vector<64x32xf32>
    %482 = tpu.concatenate %478, %481 in 1 : vector<64x32xf32>, vector<64x32xf32> -> vector<64x64xf32>
    %c9_i32_278 = arith.constant 9 : i32
    %483 = tpu.dynamic_rotate %482 by %c9_i32_278 dim 0 : vector<64x64xf32>, i32 -> vector<64x64xf32>
    %484 = arith.mulf %483, %27 : vector<64x64xf32>
    %485 = arith.truncf %484 : vector<64x64xf32> to vector<64x64xbf16>
    %c1_279 = arith.constant 1 : index
    %c0_280 = arith.constant 0 : index
    %c0_281 = arith.constant 0 : index
    %c0_282 = arith.constant 0 : index
    %486 = vector.load %arg7[%c1_279, %c0_280, %c0_281, %c0_282] : memref<2x4x64x32xbf16, #tpu.memory_space<vmem>>, vector<1x1x64x32xbf16>
    %487 = vector.shape_cast %486 : vector<1x1x64x32xbf16> to vector<64x32xbf16>
    %cst_283 = arith.constant dense<0.000000e+00> : vector<64x32xf32>
    %488 = tpu.matmul %485, %487, %cst_283 {dimension_numbers = #tpu.dot_dimension_numbers<[1], [0], [0], [1], [0, 0, 1, 1], [], []>} : vector<64x64xbf16>, vector<64x32xbf16>, vector<64x32xf32> -> vector<64x32xf32>
    %c8_i32_284 = arith.constant 8 : i32
    %489 = tpu.dynamic_rotate %482 by %c8_i32_284 dim 0 : vector<64x64xf32>, i32 -> vector<64x64xf32>
    %490 = arith.mulf %489, %48 : vector<64x64xf32>
    %491 = arith.truncf %490 : vector<64x64xf32> to vector<64x64xbf16>
    %c1_285 = arith.constant 1 : index
    %c1_286 = arith.constant 1 : index
    %c0_287 = arith.constant 0 : index
    %c0_288 = arith.constant 0 : index
    %492 = vector.load %arg7[%c1_285, %c1_286, %c0_287, %c0_288] : memref<2x4x64x32xbf16, #tpu.memory_space<vmem>>, vector<1x1x64x32xbf16>
    %493 = vector.shape_cast %492 : vector<1x1x64x32xbf16> to vector<64x32xbf16>
    %cst_289 = arith.constant dense<0.000000e+00> : vector<64x32xf32>
    %494 = tpu.matmul %491, %493, %cst_289 {dimension_numbers = #tpu.dot_dimension_numbers<[1], [0], [0], [1], [0, 0, 1, 1], [], []>} : vector<64x64xbf16>, vector<64x32xbf16>, vector<64x32xf32> -> vector<64x32xf32>
    %495 = arith.addf %488, %494 : vector<64x32xf32>
    %c1_i32_290 = arith.constant 1 : i32
    %496 = tpu.dynamic_rotate %482 by %c1_i32_290 dim 0 : vector<64x64xf32>, i32 -> vector<64x64xf32>
    %497 = arith.mulf %496, %90 : vector<64x64xf32>
    %498 = arith.truncf %497 : vector<64x64xf32> to vector<64x64xbf16>
    %c1_291 = arith.constant 1 : index
    %c2_292 = arith.constant 2 : index
    %c0_293 = arith.constant 0 : index
    %c0_294 = arith.constant 0 : index
    %499 = vector.load %arg7[%c1_291, %c2_292, %c0_293, %c0_294] : memref<2x4x64x32xbf16, #tpu.memory_space<vmem>>, vector<1x1x64x32xbf16>
    %500 = vector.shape_cast %499 : vector<1x1x64x32xbf16> to vector<64x32xbf16>
    %cst_295 = arith.constant dense<0.000000e+00> : vector<64x32xf32>
    %501 = tpu.matmul %498, %500, %cst_295 {dimension_numbers = #tpu.dot_dimension_numbers<[1], [0], [0], [1], [0, 0, 1, 1], [], []>} : vector<64x64xbf16>, vector<64x32xbf16>, vector<64x32xf32> -> vector<64x32xf32>
    %502 = arith.addf %495, %501 : vector<64x32xf32>
    %503 = arith.truncf %482 : vector<64x64xf32> to vector<64x64xbf16>
    %c1_296 = arith.constant 1 : index
    %c3_297 = arith.constant 3 : index
    %c0_298 = arith.constant 0 : index
    %c0_299 = arith.constant 0 : index
    %504 = vector.load %arg7[%c1_296, %c3_297, %c0_298, %c0_299] : memref<2x4x64x32xbf16, #tpu.memory_space<vmem>>, vector<1x1x64x32xbf16>
    %505 = vector.shape_cast %504 : vector<1x1x64x32xbf16> to vector<64x32xbf16>
    %cst_300 = arith.constant dense<0.000000e+00> : vector<64x32xf32>
    %506 = tpu.matmul %503, %505, %cst_300 {dimension_numbers = #tpu.dot_dimension_numbers<[1], [0], [0], [1], [0, 0, 1, 1], [], []>} : vector<64x64xbf16>, vector<64x32xbf16>, vector<64x32xf32> -> vector<64x32xf32>
    %507 = arith.addf %502, %506 : vector<64x32xf32>
    %c1_301 = arith.constant 1 : index
    %c0_302 = arith.constant 0 : index
    %c0_303 = arith.constant 0 : index
    %508 = vector.load %arg9[%c1_301, %c0_302, %c0_303] : memref<2x1x32xf32, #tpu.memory_space<vmem>>, vector<1x1x32xf32>
    %509 = vector.shape_cast %508 : vector<1x1x32xf32> to vector<1x32xf32>
    %510 = vector.broadcast %509 : vector<1x32xf32> to vector<64x32xf32>
    %511 = arith.addf %507, %510 : vector<64x32xf32>
    %512 = arith.truncf %469 : vector<64x64xf32> to vector<64x64xbf16>
    %c1_304 = arith.constant 1 : index
    %c0_305 = arith.constant 0 : index
    %c0_306 = arith.constant 0 : index
    %513 = vector.load %arg8[%c1_304, %c0_305, %c0_306] : memref<2x64x32xbf16, #tpu.memory_space<vmem>>, vector<1x64x32xbf16>
    %514 = vector.shape_cast %513 : vector<1x64x32xbf16> to vector<64x32xbf16>
    %cst_307 = arith.constant dense<0.000000e+00> : vector<64x32xf32>
    %515 = tpu.matmul %512, %514, %cst_307 {dimension_numbers = #tpu.dot_dimension_numbers<[1], [0], [0], [1], [0, 0, 1, 1], [], []>} : vector<64x64xbf16>, vector<64x32xbf16>, vector<64x32xf32> -> vector<64x32xf32>
    %516 = arith.addf %511, %515 : vector<64x32xf32>
    %517 = math.absf %516 : vector<64x32xf32>
    %cst_308 = arith.constant 0.000000e+00 : f32
    %518 = vector.broadcast %cst_308 : f32 to vector<64x32xf32>
    %519 = arith.subf %518, %517 : vector<64x32xf32>
    %520 = math.exp %519 : vector<64x32xf32>
    %cst_309 = arith.constant 1.000000e+00 : f32
    %521 = vector.broadcast %cst_309 : f32 to vector<64x32xf32>
    %522 = arith.subf %520, %521 : vector<64x32xf32>
    %cst_310 = arith.constant 0.000000e+00 : f32
    %523 = vector.broadcast %cst_310 : f32 to vector<64x32xf32>
    %524 = arith.cmpf ogt, %516, %523 : vector<64x32xf32>
    %525 = arith.select %524, %516, %522 : vector<64x32xi1>, vector<64x32xf32>
    %cst_311 = arith.constant 0.000000e+00 : f32
    %526 = vector.broadcast %cst_311 : f32 to vector<64x32xf32>
    %527 = arith.subf %526, %516 : vector<64x32xf32>
    %528 = arith.select %524, %522, %527 : vector<64x32xi1>, vector<64x32xf32>
    %529 = tpu.concatenate %525, %528 in 1 : vector<64x32xf32>, vector<64x32xf32> -> vector<64x64xf32>
    %c9_i32_312 = arith.constant 9 : i32
    %530 = tpu.dynamic_rotate %529 by %c9_i32_312 dim 0 : vector<64x64xf32>, i32 -> vector<64x64xf32>
    %531 = arith.mulf %530, %27 : vector<64x64xf32>
    %532 = arith.truncf %531 : vector<64x64xf32> to vector<64x64xbf16>
    %c1_313 = arith.constant 1 : index
    %c0_314 = arith.constant 0 : index
    %c0_315 = arith.constant 0 : index
    %c0_316 = arith.constant 0 : index
    %533 = vector.load %arg10[%c1_313, %c0_314, %c0_315, %c0_316] : memref<2x4x64x64xbf16, #tpu.memory_space<vmem>>, vector<1x1x64x64xbf16>
    %534 = vector.shape_cast %533 : vector<1x1x64x64xbf16> to vector<64x64xbf16>
    %cst_317 = arith.constant dense<0.000000e+00> : vector<64x64xf32>
    %535 = tpu.matmul %532, %534, %cst_317 {dimension_numbers = #tpu.dot_dimension_numbers<[1], [0], [0], [1], [0, 0, 1, 1], [], []>} : vector<64x64xbf16>, vector<64x64xbf16>, vector<64x64xf32> -> vector<64x64xf32>
    %c8_i32_318 = arith.constant 8 : i32
    %536 = tpu.dynamic_rotate %529 by %c8_i32_318 dim 0 : vector<64x64xf32>, i32 -> vector<64x64xf32>
    %537 = arith.mulf %536, %48 : vector<64x64xf32>
    %538 = arith.truncf %537 : vector<64x64xf32> to vector<64x64xbf16>
    %c1_319 = arith.constant 1 : index
    %c1_320 = arith.constant 1 : index
    %c0_321 = arith.constant 0 : index
    %c0_322 = arith.constant 0 : index
    %539 = vector.load %arg10[%c1_319, %c1_320, %c0_321, %c0_322] : memref<2x4x64x64xbf16, #tpu.memory_space<vmem>>, vector<1x1x64x64xbf16>
    %540 = vector.shape_cast %539 : vector<1x1x64x64xbf16> to vector<64x64xbf16>
    %cst_323 = arith.constant dense<0.000000e+00> : vector<64x64xf32>
    %541 = tpu.matmul %538, %540, %cst_323 {dimension_numbers = #tpu.dot_dimension_numbers<[1], [0], [0], [1], [0, 0, 1, 1], [], []>} : vector<64x64xbf16>, vector<64x64xbf16>, vector<64x64xf32> -> vector<64x64xf32>
    %542 = arith.addf %535, %541 : vector<64x64xf32>
    %c1_i32_324 = arith.constant 1 : i32
    %543 = tpu.dynamic_rotate %529 by %c1_i32_324 dim 0 : vector<64x64xf32>, i32 -> vector<64x64xf32>
    %544 = arith.mulf %543, %90 : vector<64x64xf32>
    %545 = arith.truncf %544 : vector<64x64xf32> to vector<64x64xbf16>
    %c1_325 = arith.constant 1 : index
    %c2_326 = arith.constant 2 : index
    %c0_327 = arith.constant 0 : index
    %c0_328 = arith.constant 0 : index
    %546 = vector.load %arg10[%c1_325, %c2_326, %c0_327, %c0_328] : memref<2x4x64x64xbf16, #tpu.memory_space<vmem>>, vector<1x1x64x64xbf16>
    %547 = vector.shape_cast %546 : vector<1x1x64x64xbf16> to vector<64x64xbf16>
    %cst_329 = arith.constant dense<0.000000e+00> : vector<64x64xf32>
    %548 = tpu.matmul %545, %547, %cst_329 {dimension_numbers = #tpu.dot_dimension_numbers<[1], [0], [0], [1], [0, 0, 1, 1], [], []>} : vector<64x64xbf16>, vector<64x64xbf16>, vector<64x64xf32> -> vector<64x64xf32>
    %549 = arith.addf %542, %548 : vector<64x64xf32>
    %550 = arith.truncf %529 : vector<64x64xf32> to vector<64x64xbf16>
    %c1_330 = arith.constant 1 : index
    %c3_331 = arith.constant 3 : index
    %c0_332 = arith.constant 0 : index
    %c0_333 = arith.constant 0 : index
    %551 = vector.load %arg10[%c1_330, %c3_331, %c0_332, %c0_333] : memref<2x4x64x64xbf16, #tpu.memory_space<vmem>>, vector<1x1x64x64xbf16>
    %552 = vector.shape_cast %551 : vector<1x1x64x64xbf16> to vector<64x64xbf16>
    %cst_334 = arith.constant dense<0.000000e+00> : vector<64x64xf32>
    %553 = tpu.matmul %550, %552, %cst_334 {dimension_numbers = #tpu.dot_dimension_numbers<[1], [0], [0], [1], [0, 0, 1, 1], [], []>} : vector<64x64xbf16>, vector<64x64xbf16>, vector<64x64xf32> -> vector<64x64xf32>
    %554 = arith.addf %549, %553 : vector<64x64xf32>
    %c1_335 = arith.constant 1 : index
    %c0_336 = arith.constant 0 : index
    %c0_337 = arith.constant 0 : index
    %555 = vector.load %arg11[%c1_335, %c0_336, %c0_337] : memref<2x1x64xf32, #tpu.memory_space<vmem>>, vector<1x1x64xf32>
    %556 = vector.shape_cast %555 : vector<1x1x64xf32> to vector<1x64xf32>
    %557 = vector.broadcast %556 : vector<1x64xf32> to vector<64x64xf32>
    %558 = arith.addf %554, %557 : vector<64x64xf32>
    %559 = vector.extract_strided_slice %558 {offsets = [0, 0], sizes = [64, 32], strides = [1, 1]} : vector<64x64xf32> to vector<64x32xf32>
    %560 = vector.extract_strided_slice %558 {offsets = [0, 32], sizes = [64, 32], strides = [1, 1]} : vector<64x64xf32> to vector<64x32xf32>
    %cst_338 = arith.constant 0.000000e+00 : f32
    %561 = vector.broadcast %cst_338 : f32 to vector<64x32xf32>
    %562 = arith.subf %561, %560 : vector<64x32xf32>
    %563 = math.exp %562 : vector<64x32xf32>
    %cst_339 = arith.constant 1.000000e+00 : f32
    %564 = vector.broadcast %cst_339 : f32 to vector<64x32xf32>
    %565 = arith.addf %564, %563 : vector<64x32xf32>
    %566 = tpu.reciprocal %565 {approx = true} : vector<64x32xf32> -> vector<64x32xf32>
    %567 = arith.mulf %559, %566 : vector<64x32xf32>
    %568 = arith.addf %347, %567 : vector<64x32xf32>
    %569 = tpu.concatenate %235, %347, %456, %568 in 1 : vector<64x32xf32>, vector<64x32xf32>, vector<64x32xf32>, vector<64x32xf32> -> vector<64x128xf32>
    %c0_340 = arith.constant 0 : index
    %c0_341 = arith.constant 0 : index
    %570 = vector.load %arg12[%c0_340, %c0_341] : memref<64x128xf32, #tpu.memory_space<vmem>>, vector<64x128xf32>
    tpu.vector_store %arg12[%c0_340, %c0_341], %569 {strides = array<i32>} : memref<64x128xf32, #tpu.memory_space<vmem>>, vector<64x128xf32>,
    return
  }
  func.func @transform_0(%arg0: i32) -> (i32, i32) {
    %c0_i32 = arith.constant 0 : i32
    %c0_i32_0 = arith.constant 0 : i32
    return %arg0, %c0_i32 : i32, i32
  }
  func.func @transform_1(%arg0: i32) -> (i32, i32) {
    %c0_i32 = arith.constant 0 : i32
    %c0_i32_0 = arith.constant 0 : i32
    return %arg0, %c0_i32 : i32, i32
  }
  func.func @transform_2(%arg0: i32) -> (i32, i32, i32, i32) {
    %c0_i32 = arith.constant 0 : i32
    %c0_i32_0 = arith.constant 0 : i32
    %c0_i32_1 = arith.constant 0 : i32
    %c0_i32_2 = arith.constant 0 : i32
    %c0_i32_3 = arith.constant 0 : i32
    return %c0_i32, %c0_i32_0, %c0_i32_1, %c0_i32_2 : i32, i32, i32, i32
  }
  func.func @transform_3(%arg0: i32) -> (i32, i32, i32) {
    %c0_i32 = arith.constant 0 : i32
    %c0_i32_0 = arith.constant 0 : i32
    %c0_i32_1 = arith.constant 0 : i32
    %c0_i32_2 = arith.constant 0 : i32
    return %c0_i32, %c0_i32_0, %c0_i32_1 : i32, i32, i32
  }
  func.func @transform_4(%arg0: i32) -> (i32, i32, i32, i32) {
    %c0_i32 = arith.constant 0 : i32
    %c0_i32_0 = arith.constant 0 : i32
    %c0_i32_1 = arith.constant 0 : i32
    %c0_i32_2 = arith.constant 0 : i32
    %c0_i32_3 = arith.constant 0 : i32
    return %c0_i32, %c0_i32_0, %c0_i32_1, %c0_i32_2 : i32, i32, i32, i32
  }
  func.func @transform_5(%arg0: i32) -> (i32, i32, i32) {
    %c0_i32 = arith.constant 0 : i32
    %c0_i32_0 = arith.constant 0 : i32
    %c0_i32_1 = arith.constant 0 : i32
    %c0_i32_2 = arith.constant 0 : i32
    return %c0_i32, %c0_i32_0, %c0_i32_1 : i32, i32, i32
  }
  func.func @transform_6(%arg0: i32) -> (i32, i32, i32, i32) {
    %c0_i32 = arith.constant 0 : i32
    %c0_i32_0 = arith.constant 0 : i32
    %c0_i32_1 = arith.constant 0 : i32
    %c0_i32_2 = arith.constant 0 : i32
    %c0_i32_3 = arith.constant 0 : i32
    return %c0_i32, %c0_i32_0, %c0_i32_1, %c0_i32_2 : i32, i32, i32, i32
  }
  func.func @transform_7(%arg0: i32) -> (i32, i32, i32) {
    %c0_i32 = arith.constant 0 : i32
    %c0_i32_0 = arith.constant 0 : i32
    %c0_i32_1 = arith.constant 0 : i32
    %c0_i32_2 = arith.constant 0 : i32
    return %c0_i32, %c0_i32_0, %c0_i32_1 : i32, i32, i32
  }
  func.func @transform_8(%arg0: i32) -> (i32, i32, i32) {
    %c0_i32 = arith.constant 0 : i32
    %c0_i32_0 = arith.constant 0 : i32
    %c0_i32_1 = arith.constant 0 : i32
    %c0_i32_2 = arith.constant 0 : i32
    return %c0_i32, %c0_i32_0, %c0_i32_1 : i32, i32, i32
  }
  func.func @transform_9(%arg0: i32) -> (i32, i32, i32, i32) {
    %c0_i32 = arith.constant 0 : i32
    %c0_i32_0 = arith.constant 0 : i32
    %c0_i32_1 = arith.constant 0 : i32
    %c0_i32_2 = arith.constant 0 : i32
    %c0_i32_3 = arith.constant 0 : i32
    return %c0_i32, %c0_i32_0, %c0_i32_1, %c0_i32_2 : i32, i32, i32, i32
  }
  func.func @transform_10(%arg0: i32) -> (i32, i32, i32) {
    %c0_i32 = arith.constant 0 : i32
    %c0_i32_0 = arith.constant 0 : i32
    %c0_i32_1 = arith.constant 0 : i32
    %c0_i32_2 = arith.constant 0 : i32
    return %c0_i32, %c0_i32_0, %c0_i32_1 : i32, i32, i32
  }
  func.func @transform_11(%arg0: i32) -> (i32, i32) {
    %c0_i32 = arith.constant 0 : i32
    %c0_i32_0 = arith.constant 0 : i32
    return %arg0, %c0_i32 : i32, i32
  }
}

</mosaic_0001>

<llo_original>
// kernel: pixelcnn_layer_up.1
$region0: #{pixelcnn_layer_up.1}
  #allocation0 [shape = 'u32[]', space=smem, size = 0x4, offset = 0x4, fixed_abs, tag = 'smem constant byte address 0x4 - core index']
  #allocation1 [shape = 'u32[144,128]{1,0:T(1,128)}', space=vmem, size = 0x12000, scoped, tag = 'internal scratch']
  %s0 = inlined_call_operand.vmem [shape: f32[128,32], index: 0, kind: input, shape index: {}]
  %s1 = inlined_call_operand.hbm [shape: f32[128,32], index: 1, kind: input, shape index: {}]
  %s2 = inlined_call_operand.vmem [shape: bf16[2,6,64,32], index: 2, kind: input, shape index: {}]
  %s3 = inlined_call_operand.vmem [shape: f32[2,1,32], index: 3, kind: input, shape index: {}]
  %s4 = inlined_call_operand.vmem [shape: bf16[2,6,64,64], index: 4, kind: input, shape index: {}]
  %s5 = inlined_call_operand.vmem [shape: f32[2,1,64], index: 5, kind: input, shape index: {}]
  %s6 = inlined_call_operand.vmem [shape: bf16[2,4,64,32], index: 6, kind: input, shape index: {}]
  %s7 = inlined_call_operand.vmem [shape: bf16[2,64,32], index: 7, kind: input, shape index: {}]
  %s8 = inlined_call_operand.vmem [shape: f32[2,1,32], index: 8, kind: input, shape index: {}]
  %s9 = inlined_call_operand.vmem [shape: bf16[2,4,64,64], index: 9, kind: input, shape index: {}]
  %s10 = inlined_call_operand.vmem [shape: f32[2,1,64], index: 10, kind: input, shape index: {}]
  %s11 = inlined_call_operand.vmem [shape: f32[128,128], index: 11, kind: output, shape index: {}]
  %s12 = sld [smem:[#allocation0]]
  $region81: #{pixelcnn_layer_up.1} parent=0
    _
  %s14 = ssub.s32 1, %s12
  %s15 = scalar_select 0, %s14, %s12
  $region1: #{pixelcnn_layer_up.1} parent=0
    #allocation2 [shape = 'u8[65536]{0}', space=vmem, size = 0x10000, scoped, tag = 'input window, operand 1']
    #allocation3 [shape = 's32[2]{0}', space=sflag, size = 0x8, scoped, tag = 'scoped memory for pixelcnn_layer_up.1']
    %16 = vsyncpa [#allocation3], 0
    %s17 = scalar_lea.sflag [#allocation3], 1
    %18 = vsyncpa %s17, 0
    loop: start=0, step=1, limit=4
    $region2: #{pixelcnn_layer_up.1} parent=1 // loop_pre_header
      _
    $region3: #{pixelcnn_layer_up.1} parent=1 // loop_header
      %s20 = sphi 0, %s24
      %p21 = scmp.ge.s32.totalorder %s20, 4
      %s30 = sphi 0, %s32
      %s33 = sphi 0, %s30
      %s34 = sphi 0, %s33
      %s50 = sphi 0, %s34
      %s56 = sphi 0, %s58
      %s59 = sphi 0, %s56
      %s60 = sphi 0, %s59
      %s76 = sphi 0, %s60
      %s80 = sphi 0, %s80
      %s82 = sphi 0, %s80
      %s83 = sphi 0, %s82
      %s97 = sphi 0, %s83
      %s101 = sphi 0, %s101
      %s103 = sphi 0, %s101
      %s104 = sphi 0, %s103
      %s118 = sphi 0, %s104
      %s122 = sphi 0, %s122
      %s124 = sphi 0, %s122
      %s125 = sphi 0, %s124
      %s139 = sphi 0, %s125
      %s143 = sphi 0, %s143
      %s145 = sphi 0, %s143
      %s146 = sphi 0, %s145
      %s160 = sphi 0, %s146
      %s164 = sphi 0, %s164
      %s166 = sphi 0, %s164
      %s167 = sphi 0, %s166
      %s181 = sphi 0, %s167
      %s185 = sphi 0, %s185
      %s187 = sphi 0, %s185
      %s188 = sphi 0, %s187
      %s202 = sphi 0, %s188
      %s206 = sphi 0, %s206
      %s208 = sphi 0, %s206
      %s209 = sphi 0, %s208
      %s223 = sphi 0, %s209
      %s227 = sphi 0, %s227
      %s229 = sphi 0, %s227
      %s230 = sphi 0, %s229
      %s244 = sphi 0, %s230
      %s248 = sphi 0, %s248
      %s250 = sphi 0, %s248
      %s251 = sphi 0, %s250
      %s265 = sphi 0, %s251
      %s271 = sphi 0, %s273
      %s274 = sphi 0, %s271
      %s275 = sphi 0, %s274
      %s291 = sphi 0, %s275
    $region4: #{pixelcnn_layer_up.1} parent=1 // loop_header_branch
      %23 = sbr.rel (%p21) target = $region8
    $region5: #{pixelcnn_layer_up.1} parent=1 // loop_body
      %s25 = ssub.s32 %s20, 1
      %s26 = ssub.s32 %s20, 2
      %s27 = sadd.s32 %s20, 1
      %s28 = ssub.s32 %s20, %s27
      %p29 = scmp.eq.s32.totalorder %s28, 0
      %s31 = sadd.s32 %s30, 1
      %s32 = scalar_select %p29, %s30, %s31
      %p35 = pneg %p29
      %p36 = scmp.eq.s32.totalorder %s20, 1
      %p37 = por %p35, %p36
      %p38 = scmp.ne.s32.totalorder %s30, %s33
      %p39 = scmp.eq.s32.totalorder %s20, 0
      %p40 = por %p38, %p39
      %p41 = scmp.ne.s32.totalorder %s30, %s33
      %p42 = scmp.eq.s32.totalorder %s25, 1
      %p43 = por %p41, %p42
      %p44 = scmp.ne.s32.totalorder %s33, %s34
      %p45 = scmp.eq.s32.totalorder %s25, 0
      %p46 = por %p44, %p45
      %p47 = scmp.ne.s32.totalorder %s33, %s34
      %p48 = scmp.eq.s32.totalorder %s26, 1
      %p49 = por %p47, %p48
      %p51 = scmp.ne.s32.totalorder %s34, %s50
      %p52 = scmp.eq.s32.totalorder %s26, 0
      %p53 = por %p51, %p52
      %s54 = ssub.s32 %s20, %s27
      %p55 = scmp.eq.s32.totalorder %s54, 0
      %s57 = sadd.s32 %s56, 1
      %s58 = scalar_select %p55, %s56, %s57
      %p61 = pneg %p55
      %p62 = scmp.eq.s32.totalorder %s20, 1
      %p63 = por %p61, %p62
      %p64 = scmp.ne.s32.totalorder %s56, %s59
      %p65 = scmp.eq.s32.totalorder %s20, 0
      %p66 = por %p64, %p65
      %p67 = scmp.ne.s32.totalorder %s56, %s59
      %p68 = scmp.eq.s32.totalorder %s25, 1
      %p69 = por %p67, %p68
      %p70 = scmp.ne.s32.totalorder %s59, %s60
      %p71 = scmp.eq.s32.totalorder %s25, 0
      %p72 = por %p70, %p71
      %p73 = scmp.ne.s32.totalorder %s59, %s60
      %p74 = scmp.eq.s32.totalorder %s26, 1
      %p75 = por %p73, %p74
      %p77 = scmp.ne.s32.totalorder %s60, %s76
      %p78 = scmp.eq.s32.totalorder %s26, 0
      %p79 = por %p77, %p78
      %s81 = sadd.s32 %s80, 1
      %p84 = scmp.eq.s32.totalorder %s20, 1
      %p85 = scmp.ne.s32.totalorder %s80, %s82
      %p86 = scmp.eq.s32.totalorder %s20, 0
      %p87 = por %p85, %p86
      %p88 = scmp.ne.s32.totalorder %s80, %s82
      %p89 = scmp.eq.s32.totalorder %s25, 1
      %p90 = por %p88, %p89
      %p91 = scmp.ne.s32.totalorder %s82, %s83
      %p92 = scmp.eq.s32.totalorder %s25, 0
      %p93 = por %p91, %p92
      %p94 = scmp.ne.s32.totalorder %s82, %s83
      %p95 = scmp.eq.s32.totalorder %s26, 1
      %p96 = por %p94, %p95
      %p98 = scmp.ne.s32.totalorder %s83, %s97
      %p99 = scmp.eq.s32.totalorder %s26, 0
      %p100 = por %p98, %p99
      %s102 = sadd.s32 %s101, 1
      %p105 = scmp.eq.s32.totalorder %s20, 1
      %p106 = scmp.ne.s32.totalorder %s101, %s103
      %p107 = scmp.eq.s32.totalorder %s20, 0
      %p108 = por %p106, %p107
      %p109 = scmp.ne.s32.totalorder %s101, %s103
      %p110 = scmp.eq.s32.totalorder %s25, 1
      %p111 = por %p109, %p110
      %p112 = scmp.ne.s32.totalorder %s103, %s104
      %p113 = scmp.eq.s32.totalorder %s25, 0
      %p114 = por %p112, %p113
      %p115 = scmp.ne.s32.totalorder %s103, %s104
      %p116 = scmp.eq.s32.totalorder %s26, 1
      %p117 = por %p115, %p116
      %p119 = scmp.ne.s32.totalorder %s104, %s118
      %p120 = scmp.eq.s32.totalorder %s26, 0
      %p121 = por %p119, %p120
      %s123 = sadd.s32 %s122, 1
      %p126 = scmp.eq.s32.totalorder %s20, 1
      %p127 = scmp.ne.s32.totalorder %s122, %s124
      %p128 = scmp.eq.s32.totalorder %s20, 0
      %p129 = por %p127, %p128
      %p130 = scmp.ne.s32.totalorder %s122, %s124
      %p131 = scmp.eq.s32.totalorder %s25, 1
      %p132 = por %p130, %p131
      %p133 = scmp.ne.s32.totalorder %s124, %s125
      %p134 = scmp.eq.s32.totalorder %s25, 0
      %p135 = por %p133, %p134
      %p136 = scmp.ne.s32.totalorder %s124, %s125
      %p137 = scmp.eq.s32.totalorder %s26, 1
      %p138 = por %p136, %p137
      %p140 = scmp.ne.s32.totalorder %s125, %s139
      %p141 = scmp.eq.s32.totalorder %s26, 0
      %p142 = por %p140, %p141
      %s144 = sadd.s32 %s143, 1
      %p147 = scmp.eq.s32.totalorder %s20, 1
      %p148 = scmp.ne.s32.totalorder %s143, %s145
      %p149 = scmp.eq.s32.totalorder %s20, 0
      %p150 = por %p148, %p149
      %p151 = scmp.ne.s32.totalorder %s143, %s145
      %p152 = scmp.eq.s32.totalorder %s25, 1
      %p153 = por %p151, %p152
      %p154 = scmp.ne.s32.totalorder %s145, %s146
      %p155 = scmp.eq.s32.totalorder %s25, 0
      %p156 = por %p154, %p155
      %p157 = scmp.ne.s32.totalorder %s145, %s146
      %p158 = scmp.eq.s32.totalorder %s26, 1
      %p159 = por %p157, %p158
      %p161 = scmp.ne.s32.totalorder %s146, %s160
      %p162 = scmp.eq.s32.totalorder %s26, 0
      %p163 = por %p161, %p162
      %s165 = sadd.s32 %s164, 1
      %p168 = scmp.eq.s32.totalorder %s20, 1
      %p169 = scmp.ne.s32.totalorder %s164, %s166
      %p170 = scmp.eq.s32.totalorder %s20, 0
      %p171 = por %p169, %p170
      %p172 = scmp.ne.s32.totalorder %s164, %s166
      %p173 = scmp.eq.s32.totalorder %s25, 1
      %p174 = por %p172, %p173
      %p175 = scmp.ne.s32.totalorder %s166, %s167
      %p176 = scmp.eq.s32.totalorder %s25, 0
      %p177 = por %p175, %p176
      %p178 = scmp.ne.s32.totalorder %s166, %s167
      %p179 = scmp.eq.s32.totalorder %s26, 1
      %p180 = por %p178, %p179
      %p182 = scmp.ne.s32.totalorder %s167, %s181
      %p183 = scmp.eq.s32.totalorder %s26, 0
      %p184 = por %p182, %p183
      %s186 = sadd.s32 %s185, 1
      %p189 = scmp.eq.s32.totalorder %s20, 1
      %p190 = scmp.ne.s32.totalorder %s185, %s187
      %p191 = scmp.eq.s32.totalorder %s20, 0
      %p192 = por %p190, %p191
      %p193 = scmp.ne.s32.totalorder %s185, %s187
      %p194 = scmp.eq.s32.totalorder %s25, 1
      %p195 = por %p193, %p194
      %p196 = scmp.ne.s32.totalorder %s187, %s188
      %p197 = scmp.eq.s32.totalorder %s25, 0
      %p198 = por %p196, %p197
      %p199 = scmp.ne.s32.totalorder %s187, %s188
      %p200 = scmp.eq.s32.totalorder %s26, 1
      %p201 = por %p199, %p200
      %p203 = scmp.ne.s32.totalorder %s188, %s202
      %p204 = scmp.eq.s32.totalorder %s26, 0
      %p205 = por %p203, %p204
      %s207 = sadd.s32 %s206, 1
      %p210 = scmp.eq.s32.totalorder %s20, 1
      %p211 = scmp.ne.s32.totalorder %s206, %s208
      %p212 = scmp.eq.s32.totalorder %s20, 0
      %p213 = por %p211, %p212
      %p214 = scmp.ne.s32.totalorder %s206, %s208
      %p215 = scmp.eq.s32.totalorder %s25, 1
      %p216 = por %p214, %p215
      %p217 = scmp.ne.s32.totalorder %s208, %s209
      %p218 = scmp.eq.s32.totalorder %s25, 0
      %p219 = por %p217, %p218
      %p220 = scmp.ne.s32.totalorder %s208, %s209
      %p221 = scmp.eq.s32.totalorder %s26, 1
      %p222 = por %p220, %p221
      %p224 = scmp.ne.s32.totalorder %s209, %s223
      %p225 = scmp.eq.s32.totalorder %s26, 0
      %p226 = por %p224, %p225
      %s228 = sadd.s32 %s227, 1
      %p231 = scmp.eq.s32.totalorder %s20, 1
      %p232 = scmp.ne.s32.totalorder %s227, %s229
      %p233 = scmp.eq.s32.totalorder %s20, 0
      %p234 = por %p232, %p233
      %p235 = scmp.ne.s32.totalorder %s227, %s229
      %p236 = scmp.eq.s32.totalorder %s25, 1
      %p237 = por %p235, %p236
      %p238 = scmp.ne.s32.totalorder %s229, %s230
      %p239 = scmp.eq.s32.totalorder %s25, 0
      %p240 = por %p238, %p239
      %p241 = scmp.ne.s32.totalorder %s229, %s230
      %p242 = scmp.eq.s32.totalorder %s26, 1
      %p243 = por %p241, %p242
      %p245 = scmp.ne.s32.totalorder %s230, %s244
      %p246 = scmp.eq.s32.totalorder %s26, 0
      %p247 = por %p245, %p246
      %s249 = sadd.s32 %s248, 1
      %p252 = scmp.eq.s32.totalorder %s20, 1
      %p253 = scmp.ne.s32.totalorder %s248, %s250
      %p254 = scmp.eq.s32.totalorder %s20, 0
      %p255 = por %p253, %p254
      %p256 = scmp.ne.s32.totalorder %s248, %s250
      %p257 = scmp.eq.s32.totalorder %s25, 1
      %p258 = por %p256, %p257
      %p259 = scmp.ne.s32.totalorder %s250, %s251
      %p260 = scmp.eq.s32.totalorder %s25, 0
      %p261 = por %p259, %p260
      %p262 = scmp.ne.s32.totalorder %s250, %s251
      %p263 = scmp.eq.s32.totalorder %s26, 1
      %p264 = por %p262, %p263
      %p266 = scmp.ne.s32.totalorder %s251, %s265
      %p267 = scmp.eq.s32.totalorder %s26, 0
      %p268 = por %p266, %p267
      %s269 = ssub.s32 %s20, %s27
      %p270 = scmp.eq.s32.totalorder %s269, 0
      %s272 = sadd.s32 %s271, 1
      %s273 = scalar_select %p270, %s271, %s272
      %p276 = pneg %p270
      %p277 = scmp.eq.s32.totalorder %s20, 1
      %p278 = por %p276, %p277
      %p279 = scmp.ne.s32.totalorder %s271, %s274
      %p280 = scmp.eq.s32.totalorder %s20, 0
      %p281 = por %p279, %p280
      %p282 = scmp.ne.s32.totalorder %s271, %s274
      %p283 = scmp.eq.s32.totalorder %s25, 1
      %p284 = por %p282, %p283
      %p285 = scmp.ne.s32.totalorder %s274, %s275
      %p286 = scmp.eq.s32.totalorder %s25, 0
      %p287 = por %p285, %p286
      %p288 = scmp.ne.s32.totalorder %s274, %s275
      %p289 = scmp.eq.s32.totalorder %s26, 1
      %p290 = por %p288, %p289
      %p292 = scmp.ne.s32.totalorder %s275, %s291
      %p293 = scmp.eq.s32.totalorder %s26, 0
      %p294 = por %p292, %p293
      %p295 = scmp.le.s32.totalorder 1, %s20
      %p296 = scmp.lt.s32.totalorder %s20, 3
      %p297 = pnand %p295, %p296
      %p298 = pneg %p297
      // Predicated region
      $region9: #{pixelcnn_layer_up.1} parent=5 // pred_check
        _
      $region10: #{pixelcnn_layer_up.1} parent=5 // pred_check_branch
        %300 = sbr.rel (%p297) target = $region12
      $region11: #{pixelcnn_layer_up.1} parent=5 // pred_region
        %s301 = ssub.s32 %s20, 1
        // Predicated region
        $region13: #{pixelcnn_layer_up.1} parent=11 // pred_check
          %p302 = pneg %p93
        $region14: #{pixelcnn_layer_up.1} parent=11 // pred_check_branch
          %304 = sbr.rel (%p302) target = $region16
        $region15: #{pixelcnn_layer_up.1} parent=11 // pred_region
          _
        $region16: #{pixelcnn_layer_up.1} parent=11 // pred_fallthru
          _
        // Predicated region
        $region17: #{pixelcnn_layer_up.1} parent=11 // pred_check
          %p305 = pneg %p114
        $region18: #{pixelcnn_layer_up.1} parent=11 // pred_check_branch
          %307 = sbr.rel (%p305) target = $region20
        $region19: #{pixelcnn_layer_up.1} parent=11 // pred_region
          _
        $region20: #{pixelcnn_layer_up.1} parent=11 // pred_fallthru
          _
        // Predicated region
        $region21: #{pixelcnn_layer_up.1} parent=11 // pred_check
          %p308 = pneg %p135
        $region22: #{pixelcnn_layer_up.1} parent=11 // pred_check_branch
          %310 = sbr.rel (%p308) target = $region24
        $region23: #{pixelcnn_layer_up.1} parent=11 // pred_region
          _
        $region24: #{pixelcnn_layer_up.1} parent=11 // pred_fallthru
          _
        // Predicated region
        $region25: #{pixelcnn_layer_up.1} parent=11 // pred_check
          %p311 = pneg %p156
        $region26: #{pixelcnn_layer_up.1} parent=11 // pred_check_branch
          %313 = sbr.rel (%p311) target = $region28
        $region27: #{pixelcnn_layer_up.1} parent=11 // pred_region
          _
        $region28: #{pixelcnn_layer_up.1} parent=11 // pred_fallthru
          _
        // Predicated region
        $region29: #{pixelcnn_layer_up.1} parent=11 // pred_check
          %p314 = pneg %p177
        $region30: #{pixelcnn_layer_up.1} parent=11 // pred_check_branch
          %316 = sbr.rel (%p314) target = $region32
        $region31: #{pixelcnn_layer_up.1} parent=11 // pred_region
          _
        $region32: #{pixelcnn_layer_up.1} parent=11 // pred_fallthru
          _
        // Predicated region
        $region33: #{pixelcnn_layer_up.1} parent=11 // pred_check
          %p317 = pneg %p198
        $region34: #{pixelcnn_layer_up.1} parent=11 // pred_check_branch
          %319 = sbr.rel (%p317) target = $region36
        $region35: #{pixelcnn_layer_up.1} parent=11 // pred_region
          _
        $region36: #{pixelcnn_layer_up.1} parent=11 // pred_fallthru
          _
        // Predicated region
        $region37: #{pixelcnn_layer_up.1} parent=11 // pred_check
          %p320 = pneg %p219
        $region38: #{pixelcnn_layer_up.1} parent=11 // pred_check_branch
          %322 = sbr.rel (%p320) target = $region40
        $region39: #{pixelcnn_layer_up.1} parent=11 // pred_region
          _
        $region40: #{pixelcnn_layer_up.1} parent=11 // pred_fallthru
          _
        // Predicated region
        $region41: #{pixelcnn_layer_up.1} parent=11 // pred_check
          %p323 = pneg %p240
        $region42: #{pixelcnn_layer_up.1} parent=11 // pred_check_branch
          %325 = sbr.rel (%p323) target = $region44
        $region43: #{pixelcnn_layer_up.1} parent=11 // pred_region
          _
        $region44: #{pixelcnn_layer_up.1} parent=11 // pred_fallthru
          _
        // Predicated region
        $region45: #{pixelcnn_layer_up.1} parent=11 // pred_check
          %p326 = pneg %p261
        $region46: #{pixelcnn_layer_up.1} parent=11 // pred_check_branch
          %328 = sbr.rel (%p326) target = $region48
        $region47: #{pixelcnn_layer_up.1} parent=11 // pred_region
          _
        $region48: #{pixelcnn_layer_up.1} parent=11 // pred_fallthru
          _
      $region12: #{pixelcnn_layer_up.1} parent=5 // pred_fallthru
        _
      %p329 = scmp.lt.s32.totalorder %s20, 2
      // Predicated region
      $region49: #{pixelcnn_layer_up.1} parent=5 // pred_check
        %p330 = pneg %p329
      $region50: #{pixelcnn_layer_up.1} parent=5 // pred_check_branch
        %332 = sbr.rel (%p330) target = $region52
      $region51: #{pixelcnn_layer_up.1} parent=5 // pred_region
        // Predicated region
        $region53: #{pixelcnn_layer_up.1} parent=51 // pred_check
          %p333 = pneg %p40
        $region54: #{pixelcnn_layer_up.1} parent=51 // pred_check_branch
          %335 = sbr.rel (%p333) target = $region56
        $region55: #{pixelcnn_layer_up.1} parent=51 // pred_region
          %s336 = smul.u32 8, %s20
          %p337 = scmp.lt.s32.totalorder %s336, 15
          %s338 = scalar_select %p337, %s336, 15
          %s339 = smul.addr %s338, 8
          %s340 = scalar_lea.vmem %s0, %s339
          %s341 = smul.u32 8, %s20
        $region56: #{pixelcnn_layer_up.1} parent=51 // pred_fallthru
          _
        // Predicated region
        $region57: #{pixelcnn_layer_up.1} parent=51 // pred_check
          %p342 = pneg %p66
        $region58: #{pixelcnn_layer_up.1} parent=51 // pred_check_branch
          %344 = sbr.rel (%p342) target = $region60
        $region59: #{pixelcnn_layer_up.1} parent=51 // pred_region
          %s345 = sand.u32 %s56, 1
          %s346 = scalar_lea.sflag [#allocation3], %s345
          %s347 = sand.u32 %s56, 1
          %s348 = smul.addr %s347, 64
          %s349 = scalar_lea.vmem [#allocation2], %s348
          %s350 = smul.u32 8, %s20
          %s352 = ssub.s32 1024, 1024
          %353 = vsyncadd %s346, %s352
          %s354 = smul.addr %s350, 128
          %s355 = scalar_lea.hbm %s1, %s354
          %s356 = sshll.u32 %s349, 4
          %s357 = int_to_ptr.vmem [resolvable:$true] %s356
          %362 = dma.hbm_to_vmem [thread:$0]  %s355, 1024, %s357, %s346, 128, 128, 8
        $region60: #{pixelcnn_layer_up.1} parent=51 // pred_fallthru
          _
      $region52: #{pixelcnn_layer_up.1} parent=5 // pred_fallthru
        _
      %p363 = scmp.le.s32.totalorder 1, %s20
      %p364 = scmp.lt.s32.totalorder %s20, 3
      %p365 = pnand %p363, %p364
      %p366 = pneg %p365
      // Predicated region
      $region61: #{pixelcnn_layer_up.1} parent=5 // pred_check
        _
      $region62: #{pixelcnn_layer_up.1} parent=5 // pred_check_branch
        %368 = sbr.rel (%p365) target = $region64
      $region63: #{pixelcnn_layer_up.1} parent=5 // pred_region
        %s369 = ssub.s32 %s20, 1
        %s370 = sand.u32 %s59, 1
        %s371 = scalar_lea.sflag [#allocation3], %s370
        %s372 = sand.u32 %s59, 1
        %s373 = smul.addr %s372, 64
        %s374 = scalar_lea.vmem [#allocation2], %s373
        // Predicated region
        $region65: #{pixelcnn_layer_up.1} parent=63 // pred_check
          %p375 = pneg %p72
        $region66: #{pixelcnn_layer_up.1} parent=63 // pred_check_branch
          %377 = sbr.rel (%p375) target = $region68
        $region67: #{pixelcnn_layer_up.1} parent=63 // pred_region
          %378 = dma.done %s371, 1024
        $region68: #{pixelcnn_layer_up.1} parent=63 // pred_fallthru
          _
        %s379 = smul.u32 8, %s25
        %p380 = scmp.lt.s32.totalorder %s379, 15
        %s381 = scalar_select %p380, %s379, 15
        %s382 = smul.addr %s381, 8
        %s383 = scalar_lea.vmem %s0, %s382
        %p384 = pneg %p46
        %p385 = pneg %p43
        %s386 = sand.u32 %s59, 1
        %s387 = scalar_lea.sflag [#allocation3], %s386
        %s388 = sand.u32 %s59, 1
        %s389 = smul.addr %s388, 64
        %s390 = scalar_lea.vmem [#allocation2], %s389
        %p391 = pneg %p72
        %p392 = pneg %p69
        %p393 = pneg %p93
        %p394 = pneg %p90
        %p395 = pneg %p114
        %p396 = pneg %p111
        %p397 = pneg %p135
        %p398 = pneg %p132
        %p399 = pneg %p156
        %p400 = pneg %p153
        %p401 = pneg %p177
        %p402 = pneg %p174
        %p403 = pneg %p198
        %p404 = pneg %p195
        %p405 = pneg %p219
        %p406 = pneg %p216
        %p407 = pneg %p240
        %p408 = pneg %p237
        %p409 = pneg %p261
        %p410 = pneg %p258
        %p411 = pneg %p287
        %p412 = pneg %p284
        %s413 = smul.u32 8, %s25
        %p414 = scmp.lt.s32.totalorder %s413, 15
        %s415 = scalar_select %p414, %s413, 15
        %s416 = smul.addr %s415, 8
        %s417 = scalar_lea.vmem %s11, %s416
        %s418 = smul.u32 8, %s25
        %p419 = scmp.lt.s32.totalorder %s418, 15
        %s420 = scalar_select %p419, %s418, 15
        %s421 = smul.addr %s420, 8
        %s422 = scalar_lea.vmem %s0, %s421
        %s423 = smul.u32 8, %s25
        %s424 = smul.u32 8, %s25
        %s425 = smul.u32 8, %s25
        %p426 = scmp.lt.s32.totalorder %s425, 15
        %s427 = scalar_select %p426, %s425, 15
        %s428 = smul.addr %s427, 8
        %s429 = scalar_lea.vmem %s11, %s428
        %s430 = smul.u32 8, %s25
        %v432 = vlaneseq
        %v433 = vshrl.u32 %v432, 7
        %v434 = vadd.s32 %v433, 8
        %v435 = vadd.s32 %v433, 16
        %v436 = vadd.s32 %v433, 24
        %v437 = vadd.s32 %v433, 32
        %v438 = vadd.s32 %v433, 40
        %v439 = vadd.s32 %v433, 48
        %v440 = vadd.s32 %v433, 56
        %v441 = vand.u32 %v433, 7
        %v442 = vand.u32 %v434, 7
        %v443 = vand.u32 %v435, 7
        %v444 = vand.u32 %v436, 7
        %v445 = vand.u32 %v437, 7
        %v446 = vand.u32 %v438, 7
        %v447 = vand.u32 %v439, 7
        %v448 = vand.u32 %v440, 7
        %v449 = vshra.s32 %v433, 3
        %v450 = vshra.s32 %v434, 3
        %v451 = vshra.s32 %v435, 3
        %v452 = vshra.s32 %v436, 3
        %v453 = vshra.s32 %v437, 3
        %v454 = vshra.s32 %v438, 3
        %v455 = vshra.s32 %v439, 3
        %v456 = vshra.s32 %v440, 3
        %v457 = vand.u32 %v449, 7
        %v458 = vand.u32 %v450, 7
        %v459 = vand.u32 %v451, 7
        %v460 = vand.u32 %v452, 7
        %v461 = vand.u32 %v453, 7
        %v462 = vand.u32 %v454, 7
        %v463 = vand.u32 %v455, 7
        %v464 = vand.u32 %v456, 7
        %v465 = vadd.s32 %v457, 4294967295
        %v466 = vadd.s32 %v458, 4294967295
        %v467 = vadd.s32 %v459, 4294967295
        %v468 = vadd.s32 %v460, 4294967295
        %v469 = vadd.s32 %v461, 4294967295
        %v470 = vadd.s32 %v462, 4294967295
        %v471 = vadd.s32 %v463, 4294967295
        %v472 = vadd.s32 %v464, 4294967295
        %vm473 = vcmp.ge.s32.totalorder %v465, 0
        %vm474 = vcmp.ge.s32.totalorder %v466, 0
        %vm475 = vcmp.ge.s32.totalorder %v467, 0
        %vm476 = vcmp.ge.s32.totalorder %v468, 0
        %vm477 = vcmp.ge.s32.totalorder %v469, 0
        %vm478 = vcmp.ge.s32.totalorder %v470, 0
        %vm479 = vcmp.ge.s32.totalorder %v471, 0
        %vm480 = vcmp.ge.s32.totalorder %v472, 0
        %vm481 = vcmp.lt.s32.totalorder %v465, 8
        %vm482 = vcmp.lt.s32.totalorder %v466, 8
        %vm483 = vcmp.lt.s32.totalorder %v467, 8
        %vm484 = vcmp.lt.s32.totalorder %v468, 8
        %vm485 = vcmp.lt.s32.totalorder %v469, 8
        %vm486 = vcmp.lt.s32.totalorder %v470, 8
        %vm487 = vcmp.lt.s32.totalorder %v471, 8
        %vm488 = vcmp.lt.s32.totalorder %v472, 8
        %vm489 = vmand %vm473, %vm481
        %vm490 = vmand %vm474, %vm482
        %vm491 = vmand %vm475, %vm483
        %vm492 = vmand %vm476, %vm484
        %vm493 = vmand %vm477, %vm485
        %vm494 = vmand %vm478, %vm486
        %vm495 = vmand %vm479, %vm487
        %vm496 = vmand %vm480, %vm488
        %v497 = vadd.s32 %v441, 4294967295
        %v498 = vadd.s32 %v442, 4294967295
        %v499 = vadd.s32 %v443, 4294967295
        %v500 = vadd.s32 %v444, 4294967295
        %v501 = vadd.s32 %v445, 4294967295
        %v502 = vadd.s32 %v446, 4294967295
        %v503 = vadd.s32 %v447, 4294967295
        %v504 = vadd.s32 %v448, 4294967295
        %vm505 = vcmp.ge.s32.totalorder %v497, 0
        %vm506 = vcmp.ge.s32.totalorder %v498, 0
        %vm507 = vcmp.ge.s32.totalorder %v499, 0
        %vm508 = vcmp.ge.s32.totalorder %v500, 0
        %vm509 = vcmp.ge.s32.totalorder %v501, 0
        %vm510 = vcmp.ge.s32.totalorder %v502, 0
        %vm511 = vcmp.ge.s32.totalorder %v503, 0
        %vm512 = vcmp.ge.s32.totalorder %v504, 0
        %vm513 = vmand %vm489, %vm505
        %vm514 = vmand %vm490, %vm506
        %vm515 = vmand %vm491, %vm507
        %vm516 = vmand %vm492, %vm508
        %vm517 = vmand %vm493, %vm509
        %vm518 = vmand %vm494, %vm510
        %vm519 = vmand %vm495, %vm511
        %vm520 = vmand %vm496, %vm512
        %vm521 = vcmp.lt.s32.totalorder %v497, 8
        %vm522 = vcmp.lt.s32.totalorder %v498, 8
        %vm523 = vcmp.lt.s32.totalorder %v499, 8
        %vm524 = vcmp.lt.s32.totalorder %v500, 8
        %vm525 = vcmp.lt.s32.totalorder %v501, 8
        %vm526 = vcmp.lt.s32.totalorder %v502, 8
        %vm527 = vcmp.lt.s32.totalorder %v503, 8
        %vm528 = vcmp.lt.s32.totalorder %v504, 8
        %vm529 = vmand %vm513, %vm521
        %vm530 = vmand %vm514, %vm522
        %vm531 = vmand %vm515, %vm523
        %vm532 = vmand %vm516, %vm524
        %vm533 = vmand %vm517, %vm525
        %vm534 = vmand %vm518, %vm526
        %vm535 = vmand %vm519, %vm527
        %vm536 = vmand %vm520, %vm528
        %v537 = vsel %vm529, 1, 0
        %v538 = vsel %vm530, 1, 0
        %v539 = vsel %vm531, 1, 0
        %v540 = vsel %vm532, 1, 0
        %v541 = vsel %vm533, 1, 0
        %v542 = vsel %vm534, 1, 0
        %v543 = vsel %vm535, 1, 0
        %v544 = vsel %vm536, 1, 0
        %v545 = vcvt.s32.f32 %v537
        %v546 = vcvt.s32.f32 %v538
        %v547 = vcvt.s32.f32 %v539
        %v548 = vcvt.s32.f32 %v540
        %v549 = vcvt.s32.f32 %v541
        %v550 = vcvt.s32.f32 %v542
        %v551 = vcvt.s32.f32 %v543
        %v552 = vcvt.s32.f32 %v544
        %vm553 = vcmp.ge.s32.totalorder %v441, 0
        %vm554 = vcmp.ge.s32.totalorder %v442, 0
        %vm555 = vcmp.ge.s32.totalorder %v443, 0
        %vm556 = vcmp.ge.s32.totalorder %v444, 0
        %vm557 = vcmp.ge.s32.totalorder %v445, 0
        %vm558 = vcmp.ge.s32.totalorder %v446, 0
        %vm559 = vcmp.ge.s32.totalorder %v447, 0
        %vm560 = vcmp.ge.s32.totalorder %v448, 0
        %vm561 = vmand %vm489, %vm553
        %vm562 = vmand %vm490, %vm554
        %vm563 = vmand %vm491, %vm555
        %vm564 = vmand %vm492, %vm556
        %vm565 = vmand %vm493, %vm557
        %vm566 = vmand %vm494, %vm558
        %vm567 = vmand %vm495, %vm559
        %vm568 = vmand %vm496, %vm560
        %vm569 = vcmp.lt.s32.totalorder %v441, 8
        %vm570 = vcmp.lt.s32.totalorder %v442, 8
        %vm571 = vcmp.lt.s32.totalorder %v443, 8
        %vm572 = vcmp.lt.s32.totalorder %v444, 8
        %vm573 = vcmp.lt.s32.totalorder %v445, 8
        %vm574 = vcmp.lt.s32.totalorder %v446, 8
        %vm575 = vcmp.lt.s32.totalorder %v447, 8
        %vm576 = vcmp.lt.s32.totalorder %v448, 8
        %vm577 = vmand %vm561, %vm569
        %vm578 = vmand %vm562, %vm570
        %vm579 = vmand %vm563, %vm571
        %vm580 = vmand %vm564, %vm572
        %vm581 = vmand %vm565, %vm573
        %vm582 = vmand %vm566, %vm574
        %vm583 = vmand %vm567, %vm575
        %vm584 = vmand %vm568, %vm576
        %v585 = vsel %vm577, 1, 0
        %v586 = vsel %vm578, 1, 0
        %v587 = vsel %vm579, 1, 0
        %v588 = vsel %vm580, 1, 0
        %v589 = vsel %vm581, 1, 0
        %v590 = vsel %vm582, 1, 0
        %v591 = vsel %vm583, 1, 0
        %v592 = vsel %vm584, 1, 0
        %v593 = vcvt.s32.f32 %v585
        %v594 = vcvt.s32.f32 %v586
        %v595 = vcvt.s32.f32 %v587
        %v596 = vcvt.s32.f32 %v588
        %v597 = vcvt.s32.f32 %v589
        %v598 = vcvt.s32.f32 %v590
        %v599 = vcvt.s32.f32 %v591
        %v600 = vcvt.s32.f32 %v592
        %v601 = vadd.s32 %v441, 1
        %v602 = vadd.s32 %v442, 1
        %v603 = vadd.s32 %v443, 1
        %v604 = vadd.s32 %v444, 1
        %v605 = vadd.s32 %v445, 1
        %v606 = vadd.s32 %v446, 1
        %v607 = vadd.s32 %v447, 1
        %v608 = vadd.s32 %v448, 1
        %vm609 = vcmp.ge.s32.totalorder %v601, 0
        %vm610 = vcmp.ge.s32.totalorder %v602, 0
        %vm611 = vcmp.ge.s32.totalorder %v603, 0
        %vm612 = vcmp.ge.s32.totalorder %v604, 0
        %vm613 = vcmp.ge.s32.totalorder %v605, 0
        %vm614 = vcmp.ge.s32.totalorder %v606, 0
        %vm615 = vcmp.ge.s32.totalorder %v607, 0
        %vm616 = vcmp.ge.s32.totalorder %v608, 0
        %vm617 = vmand %vm489, %vm609
        %vm618 = vmand %vm490, %vm610
        %vm619 = vmand %vm491, %vm611
        %vm620 = vmand %vm492, %vm612
        %vm621 = vmand %vm493, %vm613
        %vm622 = vmand %vm494, %vm614
        %vm623 = vmand %vm495, %vm615
        %vm624 = vmand %vm496, %vm616
        %vm625 = vcmp.lt.s32.totalorder %v601, 8
        %vm626 = vcmp.lt.s32.totalorder %v602, 8
        %vm627 = vcmp.lt.s32.totalorder %v603, 8
        %vm628 = vcmp.lt.s32.totalorder %v604, 8
        %vm629 = vcmp.lt.s32.totalorder %v605, 8
        %vm630 = vcmp.lt.s32.totalorder %v606, 8
        %vm631 = vcmp.lt.s32.totalorder %v607, 8
        %vm632 = vcmp.lt.s32.totalorder %v608, 8
        %vm633 = vmand %vm617, %vm625
        %vm634 = vmand %vm618, %vm626
        %vm635 = vmand %vm619, %vm627
        %vm636 = vmand %vm620, %vm628
        %vm637 = vmand %vm621, %vm629
        %vm638 = vmand %vm622, %vm630
        %vm639 = vmand %vm623, %vm631
        %vm640 = vmand %vm624, %vm632
        %v641 = vsel %vm633, 1, 0
        %v642 = vsel %vm634, 1, 0
        %v643 = vsel %vm635, 1, 0
        %v644 = vsel %vm636, 1, 0
        %v645 = vsel %vm637, 1, 0
        %v646 = vsel %vm638, 1, 0
        %v647 = vsel %vm639, 1, 0
        %v648 = vsel %vm640, 1, 0
        %v649 = vcvt.s32.f32 %v641
        %v650 = vcvt.s32.f32 %v642
        %v651 = vcvt.s32.f32 %v643
        %v652 = vcvt.s32.f32 %v644
        %v653 = vcvt.s32.f32 %v645
        %v654 = vcvt.s32.f32 %v646
        %v655 = vcvt.s32.f32 %v647
        %v656 = vcvt.s32.f32 %v648
        %vm657 = vcmp.ge.s32.totalorder %v457, 0
        %vm658 = vcmp.ge.s32.totalorder %v458, 0
        %vm659 = vcmp.ge.s32.totalorder %v459, 0
        %vm660 = vcmp.ge.s32.totalorder %v460, 0
        %vm661 = vcmp.ge.s32.totalorder %v461, 0
        %vm662 = vcmp.ge.s32.totalorder %v462, 0
        %vm663 = vcmp.ge.s32.totalorder %v463, 0
        %vm664 = vcmp.ge.s32.totalorder %v464, 0
        %vm665 = vcmp.lt.s32.totalorder %v457, 8
        %vm666 = vcmp.lt.s32.totalorder %v458, 8
        %vm667 = vcmp.lt.s32.totalorder %v459, 8
        %vm668 = vcmp.lt.s32.totalorder %v460, 8
        %vm669 = vcmp.lt.s32.totalorder %v461, 8
        %vm670 = vcmp.lt.s32.totalorder %v462, 8
        %vm671 = vcmp.lt.s32.totalorder %v463, 8
        %vm672 = vcmp.lt.s32.totalorder %v464, 8
        %vm673 = vmand %vm657, %vm665
        %vm674 = vmand %vm658, %vm666
        %vm675 = vmand %vm659, %vm667
        %vm676 = vmand %vm660, %vm668
        %vm677 = vmand %vm661, %vm669
        %vm678 = vmand %vm662, %vm670
        %vm679 = vmand %vm663, %vm671
        %vm680 = vmand %vm664, %vm672
        %vm681 = vmand %vm673, %vm505
        %vm682 = vmand %vm674, %vm506
        %vm683 = vmand %vm675, %vm507
        %vm684 = vmand %vm676, %vm508
        %vm685 = vmand %vm677, %vm509
        %vm686 = vmand %vm678, %vm510
        %vm687 = vmand %vm679, %vm511
        %vm688 = vmand %vm680, %vm512
        %vm689 = vmand %vm681, %vm521
        %vm690 = vmand %vm682, %vm522
        %vm691 = vmand %vm683, %vm523
        %vm692 = vmand %vm684, %vm524
        %vm693 = vmand %vm685, %vm525
        %vm694 = vmand %vm686, %vm526
        %vm695 = vmand %vm687, %vm527
        %vm696 = vmand %vm688, %vm528
        %v697 = vsel %vm689, 1, 0
        %v698 = vsel %vm690, 1, 0
        %v699 = vsel %vm691, 1, 0
        %v700 = vsel %vm692, 1, 0
        %v701 = vsel %vm693, 1, 0
        %v702 = vsel %vm694, 1, 0
        %v703 = vsel %vm695, 1, 0
        %v704 = vsel %vm696, 1, 0
        %v705 = vcvt.s32.f32 %v697
        %v706 = vcvt.s32.f32 %v698
        %v707 = vcvt.s32.f32 %v699
        %v708 = vcvt.s32.f32 %v700
        %v709 = vcvt.s32.f32 %v701
        %v710 = vcvt.s32.f32 %v702
        %v711 = vcvt.s32.f32 %v703
        %v712 = vcvt.s32.f32 %v704
        %vm713 = vmand %vm673, %vm609
        %vm714 = vmand %vm674, %vm610
        %vm715 = vmand %vm675, %vm611
        %vm716 = vmand %vm676, %vm612
        %vm717 = vmand %vm677, %vm613
        %vm718 = vmand %vm678, %vm614
        %vm719 = vmand %vm679, %vm615
        %vm720 = vmand %vm680, %vm616
        %vm721 = vmand %vm713, %vm625
        %vm722 = vmand %vm714, %vm626
        %vm723 = vmand %vm715, %vm627
        %vm724 = vmand %vm716, %vm628
        %vm725 = vmand %vm717, %vm629
        %vm726 = vmand %vm718, %vm630
        %vm727 = vmand %vm719, %vm631
        %vm728 = vmand %vm720, %vm632
        %v729 = vsel %vm721, 1, 0
        %v730 = vsel %vm722, 1, 0
        %v731 = vsel %vm723, 1, 0
        %v732 = vsel %vm724, 1, 0
        %v733 = vsel %vm725, 1, 0
        %v734 = vsel %vm726, 1, 0
        %v735 = vsel %vm727, 1, 0
        %v736 = vsel %vm728, 1, 0
        %v737 = vcvt.s32.f32 %v729
        %v738 = vcvt.s32.f32 %v730
        %v739 = vcvt.s32.f32 %v731
        %v740 = vcvt.s32.f32 %v732
        %v741 = vcvt.s32.f32 %v733
        %v742 = vcvt.s32.f32 %v734
        %v743 = vcvt.s32.f32 %v735
        %v744 = vcvt.s32.f32 %v736
        %v745 = vld [vmem:[%s422] sm:$0xff]
        %v746 = vld [vmem:[%s422 + $0x8] sm:$0xff]
        %v747 = vld [vmem:[%s422 + $0x10] sm:$0xff]
        %v748 = vld [vmem:[%s422 + $0x18] sm:$0xff]
        %v749 = vld [vmem:[%s422 + $0x20] sm:$0xff]
        %v750 = vld [vmem:[%s422 + $0x28] sm:$0xff]
        %v751 = vld [vmem:[%s422 + $0x30] sm:$0xff]
        %v752 = vld [vmem:[%s422 + $0x38] sm:$0xff]
        %v753 = vld [vmem:[%s374] sm:$0xff]
        %v754 = vld [vmem:[%s374 + $0x8] sm:$0xff]
        %v755 = vld [vmem:[%s374 + $0x10] sm:$0xff]
        %v756 = vld [vmem:[%s374 + $0x18] sm:$0xff]
        %v757 = vld [vmem:[%s374 + $0x20] sm:$0xff]
        %v758 = vld [vmem:[%s374 + $0x28] sm:$0xff]
        %v759 = vld [vmem:[%s374 + $0x30] sm:$0xff]
        %v760 = vld [vmem:[%s374 + $0x38] sm:$0xff]
        %v761 = vand.u32 2147483647, %v745
        %v762 = vand.u32 2147483647, %v746
        %v763 = vand.u32 2147483647, %v747
        %v764 = vand.u32 2147483647, %v748
        %v765 = vand.u32 2147483647, %v749
        %v766 = vand.u32 2147483647, %v750
        %v767 = vand.u32 2147483647, %v751
        %v768 = vand.u32 2147483647, %v752
        %v769 = vsub.f32 0.0, %v761
        %v770 = vsub.f32 0.0, %v762
        %v771 = vsub.f32 0.0, %v763
        %v772 = vsub.f32 0.0, %v764
        %v773 = vsub.f32 0.0, %v765
        %v774 = vsub.f32 0.0, %v766
        %v775 = vsub.f32 0.0, %v767
        %v776 = vsub.f32 0.0, %v768
        %v777 = vmul.f32 %v769, 1.442695
        %v778 = vpow.pop %v777
        %v779 = vmul.f32 %v770, 1.442695
        %v780 = vpow.pop %v779
        %v781 = vmul.f32 %v771, 1.442695
        %v782 = vpow.pop %v781
        %v783 = vmul.f32 %v772, 1.442695
        %v784 = vpow.pop %v783
        %v785 = vmul.f32 %v773, 1.442695
        %v786 = vpow.pop %v785
        %v787 = vmul.f32 %v774, 1.442695
        %v788 = vpow.pop %v787
        %v789 = vmul.f32 %v775, 1.442695
        %v790 = vpow.pop %v789
        %v791 = vmul.f32 %v776, 1.442695
        %v792 = vpow.pop %v791
        %v793 = vsub.f32 %v778, 1.0
        %v794 = vsub.f32 %v780, 1.0
        %v795 = vsub.f32 %v782, 1.0
        %v796 = vsub.f32 %v784, 1.0
        %v797 = vsub.f32 %v786, 1.0
        %v798 = vsub.f32 %v788, 1.0
        %v799 = vsub.f32 %v790, 1.0
        %v800 = vsub.f32 %v792, 1.0
        %vm801 = vcmp.gt.f32.partialorder %v745, 0.0
        %vm802 = vcmp.gt.f32.partialorder %v746, 0.0
        %vm803 = vcmp.gt.f32.partialorder %v747, 0.0
        %vm804 = vcmp.gt.f32.partialorder %v748, 0.0
        %vm805 = vcmp.gt.f32.partialorder %v749, 0.0
        %vm806 = vcmp.gt.f32.partialorder %v750, 0.0
        %vm807 = vcmp.gt.f32.partialorder %v751, 0.0
        %vm808 = vcmp.gt.f32.partialorder %v752, 0.0
        %v809 = vsel %vm801, %v745, %v793
        %v810 = vsel %vm802, %v746, %v794
        %v811 = vsel %vm803, %v747, %v795
        %v812 = vsel %vm804, %v748, %v796
        %v813 = vsel %vm805, %v749, %v797
        %v814 = vsel %vm806, %v750, %v798
        %v815 = vsel %vm807, %v751, %v799
        %v816 = vsel %vm808, %v752, %v800
        %v817 = vsub.f32 0.0, %v745
        %v818 = vsub.f32 0.0, %v746
        %v819 = vsub.f32 0.0, %v747
        %v820 = vsub.f32 0.0, %v748
        %v821 = vsub.f32 0.0, %v749
        %v822 = vsub.f32 0.0, %v750
        %v823 = vsub.f32 0.0, %v751
        %v824 = vsub.f32 0.0, %v752
        %v825 = vsel %vm801, %v793, %v817
        %v826 = vsel %vm802, %v794, %v818
        %v827 = vsel %vm803, %v795, %v819
        %v828 = vsel %vm804, %v796, %v820
        %v829 = vsel %vm805, %v797, %v821
        %v830 = vsel %vm806, %v798, %v822
        %v831 = vsel %vm807, %v799, %v823
        %v832 = vsel %vm808, %v800, %v824
        %841 = vrot.lane.b32.xlu0 %v825, 32
        %v842 = vpop.permute.xlu0 %841
        %843 = vrot.lane.b32.xlu0 %v826, 32
        %v844 = vpop.permute.xlu0 %843
        %845 = vrot.lane.b32.xlu0 %v827, 32
        %v846 = vpop.permute.xlu0 %845
        %847 = vrot.lane.b32.xlu0 %v828, 32
        %v848 = vpop.permute.xlu0 %847
        %849 = vrot.lane.b32.xlu0 %v829, 32
        %v850 = vpop.permute.xlu0 %849
        %851 = vrot.lane.b32.xlu0 %v830, 32
        %v852 = vpop.permute.xlu0 %851
        %853 = vrot.lane.b32.xlu0 %v831, 32
        %v854 = vpop.permute.xlu0 %853
        %855 = vrot.lane.b32.xlu0 %v832, 32
        %v856 = vpop.permute.xlu0 %855
        %vm865 = vcmask 261120
        %v866 = vsel %vm865, %v809, %v842
        %v867 = vsel %vm865, %v810, %v844
        %v868 = vsel %vm865, %v811, %v846
        %v869 = vsel %vm865, %v812, %v848
        %v870 = vsel %vm865, %v813, %v850
        %v871 = vsel %vm865, %v814, %v852
        %v872 = vsel %vm865, %v815, %v854
        %v873 = vsel %vm865, %v816, %v856
        %v874 = vrot.slane %v866, 7
        %v875 = vrot.slane %v867, 7
        %v876 = vrot.slane %v868, 7
        %v877 = vrot.slane %v869, 7
        %v878 = vrot.slane %v870, 7
        %v879 = vrot.slane %v871, 7
        %v880 = vrot.slane %v872, 7
        %v881 = vrot.slane %v873, 7
        %vm882 = vcmp.lt.s32.totalorder %v433, 1
        %v883 = vsel %vm882, %v880, %v881
        %v884 = vsel %vm882, %v879, %v880
        %v885 = vsel %vm882, %v878, %v879
        %v886 = vsel %vm882, %v877, %v878
        %v887 = vsel %vm882, %v876, %v877
        %v888 = vsel %vm882, %v875, %v876
        %v889 = vsel %vm882, %v874, %v875
        %v890 = vsel %vm882, %v881, %v874
        %v891 = vmul.f32 %v883, %v545
        %v892 = vmul.f32 %v890, %v546
        %v893 = vmul.f32 %v889, %v547
        %v894 = vmul.f32 %v888, %v548
        %v895 = vmul.f32 %v887, %v549
        %v896 = vmul.f32 %v886, %v550
        %v897 = vmul.f32 %v885, %v551
        %v898 = vmul.f32 %v884, %v552
        %v899 = vpack.c.bf16 %v892, %v891
        %v900 = vpack.c.bf16 %v894, %v893
        %v901 = vpack.c.bf16 %v896, %v895
        %v902 = vpack.c.bf16 %v898, %v897
        %v903 = vld [vmem:[%s2] sm:$0xf]
        %v904 = vld [vmem:[%s2 + $0x4] sm:$0xf]
        %v905 = vld [vmem:[%s2 + $0x8] sm:$0xf]
        %v906 = vld [vmem:[%s2 + $0xc] sm:$0xf]
        %v907 = vld [vmem:[%s2 + $0x10] sm:$0xf]
        %v908 = vld [vmem:[%s2 + $0x14] sm:$0xf]
        %v909 = vld [vmem:[%s2 + $0x18] sm:$0xf]
        %v910 = vld [vmem:[%s2 + $0x1c] sm:$0xf]
        %v911 = vmul.f32 %v873, %v593
        %v912 = vmul.f32 %v866, %v594
        %v913 = vmul.f32 %v867, %v595
        %v914 = vmul.f32 %v868, %v596
        %v915 = vmul.f32 %v869, %v597
        %v916 = vmul.f32 %v870, %v598
        %v917 = vmul.f32 %v871, %v599
        %v918 = vmul.f32 %v872, %v600
        %v919 = vpack.c.bf16 %v912, %v911
        %v920 = vpack.c.bf16 %v914, %v913
        %v921 = vpack.c.bf16 %v916, %v915
        %v922 = vpack.c.bf16 %v918, %v917
        %s923 = scalar_lea.vmem %s2, 32
        %v924 = vld [vmem:[%s923] sm:$0xf]
        %v925 = vld [vmem:[%s923 + $0x4] sm:$0xf]
        %v926 = vld [vmem:[%s923 + $0x8] sm:$0xf]
        %v927 = vld [vmem:[%s923 + $0xc] sm:$0xf]
        %v928 = vld [vmem:[%s923 + $0x10] sm:$0xf]
        %v929 = vld [vmem:[%s923 + $0x14] sm:$0xf]
        %v930 = vld [vmem:[%s923 + $0x18] sm:$0xf]
        %v931 = vld [vmem:[%s923 + $0x1c] sm:$0xf]
        %v940 = vunpack.c.l.b16 %v924
        %v941 = vunpack.c.l.b16 %v925
        %v942 = vunpack.c.l.b16 %v926
        %v943 = vunpack.c.l.b16 %v927
        %v944 = vunpack.c.l.b16 %v928
        %v945 = vunpack.c.l.b16 %v929
        %v946 = vunpack.c.l.b16 %v930
        %v947 = vunpack.c.l.b16 %v931
        %v948 = vpack.c.b16 %v941, %v940
        %v949 = vpack.c.b16 %v943, %v942
        %v950 = vpack.c.b16 %v945, %v944
        %v951 = vpack.c.b16 %v947, %v946
        %vm956 = vcmask 523264
        %v958 = vsel %vm956, %v919, 0
        %v961 = vsel %vm956, %v920, 0
        %v964 = vsel %vm956, %v921, 0
        %v967 = vsel %vm956, %v922, 0
        %969 = vmatprep.subr.bf16.mxu0 0
        %970 = vmatpush1.bf16.msra.mxu0 %v948
        %971 = vmatprep.subr.bf16.mxu0 0
        %972 = vmatpush1.bf16.msra.mxu0 %v949
        %973 = vmatprep.subr.bf16.mxu0 0
        %974 = vmatpush1.bf16.msra.mxu0 %v950
        %975 = vmatprep.subr.bf16.mxu0 0
        %976 = vmatpush1.bf16.msra.mxu0 %v951
        %977 = vmatprep.subr.bf16.mxu0 0
        %978 = vmatpush1.bf16.msra.mxu0 0
        %979 = vmatprep.subr.bf16.mxu0 0
        %980 = vmatpush1.bf16.msra.mxu0 0
        %981 = vmatprep.subr.bf16.mxu0 0
        %982 = vmatpush1.bf16.msra.mxu0 0
        %983 = vmatprep.subr.bf16.mxu0 0
        %984 = vmatpush1.bf16.msra.mxu0 0
        %985 = vmatprep.subr.bf16.mxu0 0
        %986 = vmatpush1.bf16.msra.mxu0 0
        %987 = vmatprep.subr.bf16.mxu0 0
        %988 = vmatpush1.bf16.msra.mxu0 0
        %989 = vmatprep.subr.bf16.mxu0 0
        %990 = vmatpush1.bf16.msra.mxu0 0
        %991 = vmatprep.subr.bf16.mxu0 0
        %992 = vmatpush1.bf16.msra.mxu0 0
        %993 = vmatprep.subr.bf16.mxu0 0
        %994 = vmatpush1.bf16.msra.mxu0 0
        %995 = vmatprep.subr.bf16.mxu0 0
        %996 = vmatpush1.bf16.msra.mxu0 0
        %997 = vmatprep.subr.bf16.mxu0 0
        %998 = vmatpush1.bf16.msra.mxu0 0
        %999 = vmatprep.subr.bf16.mxu0 0
        %1000 = vmatpush1.bf16.msra.mxu0 0
        %1001 = vmatprep.mubr.bf16.mxu0 0
        %1002 = vmatmul.mubr.bf16.gmra.mrb[0].mxu0 %v958
        %v1003 = vpop.f32.mrb[0].mxu0
        %v1004 = vadd.f32 0.0, %v1003
        %v1005 = vpop.f32.mrb[0].mxu0
        %v1006 = vpop.f32.mrb[0].mxu0
        %v1007 = vadd.f32 0.0, %v1006
        %v1008 = vpop.f32.mrb[0].mxu0
        %1009 = vmatprep.mubr.bf16.mxu0 0
        %1010 = vmatmul.mubr.bf16.gmra.mrb[0].mxu0 %v961
        %v1011 = vpop.f32.mrb[0].mxu0
        %v1012 = vadd.f32 0.0, %v1011
        %v1013 = vpop.f32.mrb[0].mxu0
        %v1014 = vpop.f32.mrb[0].mxu0
        %v1015 = vadd.f32 0.0, %v1014
        %v1016 = vpop.f32.mrb[0].mxu0
        %1017 = vmatprep.mubr.bf16.mxu0 0
        %1018 = vmatmul.mubr.bf16.gmra.mrb[0].mxu0 %v964
        %v1019 = vpop.f32.mrb[0].mxu0
        %v1020 = vadd.f32 0.0, %v1019
        %v1021 = vpop.f32.mrb[0].mxu0
        %v1022 = vpop.f32.mrb[0].mxu0
        %v1023 = vadd.f32 0.0, %v1022
        %v1024 = vpop.f32.mrb[0].mxu0
        %1025 = vmatprep.mubr.bf16.mxu0 0
        %1026 = vmatmul.mubr.bf16.gmra.mrb[0].mxu0 %v967
        %v1027 = vpop.f32.mrb[0].mxu0
        %v1028 = vadd.f32 0.0, %v1027
        %v1029 = vpop.f32.mrb[0].mxu0
        %v1030 = vpop.f32.mrb[0].mxu0
        %v1031 = vadd.f32 0.0, %v1030
        %v1032 = vpop.f32.mrb[0].mxu0
        %1033 = vdwg.mxu0
        %v1042 = vunpack.c.l.b16 %v903
        %v1043 = vunpack.c.l.b16 %v904
        %v1044 = vunpack.c.l.b16 %v905
        %v1045 = vunpack.c.l.b16 %v906
        %v1046 = vunpack.c.l.b16 %v907
        %v1047 = vunpack.c.l.b16 %v908
        %v1048 = vunpack.c.l.b16 %v909
        %v1049 = vunpack.c.l.b16 %v910
        %v1050 = vpack.c.b16 %v1043, %v1042
        %v1051 = vpack.c.b16 %v1045, %v1044
        %v1052 = vpack.c.b16 %v1047, %v1046
        %v1053 = vpack.c.b16 %v1049, %v1048
        %v1059 = vsel %vm956, %v899, 0
        %v1062 = vsel %vm956, %v900, 0
        %v1065 = vsel %vm956, %v901, 0
        %v1068 = vsel %vm956, %v902, 0
        %1070 = vmatprep.subr.bf16.mxu0 0
        %1071 = vmatpush1.bf16.msra.mxu0 %v1050
        %1072 = vmatprep.subr.bf16.mxu0 0
        %1073 = vmatpush1.bf16.msra.mxu0 %v1051
        %1074 = vmatprep.subr.bf16.mxu0 0
        %1075 = vmatpush1.bf16.msra.mxu0 %v1052
        %1076 = vmatprep.subr.bf16.mxu0 0
        %1077 = vmatpush1.bf16.msra.mxu0 %v1053
        %1078 = vmatprep.subr.bf16.mxu0 0
        %1079 = vmatpush1.bf16.msra.mxu0 0
        %1080 = vmatprep.subr.bf16.mxu0 0
        %1081 = vmatpush1.bf16.msra.mxu0 0
        %1082 = vmatprep.subr.bf16.mxu0 0
        %1083 = vmatpush1.bf16.msra.mxu0 0
        %1084 = vmatprep.subr.bf16.mxu0 0
        %1085 = vmatpush1.bf16.msra.mxu0 0
        %1086 = vmatprep.subr.bf16.mxu0 0
        %1087 = vmatpush1.bf16.msra.mxu0 0
        %1088 = vmatprep.subr.bf16.mxu0 0
        %1089 = vmatpush1.bf16.msra.mxu0 0
        %1090 = vmatprep.subr.bf16.mxu0 0
        %1091 = vmatpush1.bf16.msra.mxu0 0
        %1092 = vmatprep.subr.bf16.mxu0 0
        %1093 = vmatpush1.bf16.msra.mxu0 0
        %1094 = vmatprep.subr.bf16.mxu0 0
        %1095 = vmatpush1.bf16.msra.mxu0 0
        %1096 = vmatprep.subr.bf16.mxu0 0
        %1097 = vmatpush1.bf16.msra.mxu0 0
        %1098 = vmatprep.subr.bf16.mxu0 0
        %1099 = vmatpush1.bf16.msra.mxu0 0
        %1100 = vmatprep.subr.bf16.mxu0 0
        %1101 = vmatpush1.bf16.msra.mxu0 0
        %1102 = vmatprep.mubr.bf16.mxu0 0
        %1103 = vmatmul.mubr.bf16.gmra.mrb[0].mxu0 %v1059
        %v1104 = vpop.f32.mrb[0].mxu0
        %v1105 = vadd.f32 %v1004, %v1104
        %v1106 = vpop.f32.mrb[0].mxu0
        %v1107 = vpop.f32.mrb[0].mxu0
        %v1108 = vadd.f32 %v1007, %v1107
        %v1109 = vpop.f32.mrb[0].mxu0
        %1110 = vmatprep.mubr.bf16.mxu0 0
        %1111 = vmatmul.mubr.bf16.gmra.mrb[0].mxu0 %v1062
        %v1112 = vpop.f32.mrb[0].mxu0
        %v1113 = vadd.f32 %v1012, %v1112
        %v1114 = vpop.f32.mrb[0].mxu0
        %v1115 = vpop.f32.mrb[0].mxu0
        %v1116 = vadd.f32 %v1015, %v1115
        %v1117 = vpop.f32.mrb[0].mxu0
        %1118 = vmatprep.mubr.bf16.mxu0 0
        %1119 = vmatmul.mubr.bf16.gmra.mrb[0].mxu0 %v1065
        %v1120 = vpop.f32.mrb[0].mxu0
        %v1121 = vadd.f32 %v1020, %v1120
        %v1122 = vpop.f32.mrb[0].mxu0
        %v1123 = vpop.f32.mrb[0].mxu0
        %v1124 = vadd.f32 %v1023, %v1123
        %v1125 = vpop.f32.mrb[0].mxu0
        %1126 = vmatprep.mubr.bf16.mxu0 0
        %1127 = vmatmul.mubr.bf16.gmra.mrb[0].mxu0 %v1068
        %v1128 = vpop.f32.mrb[0].mxu0
        %v1129 = vadd.f32 %v1028, %v1128
        %v1130 = vpop.f32.mrb[0].mxu0
        %v1131 = vpop.f32.mrb[0].mxu0
        %v1132 = vadd.f32 %v1031, %v1131
        %v1133 = vpop.f32.mrb[0].mxu0
        %1134 = vdwg.mxu0
        %v1135 = vrot.slane %v866, 1
        %v1136 = vrot.slane %v867, 1
        %v1137 = vrot.slane %v868, 1
        %v1138 = vrot.slane %v869, 1
        %v1139 = vrot.slane %v870, 1
        %v1140 = vrot.slane %v871, 1
        %v1141 = vrot.slane %v872, 1
        %v1142 = vrot.slane %v873, 1
        %vm1143 = vcmp.lt.s32.totalorder %v433, 7
        %v1144 = vsel %vm1143, %v1141, %v1142
        %v1145 = vsel %vm1143, %v1140, %v1141
        %v1146 = vsel %vm1143, %v1139, %v1140
        %v1147 = vsel %vm1143, %v1138, %v1139
        %v1148 = vsel %vm1143, %v1137, %v1138
        %v1149 = vsel %vm1143, %v1136, %v1137
        %v1150 = vsel %vm1143, %v1135, %v1136
        %v1151 = vsel %vm1143, %v1142, %v1135
        %v1152 = vmul.f32 %v1151, %v649
        %v1153 = vmul.f32 %v1150, %v650
        %v1154 = vmul.f32 %v1149, %v651
        %v1155 = vmul.f32 %v1148, %v652
        %v1156 = vmul.f32 %v1147, %v653
        %v1157 = vmul.f32 %v1146, %v654
        %v1158 = vmul.f32 %v1145, %v655
        %v1159 = vmul.f32 %v1144, %v656
        %v1160 = vpack.c.bf16 %v1153, %v1152
        %v1161 = vpack.c.bf16 %v1155, %v1154
        %v1162 = vpack.c.bf16 %v1157, %v1156
        %v1163 = vpack.c.bf16 %v1159, %v1158
        %s1164 = scalar_lea.vmem %s2, 64
        %v1165 = vld [vmem:[%s1164] sm:$0xf]
        %v1166 = vld [vmem:[%s1164 + $0x4] sm:$0xf]
        %v1167 = vld [vmem:[%s1164 + $0x8] sm:$0xf]
        %v1168 = vld [vmem:[%s1164 + $0xc] sm:$0xf]
        %v1169 = vld [vmem:[%s1164 + $0x10] sm:$0xf]
        %v1170 = vld [vmem:[%s1164 + $0x14] sm:$0xf]
        %v1171 = vld [vmem:[%s1164 + $0x18] sm:$0xf]
        %v1172 = vld [vmem:[%s1164 + $0x1c] sm:$0xf]
        %v1181 = vunpack.c.l.b16 %v1165
        %v1182 = vunpack.c.l.b16 %v1166
        %v1183 = vunpack.c.l.b16 %v1167
        %v1184 = vunpack.c.l.b16 %v1168
        %v1185 = vunpack.c.l.b16 %v1169
        %v1186 = vunpack.c.l.b16 %v1170
        %v1187 = vunpack.c.l.b16 %v1171
        %v1188 = vunpack.c.l.b16 %v1172
        %v1189 = vpack.c.b16 %v1182, %v1181
        %v1190 = vpack.c.b16 %v1184, %v1183
        %v1191 = vpack.c.b16 %v1186, %v1185
        %v1192 = vpack.c.b16 %v1188, %v1187
        %v1198 = vsel %vm956, %v1160, 0
        %v1201 = vsel %vm956, %v1161, 0
        %v1204 = vsel %vm956, %v1162, 0
        %v1207 = vsel %vm956, %v1163, 0
        %1209 = vmatprep.subr.bf16.mxu0 0
        %1210 = vmatpush1.bf16.msra.mxu0 %v1189
        %1211 = vmatprep.subr.bf16.mxu0 0
        %1212 = vmatpush1.bf16.msra.mxu0 %v1190
        %1213 = vmatprep.subr.bf16.mxu0 0
        %1214 = vmatpush1.bf16.msra.mxu0 %v1191
        %1215 = vmatprep.subr.bf16.mxu0 0
        %1216 = vmatpush1.bf16.msra.mxu0 %v1192
        %1217 = vmatprep.subr.bf16.mxu0 0
        %1218 = vmatpush1.bf16.msra.mxu0 0
        %1219 = vmatprep.subr.bf16.mxu0 0
        %1220 = vmatpush1.bf16.msra.mxu0 0
        %1221 = vmatprep.subr.bf16.mxu0 0
        %1222 = vmatpush1.bf16.msra.mxu0 0
        %1223 = vmatprep.subr.bf16.mxu0 0
        %1224 = vmatpush1.bf16.msra.mxu0 0
        %1225 = vmatprep.subr.bf16.mxu0 0
        %1226 = vmatpush1.bf16.msra.mxu0 0
        %1227 = vmatprep.subr.bf16.mxu0 0
        %1228 = vmatpush1.bf16.msra.mxu0 0
        %1229 = vmatprep.subr.bf16.mxu0 0
        %1230 = vmatpush1.bf16.msra.mxu0 0
        %1231 = vmatprep.subr.bf16.mxu0 0
        %1232 = vmatpush1.bf16.msra.mxu0 0
        %1233 = vmatprep.subr.bf16.mxu0 0
        %1234 = vmatpush1.bf16.msra.mxu0 0
        %1235 = vmatprep.subr.bf16.mxu0 0
        %1236 = vmatpush1.bf16.msra.mxu0 0
        %1237 = vmatprep.subr.bf16.mxu0 0
        %1238 = vmatpush1.bf16.msra.mxu0 0
        %1239 = vmatprep.subr.bf16.mxu0 0
        %1240 = vmatpush1.bf16.msra.mxu0 0
        %1241 = vmatprep.mubr.bf16.mxu0 0
        %1242 = vmatmul.mubr.bf16.gmra.mrb[0].mxu0 %v1198
        %v1243 = vpop.f32.mrb[0].mxu0
        %v1244 = vadd.f32 0.0, %v1243
        %v1245 = vpop.f32.mrb[0].mxu0
        %v1246 = vpop.f32.mrb[0].mxu0
        %v1247 = vadd.f32 0.0, %v1246
        %v1248 = vpop.f32.mrb[0].mxu0
        %1249 = vmatprep.mubr.bf16.mxu0 0
        %1250 = vmatmul.mubr.bf16.gmra.mrb[0].mxu0 %v1201
        %v1251 = vpop.f32.mrb[0].mxu0
        %v1252 = vadd.f32 0.0, %v1251
        %v1253 = vpop.f32.mrb[0].mxu0
        %v1254 = vpop.f32.mrb[0].mxu0
        %v1255 = vadd.f32 0.0, %v1254
        %v1256 = vpop.f32.mrb[0].mxu0
        %1257 = vmatprep.mubr.bf16.mxu0 0
        %1258 = vmatmul.mubr.bf16.gmra.mrb[0].mxu0 %v1204
        %v1259 = vpop.f32.mrb[0].mxu0
        %v1260 = vadd.f32 0.0, %v1259
        %v1261 = vpop.f32.mrb[0].mxu0
        %v1262 = vpop.f32.mrb[0].mxu0
        %v1263 = vadd.f32 0.0, %v1262
        %v1264 = vpop.f32.mrb[0].mxu0
        %1265 = vmatprep.mubr.bf16.mxu0 0
        %1266 = vmatmul.mubr.bf16.gmra.mrb[0].mxu0 %v1207
        %v1267 = vpop.f32.mrb[0].mxu0
        %v1268 = vadd.f32 0.0, %v1267
        %v1269 = vpop.f32.mrb[0].mxu0
        %v1270 = vpop.f32.mrb[0].mxu0
        %v1271 = vadd.f32 0.0, %v1270
        %v1272 = vpop.f32.mrb[0].mxu0
        %1273 = vdwg.mxu0
        %v1274 = vadd.f32 %v1105, %v1244
        %v1275 = vadd.f32 %v1108, %v1247
        %v1276 = vadd.f32 %v1113, %v1252
        %v1277 = vadd.f32 %v1116, %v1255
        %v1278 = vadd.f32 %v1121, %v1260
        %v1279 = vadd.f32 %v1124, %v1263
        %v1280 = vadd.f32 %v1129, %v1268
        %v1281 = vadd.f32 %v1132, %v1271
        %v1282 = vmul.f32 %v890, %v705
        %v1283 = vmul.f32 %v889, %v706
        %v1284 = vmul.f32 %v888, %v707
        %v1285 = vmul.f32 %v887, %v708
        %v1286 = vmul.f32 %v886, %v709
        %v1287 = vmul.f32 %v885, %v710
        %v1288 = vmul.f32 %v884, %v711
        %v1289 = vmul.f32 %v883, %v712
        %v1290 = vpack.c.bf16 %v1283, %v1282
        %v1291 = vpack.c.bf16 %v1285, %v1284
        %v1292 = vpack.c.bf16 %v1287, %v1286
        %v1293 = vpack.c.bf16 %v1289, %v1288
        %s1294 = scalar_lea.vmem %s2, 96
        %v1295 = vld [vmem:[%s1294] sm:$0xf]
        %v1296 = vld [vmem:[%s1294 + $0x4] sm:$0xf]
        %v1297 = vld [vmem:[%s1294 + $0x8] sm:$0xf]
        %v1298 = vld [vmem:[%s1294 + $0xc] sm:$0xf]
        %v1299 = vld [vmem:[%s1294 + $0x10] sm:$0xf]
        %v1300 = vld [vmem:[%s1294 + $0x14] sm:$0xf]
        %v1301 = vld [vmem:[%s1294 + $0x18] sm:$0xf]
        %v1302 = vld [vmem:[%s1294 + $0x1c] sm:$0xf]
        %v1311 = vunpack.c.l.b16 %v1295
        %v1312 = vunpack.c.l.b16 %v1296
        %v1313 = vunpack.c.l.b16 %v1297
        %v1314 = vunpack.c.l.b16 %v1298
        %v1315 = vunpack.c.l.b16 %v1299
        %v1316 = vunpack.c.l.b16 %v1300
        %v1317 = vunpack.c.l.b16 %v1301
        %v1318 = vunpack.c.l.b16 %v1302
        %v1319 = vpack.c.b16 %v1312, %v1311
        %v1320 = vpack.c.b16 %v1314, %v1313
        %v1321 = vpack.c.b16 %v1316, %v1315
        %v1322 = vpack.c.b16 %v1318, %v1317
        %v1328 = vsel %vm956, %v1290, 0
        %v1331 = vsel %vm956, %v1291, 0
        %v1334 = vsel %vm956, %v1292, 0
        %v1337 = vsel %vm956, %v1293, 0
        %1339 = vmatprep.subr.bf16.mxu0 0
        %1340 = vmatpush1.bf16.msra.mxu0 %v1319
        %1341 = vmatprep.subr.bf16.mxu0 0
        %1342 = vmatpush1.bf16.msra.mxu0 %v1320
        %1343 = vmatprep.subr.bf16.mxu0 0
        %1344 = vmatpush1.bf16.msra.mxu0 %v1321
        %1345 = vmatprep.subr.bf16.mxu0 0
        %1346 = vmatpush1.bf16.msra.mxu0 %v1322
        %1347 = vmatprep.subr.bf16.mxu0 0
        %1348 = vmatpush1.bf16.msra.mxu0 0
        %1349 = vmatprep.subr.bf16.mxu0 0
        %1350 = vmatpush1.bf16.msra.mxu0 0
        %1351 = vmatprep.subr.bf16.mxu0 0
        %1352 = vmatpush1.bf16.msra.mxu0 0
        %1353 = vmatprep.subr.bf16.mxu0 0
        %1354 = vmatpush1.bf16.msra.mxu0 0
        %1355 = vmatprep.subr.bf16.mxu0 0
        %1356 = vmatpush1.bf16.msra.mxu0 0
        %1357 = vmatprep.subr.bf16.mxu0 0
        %1358 = vmatpush1.bf16.msra.mxu0 0
        %1359 = vmatprep.subr.bf16.mxu0 0
        %1360 = vmatpush1.bf16.msra.mxu0 0
        %1361 = vmatprep.subr.bf16.mxu0 0
        %1362 = vmatpush1.bf16.msra.mxu0 0
        %1363 = vmatprep.subr.bf16.mxu0 0
        %1364 = vmatpush1.bf16.msra.mxu0 0
        %1365 = vmatprep.subr.bf16.mxu0 0
        %1366 = vmatpush1.bf16.msra.mxu0 0
        %1367 = vmatprep.subr.bf16.mxu0 0
        %1368 = vmatpush1.bf16.msra.mxu0 0
        %1369 = vmatprep.subr.bf16.mxu0 0
        %1370 = vmatpush1.bf16.msra.mxu0 0
        %1371 = vmatprep.mubr.bf16.mxu0 0
        %1372 = vmatmul.mubr.bf16.gmra.mrb[0].mxu0 %v1328
        %v1373 = vpop.f32.mrb[0].mxu0
        %v1374 = vadd.f32 0.0, %v1373
        %v1375 = vpop.f32.mrb[0].mxu0
        %v1376 = vpop.f32.mrb[0].mxu0
        %v1377 = vadd.f32 0.0, %v1376
        %v1378 = vpop.f32.mrb[0].mxu0
        %1379 = vmatprep.mubr.bf16.mxu0 0
        %1380 = vmatmul.mubr.bf16.gmra.mrb[0].mxu0 %v1331
        %v1381 = vpop.f32.mrb[0].mxu0
        %v1382 = vadd.f32 0.0, %v1381
        %v1383 = vpop.f32.mrb[0].mxu0
        %v1384 = vpop.f32.mrb[0].mxu0
        %v1385 = vadd.f32 0.0, %v1384
        %v1386 = vpop.f32.mrb[0].mxu0
        %1387 = vmatprep.mubr.bf16.mxu0 0
        %1388 = vmatmul.mubr.bf16.gmra.mrb[0].mxu0 %v1334
        %v1389 = vpop.f32.mrb[0].mxu0
        %v1390 = vadd.f32 0.0, %v1389
        %v1391 = vpop.f32.mrb[0].mxu0
        %v1392 = vpop.f32.mrb[0].mxu0
        %v1393 = vadd.f32 0.0, %v1392
        %v1394 = vpop.f32.mrb[0].mxu0
        %1395 = vmatprep.mubr.bf16.mxu0 0
        %1396 = vmatmul.mubr.bf16.gmra.mrb[0].mxu0 %v1337
        %v1397 = vpop.f32.mrb[0].mxu0
        %v1398 = vadd.f32 0.0, %v1397
        %v1399 = vpop.f32.mrb[0].mxu0
        %v1400 = vpop.f32.mrb[0].mxu0
        %v1401 = vadd.f32 0.0, %v1400
        %v1402 = vpop.f32.mrb[0].mxu0
        %1403 = vdwg.mxu0
        %v1404 = vadd.f32 %v1274, %v1374
        %v1405 = vadd.f32 %v1275, %v1377
        %v1406 = vadd.f32 %v1276, %v1382
        %v1407 = vadd.f32 %v1277, %v1385
        %v1408 = vadd.f32 %v1278, %v1390
        %v1409 = vadd.f32 %v1279, %v1393
        %v1410 = vadd.f32 %v1280, %v1398
        %v1411 = vadd.f32 %v1281, %v1401
        %v1412 = vpack.c.bf16 %v867, %v866
        %v1413 = vpack.c.bf16 %v869, %v868
        %v1414 = vpack.c.bf16 %v871, %v870
        %v1415 = vpack.c.bf16 %v873, %v872
        %s1416 = scalar_lea.vmem %s2, 128
        %v1417 = vld [vmem:[%s1416] sm:$0xf]
        %v1418 = vld [vmem:[%s1416 + $0x4] sm:$0xf]
        %v1419 = vld [vmem:[%s1416 + $0x8] sm:$0xf]
        %v1420 = vld [vmem:[%s1416 + $0xc] sm:$0xf]
        %v1421 = vld [vmem:[%s1416 + $0x10] sm:$0xf]
        %v1422 = vld [vmem:[%s1416 + $0x14] sm:$0xf]
        %v1423 = vld [vmem:[%s1416 + $0x18] sm:$0xf]
        %v1424 = vld [vmem:[%s1416 + $0x1c] sm:$0xf]
        %v1433 = vunpack.c.l.b16 %v1417
        %v1434 = vunpack.c.l.b16 %v1418
        %v1435 = vunpack.c.l.b16 %v1419
        %v1436 = vunpack.c.l.b16 %v1420
        %v1437 = vunpack.c.l.b16 %v1421
        %v1438 = vunpack.c.l.b16 %v1422
        %v1439 = vunpack.c.l.b16 %v1423
        %v1440 = vunpack.c.l.b16 %v1424
        %v1441 = vpack.c.b16 %v1434, %v1433
        %v1442 = vpack.c.b16 %v1436, %v1435
        %v1443 = vpack.c.b16 %v1438, %v1437
        %v1444 = vpack.c.b16 %v1440, %v1439
        %v1450 = vsel %vm956, %v1412, 0
        %v1453 = vsel %vm956, %v1413, 0
        %v1456 = vsel %vm956, %v1414, 0
        %v1459 = vsel %vm956, %v1415, 0
        %1461 = vmatprep.subr.bf16.mxu0 0
        %1462 = vmatpush1.bf16.msra.mxu0 %v1441
        %1463 = vmatprep.subr.bf16.mxu0 0
        %1464 = vmatpush1.bf16.msra.mxu0 %v1442
        %1465 = vmatprep.subr.bf16.mxu0 0
        %1466 = vmatpush1.bf16.msra.mxu0 %v1443
        %1467 = vmatprep.subr.bf16.mxu0 0
        %1468 = vmatpush1.bf16.msra.mxu0 %v1444
        %1469 = vmatprep.subr.bf16.mxu0 0
        %1470 = vmatpush1.bf16.msra.mxu0 0
        %1471 = vmatprep.subr.bf16.mxu0 0
        %1472 = vmatpush1.bf16.msra.mxu0 0
        %1473 = vmatprep.subr.bf16.mxu0 0
        %1474 = vmatpush1.bf16.msra.mxu0 0
        %1475 = vmatprep.subr.bf16.mxu0 0
        %1476 = vmatpush1.bf16.msra.mxu0 0
        %1477 = vmatprep.subr.bf16.mxu0 0
        %1478 = vmatpush1.bf16.msra.mxu0 0
        %1479 = vmatprep.subr.bf16.mxu0 0
        %1480 = vmatpush1.bf16.msra.mxu0 0
        %1481 = vmatprep.subr.bf16.mxu0 0
        %1482 = vmatpush1.bf16.msra.mxu0 0
        %1483 = vmatprep.subr.bf16.mxu0 0
        %1484 = vmatpush1.bf16.msra.mxu0 0
        %1485 = vmatprep.subr.bf16.mxu0 0
        %1486 = vmatpush1.bf16.msra.mxu0 0
        %1487 = vmatprep.subr.bf16.mxu0 0
        %1488 = vmatpush1.bf16.msra.mxu0 0
        %1489 = vmatprep.subr.bf16.mxu0 0
        %1490 = vmatpush1.bf16.msra.mxu0 0
        %1491 = vmatprep.subr.bf16.mxu0 0
        %1492 = vmatpush1.bf16.msra.mxu0 0
        %1493 = vmatprep.mubr.bf16.mxu0 0
        %1494 = vmatmul.mubr.bf16.gmra.mrb[0].mxu0 %v1450
        %v1495 = vpop.f32.mrb[0].mxu0
        %v1496 = vadd.f32 0.0, %v1495
        %v1497 = vpop.f32.mrb[0].mxu0
        %v1498 = vpop.f32.mrb[0].mxu0
        %v1499 = vadd.f32 0.0, %v1498
        %v1500 = vpop.f32.mrb[0].mxu0
        %1501 = vmatprep.mubr.bf16.mxu0 0
        %1502 = vmatmul.mubr.bf16.gmra.mrb[0].mxu0 %v1453
        %v1503 = vpop.f32.mrb[0].mxu0
        %v1504 = vadd.f32 0.0, %v1503
        %v1505 = vpop.f32.mrb[0].mxu0
        %v1506 = vpop.f32.mrb[0].mxu0
        %v1507 = vadd.f32 0.0, %v1506
        %v1508 = vpop.f32.mrb[0].mxu0
        %1509 = vmatprep.mubr.bf16.mxu0 0
        %1510 = vmatmul.mubr.bf16.gmra.mrb[0].mxu0 %v1456
        %v1511 = vpop.f32.mrb[0].mxu0
        %v1512 = vadd.f32 0.0, %v1511
        %v1513 = vpop.f32.mrb[0].mxu0
        %v1514 = vpop.f32.mrb[0].mxu0
        %v1515 = vadd.f32 0.0, %v1514
        %v1516 = vpop.f32.mrb[0].mxu0
        %1517 = vmatprep.mubr.bf16.mxu0 0
        %1518 = vmatmul.mubr.bf16.gmra.mrb[0].mxu0 %v1459
        %v1519 = vpop.f32.mrb[0].mxu0
        %v1520 = vadd.f32 0.0, %v1519
        %v1521 = vpop.f32.mrb[0].mxu0
        %v1522 = vpop.f32.mrb[0].mxu0
        %v1523 = vadd.f32 0.0, %v1522
        %v1524 = vpop.f32.mrb[0].mxu0
        %1525 = vdwg.mxu0
        %v1526 = vadd.f32 %v1404, %v1496
        %v1527 = vadd.f32 %v1405, %v1499
        %v1528 = vadd.f32 %v1406, %v1504
        %v1529 = vadd.f32 %v1407, %v1507
        %v1530 = vadd.f32 %v1408, %v1512
        %v1531 = vadd.f32 %v1409, %v1515
        %v1532 = vadd.f32 %v1410, %v1520
        %v1533 = vadd.f32 %v1411, %v1523
        %v1534 = vmul.f32 %v1150, %v737
        %v1535 = vmul.f32 %v1149, %v738
        %v1536 = vmul.f32 %v1148, %v739
        %v1537 = vmul.f32 %v1147, %v740
        %v1538 = vmul.f32 %v1146, %v741
        %v1539 = vmul.f32 %v1145, %v742
        %v1540 = vmul.f32 %v1144, %v743
        %v1541 = vmul.f32 %v1151, %v744
        %v1542 = vpack.c.bf16 %v1535, %v1534
        %v1543 = vpack.c.bf16 %v1537, %v1536
        %v1544 = vpack.c.bf16 %v1539, %v1538
        %v1545 = vpack.c.bf16 %v1541, %v1540
        %s1546 = scalar_lea.vmem %s2, 160
        %v1547 = vld [vmem:[%s1546] sm:$0xf]
        %v1548 = vld [vmem:[%s1546 + $0x4] sm:$0xf]
        %v1549 = vld [vmem:[%s1546 + $0x8] sm:$0xf]
        %v1550 = vld [vmem:[%s1546 + $0xc] sm:$0xf]
        %v1551 = vld [vmem:[%s1546 + $0x10] sm:$0xf]
        %v1552 = vld [vmem:[%s1546 + $0x14] sm:$0xf]
        %v1553 = vld [vmem:[%s1546 + $0x18] sm:$0xf]
        %v1554 = vld [vmem:[%s1546 + $0x1c] sm:$0xf]
        %v1563 = vunpack.c.l.b16 %v1547
        %v1564 = vunpack.c.l.b16 %v1548
        %v1565 = vunpack.c.l.b16 %v1549
        %v1566 = vunpack.c.l.b16 %v1550
        %v1567 = vunpack.c.l.b16 %v1551
        %v1568 = vunpack.c.l.b16 %v1552
        %v1569 = vunpack.c.l.b16 %v1553
        %v1570 = vunpack.c.l.b16 %v1554
        %v1571 = vpack.c.b16 %v1564, %v1563
        %v1572 = vpack.c.b16 %v1566, %v1565
        %v1573 = vpack.c.b16 %v1568, %v1567
        %v1574 = vpack.c.b16 %v1570, %v1569
        %v1580 = vsel %vm956, %v1542, 0
        %v1583 = vsel %vm956, %v1543, 0
        %v1586 = vsel %vm956, %v1544, 0
        %v1589 = vsel %vm956, %v1545, 0
        %1591 = vmatprep.subr.bf16.mxu0 0
        %1592 = vmatpush1.bf16.msra.mxu0 %v1571
        %1593 = vmatprep.subr.bf16.mxu0 0
        %1594 = vmatpush1.bf16.msra.mxu0 %v1572
        %1595 = vmatprep.subr.bf16.mxu0 0
        %1596 = vmatpush1.bf16.msra.mxu0 %v1573
        %1597 = vmatprep.subr.bf16.mxu0 0
        %1598 = vmatpush1.bf16.msra.mxu0 %v1574
        %1599 = vmatprep.subr.bf16.mxu0 0
        %1600 = vmatpush1.bf16.msra.mxu0 0
        %1601 = vmatprep.subr.bf16.mxu0 0
        %1602 = vmatpush1.bf16.msra.mxu0 0
        %1603 = vmatprep.subr.bf16.mxu0 0
        %1604 = vmatpush1.bf16.msra.mxu0 0
        %1605 = vmatprep.subr.bf16.mxu0 0
        %1606 = vmatpush1.bf16.msra.mxu0 0
        %1607 = vmatprep.subr.bf16.mxu0 0
        %1608 = vmatpush1.bf16.msra.mxu0 0
        %1609 = vmatprep.subr.bf16.mxu0 0
        %1610 = vmatpush1.bf16.msra.mxu0 0
        %1611 = vmatprep.subr.bf16.mxu0 0
        %1612 = vmatpush1.bf16.msra.mxu0 0
        %1613 = vmatprep.subr.bf16.mxu0 0
        %1614 = vmatpush1.bf16.msra.mxu0 0
        %1615 = vmatprep.subr.bf16.mxu0 0
        %1616 = vmatpush1.bf16.msra.mxu0 0
        %1617 = vmatprep.subr.bf16.mxu0 0
        %1618 = vmatpush1.bf16.msra.mxu0 0
        %1619 = vmatprep.subr.bf16.mxu0 0
        %1620 = vmatpush1.bf16.msra.mxu0 0
        %1621 = vmatprep.subr.bf16.mxu0 0
        %1622 = vmatpush1.bf16.msra.mxu0 0
        %1623 = vmatprep.mubr.bf16.mxu0 0
        %1624 = vmatmul.mubr.bf16.gmra.mrb[0].mxu0 %v1580
        %v1625 = vpop.f32.mrb[0].mxu0
        %v1626 = vadd.f32 0.0, %v1625
        %v1627 = vpop.f32.mrb[0].mxu0
        %v1628 = vpop.f32.mrb[0].mxu0
        %v1629 = vadd.f32 0.0, %v1628
        %v1630 = vpop.f32.mrb[0].mxu0
        %1631 = vmatprep.mubr.bf16.mxu0 0
        %1632 = vmatmul.mubr.bf16.gmra.mrb[0].mxu0 %v1583
        %v1633 = vpop.f32.mrb[0].mxu0
        %v1634 = vadd.f32 0.0, %v1633
        %v1635 = vpop.f32.mrb[0].mxu0
        %v1636 = vpop.f32.mrb[0].mxu0
        %v1637 = vadd.f32 0.0, %v1636
        %v1638 = vpop.f32.mrb[0].mxu0
        %1639 = vmatprep.mubr.bf16.mxu0 0
        %1640 = vmatmul.mubr.bf16.gmra.mrb[0].mxu0 %v1586
        %v1641 = vpop.f32.mrb[0].mxu0
        %v1642 = vadd.f32 0.0, %v1641
        %v1643 = vpop.f32.mrb[0].mxu0
        %v1644 = vpop.f32.mrb[0].mxu0
        %v1645 = vadd.f32 0.0, %v1644
        %v1646 = vpop.f32.mrb[0].mxu0
        %1647 = vmatprep.mubr.bf16.mxu0 0
        %1648 = vmatmul.mubr.bf16.gmra.mrb[0].mxu0 %v1589
        %v1649 = vpop.f32.mrb[0].mxu0
        %v1650 = vadd.f32 0.0, %v1649
        %v1651 = vpop.f32.mrb[0].mxu0
        %v1652 = vpop.f32.mrb[0].mxu0
        %v1653 = vadd.f32 0.0, %v1652
        %v1654 = vpop.f32.mrb[0].mxu0
        %1655 = vdwg.mxu0
        %v1656 = vadd.f32 %v1526, %v1626
        %v1657 = vadd.f32 %v1527, %v1629
        %v1658 = vadd.f32 %v1528, %v1634
        %v1659 = vadd.f32 %v1529, %v1637
        %v1660 = vadd.f32 %v1530, %v1642
        %v1661 = vadd.f32 %v1531, %v1645
        %v1662 = vadd.f32 %v1532, %v1650
        %v1663 = vadd.f32 %v1533, %v1653
        %v1664 = vld [vmem:[%s3] sm:$0x1]
        %v1666 = vlaneseq
        %v1667 = vshrl.u32 %v1666, 7
        %v1668 = vsub.s32 0, %v1667
        %v1669 = vrot.slane %v1664, %v1668
        %v1671 = vadd.f32 %v1656, %v1669
        %v1672 = vadd.f32 %v1657, %v1669
        %v1673 = vadd.f32 %v1658, %v1669
        %v1674 = vadd.f32 %v1659, %v1669
        %v1675 = vadd.f32 %v1660, %v1669
        %v1676 = vadd.f32 %v1661, %v1669
        %v1677 = vadd.f32 %v1662, %v1669
        %v1678 = vadd.f32 %v1663, %v1669
        %v1679 = vand.u32 2147483647, %v1671
        %v1680 = vand.u32 2147483647, %v1672
        %v1681 = vand.u32 2147483647, %v1673
        %v1682 = vand.u32 2147483647, %v1674
        %v1683 = vand.u32 2147483647, %v1675
        %v1684 = vand.u32 2147483647, %v1676
        %v1685 = vand.u32 2147483647, %v1677
        %v1686 = vand.u32 2147483647, %v1678
        %v1687 = vsub.f32 0.0, %v1679
        %v1688 = vsub.f32 0.0, %v1680
        %v1689 = vsub.f32 0.0, %v1681
        %v1690 = vsub.f32 0.0, %v1682
        %v1691 = vsub.f32 0.0, %v1683
        %v1692 = vsub.f32 0.0, %v1684
        %v1693 = vsub.f32 0.0, %v1685
        %v1694 = vsub.f32 0.0, %v1686
        %v1695 = vmul.f32 %v1687, 1.442695
        %v1696 = vpow.pop %v1695
        %v1697 = vmul.f32 %v1688, 1.442695
        %v1698 = vpow.pop %v1697
        %v1699 = vmul.f32 %v1689, 1.442695
        %v1700 = vpow.pop %v1699
        %v1701 = vmul.f32 %v1690, 1.442695
        %v1702 = vpow.pop %v1701
        %v1703 = vmul.f32 %v1691, 1.442695
        %v1704 = vpow.pop %v1703
        %v1705 = vmul.f32 %v1692, 1.442695
        %v1706 = vpow.pop %v1705
        %v1707 = vmul.f32 %v1693, 1.442695
        %v1708 = vpow.pop %v1707
        %v1709 = vmul.f32 %v1694, 1.442695
        %v1710 = vpow.pop %v1709
        %v1711 = vsub.f32 %v1696, 1.0
        %v1712 = vsub.f32 %v1698, 1.0
        %v1713 = vsub.f32 %v1700, 1.0
        %v1714 = vsub.f32 %v1702, 1.0
        %v1715 = vsub.f32 %v1704, 1.0
        %v1716 = vsub.f32 %v1706, 1.0
        %v1717 = vsub.f32 %v1708, 1.0
        %v1718 = vsub.f32 %v1710, 1.0
        %vm1719 = vcmp.gt.f32.partialorder %v1671, 0.0
        %vm1720 = vcmp.gt.f32.partialorder %v1672, 0.0
        %vm1721 = vcmp.gt.f32.partialorder %v1673, 0.0
        %vm1722 = vcmp.gt.f32.partialorder %v1674, 0.0
        %vm1723 = vcmp.gt.f32.partialorder %v1675, 0.0
        %vm1724 = vcmp.gt.f32.partialorder %v1676, 0.0
        %vm1725 = vcmp.gt.f32.partialorder %v1677, 0.0
        %vm1726 = vcmp.gt.f32.partialorder %v1678, 0.0
        %v1727 = vsel %vm1719, %v1671, %v1711
        %v1728 = vsel %vm1720, %v1672, %v1712
        %v1729 = vsel %vm1721, %v1673, %v1713
        %v1730 = vsel %vm1722, %v1674, %v1714
        %v1731 = vsel %vm1723, %v1675, %v1715
        %v1732 = vsel %vm1724, %v1676, %v1716
        %v1733 = vsel %vm1725, %v1677, %v1717
        %v1734 = vsel %vm1726, %v1678, %v1718
        %v1735 = vsub.f32 0.0, %v1671
        %v1736 = vsub.f32 0.0, %v1672
        %v1737 = vsub.f32 0.0, %v1673
        %v1738 = vsub.f32 0.0, %v1674
        %v1739 = vsub.f32 0.0, %v1675
        %v1740 = vsub.f32 0.0, %v1676
        %v1741 = vsub.f32 0.0, %v1677
        %v1742 = vsub.f32 0.0, %v1678
        %v1743 = vsel %vm1719, %v1711, %v1735
        %v1744 = vsel %vm1720, %v1712, %v1736
        %v1745 = vsel %vm1721, %v1713, %v1737
        %v1746 = vsel %vm1722, %v1714, %v1738
        %v1747 = vsel %vm1723, %v1715, %v1739
        %v1748 = vsel %vm1724, %v1716, %v1740
        %v1749 = vsel %vm1725, %v1717, %v1741
        %v1750 = vsel %vm1726, %v1718, %v1742
        %1759 = vrot.lane.b32.xlu0 %v1743, 32
        %v1760 = vpop.permute.xlu0 %1759
        %1761 = vrot.lane.b32.xlu0 %v1744, 32
        %v1762 = vpop.permute.xlu0 %1761
        %1763 = vrot.lane.b32.xlu0 %v1745, 32
        %v1764 = vpop.permute.xlu0 %1763
        %1765 = vrot.lane.b32.xlu0 %v1746, 32
        %v1766 = vpop.permute.xlu0 %1765
        %1767 = vrot.lane.b32.xlu0 %v1747, 32
        %v1768 = vpop.permute.xlu0 %1767
        %1769 = vrot.lane.b32.xlu0 %v1748, 32
        %v1770 = vpop.permute.xlu0 %1769
        %1771 = vrot.lane.b32.xlu0 %v1749, 32
        %v1772 = vpop.permute.xlu0 %1771
        %1773 = vrot.lane.b32.xlu0 %v1750, 32
        %v1774 = vpop.permute.xlu0 %1773
        %v1783 = vsel %vm865, %v1727, %v1760
        %v1784 = vsel %vm865, %v1728, %v1762
        %v1785 = vsel %vm865, %v1729, %v1764
        %v1786 = vsel %vm865, %v1730, %v1766
        %v1787 = vsel %vm865, %v1731, %v1768
        %v1788 = vsel %vm865, %v1732, %v1770
        %v1789 = vsel %vm865, %v1733, %v1772
        %v1790 = vsel %vm865, %v1734, %v1774
        %v1791 = vrot.slane %v1783, 7
        %v1792 = vrot.slane %v1784, 7
        %v1793 = vrot.slane %v1785, 7
        %v1794 = vrot.slane %v1786, 7
        %v1795 = vrot.slane %v1787, 7
        %v1796 = vrot.slane %v1788, 7
        %v1797 = vrot.slane %v1789, 7
        %v1798 = vrot.slane %v1790, 7
        %v1799 = vsel %vm882, %v1797, %v1798
        %v1800 = vsel %vm882, %v1796, %v1797
        %v1801 = vsel %vm882, %v1795, %v1796
        %v1802 = vsel %vm882, %v1794, %v1795
        %v1803 = vsel %vm882, %v1793, %v1794
        %v1804 = vsel %vm882, %v1792, %v1793
        %v1805 = vsel %vm882, %v1791, %v1792
        %v1806 = vsel %vm882, %v1798, %v1791
        %v1807 = vmul.f32 %v1799, %v545
        %v1808 = vmul.f32 %v1806, %v546
        %v1809 = vmul.f32 %v1805, %v547
        %v1810 = vmul.f32 %v1804, %v548
        %v1811 = vmul.f32 %v1803, %v549
        %v1812 = vmul.f32 %v1802, %v550
        %v1813 = vmul.f32 %v1801, %v551
        %v1814 = vmul.f32 %v1800, %v552
        %v1815 = vpack.c.bf16 %v1808, %v1807
        %v1816 = vpack.c.bf16 %v1810, %v1809
        %v1817 = vpack.c.bf16 %v1812, %v1811
        %v1818 = vpack.c.bf16 %v1814, %v1813
        %v1819 = vld [vmem:[%s4] sm:$0xf]
        %v1820 = vld [vmem:[%s4 + $0x4] sm:$0xf]
        %v1821 = vld [vmem:[%s4 + $0x8] sm:$0xf]
        %v1822 = vld [vmem:[%s4 + $0xc] sm:$0xf]
        %v1823 = vld [vmem:[%s4 + $0x10] sm:$0xf]
        %v1824 = vld [vmem:[%s4 + $0x14] sm:$0xf]
        %v1825 = vld [vmem:[%s4 + $0x18] sm:$0xf]
        %v1826 = vld [vmem:[%s4 + $0x1c] sm:$0xf]
        %v1827 = vmul.f32 %v1790, %v593
        %v1828 = vmul.f32 %v1783, %v594
        %v1829 = vmul.f32 %v1784, %v595
        %v1830 = vmul.f32 %v1785, %v596
        %v1831 = vmul.f32 %v1786, %v597
        %v1832 = vmul.f32 %v1787, %v598
        %v1833 = vmul.f32 %v1788, %v599
        %v1834 = vmul.f32 %v1789, %v600
        %v1835 = vpack.c.bf16 %v1828, %v1827
        %v1836 = vpack.c.bf16 %v1830, %v1829
        %v1837 = vpack.c.bf16 %v1832, %v1831
        %v1838 = vpack.c.bf16 %v1834, %v1833
        %s1839 = scalar_lea.vmem %s4, 32
        %v1840 = vld [vmem:[%s1839] sm:$0xf]
        %v1841 = vld [vmem:[%s1839 + $0x4] sm:$0xf]
        %v1842 = vld [vmem:[%s1839 + $0x8] sm:$0xf]
        %v1843 = vld [vmem:[%s1839 + $0xc] sm:$0xf]
        %v1844 = vld [vmem:[%s1839 + $0x10] sm:$0xf]
        %v1845 = vld [vmem:[%s1839 + $0x14] sm:$0xf]
        %v1846 = vld [vmem:[%s1839 + $0x18] sm:$0xf]
        %v1847 = vld [vmem:[%s1839 + $0x1c] sm:$0xf]
        %v1856 = vunpack.c.l.b16 %v1840
        %v1857 = vunpack.c.l.b16 %v1841
        %v1858 = vunpack.c.l.b16 %v1842
        %v1859 = vunpack.c.l.b16 %v1843
        %v1860 = vunpack.c.l.b16 %v1844
        %v1861 = vunpack.c.l.b16 %v1845
        %v1862 = vunpack.c.l.b16 %v1846
        %v1863 = vunpack.c.l.b16 %v1847
        %v1864 = vpack.c.b16 %v1857, %v1856
        %v1865 = vpack.c.b16 %v1859, %v1858
        %v1866 = vpack.c.b16 %v1861, %v1860
        %v1867 = vpack.c.b16 %v1863, %v1862
        %v1873 = vsel %vm956, %v1835, 0
        %v1876 = vsel %vm956, %v1836, 0
        %v1879 = vsel %vm956, %v1837, 0
        %v1882 = vsel %vm956, %v1838, 0
        %1884 = vmatprep.subr.bf16.mxu0 0
        %1885 = vmatpush1.bf16.msra.mxu0 %v1864
        %1886 = vmatprep.subr.bf16.mxu0 0
        %1887 = vmatpush1.bf16.msra.mxu0 %v1865
        %1888 = vmatprep.subr.bf16.mxu0 0
        %1889 = vmatpush1.bf16.msra.mxu0 %v1866
        %1890 = vmatprep.subr.bf16.mxu0 0
        %1891 = vmatpush1.bf16.msra.mxu0 %v1867
        %1892 = vmatprep.subr.bf16.mxu0 0
        %1893 = vmatpush1.bf16.msra.mxu0 0
        %1894 = vmatprep.subr.bf16.mxu0 0
        %1895 = vmatpush1.bf16.msra.mxu0 0
        %1896 = vmatprep.subr.bf16.mxu0 0
        %1897 = vmatpush1.bf16.msra.mxu0 0
        %1898 = vmatprep.subr.bf16.mxu0 0
        %1899 = vmatpush1.bf16.msra.mxu0 0
        %1900 = vmatprep.subr.bf16.mxu0 0
        %1901 = vmatpush1.bf16.msra.mxu0 0
        %1902 = vmatprep.subr.bf16.mxu0 0
        %1903 = vmatpush1.bf16.msra.mxu0 0
        %1904 = vmatprep.subr.bf16.mxu0 0
        %1905 = vmatpush1.bf16.msra.mxu0 0
        %1906 = vmatprep.subr.bf16.mxu0 0
        %1907 = vmatpush1.bf16.msra.mxu0 0
        %1908 = vmatprep.subr.bf16.mxu0 0
        %1909 = vmatpush1.bf16.msra.mxu0 0
        %1910 = vmatprep.subr.bf16.mxu0 0
        %1911 = vmatpush1.bf16.msra.mxu0 0
        %1912 = vmatprep.subr.bf16.mxu0 0
        %1913 = vmatpush1.bf16.msra.mxu0 0
        %1914 = vmatprep.subr.bf16.mxu0 0
        %1915 = vmatpush1.bf16.msra.mxu0 0
        %1916 = vmatprep.mubr.bf16.mxu0 0
        %1917 = vmatmul.mubr.bf16.gmra.mrb[0].mxu0 %v1873
        %v1918 = vpop.f32.mrb[0].mxu0
        %v1919 = vadd.f32 0.0, %v1918
        %v1920 = vpop.f32.mrb[0].mxu0
        %v1921 = vpop.f32.mrb[0].mxu0
        %v1922 = vadd.f32 0.0, %v1921
        %v1923 = vpop.f32.mrb[0].mxu0
        %1924 = vmatprep.mubr.bf16.mxu0 0
        %1925 = vmatmul.mubr.bf16.gmra.mrb[0].mxu0 %v1876
        %v1926 = vpop.f32.mrb[0].mxu0
        %v1927 = vadd.f32 0.0, %v1926
        %v1928 = vpop.f32.mrb[0].mxu0
        %v1929 = vpop.f32.mrb[0].mxu0
        %v1930 = vadd.f32 0.0, %v1929
        %v1931 = vpop.f32.mrb[0].mxu0
        %1932 = vmatprep.mubr.bf16.mxu0 0
        %1933 = vmatmul.mubr.bf16.gmra.mrb[0].mxu0 %v1879
        %v1934 = vpop.f32.mrb[0].mxu0
        %v1935 = vadd.f32 0.0, %v1934
        %v1936 = vpop.f32.mrb[0].mxu0
        %v1937 = vpop.f32.mrb[0].mxu0
        %v1938 = vadd.f32 0.0, %v1937
        %v1939 = vpop.f32.mrb[0].mxu0
        %1940 = vmatprep.mubr.bf16.mxu0 0
        %1941 = vmatmul.mubr.bf16.gmra.mrb[0].mxu0 %v1882
        %v1942 = vpop.f32.mrb[0].mxu0
        %v1943 = vadd.f32 0.0, %v1942
        %v1944 = vpop.f32.mrb[0].mxu0
        %v1945 = vpop.f32.mrb[0].mxu0
        %v1946 = vadd.f32 0.0, %v1945
        %v1947 = vpop.f32.mrb[0].mxu0
        %1948 = vdwg.mxu0
        %v1957 = vunpack.c.l.b16 %v1819
        %v1958 = vunpack.c.l.b16 %v1820
        %v1959 = vunpack.c.l.b16 %v1821
        %v1960 = vunpack.c.l.b16 %v1822
        %v1961 = vunpack.c.l.b16 %v1823
        %v1962 = vunpack.c.l.b16 %v1824
        %v1963 = vunpack.c.l.b16 %v1825
        %v1964 = vunpack.c.l.b16 %v1826
        %v1965 = vpack.c.b16 %v1958, %v1957
        %v1966 = vpack.c.b16 %v1960, %v1959
        %v1967 = vpack.c.b16 %v1962, %v1961
        %v1968 = vpack.c.b16 %v1964, %v1963
        %v1974 = vsel %vm956, %v1815, 0
        %v1977 = vsel %vm956, %v1816, 0
        %v1980 = vsel %vm956, %v1817, 0
        %v1983 = vsel %vm956, %v1818, 0
        %1985 = vmatprep.subr.bf16.mxu0 0
        %1986 = vmatpush1.bf16.msra.mxu0 %v1965
        %1987 = vmatprep.subr.bf16.mxu0 0
        %1988 = vmatpush1.bf16.msra.mxu0 %v1966
        %1989 = vmatprep.subr.bf16.mxu0 0
        %1990 = vmatpush1.bf16.msra.mxu0 %v1967
        %1991 = vmatprep.subr.bf16.mxu0 0
        %1992 = vmatpush1.bf16.msra.mxu0 %v1968
        %1993 = vmatprep.subr.bf16.mxu0 0
        %1994 = vmatpush1.bf16.msra.mxu0 0
        %1995 = vmatprep.subr.bf16.mxu0 0
        %1996 = vmatpush1.bf16.msra.mxu0 0
        %1997 = vmatprep.subr.bf16.mxu0 0
        %1998 = vmatpush1.bf16.msra.mxu0 0
        %1999 = vmatprep.subr.bf16.mxu0 0
        %2000 = vmatpush1.bf16.msra.mxu0 0
        %2001 = vmatprep.subr.bf16.mxu0 0
        %2002 = vmatpush1.bf16.msra.mxu0 0
        %2003 = vmatprep.subr.bf16.mxu0 0
        %2004 = vmatpush1.bf16.msra.mxu0 0
        %2005 = vmatprep.subr.bf16.mxu0 0
        %2006 = vmatpush1.bf16.msra.mxu0 0
        %2007 = vmatprep.subr.bf16.mxu0 0
        %2008 = vmatpush1.bf16.msra.mxu0 0
        %2009 = vmatprep.subr.bf16.mxu0 0
        %2010 = vmatpush1.bf16.msra.mxu0 0
        %2011 = vmatprep.subr.bf16.mxu0 0
        %2012 = vmatpush1.bf16.msra.mxu0 0
        %2013 = vmatprep.subr.bf16.mxu0 0
        %2014 = vmatpush1.bf16.msra.mxu0 0
        %2015 = vmatprep.subr.bf16.mxu0 0
        %2016 = vmatpush1.bf16.msra.mxu0 0
        %2017 = vmatprep.mubr.bf16.mxu0 0
        %2018 = vmatmul.mubr.bf16.gmra.mrb[0].mxu0 %v1974
        %v2019 = vpop.f32.mrb[0].mxu0
        %v2020 = vadd.f32 %v1919, %v2019
        %v2021 = vpop.f32.mrb[0].mxu0
        %v2022 = vpop.f32.mrb[0].mxu0
        %v2023 = vadd.f32 %v1922, %v2022
        %v2024 = vpop.f32.mrb[0].mxu0
        %2025 = vmatprep.mubr.bf16.mxu0 0
        %2026 = vmatmul.mubr.bf16.gmra.mrb[0].mxu0 %v1977
        %v2027 = vpop.f32.mrb[0].mxu0
        %v2028 = vadd.f32 %v1927, %v2027
        %v2029 = vpop.f32.mrb[0].mxu0
        %v2030 = vpop.f32.mrb[0].mxu0
        %v2031 = vadd.f32 %v1930, %v2030
        %v2032 = vpop.f32.mrb[0].mxu0
        %2033 = vmatprep.mubr.bf16.mxu0 0
        %2034 = vmatmul.mubr.bf16.gmra.mrb[0].mxu0 %v1980
        %v2035 = vpop.f32.mrb[0].mxu0
        %v2036 = vadd.f32 %v1935, %v2035
        %v2037 = vpop.f32.mrb[0].mxu0
        %v2038 = vpop.f32.mrb[0].mxu0
        %v2039 = vadd.f32 %v1938, %v2038
        %v2040 = vpop.f32.mrb[0].mxu0
        %2041 = vmatprep.mubr.bf16.mxu0 0
        %2042 = vmatmul.mubr.bf16.gmra.mrb[0].mxu0 %v1983
        %v2043 = vpop.f32.mrb[0].mxu0
        %v2044 = vadd.f32 %v1943, %v2043
        %v2045 = vpop.f32.mrb[0].mxu0
        %v2046 = vpop.f32.mrb[0].mxu0
        %v2047 = vadd.f32 %v1946, %v2046
        %v2048 = vpop.f32.mrb[0].mxu0
        %2049 = vdwg.mxu0
        %v2050 = vrot.slane %v1783, 1
        %v2051 = vrot.slane %v1784, 1
        %v2052 = vrot.slane %v1785, 1
        %v2053 = vrot.slane %v1786, 1
        %v2054 = vrot.slane %v1787, 1
        %v2055 = vrot.slane %v1788, 1
        %v2056 = vrot.slane %v1789, 1
        %v2057 = vrot.slane %v1790, 1
        %v2058 = vsel %vm1143, %v2056, %v2057
        %v2059 = vsel %vm1143, %v2055, %v2056
        %v2060 = vsel %vm1143, %v2054, %v2055
        %v2061 = vsel %vm1143, %v2053, %v2054
        %v2062 = vsel %vm1143, %v2052, %v2053
        %v2063 = vsel %vm1143, %v2051, %v2052
        %v2064 = vsel %vm1143, %v2050, %v2051
        %v2065 = vsel %vm1143, %v2057, %v2050
        %v2066 = vmul.f32 %v2065, %v649
        %v2067 = vmul.f32 %v2064, %v650
        %v2068 = vmul.f32 %v2063, %v651
        %v2069 = vmul.f32 %v2062, %v652
        %v2070 = vmul.f32 %v2061, %v653
        %v2071 = vmul.f32 %v2060, %v654
        %v2072 = vmul.f32 %v2059, %v655
        %v2073 = vmul.f32 %v2058, %v656
        %v2074 = vpack.c.bf16 %v2067, %v2066
        %v2075 = vpack.c.bf16 %v2069, %v2068
        %v2076 = vpack.c.bf16 %v2071, %v2070
        %v2077 = vpack.c.bf16 %v2073, %v2072
        %s2078 = scalar_lea.vmem %s4, 64
        %v2079 = vld [vmem:[%s2078] sm:$0xf]
        %v2080 = vld [vmem:[%s2078 + $0x4] sm:$0xf]
        %v2081 = vld [vmem:[%s2078 + $0x8] sm:$0xf]
        %v2082 = vld [vmem:[%s2078 + $0xc] sm:$0xf]
        %v2083 = vld [vmem:[%s2078 + $0x10] sm:$0xf]
        %v2084 = vld [vmem:[%s2078 + $0x14] sm:$0xf]
        %v2085 = vld [vmem:[%s2078 + $0x18] sm:$0xf]
        %v2086 = vld [vmem:[%s2078 + $0x1c] sm:$0xf]
        %v2095 = vunpack.c.l.b16 %v2079
        %v2096 = vunpack.c.l.b16 %v2080
        %v2097 = vunpack.c.l.b16 %v2081
        %v2098 = vunpack.c.l.b16 %v2082
        %v2099 = vunpack.c.l.b16 %v2083
        %v2100 = vunpack.c.l.b16 %v2084
        %v2101 = vunpack.c.l.b16 %v2085
        %v2102 = vunpack.c.l.b16 %v2086
        %v2103 = vpack.c.b16 %v2096, %v2095
        %v2104 = vpack.c.b16 %v2098, %v2097
        %v2105 = vpack.c.b16 %v2100, %v2099
        %v2106 = vpack.c.b16 %v2102, %v2101
        %v2112 = vsel %vm956, %v2074, 0
        %v2115 = vsel %vm956, %v2075, 0
        %v2118 = vsel %vm956, %v2076, 0
        %v2121 = vsel %vm956, %v2077, 0
        %2123 = vmatprep.subr.bf16.mxu0 0
        %2124 = vmatpush1.bf16.msra.mxu0 %v2103
        %2125 = vmatprep.subr.bf16.mxu0 0
        %2126 = vmatpush1.bf16.msra.mxu0 %v2104
        %2127 = vmatprep.subr.bf16.mxu0 0
        %2128 = vmatpush1.bf16.msra.mxu0 %v2105
        %2129 = vmatprep.subr.bf16.mxu0 0
        %2130 = vmatpush1.bf16.msra.mxu0 %v2106
        %2131 = vmatprep.subr.bf16.mxu0 0
        %2132 = vmatpush1.bf16.msra.mxu0 0
        %2133 = vmatprep.subr.bf16.mxu0 0
        %2134 = vmatpush1.bf16.msra.mxu0 0
        %2135 = vmatprep.subr.bf16.mxu0 0
        %2136 = vmatpush1.bf16.msra.mxu0 0
        %2137 = vmatprep.subr.bf16.mxu0 0
        %2138 = vmatpush1.bf16.msra.mxu0 0
        %2139 = vmatprep.subr.bf16.mxu0 0
        %2140 = vmatpush1.bf16.msra.mxu0 0
        %2141 = vmatprep.subr.bf16.mxu0 0
        %2142 = vmatpush1.bf16.msra.mxu0 0
        %2143 = vmatprep.subr.bf16.mxu0 0
        %2144 = vmatpush1.bf16.msra.mxu0 0
        %2145 = vmatprep.subr.bf16.mxu0 0
        %2146 = vmatpush1.bf16.msra.mxu0 0
        %2147 = vmatprep.subr.bf16.mxu0 0
        %2148 = vmatpush1.bf16.msra.mxu0 0
        %2149 = vmatprep.subr.bf16.mxu0 0
        %2150 = vmatpush1.bf16.msra.mxu0 0
        %2151 = vmatprep.subr.bf16.mxu0 0
        %2152 = vmatpush1.bf16.msra.mxu0 0
        %2153 = vmatprep.subr.bf16.mxu0 0
        %2154 = vmatpush1.bf16.msra.mxu0 0
        %2155 = vmatprep.mubr.bf16.mxu0 0
        %2156 = vmatmul.mubr.bf16.gmra.mrb[0].mxu0 %v2112
        %v2157 = vpop.f32.mrb[0].mxu0
        %v2158 = vadd.f32 0.0, %v2157
        %v2159 = vpop.f32.mrb[0].mxu0
        %v2160 = vpop.f32.mrb[0].mxu0
        %v2161 = vadd.f32 0.0, %v2160
        %v2162 = vpop.f32.mrb[0].mxu0
        %2163 = vmatprep.mubr.bf16.mxu0 0
        %2164 = vmatmul.mubr.bf16.gmra.mrb[0].mxu0 %v2115
        %v2165 = vpop.f32.mrb[0].mxu0
        %v2166 = vadd.f32 0.0, %v2165
        %v2167 = vpop.f32.mrb[0].mxu0
        %v2168 = vpop.f32.mrb[0].mxu0
        %v2169 = vadd.f32 0.0, %v2168
        %v2170 = vpop.f32.mrb[0].mxu0
        %2171 = vmatprep.mubr.bf16.mxu0 0
        %2172 = vmatmul.mubr.bf16.gmra.mrb[0].mxu0 %v2118
        %v2173 = vpop.f32.mrb[0].mxu0
        %v2174 = vadd.f32 0.0, %v2173
        %v2175 = vpop.f32.mrb[0].mxu0
        %v2176 = vpop.f32.mrb[0].mxu0
        %v2177 = vadd.f32 0.0, %v2176
        %v2178 = vpop.f32.mrb[0].mxu0
        %2179 = vmatprep.mubr.bf16.mxu0 0
        %2180 = vmatmul.mubr.bf16.gmra.mrb[0].mxu0 %v2121
        %v2181 = vpop.f32.mrb[0].mxu0
        %v2182 = vadd.f32 0.0, %v2181
        %v2183 = vpop.f32.mrb[0].mxu0
        %v2184 = vpop.f32.mrb[0].mxu0
        %v2185 = vadd.f32 0.0, %v2184
        %v2186 = vpop.f32.mrb[0].mxu0
        %2187 = vdwg.mxu0
        %v2188 = vadd.f32 %v2020, %v2158
        %v2189 = vadd.f32 %v2023, %v2161
        %v2190 = vadd.f32 %v2028, %v2166
        %v2191 = vadd.f32 %v2031, %v2169
        %v2192 = vadd.f32 %v2036, %v2174
        %v2193 = vadd.f32 %v2039, %v2177
        %v2194 = vadd.f32 %v2044, %v2182
        %v2195 = vadd.f32 %v2047, %v2185
        %v2196 = vmul.f32 %v1806, %v705
        %v2197 = vmul.f32 %v1805, %v706
        %v2198 = vmul.f32 %v1804, %v707
        %v2199 = vmul.f32 %v1803, %v708
        %v2200 = vmul.f32 %v1802, %v709
        %v2201 = vmul.f32 %v1801, %v710
        %v2202 = vmul.f32 %v1800, %v711
        %v2203 = vmul.f32 %v1799, %v712
        %v2204 = vpack.c.bf16 %v2197, %v2196
        %v2205 = vpack.c.bf16 %v2199, %v2198
        %v2206 = vpack.c.bf16 %v2201, %v2200
        %v2207 = vpack.c.bf16 %v2203, %v2202
        %s2208 = scalar_lea.vmem %s4, 96
        %v2209 = vld [vmem:[%s2208] sm:$0xf]
        %v2210 = vld [vmem:[%s2208 + $0x4] sm:$0xf]
        %v2211 = vld [vmem:[%s2208 + $0x8] sm:$0xf]
        %v2212 = vld [vmem:[%s2208 + $0xc] sm:$0xf]
        %v2213 = vld [vmem:[%s2208 + $0x10] sm:$0xf]
        %v2214 = vld [vmem:[%s2208 + $0x14] sm:$0xf]
        %v2215 = vld [vmem:[%s2208 + $0x18] sm:$0xf]
        %v2216 = vld [vmem:[%s2208 + $0x1c] sm:$0xf]
        %v2225 = vunpack.c.l.b16 %v2209
        %v2226 = vunpack.c.l.b16 %v2210
        %v2227 = vunpack.c.l.b16 %v2211
        %v2228 = vunpack.c.l.b16 %v2212
        %v2229 = vunpack.c.l.b16 %v2213
        %v2230 = vunpack.c.l.b16 %v2214
        %v2231 = vunpack.c.l.b16 %v2215
        %v2232 = vunpack.c.l.b16 %v2216
        %v2233 = vpack.c.b16 %v2226, %v2225
        %v2234 = vpack.c.b16 %v2228, %v2227
        %v2235 = vpack.c.b16 %v2230, %v2229
        %v2236 = vpack.c.b16 %v2232, %v2231
        %v2242 = vsel %vm956, %v2204, 0
        %v2245 = vsel %vm956, %v2205, 0
        %v2248 = vsel %vm956, %v2206, 0
        %v2251 = vsel %vm956, %v2207, 0
        %2253 = vmatprep.subr.bf16.mxu0 0
        %2254 = vmatpush1.bf16.msra.mxu0 %v2233
        %2255 = vmatprep.subr.bf16.mxu0 0
        %2256 = vmatpush1.bf16.msra.mxu0 %v2234
        %2257 = vmatprep.subr.bf16.mxu0 0
        %2258 = vmatpush1.bf16.msra.mxu0 %v2235
        %2259 = vmatprep.subr.bf16.mxu0 0
        %2260 = vmatpush1.bf16.msra.mxu0 %v2236
        %2261 = vmatprep.subr.bf16.mxu0 0
        %2262 = vmatpush1.bf16.msra.mxu0 0
        %2263 = vmatprep.subr.bf16.mxu0 0
        %2264 = vmatpush1.bf16.msra.mxu0 0
        %2265 = vmatprep.subr.bf16.mxu0 0
        %2266 = vmatpush1.bf16.msra.mxu0 0
        %2267 = vmatprep.subr.bf16.mxu0 0
        %2268 = vmatpush1.bf16.msra.mxu0 0
        %2269 = vmatprep.subr.bf16.mxu0 0
        %2270 = vmatpush1.bf16.msra.mxu0 0
        %2271 = vmatprep.subr.bf16.mxu0 0
        %2272 = vmatpush1.bf16.msra.mxu0 0
        %2273 = vmatprep.subr.bf16.mxu0 0
        %2274 = vmatpush1.bf16.msra.mxu0 0
        %2275 = vmatprep.subr.bf16.mxu0 0
        %2276 = vmatpush1.bf16.msra.mxu0 0
        %2277 = vmatprep.subr.bf16.mxu0 0
        %2278 = vmatpush1.bf16.msra.mxu0 0
        %2279 = vmatprep.subr.bf16.mxu0 0
        %2280 = vmatpush1.bf16.msra.mxu0 0
        %2281 = vmatprep.subr.bf16.mxu0 0
        %2282 = vmatpush1.bf16.msra.mxu0 0
        %2283 = vmatprep.subr.bf16.mxu0 0
        %2284 = vmatpush1.bf16.msra.mxu0 0
        %2285 = vmatprep.mubr.bf16.mxu0 0
        %2286 = vmatmul.mubr.bf16.gmra.mrb[0].mxu0 %v2242
        %v2287 = vpop.f32.mrb[0].mxu0
        %v2288 = vadd.f32 0.0, %v2287
        %v2289 = vpop.f32.mrb[0].mxu0
        %v2290 = vpop.f32.mrb[0].mxu0
        %v2291 = vadd.f32 0.0, %v2290
        %v2292 = vpop.f32.mrb[0].mxu0
        %2293 = vmatprep.mubr.bf16.mxu0 0
        %2294 = vmatmul.mubr.bf16.gmra.mrb[0].mxu0 %v2245
        %v2295 = vpop.f32.mrb[0].mxu0
        %v2296 = vadd.f32 0.0, %v2295
        %v2297 = vpop.f32.mrb[0].mxu0
        %v2298 = vpop.f32.mrb[0].mxu0
        %v2299 = vadd.f32 0.0, %v2298
        %v2300 = vpop.f32.mrb[0].mxu0
        %2301 = vmatprep.mubr.bf16.mxu0 0
        %2302 = vmatmul.mubr.bf16.gmra.mrb[0].mxu0 %v2248
        %v2303 = vpop.f32.mrb[0].mxu0
        %v2304 = vadd.f32 0.0, %v2303
        %v2305 = vpop.f32.mrb[0].mxu0
        %v2306 = vpop.f32.mrb[0].mxu0
        %v2307 = vadd.f32 0.0, %v2306
        %v2308 = vpop.f32.mrb[0].mxu0
        %2309 = vmatprep.mubr.bf16.mxu0 0
        %2310 = vmatmul.mubr.bf16.gmra.mrb[0].mxu0 %v2251
        %v2311 = vpop.f32.mrb[0].mxu0
        %v2312 = vadd.f32 0.0, %v2311
        %v2313 = vpop.f32.mrb[0].mxu0
        %v2314 = vpop.f32.mrb[0].mxu0
        %v2315 = vadd.f32 0.0, %v2314
        %v2316 = vpop.f32.mrb[0].mxu0
        %2317 = vdwg.mxu0
        %v2318 = vadd.f32 %v2188, %v2288
        %v2319 = vadd.f32 %v2189, %v2291
        %v2320 = vadd.f32 %v2190, %v2296
        %v2321 = vadd.f32 %v2191, %v2299
        %v2322 = vadd.f32 %v2192, %v2304
        %v2323 = vadd.f32 %v2193, %v2307
        %v2324 = vadd.f32 %v2194, %v2312
        %v2325 = vadd.f32 %v2195, %v2315
        %v2326 = vpack.c.bf16 %v1784, %v1783
        %v2327 = vpack.c.bf16 %v1786, %v1785
        %v2328 = vpack.c.bf16 %v1788, %v1787
        %v2329 = vpack.c.bf16 %v1790, %v1789
        %s2330 = scalar_lea.vmem %s4, 128
        %v2331 = vld [vmem:[%s2330] sm:$0xf]
        %v2332 = vld [vmem:[%s2330 + $0x4] sm:$0xf]
        %v2333 = vld [vmem:[%s2330 + $0x8] sm:$0xf]
        %v2334 = vld [vmem:[%s2330 + $0xc] sm:$0xf]
        %v2335 = vld [vmem:[%s2330 + $0x10] sm:$0xf]
        %v2336 = vld [vmem:[%s2330 + $0x14] sm:$0xf]
        %v2337 = vld [vmem:[%s2330 + $0x18] sm:$0xf]
        %v2338 = vld [vmem:[%s2330 + $0x1c] sm:$0xf]
        %v2347 = vunpack.c.l.b16 %v2331
        %v2348 = vunpack.c.l.b16 %v2332
        %v2349 = vunpack.c.l.b16 %v2333
        %v2350 = vunpack.c.l.b16 %v2334
        %v2351 = vunpack.c.l.b16 %v2335
        %v2352 = vunpack.c.l.b16 %v2336
        %v2353 = vunpack.c.l.b16 %v2337
        %v2354 = vunpack.c.l.b16 %v2338
        %v2355 = vpack.c.b16 %v2348, %v2347
        %v2356 = vpack.c.b16 %v2350, %v2349
        %v2357 = vpack.c.b16 %v2352, %v2351
        %v2358 = vpack.c.b16 %v2354, %v2353
        %v2364 = vsel %vm956, %v2326, 0
        %v2367 = vsel %vm956, %v2327, 0
        %v2370 = vsel %vm956, %v2328, 0
        %v2373 = vsel %vm956, %v2329, 0
        %2375 = vmatprep.subr.bf16.mxu0 0
        %2376 = vmatpush1.bf16.msra.mxu0 %v2355
        %2377 = vmatprep.subr.bf16.mxu0 0
        %2378 = vmatpush1.bf16.msra.mxu0 %v2356
        %2379 = vmatprep.subr.bf16.mxu0 0
        %2380 = vmatpush1.bf16.msra.mxu0 %v2357
        %2381 = vmatprep.subr.bf16.mxu0 0
        %2382 = vmatpush1.bf16.msra.mxu0 %v2358
        %2383 = vmatprep.subr.bf16.mxu0 0
        %2384 = vmatpush1.bf16.msra.mxu0 0
        %2385 = vmatprep.subr.bf16.mxu0 0
        %2386 = vmatpush1.bf16.msra.mxu0 0
        %2387 = vmatprep.subr.bf16.mxu0 0
        %2388 = vmatpush1.bf16.msra.mxu0 0
        %2389 = vmatprep.subr.bf16.mxu0 0
        %2390 = vmatpush1.bf16.msra.mxu0 0
        %2391 = vmatprep.subr.bf16.mxu0 0
        %2392 = vmatpush1.bf16.msra.mxu0 0
        %2393 = vmatprep.subr.bf16.mxu0 0
        %2394 = vmatpush1.bf16.msra.mxu0 0
        %2395 = vmatprep.subr.bf16.mxu0 0
        %2396 = vmatpush1.bf16.msra.mxu0 0
        %2397 = vmatprep.subr.bf16.mxu0 0
        %2398 = vmatpush1.bf16.msra.mxu0 0
        %2399 = vmatprep.subr.bf16.mxu0 0
        %2400 = vmatpush1.bf16.msra.mxu0 0
        %2401 = vmatprep.subr.bf16.mxu0 0
        %2402 = vmatpush1.bf16.msra.mxu0 0
        %2403 = vmatprep.subr.bf16.mxu0 0
        %2404 = vmatpush1.bf16.msra.mxu0 0
        %2405 = vmatprep.subr.bf16.mxu0 0
        %2406 = vmatpush1.bf16.msra.mxu0 0
        %2407 = vmatprep.mubr.bf16.mxu0 0
        %2408 = vmatmul.mubr.bf16.gmra.mrb[0].mxu0 %v2364
        %v2409 = vpop.f32.mrb[0].mxu0
        %v2410 = vadd.f32 0.0, %v2409
        %v2411 = vpop.f32.mrb[0].mxu0
        %v2412 = vpop.f32.mrb[0].mxu0
        %v2413 = vadd.f32 0.0, %v2412
        %v2414 = vpop.f32.mrb[0].mxu0
        %2415 = vmatprep.mubr.bf16.mxu0 0
        %2416 = vmatmul.mubr.bf16.gmra.mrb[0].mxu0 %v2367
        %v2417 = vpop.f32.mrb[0].mxu0
        %v2418 = vadd.f32 0.0, %v2417
        %v2419 = vpop.f32.mrb[0].mxu0
        %v2420 = vpop.f32.mrb[0].mxu0
        %v2421 = vadd.f32 0.0, %v2420
        %v2422 = vpop.f32.mrb[0].mxu0
        %2423 = vmatprep.mubr.bf16.mxu0 0
        %2424 = vmatmul.mubr.bf16.gmra.mrb[0].mxu0 %v2370
        %v2425 = vpop.f32.mrb[0].mxu0
        %v2426 = vadd.f32 0.0, %v2425
        %v2427 = vpop.f32.mrb[0].mxu0
        %v2428 = vpop.f32.mrb[0].mxu0
        %v2429 = vadd.f32 0.0, %v2428
        %v2430 = vpop.f32.mrb[0].mxu0
        %2431 = vmatprep.mubr.bf16.mxu0 0
        %2432 = vmatmul.mubr.bf16.gmra.mrb[0].mxu0 %v2373
        %v2433 = vpop.f32.mrb[0].mxu0
        %v2434 = vadd.f32 0.0, %v2433
        %v2435 = vpop.f32.mrb[0].mxu0
        %v2436 = vpop.f32.mrb[0].mxu0
        %v2437 = vadd.f32 0.0, %v2436
        %v2438 = vpop.f32.mrb[0].mxu0
        %2439 = vdwg.mxu0
        %v2440 = vadd.f32 %v2318, %v2410
        %v2441 = vadd.f32 %v2319, %v2413
        %v2442 = vadd.f32 %v2320, %v2418
        %v2443 = vadd.f32 %v2321, %v2421
        %v2444 = vadd.f32 %v2322, %v2426
        %v2445 = vadd.f32 %v2323, %v2429
        %v2446 = vadd.f32 %v2324, %v2434
        %v2447 = vadd.f32 %v2325, %v2437
        %v2448 = vmul.f32 %v2064, %v737
        %v2449 = vmul.f32 %v2063, %v738
        %v2450 = vmul.f32 %v2062, %v739
        %v2451 = vmul.f32 %v2061, %v740
        %v2452 = vmul.f32 %v2060, %v741
        %v2453 = vmul.f32 %v2059, %v742
        %v2454 = vmul.f32 %v2058, %v743
        %v2455 = vmul.f32 %v2065, %v744
        %v2456 = vpack.c.bf16 %v2449, %v2448
        %v2457 = vpack.c.bf16 %v2451, %v2450
        %v2458 = vpack.c.bf16 %v2453, %v2452
        %v2459 = vpack.c.bf16 %v2455, %v2454
        %s2460 = scalar_lea.vmem %s4, 160
        %v2461 = vld [vmem:[%s2460] sm:$0xf]
        %v2462 = vld [vmem:[%s2460 + $0x4] sm:$0xf]
        %v2463 = vld [vmem:[%s2460 + $0x8] sm:$0xf]
        %v2464 = vld [vmem:[%s2460 + $0xc] sm:$0xf]
        %v2465 = vld [vmem:[%s2460 + $0x10] sm:$0xf]
        %v2466 = vld [vmem:[%s2460 + $0x14] sm:$0xf]
        %v2467 = vld [vmem:[%s2460 + $0x18] sm:$0xf]
        %v2468 = vld [vmem:[%s2460 + $0x1c] sm:$0xf]
        %v2477 = vunpack.c.l.b16 %v2461
        %v2478 = vunpack.c.l.b16 %v2462
        %v2479 = vunpack.c.l.b16 %v2463
        %v2480 = vunpack.c.l.b16 %v2464
        %v2481 = vunpack.c.l.b16 %v2465
        %v2482 = vunpack.c.l.b16 %v2466
        %v2483 = vunpack.c.l.b16 %v2467
        %v2484 = vunpack.c.l.b16 %v2468
        %v2485 = vpack.c.b16 %v2478, %v2477
        %v2486 = vpack.c.b16 %v2480, %v2479
        %v2487 = vpack.c.b16 %v2482, %v2481
        %v2488 = vpack.c.b16 %v2484, %v2483
        %v2494 = vsel %vm956, %v2456, 0
        %v2497 = vsel %vm956, %v2457, 0
        %v2500 = vsel %vm956, %v2458, 0
        %v2503 = vsel %vm956, %v2459, 0
        %2505 = vmatprep.subr.bf16.mxu0 0
        %2506 = vmatpush1.bf16.msra.mxu0 %v2485
        %2507 = vmatprep.subr.bf16.mxu0 0
        %2508 = vmatpush1.bf16.msra.mxu0 %v2486
        %2509 = vmatprep.subr.bf16.mxu0 0
        %2510 = vmatpush1.bf16.msra.mxu0 %v2487
        %2511 = vmatprep.subr.bf16.mxu0 0
        %2512 = vmatpush1.bf16.msra.mxu0 %v2488
        %2513 = vmatprep.subr.bf16.mxu0 0
        %2514 = vmatpush1.bf16.msra.mxu0 0
        %2515 = vmatprep.subr.bf16.mxu0 0
        %2516 = vmatpush1.bf16.msra.mxu0 0
        %2517 = vmatprep.subr.bf16.mxu0 0
        %2518 = vmatpush1.bf16.msra.mxu0 0
        %2519 = vmatprep.subr.bf16.mxu0 0
        %2520 = vmatpush1.bf16.msra.mxu0 0
        %2521 = vmatprep.subr.bf16.mxu0 0
        %2522 = vmatpush1.bf16.msra.mxu0 0
        %2523 = vmatprep.subr.bf16.mxu0 0
        %2524 = vmatpush1.bf16.msra.mxu0 0
        %2525 = vmatprep.subr.bf16.mxu0 0
        %2526 = vmatpush1.bf16.msra.mxu0 0
        %2527 = vmatprep.subr.bf16.mxu0 0
        %2528 = vmatpush1.bf16.msra.mxu0 0
        %2529 = vmatprep.subr.bf16.mxu0 0
        %2530 = vmatpush1.bf16.msra.mxu0 0
        %2531 = vmatprep.subr.bf16.mxu0 0
        %2532 = vmatpush1.bf16.msra.mxu0 0
        %2533 = vmatprep.subr.bf16.mxu0 0
        %2534 = vmatpush1.bf16.msra.mxu0 0
        %2535 = vmatprep.subr.bf16.mxu0 0
        %2536 = vmatpush1.bf16.msra.mxu0 0
        %2537 = vmatprep.mubr.bf16.mxu0 0
        %2538 = vmatmul.mubr.bf16.gmra.mrb[0].mxu0 %v2494
        %v2539 = vpop.f32.mrb[0].mxu0
        %v2540 = vadd.f32 0.0, %v2539
        %v2541 = vpop.f32.mrb[0].mxu0
        %v2542 = vpop.f32.mrb[0].mxu0
        %v2543 = vadd.f32 0.0, %v2542
        %v2544 = vpop.f32.mrb[0].mxu0
        %2545 = vmatprep.mubr.bf16.mxu0 0
        %2546 = vmatmul.mubr.bf16.gmra.mrb[0].mxu0 %v2497
        %v2547 = vpop.f32.mrb[0].mxu0
        %v2548 = vadd.f32 0.0, %v2547
        %v2549 = vpop.f32.mrb[0].mxu0
        %v2550 = vpop.f32.mrb[0].mxu0
        %v2551 = vadd.f32 0.0, %v2550
        %v2552 = vpop.f32.mrb[0].mxu0
        %2553 = vmatprep.mubr.bf16.mxu0 0
        %2554 = vmatmul.mubr.bf16.gmra.mrb[0].mxu0 %v2500
        %v2555 = vpop.f32.mrb[0].mxu0
        %v2556 = vadd.f32 0.0, %v2555
        %v2557 = vpop.f32.mrb[0].mxu0
        %v2558 = vpop.f32.mrb[0].mxu0
        %v2559 = vadd.f32 0.0, %v2558
        %v2560 = vpop.f32.mrb[0].mxu0
        %2561 = vmatprep.mubr.bf16.mxu0 0
        %2562 = vmatmul.mubr.bf16.gmra.mrb[0].mxu0 %v2503
        %v2563 = vpop.f32.mrb[0].mxu0
        %v2564 = vadd.f32 0.0, %v2563
        %v2565 = vpop.f32.mrb[0].mxu0
        %v2566 = vpop.f32.mrb[0].mxu0
        %v2567 = vadd.f32 0.0, %v2566
        %v2568 = vpop.f32.mrb[0].mxu0
        %2569 = vdwg.mxu0
        %v2570 = vadd.f32 %v2440, %v2540
        %v2571 = vadd.f32 %v2441, %v2543
        %v2572 = vadd.f32 %v2442, %v2548
        %v2573 = vadd.f32 %v2443, %v2551
        %v2574 = vadd.f32 %v2444, %v2556
        %v2575 = vadd.f32 %v2445, %v2559
        %v2576 = vadd.f32 %v2446, %v2564
        %v2577 = vadd.f32 %v2447, %v2567
        %v2578 = vld [vmem:[%s5] sm:$0x1]
        %v2580 = vlaneseq
        %v2581 = vshrl.u32 %v2580, 7
        %v2582 = vsub.s32 0, %v2581
        %v2583 = vrot.slane %v2578, %v2582
        %v2585 = vadd.f32 %v2570, %v2583
        %v2586 = vadd.f32 %v2571, %v2583
        %v2587 = vadd.f32 %v2572, %v2583
        %v2588 = vadd.f32 %v2573, %v2583
        %v2589 = vadd.f32 %v2574, %v2583
        %v2590 = vadd.f32 %v2575, %v2583
        %v2591 = vadd.f32 %v2576, %v2583
        %v2592 = vadd.f32 %v2577, %v2583
        %v2593 = vsub.f32 0.0, %v2585
        %v2594 = vsub.f32 0.0, %v2586
        %v2595 = vsub.f32 0.0, %v2587
        %v2596 = vsub.f32 0.0, %v2588
        %v2597 = vsub.f32 0.0, %v2589
        %v2598 = vsub.f32 0.0, %v2590
        %v2599 = vsub.f32 0.0, %v2591
        %v2600 = vsub.f32 0.0, %v2592
        %v2601 = vmul.f32 %v2593, 1.442695
        %v2602 = vpow.pop %v2601
        %v2603 = vmul.f32 %v2594, 1.442695
        %v2604 = vpow.pop %v2603
        %v2605 = vmul.f32 %v2595, 1.442695
        %v2606 = vpow.pop %v2605
        %v2607 = vmul.f32 %v2596, 1.442695
        %v2608 = vpow.pop %v2607
        %v2609 = vmul.f32 %v2597, 1.442695
        %v2610 = vpow.pop %v2609
        %v2611 = vmul.f32 %v2598, 1.442695
        %v2612 = vpow.pop %v2611
        %v2613 = vmul.f32 %v2599, 1.442695
        %v2614 = vpow.pop %v2613
        %v2615 = vmul.f32 %v2600, 1.442695
        %v2616 = vpow.pop %v2615
        %v2617 = vadd.f32 %v2602, 1.0
        %v2618 = vadd.f32 %v2604, 1.0
        %v2619 = vadd.f32 %v2606, 1.0
        %v2620 = vadd.f32 %v2608, 1.0
        %v2621 = vadd.f32 %v2610, 1.0
        %v2622 = vadd.f32 %v2612, 1.0
        %v2623 = vadd.f32 %v2614, 1.0
        %v2624 = vadd.f32 %v2616, 1.0
        %v2625 = vrcp.pop %v2617
        %v2626 = vrcp.pop %v2618
        %v2627 = vrcp.pop %v2619
        %v2628 = vrcp.pop %v2620
        %v2629 = vrcp.pop %v2621
        %v2630 = vrcp.pop %v2622
        %v2631 = vrcp.pop %v2623
        %v2632 = vrcp.pop %v2624
        %2641 = vrot.lane.b32.xlu0 %v2625, 96
        %v2642 = vpop.permute.xlu0 %2641
        %2643 = vrot.lane.b32.xlu0 %v2626, 96
        %v2644 = vpop.permute.xlu0 %2643
        %2645 = vrot.lane.b32.xlu0 %v2627, 96
        %v2646 = vpop.permute.xlu0 %2645
        %2647 = vrot.lane.b32.xlu0 %v2628, 96
        %v2648 = vpop.permute.xlu0 %2647
        %2649 = vrot.lane.b32.xlu0 %v2629, 96
        %v2650 = vpop.permute.xlu0 %2649
        %2651 = vrot.lane.b32.xlu0 %v2630, 96
        %v2652 = vpop.permute.xlu0 %2651
        %2653 = vrot.lane.b32.xlu0 %v2631, 96
        %v2654 = vpop.permute.xlu0 %2653
        %2655 = vrot.lane.b32.xlu0 %v2632, 96
        %v2656 = vpop.permute.xlu0 %2655
        %v2665 = vmul.f32 %v2585, %v2642
        %v2666 = vmul.f32 %v2586, %v2644
        %v2667 = vmul.f32 %v2587, %v2646
        %v2668 = vmul.f32 %v2588, %v2648
        %v2669 = vmul.f32 %v2589, %v2650
        %v2670 = vmul.f32 %v2590, %v2652
        %v2671 = vmul.f32 %v2591, %v2654
        %v2672 = vmul.f32 %v2592, %v2656
        %v2673 = vadd.f32 %v745, %v2665
        %v2674 = vadd.f32 %v746, %v2666
        %v2675 = vadd.f32 %v747, %v2667
        %v2676 = vadd.f32 %v748, %v2668
        %v2677 = vadd.f32 %v749, %v2669
        %v2678 = vadd.f32 %v750, %v2670
        %v2679 = vadd.f32 %v751, %v2671
        %v2680 = vadd.f32 %v752, %v2672
        %v2681 = vand.u32 2147483647, %v2673
        %v2682 = vand.u32 2147483647, %v2674
        %v2683 = vand.u32 2147483647, %v2675
        %v2684 = vand.u32 2147483647, %v2676
        %v2685 = vand.u32 2147483647, %v2677
        %v2686 = vand.u32 2147483647, %v2678
        %v2687 = vand.u32 2147483647, %v2679
        %v2688 = vand.u32 2147483647, %v2680
        %v2689 = vsub.f32 0.0, %v2681
        %v2690 = vsub.f32 0.0, %v2682
        %v2691 = vsub.f32 0.0, %v2683
        %v2692 = vsub.f32 0.0, %v2684
        %v2693 = vsub.f32 0.0, %v2685
        %v2694 = vsub.f32 0.0, %v2686
        %v2695 = vsub.f32 0.0, %v2687
        %v2696 = vsub.f32 0.0, %v2688
        %v2697 = vmul.f32 %v2689, 1.442695
        %v2698 = vpow.pop %v2697
        %v2699 = vmul.f32 %v2690, 1.442695
        %v2700 = vpow.pop %v2699
        %v2701 = vmul.f32 %v2691, 1.442695
        %v2702 = vpow.pop %v2701
        %v2703 = vmul.f32 %v2692, 1.442695
        %v2704 = vpow.pop %v2703
        %v2705 = vmul.f32 %v2693, 1.442695
        %v2706 = vpow.pop %v2705
        %v2707 = vmul.f32 %v2694, 1.442695
        %v2708 = vpow.pop %v2707
        %v2709 = vmul.f32 %v2695, 1.442695
        %v2710 = vpow.pop %v2709
        %v2711 = vmul.f32 %v2696, 1.442695
        %v2712 = vpow.pop %v2711
        %v2713 = vsub.f32 %v2698, 1.0
        %v2714 = vsub.f32 %v2700, 1.0
        %v2715 = vsub.f32 %v2702, 1.0
        %v2716 = vsub.f32 %v2704, 1.0
        %v2717 = vsub.f32 %v2706, 1.0
        %v2718 = vsub.f32 %v2708, 1.0
        %v2719 = vsub.f32 %v2710, 1.0
        %v2720 = vsub.f32 %v2712, 1.0
        %vm2721 = vcmp.gt.f32.partialorder %v2673, 0.0
        %vm2722 = vcmp.gt.f32.partialorder %v2674, 0.0
        %vm2723 = vcmp.gt.f32.partialorder %v2675, 0.0
        %vm2724 = vcmp.gt.f32.partialorder %v2676, 0.0
        %vm2725 = vcmp.gt.f32.partialorder %v2677, 0.0
        %vm2726 = vcmp.gt.f32.partialorder %v2678, 0.0
        %vm2727 = vcmp.gt.f32.partialorder %v2679, 0.0
        %vm2728 = vcmp.gt.f32.partialorder %v2680, 0.0
        %v2729 = vsel %vm2721, %v2673, %v2713
        %v2730 = vsel %vm2722, %v2674, %v2714
        %v2731 = vsel %vm2723, %v2675, %v2715
        %v2732 = vsel %vm2724, %v2676, %v2716
        %v2733 = vsel %vm2725, %v2677, %v2717
        %v2734 = vsel %vm2726, %v2678, %v2718
        %v2735 = vsel %vm2727, %v2679, %v2719
        %v2736 = vsel %vm2728, %v2680, %v2720
        %v2737 = vsub.f32 0.0, %v2673
        %v2738 = vsub.f32 0.0, %v2674
        %v2739 = vsub.f32 0.0, %v2675
        %v2740 = vsub.f32 0.0, %v2676
        %v2741 = vsub.f32 0.0, %v2677
        %v2742 = vsub.f32 0.0, %v2678
        %v2743 = vsub.f32 0.0, %v2679
        %v2744 = vsub.f32 0.0, %v2680
        %v2745 = vsel %vm2721, %v2713, %v2737
        %v2746 = vsel %vm2722, %v2714, %v2738
        %v2747 = vsel %vm2723, %v2715, %v2739
        %v2748 = vsel %vm2724, %v2716, %v2740
        %v2749 = vsel %vm2725, %v2717, %v2741
        %v2750 = vsel %vm2726, %v2718, %v2742
        %v2751 = vsel %vm2727, %v2719, %v2743
        %v2752 = vsel %vm2728, %v2720, %v2744
        %2761 = vrot.lane.b32.xlu0 %v2745, 32
        %v2762 = vpop.permute.xlu0 %2761
        %2763 = vrot.lane.b32.xlu0 %v2746, 32
        %v2764 = vpop.permute.xlu0 %2763
        %2765 = vrot.lane.b32.xlu0 %v2747, 32
        %v2766 = vpop.permute.xlu0 %2765
        %2767 = vrot.lane.b32.xlu0 %v2748, 32
        %v2768 = vpop.permute.xlu0 %2767
        %2769 = vrot.lane.b32.xlu0 %v2749, 32
        %v2770 = vpop.permute.xlu0 %2769
        %2771 = vrot.lane.b32.xlu0 %v2750, 32
        %v2772 = vpop.permute.xlu0 %2771
        %2773 = vrot.lane.b32.xlu0 %v2751, 32
        %v2774 = vpop.permute.xlu0 %2773
        %2775 = vrot.lane.b32.xlu0 %v2752, 32
        %v2776 = vpop.permute.xlu0 %2775
        %v2785 = vsel %vm865, %v2729, %v2762
        %v2786 = vsel %vm865, %v2730, %v2764
        %v2787 = vsel %vm865, %v2731, %v2766
        %v2788 = vsel %vm865, %v2732, %v2768
        %v2789 = vsel %vm865, %v2733, %v2770
        %v2790 = vsel %vm865, %v2734, %v2772
        %v2791 = vsel %vm865, %v2735, %v2774
        %v2792 = vsel %vm865, %v2736, %v2776
        %v2793 = vand.u32 2147483647, %v753
        %v2794 = vand.u32 2147483647, %v754
        %v2795 = vand.u32 2147483647, %v755
        %v2796 = vand.u32 2147483647, %v756
        %v2797 = vand.u32 2147483647, %v757
        %v2798 = vand.u32 2147483647, %v758
        %v2799 = vand.u32 2147483647, %v759
        %v2800 = vand.u32 2147483647, %v760
        %v2801 = vsub.f32 0.0, %v2793
        %v2802 = vsub.f32 0.0, %v2794
        %v2803 = vsub.f32 0.0, %v2795
        %v2804 = vsub.f32 0.0, %v2796
        %v2805 = vsub.f32 0.0, %v2797
        %v2806 = vsub.f32 0.0, %v2798
        %v2807 = vsub.f32 0.0, %v2799
        %v2808 = vsub.f32 0.0, %v2800
        %v2809 = vmul.f32 %v2801, 1.442695
        %v2810 = vpow.pop %v2809
        %v2811 = vmul.f32 %v2802, 1.442695
        %v2812 = vpow.pop %v2811
        %v2813 = vmul.f32 %v2803, 1.442695
        %v2814 = vpow.pop %v2813
        %v2815 = vmul.f32 %v2804, 1.442695
        %v2816 = vpow.pop %v2815
        %v2817 = vmul.f32 %v2805, 1.442695
        %v2818 = vpow.pop %v2817
        %v2819 = vmul.f32 %v2806, 1.442695
        %v2820 = vpow.pop %v2819
        %v2821 = vmul.f32 %v2807, 1.442695
        %v2822 = vpow.pop %v2821
        %v2823 = vmul.f32 %v2808, 1.442695
        %v2824 = vpow.pop %v2823
        %v2825 = vsub.f32 %v2810, 1.0
        %v2826 = vsub.f32 %v2812, 1.0
        %v2827 = vsub.f32 %v2814, 1.0
        %v2828 = vsub.f32 %v2816, 1.0
        %v2829 = vsub.f32 %v2818, 1.0
        %v2830 = vsub.f32 %v2820, 1.0
        %v2831 = vsub.f32 %v2822, 1.0
        %v2832 = vsub.f32 %v2824, 1.0
        %vm2833 = vcmp.gt.f32.partialorder %v753, 0.0
        %vm2834 = vcmp.gt.f32.partialorder %v754, 0.0
        %vm2835 = vcmp.gt.f32.partialorder %v755, 0.0
        %vm2836 = vcmp.gt.f32.partialorder %v756, 0.0
        %vm2837 = vcmp.gt.f32.partialorder %v757, 0.0
        %vm2838 = vcmp.gt.f32.partialorder %v758, 0.0
        %vm2839 = vcmp.gt.f32.partialorder %v759, 0.0
        %vm2840 = vcmp.gt.f32.partialorder %v760, 0.0
        %v2841 = vsel %vm2833, %v753, %v2825
        %v2842 = vsel %vm2834, %v754, %v2826
        %v2843 = vsel %vm2835, %v755, %v2827
        %v2844 = vsel %vm2836, %v756, %v2828
        %v2845 = vsel %vm2837, %v757, %v2829
        %v2846 = vsel %vm2838, %v758, %v2830
        %v2847 = vsel %vm2839, %v759, %v2831
        %v2848 = vsel %vm2840, %v760, %v2832
        %v2849 = vsub.f32 0.0, %v753
        %v2850 = vsub.f32 0.0, %v754
        %v2851 = vsub.f32 0.0, %v755
        %v2852 = vsub.f32 0.0, %v756
        %v2853 = vsub.f32 0.0, %v757
        %v2854 = vsub.f32 0.0, %v758
        %v2855 = vsub.f32 0.0, %v759
        %v2856 = vsub.f32 0.0, %v760
        %v2857 = vsel %vm2833, %v2825, %v2849
        %v2858 = vsel %vm2834, %v2826, %v2850
        %v2859 = vsel %vm2835, %v2827, %v2851
        %v2860 = vsel %vm2836, %v2828, %v2852
        %v2861 = vsel %vm2837, %v2829, %v2853
        %v2862 = vsel %vm2838, %v2830, %v2854
        %v2863 = vsel %vm2839, %v2831, %v2855
        %v2864 = vsel %vm2840, %v2832, %v2856
        %2873 = vrot.lane.b32.xlu0 %v2857, 32
        %v2874 = vpop.permute.xlu0 %2873
        %2875 = vrot.lane.b32.xlu0 %v2858, 32
        %v2876 = vpop.permute.xlu0 %2875
        %2877 = vrot.lane.b32.xlu0 %v2859, 32
        %v2878 = vpop.permute.xlu0 %2877
        %2879 = vrot.lane.b32.xlu0 %v2860, 32
        %v2880 = vpop.permute.xlu0 %2879
        %2881 = vrot.lane.b32.xlu0 %v2861, 32
        %v2882 = vpop.permute.xlu0 %2881
        %2883 = vrot.lane.b32.xlu0 %v2862, 32
        %v2884 = vpop.permute.xlu0 %2883
        %2885 = vrot.lane.b32.xlu0 %v2863, 32
        %v2886 = vpop.permute.xlu0 %2885
        %2887 = vrot.lane.b32.xlu0 %v2864, 32
        %v2888 = vpop.permute.xlu0 %2887
        %v2897 = vsel %vm865, %v2841, %v2874
        %v2898 = vsel %vm865, %v2842, %v2876
        %v2899 = vsel %vm865, %v2843, %v2878
        %v2900 = vsel %vm865, %v2844, %v2880
        %v2901 = vsel %vm865, %v2845, %v2882
        %v2902 = vsel %vm865, %v2846, %v2884
        %v2903 = vsel %vm865, %v2847, %v2886
        %v2904 = vsel %vm865, %v2848, %v2888
        %v2905 = vrot.slane %v2897, 7
        %v2906 = vrot.slane %v2898, 7
        %v2907 = vrot.slane %v2899, 7
        %v2908 = vrot.slane %v2900, 7
        %v2909 = vrot.slane %v2901, 7
        %v2910 = vrot.slane %v2902, 7
        %v2911 = vrot.slane %v2903, 7
        %v2912 = vrot.slane %v2904, 7
        %v2913 = vsel %vm882, %v2911, %v2912
        %v2914 = vsel %vm882, %v2910, %v2911
        %v2915 = vsel %vm882, %v2909, %v2910
        %v2916 = vsel %vm882, %v2908, %v2909
        %v2917 = vsel %vm882, %v2907, %v2908
        %v2918 = vsel %vm882, %v2906, %v2907
        %v2919 = vsel %vm882, %v2905, %v2906
        %v2920 = vsel %vm882, %v2912, %v2905
        %v2921 = vmul.f32 %v2913, %v545
        %v2922 = vmul.f32 %v2920, %v546
        %v2923 = vmul.f32 %v2919, %v547
        %v2924 = vmul.f32 %v2918, %v548
        %v2925 = vmul.f32 %v2917, %v549
        %v2926 = vmul.f32 %v2916, %v550
        %v2927 = vmul.f32 %v2915, %v551
        %v2928 = vmul.f32 %v2914, %v552
        %v2929 = vpack.c.bf16 %v2922, %v2921
        %v2930 = vpack.c.bf16 %v2924, %v2923
        %v2931 = vpack.c.bf16 %v2926, %v2925
        %v2932 = vpack.c.bf16 %v2928, %v2927
        %v2933 = vld [vmem:[%s6] sm:$0xf]
        %v2934 = vld [vmem:[%s6 + $0x4] sm:$0xf]
        %v2935 = vld [vmem:[%s6 + $0x8] sm:$0xf]
        %v2936 = vld [vmem:[%s6 + $0xc] sm:$0xf]
        %v2937 = vld [vmem:[%s6 + $0x10] sm:$0xf]
        %v2938 = vld [vmem:[%s6 + $0x14] sm:$0xf]
        %v2939 = vld [vmem:[%s6 + $0x18] sm:$0xf]
        %v2940 = vld [vmem:[%s6 + $0x1c] sm:$0xf]
        %v2941 = vmul.f32 %v2904, %v593
        %v2942 = vmul.f32 %v2897, %v594
        %v2943 = vmul.f32 %v2898, %v595
        %v2944 = vmul.f32 %v2899, %v596
        %v2945 = vmul.f32 %v2900, %v597
        %v2946 = vmul.f32 %v2901, %v598
        %v2947 = vmul.f32 %v2902, %v599
        %v2948 = vmul.f32 %v2903, %v600
        %v2949 = vpack.c.bf16 %v2942, %v2941
        %v2950 = vpack.c.bf16 %v2944, %v2943
        %v2951 = vpack.c.bf16 %v2946, %v2945
        %v2952 = vpack.c.bf16 %v2948, %v2947
        %s2953 = scalar_lea.vmem %s6, 32
        %v2954 = vld [vmem:[%s2953] sm:$0xf]
        %v2955 = vld [vmem:[%s2953 + $0x4] sm:$0xf]
        %v2956 = vld [vmem:[%s2953 + $0x8] sm:$0xf]
        %v2957 = vld [vmem:[%s2953 + $0xc] sm:$0xf]
        %v2958 = vld [vmem:[%s2953 + $0x10] sm:$0xf]
        %v2959 = vld [vmem:[%s2953 + $0x14] sm:$0xf]
        %v2960 = vld [vmem:[%s2953 + $0x18] sm:$0xf]
        %v2961 = vld [vmem:[%s2953 + $0x1c] sm:$0xf]
        %v2970 = vunpack.c.l.b16 %v2954
        %v2971 = vunpack.c.l.b16 %v2955
        %v2972 = vunpack.c.l.b16 %v2956
        %v2973 = vunpack.c.l.b16 %v2957
        %v2974 = vunpack.c.l.b16 %v2958
        %v2975 = vunpack.c.l.b16 %v2959
        %v2976 = vunpack.c.l.b16 %v2960
        %v2977 = vunpack.c.l.b16 %v2961
        %v2978 = vpack.c.b16 %v2971, %v2970
        %v2979 = vpack.c.b16 %v2973, %v2972
        %v2980 = vpack.c.b16 %v2975, %v2974
        %v2981 = vpack.c.b16 %v2977, %v2976
        %v2987 = vsel %vm956, %v2949, 0
        %v2990 = vsel %vm956, %v2950, 0
        %v2993 = vsel %vm956, %v2951, 0
        %v2996 = vsel %vm956, %v2952, 0
        %2998 = vmatprep.subr.bf16.mxu0 0
        %2999 = vmatpush1.bf16.msra.mxu0 %v2978
        %3000 = vmatprep.subr.bf16.mxu0 0
        %3001 = vmatpush1.bf16.msra.mxu0 %v2979
        %3002 = vmatprep.subr.bf16.mxu0 0
        %3003 = vmatpush1.bf16.msra.mxu0 %v2980
        %3004 = vmatprep.subr.bf16.mxu0 0
        %3005 = vmatpush1.bf16.msra.mxu0 %v2981
        %3006 = vmatprep.subr.bf16.mxu0 0
        %3007 = vmatpush1.bf16.msra.mxu0 0
        %3008 = vmatprep.subr.bf16.mxu0 0
        %3009 = vmatpush1.bf16.msra.mxu0 0
        %3010 = vmatprep.subr.bf16.mxu0 0
        %3011 = vmatpush1.bf16.msra.mxu0 0
        %3012 = vmatprep.subr.bf16.mxu0 0
        %3013 = vmatpush1.bf16.msra.mxu0 0
        %3014 = vmatprep.subr.bf16.mxu0 0
        %3015 = vmatpush1.bf16.msra.mxu0 0
        %3016 = vmatprep.subr.bf16.mxu0 0
        %3017 = vmatpush1.bf16.msra.mxu0 0
        %3018 = vmatprep.subr.bf16.mxu0 0
        %3019 = vmatpush1.bf16.msra.mxu0 0
        %3020 = vmatprep.subr.bf16.mxu0 0
        %3021 = vmatpush1.bf16.msra.mxu0 0
        %3022 = vmatprep.subr.bf16.mxu0 0
        %3023 = vmatpush1.bf16.msra.mxu0 0
        %3024 = vmatprep.subr.bf16.mxu0 0
        %3025 = vmatpush1.bf16.msra.mxu0 0
        %3026 = vmatprep.subr.bf16.mxu0 0
        %3027 = vmatpush1.bf16.msra.mxu0 0
        %3028 = vmatprep.subr.bf16.mxu0 0
        %3029 = vmatpush1.bf16.msra.mxu0 0
        %3030 = vmatprep.mubr.bf16.mxu0 0
        %3031 = vmatmul.mubr.bf16.gmra.mrb[0].mxu0 %v2987
        %v3032 = vpop.f32.mrb[0].mxu0
        %v3033 = vadd.f32 0.0, %v3032
        %v3034 = vpop.f32.mrb[0].mxu0
        %v3035 = vpop.f32.mrb[0].mxu0
        %v3036 = vadd.f32 0.0, %v3035
        %v3037 = vpop.f32.mrb[0].mxu0
        %3038 = vmatprep.mubr.bf16.mxu0 0
        %3039 = vmatmul.mubr.bf16.gmra.mrb[0].mxu0 %v2990
        %v3040 = vpop.f32.mrb[0].mxu0
        %v3041 = vadd.f32 0.0, %v3040
        %v3042 = vpop.f32.mrb[0].mxu0
        %v3043 = vpop.f32.mrb[0].mxu0
        %v3044 = vadd.f32 0.0, %v3043
        %v3045 = vpop.f32.mrb[0].mxu0
        %3046 = vmatprep.mubr.bf16.mxu0 0
        %3047 = vmatmul.mubr.bf16.gmra.mrb[0].mxu0 %v2993
        %v3048 = vpop.f32.mrb[0].mxu0
        %v3049 = vadd.f32 0.0, %v3048
        %v3050 = vpop.f32.mrb[0].mxu0
        %v3051 = vpop.f32.mrb[0].mxu0
        %v3052 = vadd.f32 0.0, %v3051
        %v3053 = vpop.f32.mrb[0].mxu0
        %3054 = vmatprep.mubr.bf16.mxu0 0
        %3055 = vmatmul.mubr.bf16.gmra.mrb[0].mxu0 %v2996
        %v3056 = vpop.f32.mrb[0].mxu0
        %v3057 = vadd.f32 0.0, %v3056
        %v3058 = vpop.f32.mrb[0].mxu0
        %v3059 = vpop.f32.mrb[0].mxu0
        %v3060 = vadd.f32 0.0, %v3059
        %v3061 = vpop.f32.mrb[0].mxu0
        %3062 = vdwg.mxu0
        %v3071 = vunpack.c.l.b16 %v2933
        %v3072 = vunpack.c.l.b16 %v2934
        %v3073 = vunpack.c.l.b16 %v2935
        %v3074 = vunpack.c.l.b16 %v2936
        %v3075 = vunpack.c.l.b16 %v2937
        %v3076 = vunpack.c.l.b16 %v2938
        %v3077 = vunpack.c.l.b16 %v2939
        %v3078 = vunpack.c.l.b16 %v2940
        %v3079 = vpack.c.b16 %v3072, %v3071
        %v3080 = vpack.c.b16 %v3074, %v3073
        %v3081 = vpack.c.b16 %v3076, %v3075
        %v3082 = vpack.c.b16 %v3078, %v3077
        %v3088 = vsel %vm956, %v2929, 0
        %v3091 = vsel %vm956, %v2930, 0
        %v3094 = vsel %vm956, %v2931, 0
        %v3097 = vsel %vm956, %v2932, 0
        %3099 = vmatprep.subr.bf16.mxu0 0
        %3100 = vmatpush1.bf16.msra.mxu0 %v3079
        %3101 = vmatprep.subr.bf16.mxu0 0
        %3102 = vmatpush1.bf16.msra.mxu0 %v3080
        %3103 = vmatprep.subr.bf16.mxu0 0
        %3104 = vmatpush1.bf16.msra.mxu0 %v3081
        %3105 = vmatprep.subr.bf16.mxu0 0
        %3106 = vmatpush1.bf16.msra.mxu0 %v3082
        %3107 = vmatprep.subr.bf16.mxu0 0
        %3108 = vmatpush1.bf16.msra.mxu0 0
        %3109 = vmatprep.subr.bf16.mxu0 0
        %3110 = vmatpush1.bf16.msra.mxu0 0
        %3111 = vmatprep.subr.bf16.mxu0 0
        %3112 = vmatpush1.bf16.msra.mxu0 0
        %3113 = vmatprep.subr.bf16.mxu0 0
        %3114 = vmatpush1.bf16.msra.mxu0 0
        %3115 = vmatprep.subr.bf16.mxu0 0
        %3116 = vmatpush1.bf16.msra.mxu0 0
        %3117 = vmatprep.subr.bf16.mxu0 0
        %3118 = vmatpush1.bf16.msra.mxu0 0
        %3119 = vmatprep.subr.bf16.mxu0 0
        %3120 = vmatpush1.bf16.msra.mxu0 0
        %3121 = vmatprep.subr.bf16.mxu0 0
        %3122 = vmatpush1.bf16.msra.mxu0 0
        %3123 = vmatprep.subr.bf16.mxu0 0
        %3124 = vmatpush1.bf16.msra.mxu0 0
        %3125 = vmatprep.subr.bf16.mxu0 0
        %3126 = vmatpush1.bf16.msra.mxu0 0
        %3127 = vmatprep.subr.bf16.mxu0 0
        %3128 = vmatpush1.bf16.msra.mxu0 0
        %3129 = vmatprep.subr.bf16.mxu0 0
        %3130 = vmatpush1.bf16.msra.mxu0 0
        %3131 = vmatprep.mubr.bf16.mxu0 0
        %3132 = vmatmul.mubr.bf16.gmra.mrb[0].mxu0 %v3088
        %v3133 = vpop.f32.mrb[0].mxu0
        %v3134 = vadd.f32 %v3033, %v3133
        %v3135 = vpop.f32.mrb[0].mxu0
        %v3136 = vpop.f32.mrb[0].mxu0
        %v3137 = vadd.f32 %v3036, %v3136
        %v3138 = vpop.f32.mrb[0].mxu0
        %3139 = vmatprep.mubr.bf16.mxu0 0
        %3140 = vmatmul.mubr.bf16.gmra.mrb[0].mxu0 %v3091
        %v3141 = vpop.f32.mrb[0].mxu0
        %v3142 = vadd.f32 %v3041, %v3141
        %v3143 = vpop.f32.mrb[0].mxu0
        %v3144 = vpop.f32.mrb[0].mxu0
        %v3145 = vadd.f32 %v3044, %v3144
        %v3146 = vpop.f32.mrb[0].mxu0
        %3147 = vmatprep.mubr.bf16.mxu0 0
        %3148 = vmatmul.mubr.bf16.gmra.mrb[0].mxu0 %v3094
        %v3149 = vpop.f32.mrb[0].mxu0
        %v3150 = vadd.f32 %v3049, %v3149
        %v3151 = vpop.f32.mrb[0].mxu0
        %v3152 = vpop.f32.mrb[0].mxu0
        %v3153 = vadd.f32 %v3052, %v3152
        %v3154 = vpop.f32.mrb[0].mxu0
        %3155 = vmatprep.mubr.bf16.mxu0 0
        %3156 = vmatmul.mubr.bf16.gmra.mrb[0].mxu0 %v3097
        %v3157 = vpop.f32.mrb[0].mxu0
        %v3158 = vadd.f32 %v3057, %v3157
        %v3159 = vpop.f32.mrb[0].mxu0
        %v3160 = vpop.f32.mrb[0].mxu0
        %v3161 = vadd.f32 %v3060, %v3160
        %v3162 = vpop.f32.mrb[0].mxu0
        %3163 = vdwg.mxu0
        %v3164 = vmul.f32 %v2920, %v705
        %v3165 = vmul.f32 %v2919, %v706
        %v3166 = vmul.f32 %v2918, %v707
        %v3167 = vmul.f32 %v2917, %v708
        %v3168 = vmul.f32 %v2916, %v709
        %v3169 = vmul.f32 %v2915, %v710
        %v3170 = vmul.f32 %v2914, %v711
        %v3171 = vmul.f32 %v2913, %v712
        %v3172 = vpack.c.bf16 %v3165, %v3164
        %v3173 = vpack.c.bf16 %v3167, %v3166
        %v3174 = vpack.c.bf16 %v3169, %v3168
        %v3175 = vpack.c.bf16 %v3171, %v3170
        %s3176 = scalar_lea.vmem %s6, 64
        %v3177 = vld [vmem:[%s3176] sm:$0xf]
        %v3178 = vld [vmem:[%s3176 + $0x4] sm:$0xf]
        %v3179 = vld [vmem:[%s3176 + $0x8] sm:$0xf]
        %v3180 = vld [vmem:[%s3176 + $0xc] sm:$0xf]
        %v3181 = vld [vmem:[%s3176 + $0x10] sm:$0xf]
        %v3182 = vld [vmem:[%s3176 + $0x14] sm:$0xf]
        %v3183 = vld [vmem:[%s3176 + $0x18] sm:$0xf]
        %v3184 = vld [vmem:[%s3176 + $0x1c] sm:$0xf]
        %v3193 = vunpack.c.l.b16 %v3177
        %v3194 = vunpack.c.l.b16 %v3178
        %v3195 = vunpack.c.l.b16 %v3179
        %v3196 = vunpack.c.l.b16 %v3180
        %v3197 = vunpack.c.l.b16 %v3181
        %v3198 = vunpack.c.l.b16 %v3182
        %v3199 = vunpack.c.l.b16 %v3183
        %v3200 = vunpack.c.l.b16 %v3184
        %v3201 = vpack.c.b16 %v3194, %v3193
        %v3202 = vpack.c.b16 %v3196, %v3195
        %v3203 = vpack.c.b16 %v3198, %v3197
        %v3204 = vpack.c.b16 %v3200, %v3199
        %v3210 = vsel %vm956, %v3172, 0
        %v3213 = vsel %vm956, %v3173, 0
        %v3216 = vsel %vm956, %v3174, 0
        %v3219 = vsel %vm956, %v3175, 0
        %3221 = vmatprep.subr.bf16.mxu0 0
        %3222 = vmatpush1.bf16.msra.mxu0 %v3201
        %3223 = vmatprep.subr.bf16.mxu0 0
        %3224 = vmatpush1.bf16.msra.mxu0 %v3202
        %3225 = vmatprep.subr.bf16.mxu0 0
        %3226 = vmatpush1.bf16.msra.mxu0 %v3203
        %3227 = vmatprep.subr.bf16.mxu0 0
        %3228 = vmatpush1.bf16.msra.mxu0 %v3204
        %3229 = vmatprep.subr.bf16.mxu0 0
        %3230 = vmatpush1.bf16.msra.mxu0 0
        %3231 = vmatprep.subr.bf16.mxu0 0
        %3232 = vmatpush1.bf16.msra.mxu0 0
        %3233 = vmatprep.subr.bf16.mxu0 0
        %3234 = vmatpush1.bf16.msra.mxu0 0
        %3235 = vmatprep.subr.bf16.mxu0 0
        %3236 = vmatpush1.bf16.msra.mxu0 0
        %3237 = vmatprep.subr.bf16.mxu0 0
        %3238 = vmatpush1.bf16.msra.mxu0 0
        %3239 = vmatprep.subr.bf16.mxu0 0
        %3240 = vmatpush1.bf16.msra.mxu0 0
        %3241 = vmatprep.subr.bf16.mxu0 0
        %3242 = vmatpush1.bf16.msra.mxu0 0
        %3243 = vmatprep.subr.bf16.mxu0 0
        %3244 = vmatpush1.bf16.msra.mxu0 0
        %3245 = vmatprep.subr.bf16.mxu0 0
        %3246 = vmatpush1.bf16.msra.mxu0 0
        %3247 = vmatprep.subr.bf16.mxu0 0
        %3248 = vmatpush1.bf16.msra.mxu0 0
        %3249 = vmatprep.subr.bf16.mxu0 0
        %3250 = vmatpush1.bf16.msra.mxu0 0
        %3251 = vmatprep.subr.bf16.mxu0 0
        %3252 = vmatpush1.bf16.msra.mxu0 0
        %3253 = vmatprep.mubr.bf16.mxu0 0
        %3254 = vmatmul.mubr.bf16.gmra.mrb[0].mxu0 %v3210
        %v3255 = vpop.f32.mrb[0].mxu0
        %v3256 = vadd.f32 0.0, %v3255
        %v3257 = vpop.f32.mrb[0].mxu0
        %v3258 = vpop.f32.mrb[0].mxu0
        %v3259 = vadd.f32 0.0, %v3258
        %v3260 = vpop.f32.mrb[0].mxu0
        %3261 = vmatprep.mubr.bf16.mxu0 0
        %3262 = vmatmul.mubr.bf16.gmra.mrb[0].mxu0 %v3213
        %v3263 = vpop.f32.mrb[0].mxu0
        %v3264 = vadd.f32 0.0, %v3263
        %v3265 = vpop.f32.mrb[0].mxu0
        %v3266 = vpop.f32.mrb[0].mxu0
        %v3267 = vadd.f32 0.0, %v3266
        %v3268 = vpop.f32.mrb[0].mxu0
        %3269 = vmatprep.mubr.bf16.mxu0 0
        %3270 = vmatmul.mubr.bf16.gmra.mrb[0].mxu0 %v3216
        %v3271 = vpop.f32.mrb[0].mxu0
        %v3272 = vadd.f32 0.0, %v3271
        %v3273 = vpop.f32.mrb[0].mxu0
        %v3274 = vpop.f32.mrb[0].mxu0
        %v3275 = vadd.f32 0.0, %v3274
        %v3276 = vpop.f32.mrb[0].mxu0
        %3277 = vmatprep.mubr.bf16.mxu0 0
        %3278 = vmatmul.mubr.bf16.gmra.mrb[0].mxu0 %v3219
        %v3279 = vpop.f32.mrb[0].mxu0
        %v3280 = vadd.f32 0.0, %v3279
        %v3281 = vpop.f32.mrb[0].mxu0
        %v3282 = vpop.f32.mrb[0].mxu0
        %v3283 = vadd.f32 0.0, %v3282
        %v3284 = vpop.f32.mrb[0].mxu0
        %3285 = vdwg.mxu0
        %v3286 = vadd.f32 %v3134, %v3256
        %v3287 = vadd.f32 %v3137, %v3259
        %v3288 = vadd.f32 %v3142, %v3264
        %v3289 = vadd.f32 %v3145, %v3267
        %v3290 = vadd.f32 %v3150, %v3272
        %v3291 = vadd.f32 %v3153, %v3275
        %v3292 = vadd.f32 %v3158, %v3280
        %v3293 = vadd.f32 %v3161, %v3283
        %v3294 = vpack.c.bf16 %v2898, %v2897
        %v3295 = vpack.c.bf16 %v2900, %v2899
        %v3296 = vpack.c.bf16 %v2902, %v2901
        %v3297 = vpack.c.bf16 %v2904, %v2903
        %s3298 = scalar_lea.vmem %s6, 96
        %v3299 = vld [vmem:[%s3298] sm:$0xf]
        %v3300 = vld [vmem:[%s3298 + $0x4] sm:$0xf]
        %v3301 = vld [vmem:[%s3298 + $0x8] sm:$0xf]
        %v3302 = vld [vmem:[%s3298 + $0xc] sm:$0xf]
        %v3303 = vld [vmem:[%s3298 + $0x10] sm:$0xf]
        %v3304 = vld [vmem:[%s3298 + $0x14] sm:$0xf]
        %v3305 = vld [vmem:[%s3298 + $0x18] sm:$0xf]
        %v3306 = vld [vmem:[%s3298 + $0x1c] sm:$0xf]
        %v3315 = vunpack.c.l.b16 %v3299
        %v3316 = vunpack.c.l.b16 %v3300
        %v3317 = vunpack.c.l.b16 %v3301
        %v3318 = vunpack.c.l.b16 %v3302
        %v3319 = vunpack.c.l.b16 %v3303
        %v3320 = vunpack.c.l.b16 %v3304
        %v3321 = vunpack.c.l.b16 %v3305
        %v3322 = vunpack.c.l.b16 %v3306
        %v3323 = vpack.c.b16 %v3316, %v3315
        %v3324 = vpack.c.b16 %v3318, %v3317
        %v3325 = vpack.c.b16 %v3320, %v3319
        %v3326 = vpack.c.b16 %v3322, %v3321
        %v3332 = vsel %vm956, %v3294, 0
        %v3335 = vsel %vm956, %v3295, 0
        %v3338 = vsel %vm956, %v3296, 0
        %v3341 = vsel %vm956, %v3297, 0
        %3343 = vmatprep.subr.bf16.mxu0 0
        %3344 = vmatpush1.bf16.msra.mxu0 %v3323
        %3345 = vmatprep.subr.bf16.mxu0 0
        %3346 = vmatpush1.bf16.msra.mxu0 %v3324
        %3347 = vmatprep.subr.bf16.mxu0 0
        %3348 = vmatpush1.bf16.msra.mxu0 %v3325
        %3349 = vmatprep.subr.bf16.mxu0 0
        %3350 = vmatpush1.bf16.msra.mxu0 %v3326
        %3351 = vmatprep.subr.bf16.mxu0 0
        %3352 = vmatpush1.bf16.msra.mxu0 0
        %3353 = vmatprep.subr.bf16.mxu0 0
        %3354 = vmatpush1.bf16.msra.mxu0 0
        %3355 = vmatprep.subr.bf16.mxu0 0
        %3356 = vmatpush1.bf16.msra.mxu0 0
        %3357 = vmatprep.subr.bf16.mxu0 0
        %3358 = vmatpush1.bf16.msra.mxu0 0
        %3359 = vmatprep.subr.bf16.mxu0 0
        %3360 = vmatpush1.bf16.msra.mxu0 0
        %3361 = vmatprep.subr.bf16.mxu0 0
        %3362 = vmatpush1.bf16.msra.mxu0 0
        %3363 = vmatprep.subr.bf16.mxu0 0
        %3364 = vmatpush1.bf16.msra.mxu0 0
        %3365 = vmatprep.subr.bf16.mxu0 0
        %3366 = vmatpush1.bf16.msra.mxu0 0
        %3367 = vmatprep.subr.bf16.mxu0 0
        %3368 = vmatpush1.bf16.msra.mxu0 0
        %3369 = vmatprep.subr.bf16.mxu0 0
        %3370 = vmatpush1.bf16.msra.mxu0 0
        %3371 = vmatprep.subr.bf16.mxu0 0
        %3372 = vmatpush1.bf16.msra.mxu0 0
        %3373 = vmatprep.subr.bf16.mxu0 0
        %3374 = vmatpush1.bf16.msra.mxu0 0
        %3375 = vmatprep.mubr.bf16.mxu0 0
        %3376 = vmatmul.mubr.bf16.gmra.mrb[0].mxu0 %v3332
        %v3377 = vpop.f32.mrb[0].mxu0
        %v3378 = vadd.f32 0.0, %v3377
        %v3379 = vpop.f32.mrb[0].mxu0
        %v3380 = vpop.f32.mrb[0].mxu0
        %v3381 = vadd.f32 0.0, %v3380
        %v3382 = vpop.f32.mrb[0].mxu0
        %3383 = vmatprep.mubr.bf16.mxu0 0
        %3384 = vmatmul.mubr.bf16.gmra.mrb[0].mxu0 %v3335
        %v3385 = vpop.f32.mrb[0].mxu0
        %v3386 = vadd.f32 0.0, %v3385
        %v3387 = vpop.f32.mrb[0].mxu0
        %v3388 = vpop.f32.mrb[0].mxu0
        %v3389 = vadd.f32 0.0, %v3388
        %v3390 = vpop.f32.mrb[0].mxu0
        %3391 = vmatprep.mubr.bf16.mxu0 0
        %3392 = vmatmul.mubr.bf16.gmra.mrb[0].mxu0 %v3338
        %v3393 = vpop.f32.mrb[0].mxu0
        %v3394 = vadd.f32 0.0, %v3393
        %v3395 = vpop.f32.mrb[0].mxu0
        %v3396 = vpop.f32.mrb[0].mxu0
        %v3397 = vadd.f32 0.0, %v3396
        %v3398 = vpop.f32.mrb[0].mxu0
        %3399 = vmatprep.mubr.bf16.mxu0 0
        %3400 = vmatmul.mubr.bf16.gmra.mrb[0].mxu0 %v3341
        %v3401 = vpop.f32.mrb[0].mxu0
        %v3402 = vadd.f32 0.0, %v3401
        %v3403 = vpop.f32.mrb[0].mxu0
        %v3404 = vpop.f32.mrb[0].mxu0
        %v3405 = vadd.f32 0.0, %v3404
        %v3406 = vpop.f32.mrb[0].mxu0
        %3407 = vdwg.mxu0
        %v3408 = vadd.f32 %v3286, %v3378
        %v3409 = vadd.f32 %v3287, %v3381
        %v3410 = vadd.f32 %v3288, %v3386
        %v3411 = vadd.f32 %v3289, %v3389
        %v3412 = vadd.f32 %v3290, %v3394
        %v3413 = vadd.f32 %v3291, %v3397
        %v3414 = vadd.f32 %v3292, %v3402
        %v3415 = vadd.f32 %v3293, %v3405
        %v3416 = vld [vmem:[%s8] sm:$0x1]
        %v3418 = vlaneseq
        %v3419 = vshrl.u32 %v3418, 7
        %v3420 = vsub.s32 0, %v3419
        %v3421 = vrot.slane %v3416, %v3420
        %v3423 = vadd.f32 %v3408, %v3421
        %v3424 = vadd.f32 %v3409, %v3421
        %v3425 = vadd.f32 %v3410, %v3421
        %v3426 = vadd.f32 %v3411, %v3421
        %v3427 = vadd.f32 %v3412, %v3421
        %v3428 = vadd.f32 %v3413, %v3421
        %v3429 = vadd.f32 %v3414, %v3421
        %v3430 = vadd.f32 %v3415, %v3421
        %v3431 = vpack.c.bf16 %v2786, %v2785
        %v3432 = vpack.c.bf16 %v2788, %v2787
        %v3433 = vpack.c.bf16 %v2790, %v2789
        %v3434 = vpack.c.bf16 %v2792, %v2791
        %v3435 = vld [vmem:[%s7] sm:$0xf]
        %v3436 = vld [vmem:[%s7 + $0x4] sm:$0xf]
        %v3437 = vld [vmem:[%s7 + $0x8] sm:$0xf]
        %v3438 = vld [vmem:[%s7 + $0xc] sm:$0xf]
        %v3439 = vld [vmem:[%s7 + $0x10] sm:$0xf]
        %v3440 = vld [vmem:[%s7 + $0x14] sm:$0xf]
        %v3441 = vld [vmem:[%s7 + $0x18] sm:$0xf]
        %v3442 = vld [vmem:[%s7 + $0x1c] sm:$0xf]
        %v3451 = vunpack.c.l.b16 %v3435
        %v3452 = vunpack.c.l.b16 %v3436
        %v3453 = vunpack.c.l.b16 %v3437
        %v3454 = vunpack.c.l.b16 %v3438
        %v3455 = vunpack.c.l.b16 %v3439
        %v3456 = vunpack.c.l.b16 %v3440
        %v3457 = vunpack.c.l.b16 %v3441
        %v3458 = vunpack.c.l.b16 %v3442
        %v3459 = vpack.c.b16 %v3452, %v3451
        %v3460 = vpack.c.b16 %v3454, %v3453
        %v3461 = vpack.c.b16 %v3456, %v3455
        %v3462 = vpack.c.b16 %v3458, %v3457
        %v3468 = vsel %vm956, %v3431, 0
        %v3471 = vsel %vm956, %v3432, 0
        %v3474 = vsel %vm956, %v3433, 0
        %v3477 = vsel %vm956, %v3434, 0
        %3479 = vmatprep.subr.bf16.mxu0 0
        %3480 = vmatpush1.bf16.msra.mxu0 %v3459
        %3481 = vmatprep.subr.bf16.mxu0 0
        %3482 = vmatpush1.bf16.msra.mxu0 %v3460
        %3483 = vmatprep.subr.bf16.mxu0 0
        %3484 = vmatpush1.bf16.msra.mxu0 %v3461
        %3485 = vmatprep.subr.bf16.mxu0 0
        %3486 = vmatpush1.bf16.msra.mxu0 %v3462
        %3487 = vmatprep.subr.bf16.mxu0 0
        %3488 = vmatpush1.bf16.msra.mxu0 0
        %3489 = vmatprep.subr.bf16.mxu0 0
        %3490 = vmatpush1.bf16.msra.mxu0 0
        %3491 = vmatprep.subr.bf16.mxu0 0
        %3492 = vmatpush1.bf16.msra.mxu0 0
        %3493 = vmatprep.subr.bf16.mxu0 0
        %3494 = vmatpush1.bf16.msra.mxu0 0
        %3495 = vmatprep.subr.bf16.mxu0 0
        %3496 = vmatpush1.bf16.msra.mxu0 0
        %3497 = vmatprep.subr.bf16.mxu0 0
        %3498 = vmatpush1.bf16.msra.mxu0 0
        %3499 = vmatprep.subr.bf16.mxu0 0
        %3500 = vmatpush1.bf16.msra.mxu0 0
        %3501 = vmatprep.subr.bf16.mxu0 0
        %3502 = vmatpush1.bf16.msra.mxu0 0
        %3503 = vmatprep.subr.bf16.mxu0 0
        %3504 = vmatpush1.bf16.msra.mxu0 0
        %3505 = vmatprep.subr.bf16.mxu0 0
        %3506 = vmatpush1.bf16.msra.mxu0 0
        %3507 = vmatprep.subr.bf16.mxu0 0
        %3508 = vmatpush1.bf16.msra.mxu0 0
        %3509 = vmatprep.subr.bf16.mxu0 0
        %3510 = vmatpush1.bf16.msra.mxu0 0
        %3511 = vmatprep.mubr.bf16.mxu0 0
        %3512 = vmatmul.mubr.bf16.gmra.mrb[0].mxu0 %v3468
        %v3513 = vpop.f32.mrb[0].mxu0
        %v3514 = vadd.f32 0.0, %v3513
        %v3515 = vpop.f32.mrb[0].mxu0
        %v3516 = vpop.f32.mrb[0].mxu0
        %v3517 = vadd.f32 0.0, %v3516
        %v3518 = vpop.f32.mrb[0].mxu0
        %3519 = vmatprep.mubr.bf16.mxu0 0
        %3520 = vmatmul.mubr.bf16.gmra.mrb[0].mxu0 %v3471
        %v3521 = vpop.f32.mrb[0].mxu0
        %v3522 = vadd.f32 0.0, %v3521
        %v3523 = vpop.f32.mrb[0].mxu0
        %v3524 = vpop.f32.mrb[0].mxu0
        %v3525 = vadd.f32 0.0, %v3524
        %v3526 = vpop.f32.mrb[0].mxu0
        %3527 = vmatprep.mubr.bf16.mxu0 0
        %3528 = vmatmul.mubr.bf16.gmra.mrb[0].mxu0 %v3474
        %v3529 = vpop.f32.mrb[0].mxu0
        %v3530 = vadd.f32 0.0, %v3529
        %v3531 = vpop.f32.mrb[0].mxu0
        %v3532 = vpop.f32.mrb[0].mxu0
        %v3533 = vadd.f32 0.0, %v3532
        %v3534 = vpop.f32.mrb[0].mxu0
        %3535 = vmatprep.mubr.bf16.mxu0 0
        %3536 = vmatmul.mubr.bf16.gmra.mrb[0].mxu0 %v3477
        %v3537 = vpop.f32.mrb[0].mxu0
        %v3538 = vadd.f32 0.0, %v3537
        %v3539 = vpop.f32.mrb[0].mxu0
        %v3540 = vpop.f32.mrb[0].mxu0
        %v3541 = vadd.f32 0.0, %v3540
        %v3542 = vpop.f32.mrb[0].mxu0
        %3543 = vdwg.mxu0
        %v3544 = vadd.f32 %v3423, %v3514
        %v3545 = vadd.f32 %v3424, %v3517
        %v3546 = vadd.f32 %v3425, %v3522
        %v3547 = vadd.f32 %v3426, %v3525
        %v3548 = vadd.f32 %v3427, %v3530
        %v3549 = vadd.f32 %v3428, %v3533
        %v3550 = vadd.f32 %v3429, %v3538
        %v3551 = vadd.f32 %v3430, %v3541
        %v3552 = vand.u32 2147483647, %v3544
        %v3553 = vand.u32 2147483647, %v3545
        %v3554 = vand.u32 2147483647, %v3546
        %v3555 = vand.u32 2147483647, %v3547
        %v3556 = vand.u32 2147483647, %v3548
        %v3557 = vand.u32 2147483647, %v3549
        %v3558 = vand.u32 2147483647, %v3550
        %v3559 = vand.u32 2147483647, %v3551
        %v3560 = vsub.f32 0.0, %v3552
        %v3561 = vsub.f32 0.0, %v3553
        %v3562 = vsub.f32 0.0, %v3554
        %v3563 = vsub.f32 0.0, %v3555
        %v3564 = vsub.f32 0.0, %v3556
        %v3565 = vsub.f32 0.0, %v3557
        %v3566 = vsub.f32 0.0, %v3558
        %v3567 = vsub.f32 0.0, %v3559
        %v3568 = vmul.f32 %v3560, 1.442695
        %v3569 = vpow.pop %v3568
        %v3570 = vmul.f32 %v3561, 1.442695
        %v3571 = vpow.pop %v3570
        %v3572 = vmul.f32 %v3562, 1.442695
        %v3573 = vpow.pop %v3572
        %v3574 = vmul.f32 %v3563, 1.442695
        %v3575 = vpow.pop %v3574
        %v3576 = vmul.f32 %v3564, 1.442695
        %v3577 = vpow.pop %v3576
        %v3578 = vmul.f32 %v3565, 1.442695
        %v3579 = vpow.pop %v3578
        %v3580 = vmul.f32 %v3566, 1.442695
        %v3581 = vpow.pop %v3580
        %v3582 = vmul.f32 %v3567, 1.442695
        %v3583 = vpow.pop %v3582
        %v3584 = vsub.f32 %v3569, 1.0
        %v3585 = vsub.f32 %v3571, 1.0
        %v3586 = vsub.f32 %v3573, 1.0
        %v3587 = vsub.f32 %v3575, 1.0
        %v3588 = vsub.f32 %v3577, 1.0
        %v3589 = vsub.f32 %v3579, 1.0
        %v3590 = vsub.f32 %v3581, 1.0
        %v3591 = vsub.f32 %v3583, 1.0
        %vm3592 = vcmp.gt.f32.partialorder %v3544, 0.0
        %vm3593 = vcmp.gt.f32.partialorder %v3545, 0.0
        %vm3594 = vcmp.gt.f32.partialorder %v3546, 0.0
        %vm3595 = vcmp.gt.f32.partialorder %v3547, 0.0
        %vm3596 = vcmp.gt.f32.partialorder %v3548, 0.0
        %vm3597 = vcmp.gt.f32.partialorder %v3549, 0.0
        %vm3598 = vcmp.gt.f32.partialorder %v3550, 0.0
        %vm3599 = vcmp.gt.f32.partialorder %v3551, 0.0
        %v3600 = vsel %vm3592, %v3544, %v3584
        %v3601 = vsel %vm3593, %v3545, %v3585
        %v3602 = vsel %vm3594, %v3546, %v3586
        %v3603 = vsel %vm3595, %v3547, %v3587
        %v3604 = vsel %vm3596, %v3548, %v3588
        %v3605 = vsel %vm3597, %v3549, %v3589
        %v3606 = vsel %vm3598, %v3550, %v3590
        %v3607 = vsel %vm3599, %v3551, %v3591
        %v3608 = vsub.f32 0.0, %v3544
        %v3609 = vsub.f32 0.0, %v3545
        %v3610 = vsub.f32 0.0, %v3546
        %v3611 = vsub.f32 0.0, %v3547
        %v3612 = vsub.f32 0.0, %v3548
        %v3613 = vsub.f32 0.0, %v3549
        %v3614 = vsub.f32 0.0, %v3550
        %v3615 = vsub.f32 0.0, %v3551
        %v3616 = vsel %vm3592, %v3584, %v3608
        %v3617 = vsel %vm3593, %v3585, %v3609
        %v3618 = vsel %vm3594, %v3586, %v3610
        %v3619 = vsel %vm3595, %v3587, %v3611
        %v3620 = vsel %vm3596, %v3588, %v3612
        %v3621 = vsel %vm3597, %v3589, %v3613
        %v3622 = vsel %vm3598, %v3590, %v3614
        %v3623 = vsel %vm3599, %v3591, %v3615
        %3632 = vrot.lane.b32.xlu0 %v3616, 32
        %v3633 = vpop.permute.xlu0 %3632
        %3634 = vrot.lane.b32.xlu0 %v3617, 32
        %v3635 = vpop.permute.xlu0 %3634
        %3636 = vrot.lane.b32.xlu0 %v3618, 32
        %v3637 = vpop.permute.xlu0 %3636
        %3638 = vrot.lane.b32.xlu0 %v3619, 32
        %v3639 = vpop.permute.xlu0 %3638
        %3640 = vrot.lane.b32.xlu0 %v3620, 32
        %v3641 = vpop.permute.xlu0 %3640
        %3642 = vrot.lane.b32.xlu0 %v3621, 32
        %v3643 = vpop.permute.xlu0 %3642
        %3644 = vrot.lane.b32.xlu0 %v3622, 32
        %v3645 = vpop.permute.xlu0 %3644
        %3646 = vrot.lane.b32.xlu0 %v3623, 32
        %v3647 = vpop.permute.xlu0 %3646
        %v3656 = vsel %vm865, %v3600, %v3633
        %v3657 = vsel %vm865, %v3601, %v3635
        %v3658 = vsel %vm865, %v3602, %v3637
        %v3659 = vsel %vm865, %v3603, %v3639
        %v3660 = vsel %vm865, %v3604, %v3641
        %v3661 = vsel %vm865, %v3605, %v3643
        %v3662 = vsel %vm865, %v3606, %v3645
        %v3663 = vsel %vm865, %v3607, %v3647
        %v3664 = vrot.slane %v3656, 7
        %v3665 = vrot.slane %v3657, 7
        %v3666 = vrot.slane %v3658, 7
        %v3667 = vrot.slane %v3659, 7
        %v3668 = vrot.slane %v3660, 7
        %v3669 = vrot.slane %v3661, 7
        %v3670 = vrot.slane %v3662, 7
        %v3671 = vrot.slane %v3663, 7
        %v3672 = vsel %vm882, %v3670, %v3671
        %v3673 = vsel %vm882, %v3669, %v3670
        %v3674 = vsel %vm882, %v3668, %v3669
        %v3675 = vsel %vm882, %v3667, %v3668
        %v3676 = vsel %vm882, %v3666, %v3667
        %v3677 = vsel %vm882, %v3665, %v3666
        %v3678 = vsel %vm882, %v3664, %v3665
        %v3679 = vsel %vm882, %v3671, %v3664
        %v3680 = vmul.f32 %v3672, %v545
        %v3681 = vmul.f32 %v3679, %v546
        %v3682 = vmul.f32 %v3678, %v547
        %v3683 = vmul.f32 %v3677, %v548
        %v3684 = vmul.f32 %v3676, %v549
        %v3685 = vmul.f32 %v3675, %v550
        %v3686 = vmul.f32 %v3674, %v551
        %v3687 = vmul.f32 %v3673, %v552
        %v3688 = vpack.c.bf16 %v3681, %v3680
        %v3689 = vpack.c.bf16 %v3683, %v3682
        %v3690 = vpack.c.bf16 %v3685, %v3684
        %v3691 = vpack.c.bf16 %v3687, %v3686
        %v3692 = vld [vmem:[%s9] sm:$0xf]
        %v3693 = vld [vmem:[%s9 + $0x4] sm:$0xf]
        %v3694 = vld [vmem:[%s9 + $0x8] sm:$0xf]
        %v3695 = vld [vmem:[%s9 + $0xc] sm:$0xf]
        %v3696 = vld [vmem:[%s9 + $0x10] sm:$0xf]
        %v3697 = vld [vmem:[%s9 + $0x14] sm:$0xf]
        %v3698 = vld [vmem:[%s9 + $0x18] sm:$0xf]
        %v3699 = vld [vmem:[%s9 + $0x1c] sm:$0xf]
        %v3700 = vmul.f32 %v3663, %v593
        %v3701 = vmul.f32 %v3656, %v594
        %v3702 = vmul.f32 %v3657, %v595
        %v3703 = vmul.f32 %v3658, %v596
        %v3704 = vmul.f32 %v3659, %v597
        %v3705 = vmul.f32 %v3660, %v598
        %v3706 = vmul.f32 %v3661, %v599
        %v3707 = vmul.f32 %v3662, %v600
        %v3708 = vpack.c.bf16 %v3701, %v3700
        %v3709 = vpack.c.bf16 %v3703, %v3702
        %v3710 = vpack.c.bf16 %v3705, %v3704
        %v3711 = vpack.c.bf16 %v3707, %v3706
        %s3712 = scalar_lea.vmem %s9, 32
        %v3713 = vld [vmem:[%s3712] sm:$0xf]
        %v3714 = vld [vmem:[%s3712 + $0x4] sm:$0xf]
        %v3715 = vld [vmem:[%s3712 + $0x8] sm:$0xf]
        %v3716 = vld [vmem:[%s3712 + $0xc] sm:$0xf]
        %v3717 = vld [vmem:[%s3712 + $0x10] sm:$0xf]
        %v3718 = vld [vmem:[%s3712 + $0x14] sm:$0xf]
        %v3719 = vld [vmem:[%s3712 + $0x18] sm:$0xf]
        %v3720 = vld [vmem:[%s3712 + $0x1c] sm:$0xf]
        %v3729 = vunpack.c.l.b16 %v3713
        %v3730 = vunpack.c.l.b16 %v3714
        %v3731 = vunpack.c.l.b16 %v3715
        %v3732 = vunpack.c.l.b16 %v3716
        %v3733 = vunpack.c.l.b16 %v3717
        %v3734 = vunpack.c.l.b16 %v3718
        %v3735 = vunpack.c.l.b16 %v3719
        %v3736 = vunpack.c.l.b16 %v3720
        %v3737 = vpack.c.b16 %v3730, %v3729
        %v3738 = vpack.c.b16 %v3732, %v3731
        %v3739 = vpack.c.b16 %v3734, %v3733
        %v3740 = vpack.c.b16 %v3736, %v3735
        %v3746 = vsel %vm956, %v3708, 0
        %v3749 = vsel %vm956, %v3709, 0
        %v3752 = vsel %vm956, %v3710, 0
        %v3755 = vsel %vm956, %v3711, 0
        %3757 = vmatprep.subr.bf16.mxu0 0
        %3758 = vmatpush1.bf16.msra.mxu0 %v3737
        %3759 = vmatprep.subr.bf16.mxu0 0
        %3760 = vmatpush1.bf16.msra.mxu0 %v3738
        %3761 = vmatprep.subr.bf16.mxu0 0
        %3762 = vmatpush1.bf16.msra.mxu0 %v3739
        %3763 = vmatprep.subr.bf16.mxu0 0
        %3764 = vmatpush1.bf16.msra.mxu0 %v3740
        %3765 = vmatprep.subr.bf16.mxu0 0
        %3766 = vmatpush1.bf16.msra.mxu0 0
        %3767 = vmatprep.subr.bf16.mxu0 0
        %3768 = vmatpush1.bf16.msra.mxu0 0
        %3769 = vmatprep.subr.bf16.mxu0 0
        %3770 = vmatpush1.bf16.msra.mxu0 0
        %3771 = vmatprep.subr.bf16.mxu0 0
        %3772 = vmatpush1.bf16.msra.mxu0 0
        %3773 = vmatprep.subr.bf16.mxu0 0
        %3774 = vmatpush1.bf16.msra.mxu0 0
        %3775 = vmatprep.subr.bf16.mxu0 0
        %3776 = vmatpush1.bf16.msra.mxu0 0
        %3777 = vmatprep.subr.bf16.mxu0 0
        %3778 = vmatpush1.bf16.msra.mxu0 0
        %3779 = vmatprep.subr.bf16.mxu0 0
        %3780 = vmatpush1.bf16.msra.mxu0 0
        %3781 = vmatprep.subr.bf16.mxu0 0
        %3782 = vmatpush1.bf16.msra.mxu0 0
        %3783 = vmatprep.subr.bf16.mxu0 0
        %3784 = vmatpush1.bf16.msra.mxu0 0
        %3785 = vmatprep.subr.bf16.mxu0 0
        %3786 = vmatpush1.bf16.msra.mxu0 0
        %3787 = vmatprep.subr.bf16.mxu0 0
        %3788 = vmatpush1.bf16.msra.mxu0 0
        %3789 = vmatprep.mubr.bf16.mxu0 0
        %3790 = vmatmul.mubr.bf16.gmra.mrb[0].mxu0 %v3746
        %v3791 = vpop.f32.mrb[0].mxu0
        %v3792 = vadd.f32 0.0, %v3791
        %v3793 = vpop.f32.mrb[0].mxu0
        %v3794 = vpop.f32.mrb[0].mxu0
        %v3795 = vadd.f32 0.0, %v3794
        %v3796 = vpop.f32.mrb[0].mxu0
        %3797 = vmatprep.mubr.bf16.mxu0 0
        %3798 = vmatmul.mubr.bf16.gmra.mrb[0].mxu0 %v3749
        %v3799 = vpop.f32.mrb[0].mxu0
        %v3800 = vadd.f32 0.0, %v3799
        %v3801 = vpop.f32.mrb[0].mxu0
        %v3802 = vpop.f32.mrb[0].mxu0
        %v3803 = vadd.f32 0.0, %v3802
        %v3804 = vpop.f32.mrb[0].mxu0
        %3805 = vmatprep.mubr.bf16.mxu0 0
        %3806 = vmatmul.mubr.bf16.gmra.mrb[0].mxu0 %v3752
        %v3807 = vpop.f32.mrb[0].mxu0
        %v3808 = vadd.f32 0.0, %v3807
        %v3809 = vpop.f32.mrb[0].mxu0
        %v3810 = vpop.f32.mrb[0].mxu0
        %v3811 = vadd.f32 0.0, %v3810
        %v3812 = vpop.f32.mrb[0].mxu0
        %3813 = vmatprep.mubr.bf16.mxu0 0
        %3814 = vmatmul.mubr.bf16.gmra.mrb[0].mxu0 %v3755
        %v3815 = vpop.f32.mrb[0].mxu0
        %v3816 = vadd.f32 0.0, %v3815
        %v3817 = vpop.f32.mrb[0].mxu0
        %v3818 = vpop.f32.mrb[0].mxu0
        %v3819 = vadd.f32 0.0, %v3818
        %v3820 = vpop.f32.mrb[0].mxu0
        %3821 = vdwg.mxu0
        %v3830 = vunpack.c.l.b16 %v3692
        %v3831 = vunpack.c.l.b16 %v3693
        %v3832 = vunpack.c.l.b16 %v3694
        %v3833 = vunpack.c.l.b16 %v3695
        %v3834 = vunpack.c.l.b16 %v3696
        %v3835 = vunpack.c.l.b16 %v3697
        %v3836 = vunpack.c.l.b16 %v3698
        %v3837 = vunpack.c.l.b16 %v3699
        %v3838 = vpack.c.b16 %v3831, %v3830
        %v3839 = vpack.c.b16 %v3833, %v3832
        %v3840 = vpack.c.b16 %v3835, %v3834
        %v3841 = vpack.c.b16 %v3837, %v3836
        %v3847 = vsel %vm956, %v3688, 0
        %v3850 = vsel %vm956, %v3689, 0
        %v3853 = vsel %vm956, %v3690, 0
        %v3856 = vsel %vm956, %v3691, 0
        %3858 = vmatprep.subr.bf16.mxu0 0
        %3859 = vmatpush1.bf16.msra.mxu0 %v3838
        %3860 = vmatprep.subr.bf16.mxu0 0
        %3861 = vmatpush1.bf16.msra.mxu0 %v3839
        %3862 = vmatprep.subr.bf16.mxu0 0
        %3863 = vmatpush1.bf16.msra.mxu0 %v3840
        %3864 = vmatprep.subr.bf16.mxu0 0
        %3865 = vmatpush1.bf16.msra.mxu0 %v3841
        %3866 = vmatprep.subr.bf16.mxu0 0
        %3867 = vmatpush1.bf16.msra.mxu0 0
        %3868 = vmatprep.subr.bf16.mxu0 0
        %3869 = vmatpush1.bf16.msra.mxu0 0
        %3870 = vmatprep.subr.bf16.mxu0 0
        %3871 = vmatpush1.bf16.msra.mxu0 0
        %3872 = vmatprep.subr.bf16.mxu0 0
        %3873 = vmatpush1.bf16.msra.mxu0 0
        %3874 = vmatprep.subr.bf16.mxu0 0
        %3875 = vmatpush1.bf16.msra.mxu0 0
        %3876 = vmatprep.subr.bf16.mxu0 0
        %3877 = vmatpush1.bf16.msra.mxu0 0
        %3878 = vmatprep.subr.bf16.mxu0 0
        %3879 = vmatpush1.bf16.msra.mxu0 0
        %3880 = vmatprep.subr.bf16.mxu0 0
        %3881 = vmatpush1.bf16.msra.mxu0 0
        %3882 = vmatprep.subr.bf16.mxu0 0
        %3883 = vmatpush1.bf16.msra.mxu0 0
        %3884 = vmatprep.subr.bf16.mxu0 0
        %3885 = vmatpush1.bf16.msra.mxu0 0
        %3886 = vmatprep.subr.bf16.mxu0 0
        %3887 = vmatpush1.bf16.msra.mxu0 0
        %3888 = vmatprep.subr.bf16.mxu0 0
        %3889 = vmatpush1.bf16.msra.mxu0 0
        %3890 = vmatprep.mubr.bf16.mxu0 0
        %3891 = vmatmul.mubr.bf16.gmra.mrb[0].mxu0 %v3847
        %v3892 = vpop.f32.mrb[0].mxu0
        %v3893 = vadd.f32 %v3792, %v3892
        %v3894 = vpop.f32.mrb[0].mxu0
        %v3895 = vpop.f32.mrb[0].mxu0
        %v3896 = vadd.f32 %v3795, %v3895
        %v3897 = vpop.f32.mrb[0].mxu0
        %3898 = vmatprep.mubr.bf16.mxu0 0
        %3899 = vmatmul.mubr.bf16.gmra.mrb[0].mxu0 %v3850
        %v3900 = vpop.f32.mrb[0].mxu0
        %v3901 = vadd.f32 %v3800, %v3900
        %v3902 = vpop.f32.mrb[0].mxu0
        %v3903 = vpop.f32.mrb[0].mxu0
        %v3904 = vadd.f32 %v3803, %v3903
        %v3905 = vpop.f32.mrb[0].mxu0
        %3906 = vmatprep.mubr.bf16.mxu0 0
        %3907 = vmatmul.mubr.bf16.gmra.mrb[0].mxu0 %v3853
        %v3908 = vpop.f32.mrb[0].mxu0
        %v3909 = vadd.f32 %v3808, %v3908
        %v3910 = vpop.f32.mrb[0].mxu0
        %v3911 = vpop.f32.mrb[0].mxu0
        %v3912 = vadd.f32 %v3811, %v3911
        %v3913 = vpop.f32.mrb[0].mxu0
        %3914 = vmatprep.mubr.bf16.mxu0 0
        %3915 = vmatmul.mubr.bf16.gmra.mrb[0].mxu0 %v3856
        %v3916 = vpop.f32.mrb[0].mxu0
        %v3917 = vadd.f32 %v3816, %v3916
        %v3918 = vpop.f32.mrb[0].mxu0
        %v3919 = vpop.f32.mrb[0].mxu0
        %v3920 = vadd.f32 %v3819, %v3919
        %v3921 = vpop.f32.mrb[0].mxu0
        %3922 = vdwg.mxu0
        %v3923 = vmul.f32 %v3679, %v705
        %v3924 = vmul.f32 %v3678, %v706
        %v3925 = vmul.f32 %v3677, %v707
        %v3926 = vmul.f32 %v3676, %v708
        %v3927 = vmul.f32 %v3675, %v709
        %v3928 = vmul.f32 %v3674, %v710
        %v3929 = vmul.f32 %v3673, %v711
        %v3930 = vmul.f32 %v3672, %v712
        %v3931 = vpack.c.bf16 %v3924, %v3923
        %v3932 = vpack.c.bf16 %v3926, %v3925
        %v3933 = vpack.c.bf16 %v3928, %v3927
        %v3934 = vpack.c.bf16 %v3930, %v3929
        %s3935 = scalar_lea.vmem %s9, 64
        %v3936 = vld [vmem:[%s3935] sm:$0xf]
        %v3937 = vld [vmem:[%s3935 + $0x4] sm:$0xf]
        %v3938 = vld [vmem:[%s3935 + $0x8] sm:$0xf]
        %v3939 = vld [vmem:[%s3935 + $0xc] sm:$0xf]
        %v3940 = vld [vmem:[%s3935 + $0x10] sm:$0xf]
        %v3941 = vld [vmem:[%s3935 + $0x14] sm:$0xf]
        %v3942 = vld [vmem:[%s3935 + $0x18] sm:$0xf]
        %v3943 = vld [vmem:[%s3935 + $0x1c] sm:$0xf]
        %v3952 = vunpack.c.l.b16 %v3936
        %v3953 = vunpack.c.l.b16 %v3937
        %v3954 = vunpack.c.l.b16 %v3938
        %v3955 = vunpack.c.l.b16 %v3939
        %v3956 = vunpack.c.l.b16 %v3940
        %v3957 = vunpack.c.l.b16 %v3941
        %v3958 = vunpack.c.l.b16 %v3942
        %v3959 = vunpack.c.l.b16 %v3943
        %v3960 = vpack.c.b16 %v3953, %v3952
        %v3961 = vpack.c.b16 %v3955, %v3954
        %v3962 = vpack.c.b16 %v3957, %v3956
        %v3963 = vpack.c.b16 %v3959, %v3958
        %v3969 = vsel %vm956, %v3931, 0
        %v3972 = vsel %vm956, %v3932, 0
        %v3975 = vsel %vm956, %v3933, 0
        %v3978 = vsel %vm956, %v3934, 0
        %3980 = vmatprep.subr.bf16.mxu0 0
        %3981 = vmatpush1.bf16.msra.mxu0 %v3960
        %3982 = vmatprep.subr.bf16.mxu0 0
        %3983 = vmatpush1.bf16.msra.mxu0 %v3961
        %3984 = vmatprep.subr.bf16.mxu0 0
        %3985 = vmatpush1.bf16.msra.mxu0 %v3962
        %3986 = vmatprep.subr.bf16.mxu0 0
        %3987 = vmatpush1.bf16.msra.mxu0 %v3963
        %3988 = vmatprep.subr.bf16.mxu0 0
        %3989 = vmatpush1.bf16.msra.mxu0 0
        %3990 = vmatprep.subr.bf16.mxu0 0
        %3991 = vmatpush1.bf16.msra.mxu0 0
        %3992 = vmatprep.subr.bf16.mxu0 0
        %3993 = vmatpush1.bf16.msra.mxu0 0
        %3994 = vmatprep.subr.bf16.mxu0 0
        %3995 = vmatpush1.bf16.msra.mxu0 0
        %3996 = vmatprep.subr.bf16.mxu0 0
        %3997 = vmatpush1.bf16.msra.mxu0 0
        %3998 = vmatprep.subr.bf16.mxu0 0
        %3999 = vmatpush1.bf16.msra.mxu0 0
        %4000 = vmatprep.subr.bf16.mxu0 0
        %4001 = vmatpush1.bf16.msra.mxu0 0
        %4002 = vmatprep.subr.bf16.mxu0 0
        %4003 = vmatpush1.bf16.msra.mxu0 0
        %4004 = vmatprep.subr.bf16.mxu0 0
        %4005 = vmatpush1.bf16.msra.mxu0 0
        %4006 = vmatprep.subr.bf16.mxu0 0
        %4007 = vmatpush1.bf16.msra.mxu0 0
        %4008 = vmatprep.subr.bf16.mxu0 0
        %4009 = vmatpush1.bf16.msra.mxu0 0
        %4010 = vmatprep.subr.bf16.mxu0 0
        %4011 = vmatpush1.bf16.msra.mxu0 0
        %4012 = vmatprep.mubr.bf16.mxu0 0
        %4013 = vmatmul.mubr.bf16.gmra.mrb[0].mxu0 %v3969
        %v4014 = vpop.f32.mrb[0].mxu0
        %v4015 = vadd.f32 0.0, %v4014
        %v4016 = vpop.f32.mrb[0].mxu0
        %v4017 = vpop.f32.mrb[0].mxu0
        %v4018 = vadd.f32 0.0, %v4017
        %v4019 = vpop.f32.mrb[0].mxu0
        %4020 = vmatprep.mubr.bf16.mxu0 0
        %4021 = vmatmul.mubr.bf16.gmra.mrb[0].mxu0 %v3972
        %v4022 = vpop.f32.mrb[0].mxu0
        %v4023 = vadd.f32 0.0, %v4022
        %v4024 = vpop.f32.mrb[0].mxu0
        %v4025 = vpop.f32.mrb[0].mxu0
        %v4026 = vadd.f32 0.0, %v4025
        %v4027 = vpop.f32.mrb[0].mxu0
        %4028 = vmatprep.mubr.bf16.mxu0 0
        %4029 = vmatmul.mubr.bf16.gmra.mrb[0].mxu0 %v3975
        %v4030 = vpop.f32.mrb[0].mxu0
        %v4031 = vadd.f32 0.0, %v4030
        %v4032 = vpop.f32.mrb[0].mxu0
        %v4033 = vpop.f32.mrb[0].mxu0
        %v4034 = vadd.f32 0.0, %v4033
        %v4035 = vpop.f32.mrb[0].mxu0
        %4036 = vmatprep.mubr.bf16.mxu0 0
        %4037 = vmatmul.mubr.bf16.gmra.mrb[0].mxu0 %v3978
        %v4038 = vpop.f32.mrb[0].mxu0
        %v4039 = vadd.f32 0.0, %v4038
        %v4040 = vpop.f32.mrb[0].mxu0
        %v4041 = vpop.f32.mrb[0].mxu0
        %v4042 = vadd.f32 0.0, %v4041
        %v4043 = vpop.f32.mrb[0].mxu0
        %4044 = vdwg.mxu0
        %v4045 = vadd.f32 %v3893, %v4015
        %v4046 = vadd.f32 %v3896, %v4018
        %v4047 = vadd.f32 %v3901, %v4023
        %v4048 = vadd.f32 %v3904, %v4026
        %v4049 = vadd.f32 %v3909, %v4031
        %v4050 = vadd.f32 %v3912, %v4034
        %v4051 = vadd.f32 %v3917, %v4039
        %v4052 = vadd.f32 %v3920, %v4042
        %v4053 = vpack.c.bf16 %v3657, %v3656
        %v4054 = vpack.c.bf16 %v3659, %v3658
        %v4055 = vpack.c.bf16 %v3661, %v3660
        %v4056 = vpack.c.bf16 %v3663, %v3662
        %s4057 = scalar_lea.vmem %s9, 96
        %v4058 = vld [vmem:[%s4057] sm:$0xf]
        %v4059 = vld [vmem:[%s4057 + $0x4] sm:$0xf]
        %v4060 = vld [vmem:[%s4057 + $0x8] sm:$0xf]
        %v4061 = vld [vmem:[%s4057 + $0xc] sm:$0xf]
        %v4062 = vld [vmem:[%s4057 + $0x10] sm:$0xf]
        %v4063 = vld [vmem:[%s4057 + $0x14] sm:$0xf]
        %v4064 = vld [vmem:[%s4057 + $0x18] sm:$0xf]
        %v4065 = vld [vmem:[%s4057 + $0x1c] sm:$0xf]
        %v4074 = vunpack.c.l.b16 %v4058
        %v4075 = vunpack.c.l.b16 %v4059
        %v4076 = vunpack.c.l.b16 %v4060
        %v4077 = vunpack.c.l.b16 %v4061
        %v4078 = vunpack.c.l.b16 %v4062
        %v4079 = vunpack.c.l.b16 %v4063
        %v4080 = vunpack.c.l.b16 %v4064
        %v4081 = vunpack.c.l.b16 %v4065
        %v4082 = vpack.c.b16 %v4075, %v4074
        %v4083 = vpack.c.b16 %v4077, %v4076
        %v4084 = vpack.c.b16 %v4079, %v4078
        %v4085 = vpack.c.b16 %v4081, %v4080
        %v4091 = vsel %vm956, %v4053, 0
        %v4094 = vsel %vm956, %v4054, 0
        %v4097 = vsel %vm956, %v4055, 0
        %v4100 = vsel %vm956, %v4056, 0
        %4102 = vmatprep.subr.bf16.mxu0 0
        %4103 = vmatpush1.bf16.msra.mxu0 %v4082
        %4104 = vmatprep.subr.bf16.mxu0 0
        %4105 = vmatpush1.bf16.msra.mxu0 %v4083
        %4106 = vmatprep.subr.bf16.mxu0 0
        %4107 = vmatpush1.bf16.msra.mxu0 %v4084
        %4108 = vmatprep.subr.bf16.mxu0 0
        %4109 = vmatpush1.bf16.msra.mxu0 %v4085
        %4110 = vmatprep.subr.bf16.mxu0 0
        %4111 = vmatpush1.bf16.msra.mxu0 0
        %4112 = vmatprep.subr.bf16.mxu0 0
        %4113 = vmatpush1.bf16.msra.mxu0 0
        %4114 = vmatprep.subr.bf16.mxu0 0
        %4115 = vmatpush1.bf16.msra.mxu0 0
        %4116 = vmatprep.subr.bf16.mxu0 0
        %4117 = vmatpush1.bf16.msra.mxu0 0
        %4118 = vmatprep.subr.bf16.mxu0 0
        %4119 = vmatpush1.bf16.msra.mxu0 0
        %4120 = vmatprep.subr.bf16.mxu0 0
        %4121 = vmatpush1.bf16.msra.mxu0 0
        %4122 = vmatprep.subr.bf16.mxu0 0
        %4123 = vmatpush1.bf16.msra.mxu0 0
        %4124 = vmatprep.subr.bf16.mxu0 0
        %4125 = vmatpush1.bf16.msra.mxu0 0
        %4126 = vmatprep.subr.bf16.mxu0 0
        %4127 = vmatpush1.bf16.msra.mxu0 0
        %4128 = vmatprep.subr.bf16.mxu0 0
        %4129 = vmatpush1.bf16.msra.mxu0 0
        %4130 = vmatprep.subr.bf16.mxu0 0
        %4131 = vmatpush1.bf16.msra.mxu0 0
        %4132 = vmatprep.subr.bf16.mxu0 0
        %4133 = vmatpush1.bf16.msra.mxu0 0
        %4134 = vmatprep.mubr.bf16.mxu0 0
        %4135 = vmatmul.mubr.bf16.gmra.mrb[0].mxu0 %v4091
        %v4136 = vpop.f32.mrb[0].mxu0
        %v4137 = vadd.f32 0.0, %v4136
        %v4138 = vpop.f32.mrb[0].mxu0
        %v4139 = vpop.f32.mrb[0].mxu0
        %v4140 = vadd.f32 0.0, %v4139
        %v4141 = vpop.f32.mrb[0].mxu0
        %4142 = vmatprep.mubr.bf16.mxu0 0
        %4143 = vmatmul.mubr.bf16.gmra.mrb[0].mxu0 %v4094
        %v4144 = vpop.f32.mrb[0].mxu0
        %v4145 = vadd.f32 0.0, %v4144
        %v4146 = vpop.f32.mrb[0].mxu0
        %v4147 = vpop.f32.mrb[0].mxu0
        %v4148 = vadd.f32 0.0, %v4147
        %v4149 = vpop.f32.mrb[0].mxu0
        %4150 = vmatprep.mubr.bf16.mxu0 0
        %4151 = vmatmul.mubr.bf16.gmra.mrb[0].mxu0 %v4097
        %v4152 = vpop.f32.mrb[0].mxu0
        %v4153 = vadd.f32 0.0, %v4152
        %v4154 = vpop.f32.mrb[0].mxu0
        %v4155 = vpop.f32.mrb[0].mxu0
        %v4156 = vadd.f32 0.0, %v4155
        %v4157 = vpop.f32.mrb[0].mxu0
        %4158 = vmatprep.mubr.bf16.mxu0 0
        %4159 = vmatmul.mubr.bf16.gmra.mrb[0].mxu0 %v4100
        %v4160 = vpop.f32.mrb[0].mxu0
        %v4161 = vadd.f32 0.0, %v4160
        %v4162 = vpop.f32.mrb[0].mxu0
        %v4163 = vpop.f32.mrb[0].mxu0
        %v4164 = vadd.f32 0.0, %v4163
        %v4165 = vpop.f32.mrb[0].mxu0
        %4166 = vdwg.mxu0
        %v4167 = vadd.f32 %v4045, %v4137
        %v4168 = vadd.f32 %v4046, %v4140
        %v4169 = vadd.f32 %v4047, %v4145
        %v4170 = vadd.f32 %v4048, %v4148
        %v4171 = vadd.f32 %v4049, %v4153
        %v4172 = vadd.f32 %v4050, %v4156
        %v4173 = vadd.f32 %v4051, %v4161
        %v4174 = vadd.f32 %v4052, %v4164
        %v4175 = vld [vmem:[%s10] sm:$0x1]
        %v4177 = vlaneseq
        %v4178 = vshrl.u32 %v4177, 7
        %v4179 = vsub.s32 0, %v4178
        %v4180 = vrot.slane %v4175, %v4179
        %v4182 = vadd.f32 %v4167, %v4180
        %v4183 = vadd.f32 %v4168, %v4180
        %v4184 = vadd.f32 %v4169, %v4180
        %v4185 = vadd.f32 %v4170, %v4180
        %v4186 = vadd.f32 %v4171, %v4180
        %v4187 = vadd.f32 %v4172, %v4180
        %v4188 = vadd.f32 %v4173, %v4180
        %v4189 = vadd.f32 %v4174, %v4180
        %v4190 = vsub.f32 0.0, %v4182
        %v4191 = vsub.f32 0.0, %v4183
        %v4192 = vsub.f32 0.0, %v4184
        %v4193 = vsub.f32 0.0, %v4185
        %v4194 = vsub.f32 0.0, %v4186
        %v4195 = vsub.f32 0.0, %v4187
        %v4196 = vsub.f32 0.0, %v4188
        %v4197 = vsub.f32 0.0, %v4189
        %v4198 = vmul.f32 %v4190, 1.442695
        %v4199 = vpow.pop %v4198
        %v4200 = vmul.f32 %v4191, 1.442695
        %v4201 = vpow.pop %v4200
        %v4202 = vmul.f32 %v4192, 1.442695
        %v4203 = vpow.pop %v4202
        %v4204 = vmul.f32 %v4193, 1.442695
        %v4205 = vpow.pop %v4204
        %v4206 = vmul.f32 %v4194, 1.442695
        %v4207 = vpow.pop %v4206
        %v4208 = vmul.f32 %v4195, 1.442695
        %v4209 = vpow.pop %v4208
        %v4210 = vmul.f32 %v4196, 1.442695
        %v4211 = vpow.pop %v4210
        %v4212 = vmul.f32 %v4197, 1.442695
        %v4213 = vpow.pop %v4212
        %v4214 = vadd.f32 %v4199, 1.0
        %v4215 = vadd.f32 %v4201, 1.0
        %v4216 = vadd.f32 %v4203, 1.0
        %v4217 = vadd.f32 %v4205, 1.0
        %v4218 = vadd.f32 %v4207, 1.0
        %v4219 = vadd.f32 %v4209, 1.0
        %v4220 = vadd.f32 %v4211, 1.0
        %v4221 = vadd.f32 %v4213, 1.0
        %v4222 = vrcp.pop %v4214
        %v4223 = vrcp.pop %v4215
        %v4224 = vrcp.pop %v4216
        %v4225 = vrcp.pop %v4217
        %v4226 = vrcp.pop %v4218
        %v4227 = vrcp.pop %v4219
        %v4228 = vrcp.pop %v4220
        %v4229 = vrcp.pop %v4221
        %4238 = vrot.lane.b32.xlu0 %v4222, 96
        %v4239 = vpop.permute.xlu0 %4238
        %4240 = vrot.lane.b32.xlu0 %v4223, 96
        %v4241 = vpop.permute.xlu0 %4240
        %4242 = vrot.lane.b32.xlu0 %v4224, 96
        %v4243 = vpop.permute.xlu0 %4242
        %4244 = vrot.lane.b32.xlu0 %v4225, 96
        %v4245 = vpop.permute.xlu0 %4244
        %4246 = vrot.lane.b32.xlu0 %v4226, 96
        %v4247 = vpop.permute.xlu0 %4246
        %4248 = vrot.lane.b32.xlu0 %v4227, 96
        %v4249 = vpop.permute.xlu0 %4248
        %4250 = vrot.lane.b32.xlu0 %v4228, 96
        %v4251 = vpop.permute.xlu0 %4250
        %4252 = vrot.lane.b32.xlu0 %v4229, 96
        %v4253 = vpop.permute.xlu0 %4252
        %v4262 = vmul.f32 %v4182, %v4239
        %v4263 = vmul.f32 %v4183, %v4241
        %v4264 = vmul.f32 %v4184, %v4243
        %v4265 = vmul.f32 %v4185, %v4245
        %v4266 = vmul.f32 %v4186, %v4247
        %v4267 = vmul.f32 %v4187, %v4249
        %v4268 = vmul.f32 %v4188, %v4251
        %v4269 = vmul.f32 %v4189, %v4253
        %v4270 = vadd.f32 %v753, %v4262
        %v4271 = vadd.f32 %v754, %v4263
        %v4272 = vadd.f32 %v755, %v4264
        %v4273 = vadd.f32 %v756, %v4265
        %v4274 = vadd.f32 %v757, %v4266
        %v4275 = vadd.f32 %v758, %v4267
        %v4276 = vadd.f32 %v759, %v4268
        %v4277 = vadd.f32 %v760, %v4269
        %v4278 = vrot.slane %v2785, 7
        %v4279 = vrot.slane %v2786, 7
        %v4280 = vrot.slane %v2787, 7
        %v4281 = vrot.slane %v2788, 7
        %v4282 = vrot.slane %v2789, 7
        %v4283 = vrot.slane %v2790, 7
        %v4284 = vrot.slane %v2791, 7
        %v4285 = vrot.slane %v2792, 7
        %v4286 = vsel %vm882, %v4284, %v4285
        %v4287 = vsel %vm882, %v4283, %v4284
        %v4288 = vsel %vm882, %v4282, %v4283
        %v4289 = vsel %vm882, %v4281, %v4282
        %v4290 = vsel %vm882, %v4280, %v4281
        %v4291 = vsel %vm882, %v4279, %v4280
        %v4292 = vsel %vm882, %v4278, %v4279
        %v4293 = vsel %vm882, %v4285, %v4278
        %v4294 = vmul.f32 %v4286, %v545
        %v4295 = vmul.f32 %v4293, %v546
        %v4296 = vmul.f32 %v4292, %v547
        %v4297 = vmul.f32 %v4291, %v548
        %v4298 = vmul.f32 %v4290, %v549
        %v4299 = vmul.f32 %v4289, %v550
        %v4300 = vmul.f32 %v4288, %v551
        %v4301 = vmul.f32 %v4287, %v552
        %v4302 = vpack.c.bf16 %v4295, %v4294
        %v4303 = vpack.c.bf16 %v4297, %v4296
        %v4304 = vpack.c.bf16 %v4299, %v4298
        %v4305 = vpack.c.bf16 %v4301, %v4300
        %s4306 = scalar_lea.vmem %s2, 192
        %v4307 = vld [vmem:[%s4306] sm:$0xf]
        %v4308 = vld [vmem:[%s4306 + $0x4] sm:$0xf]
        %v4309 = vld [vmem:[%s4306 + $0x8] sm:$0xf]
        %v4310 = vld [vmem:[%s4306 + $0xc] sm:$0xf]
        %v4311 = vld [vmem:[%s4306 + $0x10] sm:$0xf]
        %v4312 = vld [vmem:[%s4306 + $0x14] sm:$0xf]
        %v4313 = vld [vmem:[%s4306 + $0x18] sm:$0xf]
        %v4314 = vld [vmem:[%s4306 + $0x1c] sm:$0xf]
        %v4315 = vmul.f32 %v2792, %v593
        %v4316 = vmul.f32 %v2785, %v594
        %v4317 = vmul.f32 %v2786, %v595
        %v4318 = vmul.f32 %v2787, %v596
        %v4319 = vmul.f32 %v2788, %v597
        %v4320 = vmul.f32 %v2789, %v598
        %v4321 = vmul.f32 %v2790, %v599
        %v4322 = vmul.f32 %v2791, %v600
        %v4323 = vpack.c.bf16 %v4316, %v4315
        %v4324 = vpack.c.bf16 %v4318, %v4317
        %v4325 = vpack.c.bf16 %v4320, %v4319
        %v4326 = vpack.c.bf16 %v4322, %v4321
        %s4327 = scalar_lea.vmem %s2, 224
        %v4328 = vld [vmem:[%s4327] sm:$0xf]
        %v4329 = vld [vmem:[%s4327 + $0x4] sm:$0xf]
        %v4330 = vld [vmem:[%s4327 + $0x8] sm:$0xf]
        %v4331 = vld [vmem:[%s4327 + $0xc] sm:$0xf]
        %v4332 = vld [vmem:[%s4327 + $0x10] sm:$0xf]
        %v4333 = vld [vmem:[%s4327 + $0x14] sm:$0xf]
        %v4334 = vld [vmem:[%s4327 + $0x18] sm:$0xf]
        %v4335 = vld [vmem:[%s4327 + $0x1c] sm:$0xf]
        %v4344 = vunpack.c.l.b16 %v4328
        %v4345 = vunpack.c.l.b16 %v4329
        %v4346 = vunpack.c.l.b16 %v4330
        %v4347 = vunpack.c.l.b16 %v4331
        %v4348 = vunpack.c.l.b16 %v4332
        %v4349 = vunpack.c.l.b16 %v4333
        %v4350 = vunpack.c.l.b16 %v4334
        %v4351 = vunpack.c.l.b16 %v4335
        %v4352 = vpack.c.b16 %v4345, %v4344
        %v4353 = vpack.c.b16 %v4347, %v4346
        %v4354 = vpack.c.b16 %v4349, %v4348
        %v4355 = vpack.c.b16 %v4351, %v4350
        %v4361 = vsel %vm956, %v4323, 0
        %v4364 = vsel %vm956, %v4324, 0
        %v4367 = vsel %vm956, %v4325, 0
        %v4370 = vsel %vm956, %v4326, 0
        %4372 = vmatprep.subr.bf16.mxu0 0
        %4373 = vmatpush1.bf16.msra.mxu0 %v4352
        %4374 = vmatprep.subr.bf16.mxu0 0
        %4375 = vmatpush1.bf16.msra.mxu0 %v4353
        %4376 = vmatprep.subr.bf16.mxu0 0
        %4377 = vmatpush1.bf16.msra.mxu0 %v4354
        %4378 = vmatprep.subr.bf16.mxu0 0
        %4379 = vmatpush1.bf16.msra.mxu0 %v4355
        %4380 = vmatprep.subr.bf16.mxu0 0
        %4381 = vmatpush1.bf16.msra.mxu0 0
        %4382 = vmatprep.subr.bf16.mxu0 0
        %4383 = vmatpush1.bf16.msra.mxu0 0
        %4384 = vmatprep.subr.bf16.mxu0 0
        %4385 = vmatpush1.bf16.msra.mxu0 0
        %4386 = vmatprep.subr.bf16.mxu0 0
        %4387 = vmatpush1.bf16.msra.mxu0 0
        %4388 = vmatprep.subr.bf16.mxu0 0
        %4389 = vmatpush1.bf16.msra.mxu0 0
        %4390 = vmatprep.subr.bf16.mxu0 0
        %4391 = vmatpush1.bf16.msra.mxu0 0
        %4392 = vmatprep.subr.bf16.mxu0 0
        %4393 = vmatpush1.bf16.msra.mxu0 0
        %4394 = vmatprep.subr.bf16.mxu0 0
        %4395 = vmatpush1.bf16.msra.mxu0 0
        %4396 = vmatprep.subr.bf16.mxu0 0
        %4397 = vmatpush1.bf16.msra.mxu0 0
        %4398 = vmatprep.subr.bf16.mxu0 0
        %4399 = vmatpush1.bf16.msra.mxu0 0
        %4400 = vmatprep.subr.bf16.mxu0 0
        %4401 = vmatpush1.bf16.msra.mxu0 0
        %4402 = vmatprep.subr.bf16.mxu0 0
        %4403 = vmatpush1.bf16.msra.mxu0 0
        %4404 = vmatprep.mubr.bf16.mxu0 0
        %4405 = vmatmul.mubr.bf16.gmra.mrb[0].mxu0 %v4361
        %v4406 = vpop.f32.mrb[0].mxu0
        %v4407 = vadd.f32 0.0, %v4406
        %v4408 = vpop.f32.mrb[0].mxu0
        %v4409 = vpop.f32.mrb[0].mxu0
        %v4410 = vadd.f32 0.0, %v4409
        %v4411 = vpop.f32.mrb[0].mxu0
        %4412 = vmatprep.mubr.bf16.mxu0 0
        %4413 = vmatmul.mubr.bf16.gmra.mrb[0].mxu0 %v4364
        %v4414 = vpop.f32.mrb[0].mxu0
        %v4415 = vadd.f32 0.0, %v4414
        %v4416 = vpop.f32.mrb[0].mxu0
        %v4417 = vpop.f32.mrb[0].mxu0
        %v4418 = vadd.f32 0.0, %v4417
        %v4419 = vpop.f32.mrb[0].mxu0
        %4420 = vmatprep.mubr.bf16.mxu0 0
        %4421 = vmatmul.mubr.bf16.gmra.mrb[0].mxu0 %v4367
        %v4422 = vpop.f32.mrb[0].mxu0
        %v4423 = vadd.f32 0.0, %v4422
        %v4424 = vpop.f32.mrb[0].mxu0
        %v4425 = vpop.f32.mrb[0].mxu0
        %v4426 = vadd.f32 0.0, %v4425
        %v4427 = vpop.f32.mrb[0].mxu0
        %4428 = vmatprep.mubr.bf16.mxu0 0
        %4429 = vmatmul.mubr.bf16.gmra.mrb[0].mxu0 %v4370
        %v4430 = vpop.f32.mrb[0].mxu0
        %v4431 = vadd.f32 0.0, %v4430
        %v4432 = vpop.f32.mrb[0].mxu0
        %v4433 = vpop.f32.mrb[0].mxu0
        %v4434 = vadd.f32 0.0, %v4433
        %v4435 = vpop.f32.mrb[0].mxu0
        %4436 = vdwg.mxu0
        %v4445 = vunpack.c.l.b16 %v4307
        %v4446 = vunpack.c.l.b16 %v4308
        %v4447 = vunpack.c.l.b16 %v4309
        %v4448 = vunpack.c.l.b16 %v4310
        %v4449 = vunpack.c.l.b16 %v4311
        %v4450 = vunpack.c.l.b16 %v4312
        %v4451 = vunpack.c.l.b16 %v4313
        %v4452 = vunpack.c.l.b16 %v4314
        %v4453 = vpack.c.b16 %v4446, %v4445
        %v4454 = vpack.c.b16 %v4448, %v4447
        %v4455 = vpack.c.b16 %v4450, %v4449
        %v4456 = vpack.c.b16 %v4452, %v4451
        %v4462 = vsel %vm956, %v4302, 0
        %v4465 = vsel %vm956, %v4303, 0
        %v4468 = vsel %vm956, %v4304, 0
        %v4471 = vsel %vm956, %v4305, 0
        %4473 = vmatprep.subr.bf16.mxu0 0
        %4474 = vmatpush1.bf16.msra.mxu0 %v4453
        %4475 = vmatprep.subr.bf16.mxu0 0
        %4476 = vmatpush1.bf16.msra.mxu0 %v4454
        %4477 = vmatprep.subr.bf16.mxu0 0
        %4478 = vmatpush1.bf16.msra.mxu0 %v4455
        %4479 = vmatprep.subr.bf16.mxu0 0
        %4480 = vmatpush1.bf16.msra.mxu0 %v4456
        %4481 = vmatprep.subr.bf16.mxu0 0
        %4482 = vmatpush1.bf16.msra.mxu0 0
        %4483 = vmatprep.subr.bf16.mxu0 0
        %4484 = vmatpush1.bf16.msra.mxu0 0
        %4485 = vmatprep.subr.bf16.mxu0 0
        %4486 = vmatpush1.bf16.msra.mxu0 0
        %4487 = vmatprep.subr.bf16.mxu0 0
        %4488 = vmatpush1.bf16.msra.mxu0 0
        %4489 = vmatprep.subr.bf16.mxu0 0
        %4490 = vmatpush1.bf16.msra.mxu0 0
        %4491 = vmatprep.subr.bf16.mxu0 0
        %4492 = vmatpush1.bf16.msra.mxu0 0
        %4493 = vmatprep.subr.bf16.mxu0 0
        %4494 = vmatpush1.bf16.msra.mxu0 0
        %4495 = vmatprep.subr.bf16.mxu0 0
        %4496 = vmatpush1.bf16.msra.mxu0 0
        %4497 = vmatprep.subr.bf16.mxu0 0
        %4498 = vmatpush1.bf16.msra.mxu0 0
        %4499 = vmatprep.subr.bf16.mxu0 0
        %4500 = vmatpush1.bf16.msra.mxu0 0
        %4501 = vmatprep.subr.bf16.mxu0 0
        %4502 = vmatpush1.bf16.msra.mxu0 0
        %4503 = vmatprep.subr.bf16.mxu0 0
        %4504 = vmatpush1.bf16.msra.mxu0 0
        %4505 = vmatprep.mubr.bf16.mxu0 0
        %4506 = vmatmul.mubr.bf16.gmra.mrb[0].mxu0 %v4462
        %v4507 = vpop.f32.mrb[0].mxu0
        %v4508 = vadd.f32 %v4407, %v4507
        %v4509 = vpop.f32.mrb[0].mxu0
        %v4510 = vpop.f32.mrb[0].mxu0
        %v4511 = vadd.f32 %v4410, %v4510
        %v4512 = vpop.f32.mrb[0].mxu0
        %4513 = vmatprep.mubr.bf16.mxu0 0
        %4514 = vmatmul.mubr.bf16.gmra.mrb[0].mxu0 %v4465
        %v4515 = vpop.f32.mrb[0].mxu0
        %v4516 = vadd.f32 %v4415, %v4515
        %v4517 = vpop.f32.mrb[0].mxu0
        %v4518 = vpop.f32.mrb[0].mxu0
        %v4519 = vadd.f32 %v4418, %v4518
        %v4520 = vpop.f32.mrb[0].mxu0
        %4521 = vmatprep.mubr.bf16.mxu0 0
        %4522 = vmatmul.mubr.bf16.gmra.mrb[0].mxu0 %v4468
        %v4523 = vpop.f32.mrb[0].mxu0
        %v4524 = vadd.f32 %v4423, %v4523
        %v4525 = vpop.f32.mrb[0].mxu0
        %v4526 = vpop.f32.mrb[0].mxu0
        %v4527 = vadd.f32 %v4426, %v4526
        %v4528 = vpop.f32.mrb[0].mxu0
        %4529 = vmatprep.mubr.bf16.mxu0 0
        %4530 = vmatmul.mubr.bf16.gmra.mrb[0].mxu0 %v4471
        %v4531 = vpop.f32.mrb[0].mxu0
        %v4532 = vadd.f32 %v4431, %v4531
        %v4533 = vpop.f32.mrb[0].mxu0
        %v4534 = vpop.f32.mrb[0].mxu0
        %v4535 = vadd.f32 %v4434, %v4534
        %v4536 = vpop.f32.mrb[0].mxu0
        %4537 = vdwg.mxu0
        %v4538 = vrot.slane %v2785, 1
        %v4539 = vrot.slane %v2786, 1
        %v4540 = vrot.slane %v2787, 1
        %v4541 = vrot.slane %v2788, 1
        %v4542 = vrot.slane %v2789, 1
        %v4543 = vrot.slane %v2790, 1
        %v4544 = vrot.slane %v2791, 1
        %v4545 = vrot.slane %v2792, 1
        %v4546 = vsel %vm1143, %v4544, %v4545
        %v4547 = vsel %vm1143, %v4543, %v4544
        %v4548 = vsel %vm1143, %v4542, %v4543
        %v4549 = vsel %vm1143, %v4541, %v4542
        %v4550 = vsel %vm1143, %v4540, %v4541
        %v4551 = vsel %vm1143, %v4539, %v4540
        %v4552 = vsel %vm1143, %v4538, %v4539
        %v4553 = vsel %vm1143, %v4545, %v4538
        %v4554 = vmul.f32 %v4553, %v649
        %v4555 = vmul.f32 %v4552, %v650
        %v4556 = vmul.f32 %v4551, %v651
        %v4557 = vmul.f32 %v4550, %v652
        %v4558 = vmul.f32 %v4549, %v653
        %v4559 = vmul.f32 %v4548, %v654
        %v4560 = vmul.f32 %v4547, %v655
        %v4561 = vmul.f32 %v4546, %v656
        %v4562 = vpack.c.bf16 %v4555, %v4554
        %v4563 = vpack.c.bf16 %v4557, %v4556
        %v4564 = vpack.c.bf16 %v4559, %v4558
        %v4565 = vpack.c.bf16 %v4561, %v4560
        %s4566 = scalar_lea.vmem %s2, 256
        %v4567 = vld [vmem:[%s4566] sm:$0xf]
        %v4568 = vld [vmem:[%s4566 + $0x4] sm:$0xf]
        %v4569 = vld [vmem:[%s4566 + $0x8] sm:$0xf]
        %v4570 = vld [vmem:[%s4566 + $0xc] sm:$0xf]
        %v4571 = vld [vmem:[%s4566 + $0x10] sm:$0xf]
        %v4572 = vld [vmem:[%s4566 + $0x14] sm:$0xf]
        %v4573 = vld [vmem:[%s4566 + $0x18] sm:$0xf]
        %v4574 = vld [vmem:[%s4566 + $0x1c] sm:$0xf]
        %v4583 = vunpack.c.l.b16 %v4567
        %v4584 = vunpack.c.l.b16 %v4568
        %v4585 = vunpack.c.l.b16 %v4569
        %v4586 = vunpack.c.l.b16 %v4570
        %v4587 = vunpack.c.l.b16 %v4571
        %v4588 = vunpack.c.l.b16 %v4572
        %v4589 = vunpack.c.l.b16 %v4573
        %v4590 = vunpack.c.l.b16 %v4574
        %v4591 = vpack.c.b16 %v4584, %v4583
        %v4592 = vpack.c.b16 %v4586, %v4585
        %v4593 = vpack.c.b16 %v4588, %v4587
        %v4594 = vpack.c.b16 %v4590, %v4589
        %v4600 = vsel %vm956, %v4562, 0
        %v4603 = vsel %vm956, %v4563, 0
        %v4606 = vsel %vm956, %v4564, 0
        %v4609 = vsel %vm956, %v4565, 0
        %4611 = vmatprep.subr.bf16.mxu0 0
        %4612 = vmatpush1.bf16.msra.mxu0 %v4591
        %4613 = vmatprep.subr.bf16.mxu0 0
        %4614 = vmatpush1.bf16.msra.mxu0 %v4592
        %4615 = vmatprep.subr.bf16.mxu0 0
        %4616 = vmatpush1.bf16.msra.mxu0 %v4593
        %4617 = vmatprep.subr.bf16.mxu0 0
        %4618 = vmatpush1.bf16.msra.mxu0 %v4594
        %4619 = vmatprep.subr.bf16.mxu0 0
        %4620 = vmatpush1.bf16.msra.mxu0 0
        %4621 = vmatprep.subr.bf16.mxu0 0
        %4622 = vmatpush1.bf16.msra.mxu0 0
        %4623 = vmatprep.subr.bf16.mxu0 0
        %4624 = vmatpush1.bf16.msra.mxu0 0
        %4625 = vmatprep.subr.bf16.mxu0 0
        %4626 = vmatpush1.bf16.msra.mxu0 0
        %4627 = vmatprep.subr.bf16.mxu0 0
        %4628 = vmatpush1.bf16.msra.mxu0 0
        %4629 = vmatprep.subr.bf16.mxu0 0
        %4630 = vmatpush1.bf16.msra.mxu0 0
        %4631 = vmatprep.subr.bf16.mxu0 0
        %4632 = vmatpush1.bf16.msra.mxu0 0
        %4633 = vmatprep.subr.bf16.mxu0 0
        %4634 = vmatpush1.bf16.msra.mxu0 0
        %4635 = vmatprep.subr.bf16.mxu0 0
        %4636 = vmatpush1.bf16.msra.mxu0 0
        %4637 = vmatprep.subr.bf16.mxu0 0
        %4638 = vmatpush1.bf16.msra.mxu0 0
        %4639 = vmatprep.subr.bf16.mxu0 0
        %4640 = vmatpush1.bf16.msra.mxu0 0
        %4641 = vmatprep.subr.bf16.mxu0 0
        %4642 = vmatpush1.bf16.msra.mxu0 0
        %4643 = vmatprep.mubr.bf16.mxu0 0
        %4644 = vmatmul.mubr.bf16.gmra.mrb[0].mxu0 %v4600
        %v4645 = vpop.f32.mrb[0].mxu0
        %v4646 = vadd.f32 0.0, %v4645
        %v4647 = vpop.f32.mrb[0].mxu0
        %v4648 = vpop.f32.mrb[0].mxu0
        %v4649 = vadd.f32 0.0, %v4648
        %v4650 = vpop.f32.mrb[0].mxu0
        %4651 = vmatprep.mubr.bf16.mxu0 0
        %4652 = vmatmul.mubr.bf16.gmra.mrb[0].mxu0 %v4603
        %v4653 = vpop.f32.mrb[0].mxu0
        %v4654 = vadd.f32 0.0, %v4653
        %v4655 = vpop.f32.mrb[0].mxu0
        %v4656 = vpop.f32.mrb[0].mxu0
        %v4657 = vadd.f32 0.0, %v4656
        %v4658 = vpop.f32.mrb[0].mxu0
        %4659 = vmatprep.mubr.bf16.mxu0 0
        %4660 = vmatmul.mubr.bf16.gmra.mrb[0].mxu0 %v4606
        %v4661 = vpop.f32.mrb[0].mxu0
        %v4662 = vadd.f32 0.0, %v4661
        %v4663 = vpop.f32.mrb[0].mxu0
        %v4664 = vpop.f32.mrb[0].mxu0
        %v4665 = vadd.f32 0.0, %v4664
        %v4666 = vpop.f32.mrb[0].mxu0
        %4667 = vmatprep.mubr.bf16.mxu0 0
        %4668 = vmatmul.mubr.bf16.gmra.mrb[0].mxu0 %v4609
        %v4669 = vpop.f32.mrb[0].mxu0
        %v4670 = vadd.f32 0.0, %v4669
        %v4671 = vpop.f32.mrb[0].mxu0
        %v4672 = vpop.f32.mrb[0].mxu0
        %v4673 = vadd.f32 0.0, %v4672
        %v4674 = vpop.f32.mrb[0].mxu0
        %4675 = vdwg.mxu0
        %v4676 = vadd.f32 %v4508, %v4646
        %v4677 = vadd.f32 %v4511, %v4649
        %v4678 = vadd.f32 %v4516, %v4654
        %v4679 = vadd.f32 %v4519, %v4657
        %v4680 = vadd.f32 %v4524, %v4662
        %v4681 = vadd.f32 %v4527, %v4665
        %v4682 = vadd.f32 %v4532, %v4670
        %v4683 = vadd.f32 %v4535, %v4673
        %v4684 = vmul.f32 %v4293, %v705
        %v4685 = vmul.f32 %v4292, %v706
        %v4686 = vmul.f32 %v4291, %v707
        %v4687 = vmul.f32 %v4290, %v708
        %v4688 = vmul.f32 %v4289, %v709
        %v4689 = vmul.f32 %v4288, %v710
        %v4690 = vmul.f32 %v4287, %v711
        %v4691 = vmul.f32 %v4286, %v712
        %v4692 = vpack.c.bf16 %v4685, %v4684
        %v4693 = vpack.c.bf16 %v4687, %v4686
        %v4694 = vpack.c.bf16 %v4689, %v4688
        %v4695 = vpack.c.bf16 %v4691, %v4690
        %s4696 = scalar_lea.vmem %s2, 288
        %v4697 = vld [vmem:[%s4696] sm:$0xf]
        %v4698 = vld [vmem:[%s4696 + $0x4] sm:$0xf]
        %v4699 = vld [vmem:[%s4696 + $0x8] sm:$0xf]
        %v4700 = vld [vmem:[%s4696 + $0xc] sm:$0xf]
        %v4701 = vld [vmem:[%s4696 + $0x10] sm:$0xf]
        %v4702 = vld [vmem:[%s4696 + $0x14] sm:$0xf]
        %v4703 = vld [vmem:[%s4696 + $0x18] sm:$0xf]
        %v4704 = vld [vmem:[%s4696 + $0x1c] sm:$0xf]
        %v4713 = vunpack.c.l.b16 %v4697
        %v4714 = vunpack.c.l.b16 %v4698
        %v4715 = vunpack.c.l.b16 %v4699
        %v4716 = vunpack.c.l.b16 %v4700
        %v4717 = vunpack.c.l.b16 %v4701
        %v4718 = vunpack.c.l.b16 %v4702
        %v4719 = vunpack.c.l.b16 %v4703
        %v4720 = vunpack.c.l.b16 %v4704
        %v4721 = vpack.c.b16 %v4714, %v4713
        %v4722 = vpack.c.b16 %v4716, %v4715
        %v4723 = vpack.c.b16 %v4718, %v4717
        %v4724 = vpack.c.b16 %v4720, %v4719
        %v4730 = vsel %vm956, %v4692, 0
        %v4733 = vsel %vm956, %v4693, 0
        %v4736 = vsel %vm956, %v4694, 0
        %v4739 = vsel %vm956, %v4695, 0
        %4741 = vmatprep.subr.bf16.mxu0 0
        %4742 = vmatpush1.bf16.msra.mxu0 %v4721
        %4743 = vmatprep.subr.bf16.mxu0 0
        %4744 = vmatpush1.bf16.msra.mxu0 %v4722
        %4745 = vmatprep.subr.bf16.mxu0 0
        %4746 = vmatpush1.bf16.msra.mxu0 %v4723
        %4747 = vmatprep.subr.bf16.mxu0 0
        %4748 = vmatpush1.bf16.msra.mxu0 %v4724
        %4749 = vmatprep.subr.bf16.mxu0 0
        %4750 = vmatpush1.bf16.msra.mxu0 0
        %4751 = vmatprep.subr.bf16.mxu0 0
        %4752 = vmatpush1.bf16.msra.mxu0 0
        %4753 = vmatprep.subr.bf16.mxu0 0
        %4754 = vmatpush1.bf16.msra.mxu0 0
        %4755 = vmatprep.subr.bf16.mxu0 0
        %4756 = vmatpush1.bf16.msra.mxu0 0
        %4757 = vmatprep.subr.bf16.mxu0 0
        %4758 = vmatpush1.bf16.msra.mxu0 0
        %4759 = vmatprep.subr.bf16.mxu0 0
        %4760 = vmatpush1.bf16.msra.mxu0 0
        %4761 = vmatprep.subr.bf16.mxu0 0
        %4762 = vmatpush1.bf16.msra.mxu0 0
        %4763 = vmatprep.subr.bf16.mxu0 0
        %4764 = vmatpush1.bf16.msra.mxu0 0
        %4765 = vmatprep.subr.bf16.mxu0 0
        %4766 = vmatpush1.bf16.msra.mxu0 0
        %4767 = vmatprep.subr.bf16.mxu0 0
        %4768 = vmatpush1.bf16.msra.mxu0 0
        %4769 = vmatprep.subr.bf16.mxu0 0
        %4770 = vmatpush1.bf16.msra.mxu0 0
        %4771 = vmatprep.subr.bf16.mxu0 0
        %4772 = vmatpush1.bf16.msra.mxu0 0
        %4773 = vmatprep.mubr.bf16.mxu0 0
        %4774 = vmatmul.mubr.bf16.gmra.mrb[0].mxu0 %v4730
        %v4775 = vpop.f32.mrb[0].mxu0
        %v4776 = vadd.f32 0.0, %v4775
        %v4777 = vpop.f32.mrb[0].mxu0
        %v4778 = vpop.f32.mrb[0].mxu0
        %v4779 = vadd.f32 0.0, %v4778
        %v4780 = vpop.f32.mrb[0].mxu0
        %4781 = vmatprep.mubr.bf16.mxu0 0
        %4782 = vmatmul.mubr.bf16.gmra.mrb[0].mxu0 %v4733
        %v4783 = vpop.f32.mrb[0].mxu0
        %v4784 = vadd.f32 0.0, %v4783
        %v4785 = vpop.f32.mrb[0].mxu0
        %v4786 = vpop.f32.mrb[0].mxu0
        %v4787 = vadd.f32 0.0, %v4786
        %v4788 = vpop.f32.mrb[0].mxu0
        %4789 = vmatprep.mubr.bf16.mxu0 0
        %4790 = vmatmul.mubr.bf16.gmra.mrb[0].mxu0 %v4736
        %v4791 = vpop.f32.mrb[0].mxu0
        %v4792 = vadd.f32 0.0, %v4791
        %v4793 = vpop.f32.mrb[0].mxu0
        %v4794 = vpop.f32.mrb[0].mxu0
        %v4795 = vadd.f32 0.0, %v4794
        %v4796 = vpop.f32.mrb[0].mxu0
        %4797 = vmatprep.mubr.bf16.mxu0 0
        %4798 = vmatmul.mubr.bf16.gmra.mrb[0].mxu0 %v4739
        %v4799 = vpop.f32.mrb[0].mxu0
        %v4800 = vadd.f32 0.0, %v4799
        %v4801 = vpop.f32.mrb[0].mxu0
        %v4802 = vpop.f32.mrb[0].mxu0
        %v4803 = vadd.f32 0.0, %v4802
        %v4804 = vpop.f32.mrb[0].mxu0
        %4805 = vdwg.mxu0
        %v4806 = vadd.f32 %v4676, %v4776
        %v4807 = vadd.f32 %v4677, %v4779
        %v4808 = vadd.f32 %v4678, %v4784
        %v4809 = vadd.f32 %v4679, %v4787
        %v4810 = vadd.f32 %v4680, %v4792
        %v4811 = vadd.f32 %v4681, %v4795
        %v4812 = vadd.f32 %v4682, %v4800
        %v4813 = vadd.f32 %v4683, %v4803
        %s4814 = scalar_lea.vmem %s2, 320
        %v4815 = vld [vmem:[%s4814] sm:$0xf]
        %v4816 = vld [vmem:[%s4814 + $0x4] sm:$0xf]
        %v4817 = vld [vmem:[%s4814 + $0x8] sm:$0xf]
        %v4818 = vld [vmem:[%s4814 + $0xc] sm:$0xf]
        %v4819 = vld [vmem:[%s4814 + $0x10] sm:$0xf]
        %v4820 = vld [vmem:[%s4814 + $0x14] sm:$0xf]
        %v4821 = vld [vmem:[%s4814 + $0x18] sm:$0xf]
        %v4822 = vld [vmem:[%s4814 + $0x1c] sm:$0xf]
        %v4831 = vunpack.c.l.b16 %v4815
        %v4832 = vunpack.c.l.b16 %v4816
        %v4833 = vunpack.c.l.b16 %v4817
        %v4834 = vunpack.c.l.b16 %v4818
        %v4835 = vunpack.c.l.b16 %v4819
        %v4836 = vunpack.c.l.b16 %v4820
        %v4837 = vunpack.c.l.b16 %v4821
        %v4838 = vunpack.c.l.b16 %v4822
        %v4839 = vpack.c.b16 %v4832, %v4831
        %v4840 = vpack.c.b16 %v4834, %v4833
        %v4841 = vpack.c.b16 %v4836, %v4835
        %v4842 = vpack.c.b16 %v4838, %v4837
        %4847 = vmatprep.subr.bf16.mxu0 0
        %4848 = vmatpush1.bf16.msra.mxu0 %v4839
        %4849 = vmatprep.subr.bf16.mxu0 0
        %4850 = vmatpush1.bf16.msra.mxu0 %v4840
        %4851 = vmatprep.subr.bf16.mxu0 0
        %4852 = vmatpush1.bf16.msra.mxu0 %v4841
        %4853 = vmatprep.subr.bf16.mxu0 0
        %4854 = vmatpush1.bf16.msra.mxu0 %v4842
        %4855 = vmatprep.subr.bf16.mxu0 0
        %4856 = vmatpush1.bf16.msra.mxu0 0
        %4857 = vmatprep.subr.bf16.mxu0 0
        %4858 = vmatpush1.bf16.msra.mxu0 0
        %4859 = vmatprep.subr.bf16.mxu0 0
        %4860 = vmatpush1.bf16.msra.mxu0 0
        %4861 = vmatprep.subr.bf16.mxu0 0
        %4862 = vmatpush1.bf16.msra.mxu0 0
        %4863 = vmatprep.subr.bf16.mxu0 0
        %4864 = vmatpush1.bf16.msra.mxu0 0
        %4865 = vmatprep.subr.bf16.mxu0 0
        %4866 = vmatpush1.bf16.msra.mxu0 0
        %4867 = vmatprep.subr.bf16.mxu0 0
        %4868 = vmatpush1.bf16.msra.mxu0 0
        %4869 = vmatprep.subr.bf16.mxu0 0
        %4870 = vmatpush1.bf16.msra.mxu0 0
        %4871 = vmatprep.subr.bf16.mxu0 0
        %4872 = vmatpush1.bf16.msra.mxu0 0
        %4873 = vmatprep.subr.bf16.mxu0 0
        %4874 = vmatpush1.bf16.msra.mxu0 0
        %4875 = vmatprep.subr.bf16.mxu0 0
        %4876 = vmatpush1.bf16.msra.mxu0 0
        %4877 = vmatprep.subr.bf16.mxu0 0
        %4878 = vmatpush1.bf16.msra.mxu0 0
        %4879 = vmatprep.mubr.bf16.mxu0 0
        %4880 = vmatmul.mubr.bf16.gmra.mrb[0].mxu0 %v3468
        %v4881 = vpop.f32.mrb[0].mxu0
        %v4882 = vadd.f32 0.0, %v4881
        %v4883 = vpop.f32.mrb[0].mxu0
        %v4884 = vpop.f32.mrb[0].mxu0
        %v4885 = vadd.f32 0.0, %v4884
        %v4886 = vpop.f32.mrb[0].mxu0
        %4887 = vmatprep.mubr.bf16.mxu0 0
        %4888 = vmatmul.mubr.bf16.gmra.mrb[0].mxu0 %v3471
        %v4889 = vpop.f32.mrb[0].mxu0
        %v4890 = vadd.f32 0.0, %v4889
        %v4891 = vpop.f32.mrb[0].mxu0
        %v4892 = vpop.f32.mrb[0].mxu0
        %v4893 = vadd.f32 0.0, %v4892
        %v4894 = vpop.f32.mrb[0].mxu0
        %4895 = vmatprep.mubr.bf16.mxu0 0
        %4896 = vmatmul.mubr.bf16.gmra.mrb[0].mxu0 %v3474
        %v4897 = vpop.f32.mrb[0].mxu0
        %v4898 = vadd.f32 0.0, %v4897
        %v4899 = vpop.f32.mrb[0].mxu0
        %v4900 = vpop.f32.mrb[0].mxu0
        %v4901 = vadd.f32 0.0, %v4900
        %v4902 = vpop.f32.mrb[0].mxu0
        %4903 = vmatprep.mubr.bf16.mxu0 0
        %4904 = vmatmul.mubr.bf16.gmra.mrb[0].mxu0 %v3477
        %v4905 = vpop.f32.mrb[0].mxu0
        %v4906 = vadd.f32 0.0, %v4905
        %v4907 = vpop.f32.mrb[0].mxu0
        %v4908 = vpop.f32.mrb[0].mxu0
        %v4909 = vadd.f32 0.0, %v4908
        %v4910 = vpop.f32.mrb[0].mxu0
        %4911 = vdwg.mxu0
        %v4912 = vadd.f32 %v4806, %v4882
        %v4913 = vadd.f32 %v4807, %v4885
        %v4914 = vadd.f32 %v4808, %v4890
        %v4915 = vadd.f32 %v4809, %v4893
        %v4916 = vadd.f32 %v4810, %v4898
        %v4917 = vadd.f32 %v4811, %v4901
        %v4918 = vadd.f32 %v4812, %v4906
        %v4919 = vadd.f32 %v4813, %v4909
        %v4920 = vmul.f32 %v4552, %v737
        %v4921 = vmul.f32 %v4551, %v738
        %v4922 = vmul.f32 %v4550, %v739
        %v4923 = vmul.f32 %v4549, %v740
        %v4924 = vmul.f32 %v4548, %v741
        %v4925 = vmul.f32 %v4547, %v742
        %v4926 = vmul.f32 %v4546, %v743
        %v4927 = vmul.f32 %v4553, %v744
        %v4928 = vpack.c.bf16 %v4921, %v4920
        %v4929 = vpack.c.bf16 %v4923, %v4922
        %v4930 = vpack.c.bf16 %v4925, %v4924
        %v4931 = vpack.c.bf16 %v4927, %v4926
        %s4932 = scalar_lea.vmem %s2, 352
        %v4933 = vld [vmem:[%s4932] sm:$0xf]
        %v4934 = vld [vmem:[%s4932 + $0x4] sm:$0xf]
        %v4935 = vld [vmem:[%s4932 + $0x8] sm:$0xf]
        %v4936 = vld [vmem:[%s4932 + $0xc] sm:$0xf]
        %v4937 = vld [vmem:[%s4932 + $0x10] sm:$0xf]
        %v4938 = vld [vmem:[%s4932 + $0x14] sm:$0xf]
        %v4939 = vld [vmem:[%s4932 + $0x18] sm:$0xf]
        %v4940 = vld [vmem:[%s4932 + $0x1c] sm:$0xf]
        %v4949 = vunpack.c.l.b16 %v4933
        %v4950 = vunpack.c.l.b16 %v4934
        %v4951 = vunpack.c.l.b16 %v4935
        %v4952 = vunpack.c.l.b16 %v4936
        %v4953 = vunpack.c.l.b16 %v4937
        %v4954 = vunpack.c.l.b16 %v4938
        %v4955 = vunpack.c.l.b16 %v4939
        %v4956 = vunpack.c.l.b16 %v4940
        %v4957 = vpack.c.b16 %v4950, %v4949
        %v4958 = vpack.c.b16 %v4952, %v4951
        %v4959 = vpack.c.b16 %v4954, %v4953
        %v4960 = vpack.c.b16 %v4956, %v4955
        %v4966 = vsel %vm956, %v4928, 0
        %v4969 = vsel %vm956, %v4929, 0
        %v4972 = vsel %vm956, %v4930, 0
        %v4975 = vsel %vm956, %v4931, 0
        %4977 = vmatprep.subr.bf16.mxu0 0
        %4978 = vmatpush1.bf16.msra.mxu0 %v4957
        %4979 = vmatprep.subr.bf16.mxu0 0
        %4980 = vmatpush1.bf16.msra.mxu0 %v4958
        %4981 = vmatprep.subr.bf16.mxu0 0
        %4982 = vmatpush1.bf16.msra.mxu0 %v4959
        %4983 = vmatprep.subr.bf16.mxu0 0
        %4984 = vmatpush1.bf16.msra.mxu0 %v4960
        %4985 = vmatprep.subr.bf16.mxu0 0
        %4986 = vmatpush1.bf16.msra.mxu0 0
        %4987 = vmatprep.subr.bf16.mxu0 0
        %4988 = vmatpush1.bf16.msra.mxu0 0
        %4989 = vmatprep.subr.bf16.mxu0 0
        %4990 = vmatpush1.bf16.msra.mxu0 0
        %4991 = vmatprep.subr.bf16.mxu0 0
        %4992 = vmatpush1.bf16.msra.mxu0 0
        %4993 = vmatprep.subr.bf16.mxu0 0
        %4994 = vmatpush1.bf16.msra.mxu0 0
        %4995 = vmatprep.subr.bf16.mxu0 0
        %4996 = vmatpush1.bf16.msra.mxu0 0
        %4997 = vmatprep.subr.bf16.mxu0 0
        %4998 = vmatpush1.bf16.msra.mxu0 0
        %4999 = vmatprep.subr.bf16.mxu0 0
        %5000 = vmatpush1.bf16.msra.mxu0 0
        %5001 = vmatprep.subr.bf16.mxu0 0
        %5002 = vmatpush1.bf16.msra.mxu0 0
        %5003 = vmatprep.subr.bf16.mxu0 0
        %5004 = vmatpush1.bf16.msra.mxu0 0
        %5005 = vmatprep.subr.bf16.mxu0 0
        %5006 = vmatpush1.bf16.msra.mxu0 0
        %5007 = vmatprep.subr.bf16.mxu0 0
        %5008 = vmatpush1.bf16.msra.mxu0 0
        %5009 = vmatprep.mubr.bf16.mxu0 0
        %5010 = vmatmul.mubr.bf16.gmra.mrb[0].mxu0 %v4966
        %v5011 = vpop.f32.mrb[0].mxu0
        %v5012 = vadd.f32 0.0, %v5011
        %v5013 = vpop.f32.mrb[0].mxu0
        %v5014 = vpop.f32.mrb[0].mxu0
        %v5015 = vadd.f32 0.0, %v5014
        %v5016 = vpop.f32.mrb[0].mxu0
        %5017 = vmatprep.mubr.bf16.mxu0 0
        %5018 = vmatmul.mubr.bf16.gmra.mrb[0].mxu0 %v4969
        %v5019 = vpop.f32.mrb[0].mxu0
        %v5020 = vadd.f32 0.0, %v5019
        %v5021 = vpop.f32.mrb[0].mxu0
        %v5022 = vpop.f32.mrb[0].mxu0
        %v5023 = vadd.f32 0.0, %v5022
        %v5024 = vpop.f32.mrb[0].mxu0
        %5025 = vmatprep.mubr.bf16.mxu0 0
        %5026 = vmatmul.mubr.bf16.gmra.mrb[0].mxu0 %v4972
        %v5027 = vpop.f32.mrb[0].mxu0
        %v5028 = vadd.f32 0.0, %v5027
        %v5029 = vpop.f32.mrb[0].mxu0
        %v5030 = vpop.f32.mrb[0].mxu0
        %v5031 = vadd.f32 0.0, %v5030
        %v5032 = vpop.f32.mrb[0].mxu0
        %5033 = vmatprep.mubr.bf16.mxu0 0
        %5034 = vmatmul.mubr.bf16.gmra.mrb[0].mxu0 %v4975
        %v5035 = vpop.f32.mrb[0].mxu0
        %v5036 = vadd.f32 0.0, %v5035
        %v5037 = vpop.f32.mrb[0].mxu0
        %v5038 = vpop.f32.mrb[0].mxu0
        %v5039 = vadd.f32 0.0, %v5038
        %v5040 = vpop.f32.mrb[0].mxu0
        %5041 = vdwg.mxu0
        %v5042 = vadd.f32 %v4912, %v5012
        %v5043 = vadd.f32 %v4913, %v5015
        %v5044 = vadd.f32 %v4914, %v5020
        %v5045 = vadd.f32 %v4915, %v5023
        %v5046 = vadd.f32 %v4916, %v5028
        %v5047 = vadd.f32 %v4917, %v5031
        %v5048 = vadd.f32 %v4918, %v5036
        %v5049 = vadd.f32 %v4919, %v5039
        %s5050 = scalar_lea.vmem %s3, 1
        %v5051 = vld [vmem:[%s5050] sm:$0x1]
        %v5053 = vlaneseq
        %v5054 = vshrl.u32 %v5053, 7
        %v5055 = vsub.s32 0, %v5054
        %v5056 = vrot.slane %v5051, %v5055
        %v5058 = vadd.f32 %v5042, %v5056
        %v5059 = vadd.f32 %v5043, %v5056
        %v5060 = vadd.f32 %v5044, %v5056
        %v5061 = vadd.f32 %v5045, %v5056
        %v5062 = vadd.f32 %v5046, %v5056
        %v5063 = vadd.f32 %v5047, %v5056
        %v5064 = vadd.f32 %v5048, %v5056
        %v5065 = vadd.f32 %v5049, %v5056
        %v5066 = vand.u32 2147483647, %v5058
        %v5067 = vand.u32 2147483647, %v5059
        %v5068 = vand.u32 2147483647, %v5060
        %v5069 = vand.u32 2147483647, %v5061
        %v5070 = vand.u32 2147483647, %v5062
        %v5071 = vand.u32 2147483647, %v5063
        %v5072 = vand.u32 2147483647, %v5064
        %v5073 = vand.u32 2147483647, %v5065
        %v5074 = vsub.f32 0.0, %v5066
        %v5075 = vsub.f32 0.0, %v5067
        %v5076 = vsub.f32 0.0, %v5068
        %v5077 = vsub.f32 0.0, %v5069
        %v5078 = vsub.f32 0.0, %v5070
        %v5079 = vsub.f32 0.0, %v5071
        %v5080 = vsub.f32 0.0, %v5072
        %v5081 = vsub.f32 0.0, %v5073
        %v5082 = vmul.f32 %v5074, 1.442695
        %v5083 = vpow.pop %v5082
        %v5084 = vmul.f32 %v5075, 1.442695
        %v5085 = vpow.pop %v5084
        %v5086 = vmul.f32 %v5076, 1.442695
        %v5087 = vpow.pop %v5086
        %v5088 = vmul.f32 %v5077, 1.442695
        %v5089 = vpow.pop %v5088
        %v5090 = vmul.f32 %v5078, 1.442695
        %v5091 = vpow.pop %v5090
        %v5092 = vmul.f32 %v5079, 1.442695
        %v5093 = vpow.pop %v5092
        %v5094 = vmul.f32 %v5080, 1.442695
        %v5095 = vpow.pop %v5094
        %v5096 = vmul.f32 %v5081, 1.442695
        %v5097 = vpow.pop %v5096
        %v5098 = vsub.f32 %v5083, 1.0
        %v5099 = vsub.f32 %v5085, 1.0
        %v5100 = vsub.f32 %v5087, 1.0
        %v5101 = vsub.f32 %v5089, 1.0
        %v5102 = vsub.f32 %v5091, 1.0
        %v5103 = vsub.f32 %v5093, 1.0
        %v5104 = vsub.f32 %v5095, 1.0
        %v5105 = vsub.f32 %v5097, 1.0
        %vm5106 = vcmp.gt.f32.partialorder %v5058, 0.0
        %vm5107 = vcmp.gt.f32.partialorder %v5059, 0.0
        %vm5108 = vcmp.gt.f32.partialorder %v5060, 0.0
        %vm5109 = vcmp.gt.f32.partialorder %v5061, 0.0
        %vm5110 = vcmp.gt.f32.partialorder %v5062, 0.0
        %vm5111 = vcmp.gt.f32.partialorder %v5063, 0.0
        %vm5112 = vcmp.gt.f32.partialorder %v5064, 0.0
        %vm5113 = vcmp.gt.f32.partialorder %v5065, 0.0
        %v5114 = vsel %vm5106, %v5058, %v5098
        %v5115 = vsel %vm5107, %v5059, %v5099
        %v5116 = vsel %vm5108, %v5060, %v5100
        %v5117 = vsel %vm5109, %v5061, %v5101
        %v5118 = vsel %vm5110, %v5062, %v5102
        %v5119 = vsel %vm5111, %v5063, %v5103
        %v5120 = vsel %vm5112, %v5064, %v5104
        %v5121 = vsel %vm5113, %v5065, %v5105
        %v5122 = vsub.f32 0.0, %v5058
        %v5123 = vsub.f32 0.0, %v5059
        %v5124 = vsub.f32 0.0, %v5060
        %v5125 = vsub.f32 0.0, %v5061
        %v5126 = vsub.f32 0.0, %v5062
        %v5127 = vsub.f32 0.0, %v5063
        %v5128 = vsub.f32 0.0, %v5064
        %v5129 = vsub.f32 0.0, %v5065
        %v5130 = vsel %vm5106, %v5098, %v5122
        %v5131 = vsel %vm5107, %v5099, %v5123
        %v5132 = vsel %vm5108, %v5100, %v5124
        %v5133 = vsel %vm5109, %v5101, %v5125
        %v5134 = vsel %vm5110, %v5102, %v5126
        %v5135 = vsel %vm5111, %v5103, %v5127
        %v5136 = vsel %vm5112, %v5104, %v5128
        %v5137 = vsel %vm5113, %v5105, %v5129
        %5146 = vrot.lane.b32.xlu0 %v5130, 32
        %v5147 = vpop.permute.xlu0 %5146
        %5148 = vrot.lane.b32.xlu0 %v5131, 32
        %v5149 = vpop.permute.xlu0 %5148
        %5150 = vrot.lane.b32.xlu0 %v5132, 32
        %v5151 = vpop.permute.xlu0 %5150
        %5152 = vrot.lane.b32.xlu0 %v5133, 32
        %v5153 = vpop.permute.xlu0 %5152
        %5154 = vrot.lane.b32.xlu0 %v5134, 32
        %v5155 = vpop.permute.xlu0 %5154
        %5156 = vrot.lane.b32.xlu0 %v5135, 32
        %v5157 = vpop.permute.xlu0 %5156
        %5158 = vrot.lane.b32.xlu0 %v5136, 32
        %v5159 = vpop.permute.xlu0 %5158
        %5160 = vrot.lane.b32.xlu0 %v5137, 32
        %v5161 = vpop.permute.xlu0 %5160
        %v5170 = vsel %vm865, %v5114, %v5147
        %v5171 = vsel %vm865, %v5115, %v5149
        %v5172 = vsel %vm865, %v5116, %v5151
        %v5173 = vsel %vm865, %v5117, %v5153
        %v5174 = vsel %vm865, %v5118, %v5155
        %v5175 = vsel %vm865, %v5119, %v5157
        %v5176 = vsel %vm865, %v5120, %v5159
        %v5177 = vsel %vm865, %v5121, %v5161
        %v5178 = vrot.slane %v5170, 7
        %v5179 = vrot.slane %v5171, 7
        %v5180 = vrot.slane %v5172, 7
        %v5181 = vrot.slane %v5173, 7
        %v5182 = vrot.slane %v5174, 7
        %v5183 = vrot.slane %v5175, 7
        %v5184 = vrot.slane %v5176, 7
        %v5185 = vrot.slane %v5177, 7
        %v5186 = vsel %vm882, %v5184, %v5185
        %v5187 = vsel %vm882, %v5183, %v5184
        %v5188 = vsel %vm882, %v5182, %v5183
        %v5189 = vsel %vm882, %v5181, %v5182
        %v5190 = vsel %vm882, %v5180, %v5181
        %v5191 = vsel %vm882, %v5179, %v5180
        %v5192 = vsel %vm882, %v5178, %v5179
        %v5193 = vsel %vm882, %v5185, %v5178
        %v5194 = vmul.f32 %v5186, %v545
        %v5195 = vmul.f32 %v5193, %v546
        %v5196 = vmul.f32 %v5192, %v547
        %v5197 = vmul.f32 %v5191, %v548
        %v5198 = vmul.f32 %v5190, %v549
        %v5199 = vmul.f32 %v5189, %v550
        %v5200 = vmul.f32 %v5188, %v551
        %v5201 = vmul.f32 %v5187, %v552
        %v5202 = vpack.c.bf16 %v5195, %v5194
        %v5203 = vpack.c.bf16 %v5197, %v5196
        %v5204 = vpack.c.bf16 %v5199, %v5198
        %v5205 = vpack.c.bf16 %v5201, %v5200
        %s5206 = scalar_lea.vmem %s4, 192
        %v5207 = vld [vmem:[%s5206] sm:$0xf]
        %v5208 = vld [vmem:[%s5206 + $0x4] sm:$0xf]
        %v5209 = vld [vmem:[%s5206 + $0x8] sm:$0xf]
        %v5210 = vld [vmem:[%s5206 + $0xc] sm:$0xf]
        %v5211 = vld [vmem:[%s5206 + $0x10] sm:$0xf]
        %v5212 = vld [vmem:[%s5206 + $0x14] sm:$0xf]
        %v5213 = vld [vmem:[%s5206 + $0x18] sm:$0xf]
        %v5214 = vld [vmem:[%s5206 + $0x1c] sm:$0xf]
        %v5215 = vmul.f32 %v5177, %v593
        %v5216 = vmul.f32 %v5170, %v594
        %v5217 = vmul.f32 %v5171, %v595
        %v5218 = vmul.f32 %v5172, %v596
        %v5219 = vmul.f32 %v5173, %v597
        %v5220 = vmul.f32 %v5174, %v598
        %v5221 = vmul.f32 %v5175, %v599
        %v5222 = vmul.f32 %v5176, %v600
        %v5223 = vpack.c.bf16 %v5216, %v5215
        %v5224 = vpack.c.bf16 %v5218, %v5217
        %v5225 = vpack.c.bf16 %v5220, %v5219
        %v5226 = vpack.c.bf16 %v5222, %v5221
        %s5227 = scalar_lea.vmem %s4, 224
        %v5228 = vld [vmem:[%s5227] sm:$0xf]
        %v5229 = vld [vmem:[%s5227 + $0x4] sm:$0xf]
        %v5230 = vld [vmem:[%s5227 + $0x8] sm:$0xf]
        %v5231 = vld [vmem:[%s5227 + $0xc] sm:$0xf]
        %v5232 = vld [vmem:[%s5227 + $0x10] sm:$0xf]
        %v5233 = vld [vmem:[%s5227 + $0x14] sm:$0xf]
        %v5234 = vld [vmem:[%s5227 + $0x18] sm:$0xf]
        %v5235 = vld [vmem:[%s5227 + $0x1c] sm:$0xf]
        %v5244 = vunpack.c.l.b16 %v5228
        %v5245 = vunpack.c.l.b16 %v5229
        %v5246 = vunpack.c.l.b16 %v5230
        %v5247 = vunpack.c.l.b16 %v5231
        %v5248 = vunpack.c.l.b16 %v5232
        %v5249 = vunpack.c.l.b16 %v5233
        %v5250 = vunpack.c.l.b16 %v5234
        %v5251 = vunpack.c.l.b16 %v5235
        %v5252 = vpack.c.b16 %v5245, %v5244
        %v5253 = vpack.c.b16 %v5247, %v5246
        %v5254 = vpack.c.b16 %v5249, %v5248
        %v5255 = vpack.c.b16 %v5251, %v5250
        %v5261 = vsel %vm956, %v5223, 0
        %v5264 = vsel %vm956, %v5224, 0
        %v5267 = vsel %vm956, %v5225, 0
        %v5270 = vsel %vm956, %v5226, 0
        %5272 = vmatprep.subr.bf16.mxu0 0
        %5273 = vmatpush1.bf16.msra.mxu0 %v5252
        %5274 = vmatprep.subr.bf16.mxu0 0
        %5275 = vmatpush1.bf16.msra.mxu0 %v5253
        %5276 = vmatprep.subr.bf16.mxu0 0
        %5277 = vmatpush1.bf16.msra.mxu0 %v5254
        %5278 = vmatprep.subr.bf16.mxu0 0
        %5279 = vmatpush1.bf16.msra.mxu0 %v5255
        %5280 = vmatprep.subr.bf16.mxu0 0
        %5281 = vmatpush1.bf16.msra.mxu0 0
        %5282 = vmatprep.subr.bf16.mxu0 0
        %5283 = vmatpush1.bf16.msra.mxu0 0
        %5284 = vmatprep.subr.bf16.mxu0 0
        %5285 = vmatpush1.bf16.msra.mxu0 0
        %5286 = vmatprep.subr.bf16.mxu0 0
        %5287 = vmatpush1.bf16.msra.mxu0 0
        %5288 = vmatprep.subr.bf16.mxu0 0
        %5289 = vmatpush1.bf16.msra.mxu0 0
        %5290 = vmatprep.subr.bf16.mxu0 0
        %5291 = vmatpush1.bf16.msra.mxu0 0
        %5292 = vmatprep.subr.bf16.mxu0 0
        %5293 = vmatpush1.bf16.msra.mxu0 0
        %5294 = vmatprep.subr.bf16.mxu0 0
        %5295 = vmatpush1.bf16.msra.mxu0 0
        %5296 = vmatprep.subr.bf16.mxu0 0
        %5297 = vmatpush1.bf16.msra.mxu0 0
        %5298 = vmatprep.subr.bf16.mxu0 0
        %5299 = vmatpush1.bf16.msra.mxu0 0
        %5300 = vmatprep.subr.bf16.mxu0 0
        %5301 = vmatpush1.bf16.msra.mxu0 0
        %5302 = vmatprep.subr.bf16.mxu0 0
        %5303 = vmatpush1.bf16.msra.mxu0 0
        %5304 = vmatprep.mubr.bf16.mxu0 0
        %5305 = vmatmul.mubr.bf16.gmra.mrb[0].mxu0 %v5261
        %v5306 = vpop.f32.mrb[0].mxu0
        %v5307 = vadd.f32 0.0, %v5306
        %v5308 = vpop.f32.mrb[0].mxu0
        %v5309 = vpop.f32.mrb[0].mxu0
        %v5310 = vadd.f32 0.0, %v5309
        %v5311 = vpop.f32.mrb[0].mxu0
        %5312 = vmatprep.mubr.bf16.mxu0 0
        %5313 = vmatmul.mubr.bf16.gmra.mrb[0].mxu0 %v5264
        %v5314 = vpop.f32.mrb[0].mxu0
        %v5315 = vadd.f32 0.0, %v5314
        %v5316 = vpop.f32.mrb[0].mxu0
        %v5317 = vpop.f32.mrb[0].mxu0
        %v5318 = vadd.f32 0.0, %v5317
        %v5319 = vpop.f32.mrb[0].mxu0
        %5320 = vmatprep.mubr.bf16.mxu0 0
        %5321 = vmatmul.mubr.bf16.gmra.mrb[0].mxu0 %v5267
        %v5322 = vpop.f32.mrb[0].mxu0
        %v5323 = vadd.f32 0.0, %v5322
        %v5324 = vpop.f32.mrb[0].mxu0
        %v5325 = vpop.f32.mrb[0].mxu0
        %v5326 = vadd.f32 0.0, %v5325
        %v5327 = vpop.f32.mrb[0].mxu0
        %5328 = vmatprep.mubr.bf16.mxu0 0
        %5329 = vmatmul.mubr.bf16.gmra.mrb[0].mxu0 %v5270
        %v5330 = vpop.f32.mrb[0].mxu0
        %v5331 = vadd.f32 0.0, %v5330
        %v5332 = vpop.f32.mrb[0].mxu0
        %v5333 = vpop.f32.mrb[0].mxu0
        %v5334 = vadd.f32 0.0, %v5333
        %v5335 = vpop.f32.mrb[0].mxu0
        %5336 = vdwg.mxu0
        %v5345 = vunpack.c.l.b16 %v5207
        %v5346 = vunpack.c.l.b16 %v5208
        %v5347 = vunpack.c.l.b16 %v5209
        %v5348 = vunpack.c.l.b16 %v5210
        %v5349 = vunpack.c.l.b16 %v5211
        %v5350 = vunpack.c.l.b16 %v5212
        %v5351 = vunpack.c.l.b16 %v5213
        %v5352 = vunpack.c.l.b16 %v5214
        %v5353 = vpack.c.b16 %v5346, %v5345
        %v5354 = vpack.c.b16 %v5348, %v5347
        %v5355 = vpack.c.b16 %v5350, %v5349
        %v5356 = vpack.c.b16 %v5352, %v5351
        %v5362 = vsel %vm956, %v5202, 0
        %v5365 = vsel %vm956, %v5203, 0
        %v5368 = vsel %vm956, %v5204, 0
        %v5371 = vsel %vm956, %v5205, 0
        %5373 = vmatprep.subr.bf16.mxu0 0
        %5374 = vmatpush1.bf16.msra.mxu0 %v5353
        %5375 = vmatprep.subr.bf16.mxu0 0
        %5376 = vmatpush1.bf16.msra.mxu0 %v5354
        %5377 = vmatprep.subr.bf16.mxu0 0
        %5378 = vmatpush1.bf16.msra.mxu0 %v5355
        %5379 = vmatprep.subr.bf16.mxu0 0
        %5380 = vmatpush1.bf16.msra.mxu0 %v5356
        %5381 = vmatprep.subr.bf16.mxu0 0
        %5382 = vmatpush1.bf16.msra.mxu0 0
        %5383 = vmatprep.subr.bf16.mxu0 0
        %5384 = vmatpush1.bf16.msra.mxu0 0
        %5385 = vmatprep.subr.bf16.mxu0 0
        %5386 = vmatpush1.bf16.msra.mxu0 0
        %5387 = vmatprep.subr.bf16.mxu0 0
        %5388 = vmatpush1.bf16.msra.mxu0 0
        %5389 = vmatprep.subr.bf16.mxu0 0
        %5390 = vmatpush1.bf16.msra.mxu0 0
        %5391 = vmatprep.subr.bf16.mxu0 0
        %5392 = vmatpush1.bf16.msra.mxu0 0
        %5393 = vmatprep.subr.bf16.mxu0 0
        %5394 = vmatpush1.bf16.msra.mxu0 0
        %5395 = vmatprep.subr.bf16.mxu0 0
        %5396 = vmatpush1.bf16.msra.mxu0 0
        %5397 = vmatprep.subr.bf16.mxu0 0
        %5398 = vmatpush1.bf16.msra.mxu0 0
        %5399 = vmatprep.subr.bf16.mxu0 0
        %5400 = vmatpush1.bf16.msra.mxu0 0
        %5401 = vmatprep.subr.bf16.mxu0 0
        %5402 = vmatpush1.bf16.msra.mxu0 0
        %5403 = vmatprep.subr.bf16.mxu0 0
        %5404 = vmatpush1.bf16.msra.mxu0 0
        %5405 = vmatprep.mubr.bf16.mxu0 0
        %5406 = vmatmul.mubr.bf16.gmra.mrb[0].mxu0 %v5362
        %v5407 = vpop.f32.mrb[0].mxu0
        %v5408 = vadd.f32 %v5307, %v5407
        %v5409 = vpop.f32.mrb[0].mxu0
        %v5410 = vpop.f32.mrb[0].mxu0
        %v5411 = vadd.f32 %v5310, %v5410
        %v5412 = vpop.f32.mrb[0].mxu0
        %5413 = vmatprep.mubr.bf16.mxu0 0
        %5414 = vmatmul.mubr.bf16.gmra.mrb[0].mxu0 %v5365
        %v5415 = vpop.f32.mrb[0].mxu0
        %v5416 = vadd.f32 %v5315, %v5415
        %v5417 = vpop.f32.mrb[0].mxu0
        %v5418 = vpop.f32.mrb[0].mxu0
        %v5419 = vadd.f32 %v5318, %v5418
        %v5420 = vpop.f32.mrb[0].mxu0
        %5421 = vmatprep.mubr.bf16.mxu0 0
        %5422 = vmatmul.mubr.bf16.gmra.mrb[0].mxu0 %v5368
        %v5423 = vpop.f32.mrb[0].mxu0
        %v5424 = vadd.f32 %v5323, %v5423
        %v5425 = vpop.f32.mrb[0].mxu0
        %v5426 = vpop.f32.mrb[0].mxu0
        %v5427 = vadd.f32 %v5326, %v5426
        %v5428 = vpop.f32.mrb[0].mxu0
        %5429 = vmatprep.mubr.bf16.mxu0 0
        %5430 = vmatmul.mubr.bf16.gmra.mrb[0].mxu0 %v5371
        %v5431 = vpop.f32.mrb[0].mxu0
        %v5432 = vadd.f32 %v5331, %v5431
        %v5433 = vpop.f32.mrb[0].mxu0
        %v5434 = vpop.f32.mrb[0].mxu0
        %v5435 = vadd.f32 %v5334, %v5434
        %v5436 = vpop.f32.mrb[0].mxu0
        %5437 = vdwg.mxu0
        %v5438 = vrot.slane %v5170, 1
        %v5439 = vrot.slane %v5171, 1
        %v5440 = vrot.slane %v5172, 1
        %v5441 = vrot.slane %v5173, 1
        %v5442 = vrot.slane %v5174, 1
        %v5443 = vrot.slane %v5175, 1
        %v5444 = vrot.slane %v5176, 1
        %v5445 = vrot.slane %v5177, 1
        %v5446 = vsel %vm1143, %v5444, %v5445
        %v5447 = vsel %vm1143, %v5443, %v5444
        %v5448 = vsel %vm1143, %v5442, %v5443
        %v5449 = vsel %vm1143, %v5441, %v5442
        %v5450 = vsel %vm1143, %v5440, %v5441
        %v5451 = vsel %vm1143, %v5439, %v5440
        %v5452 = vsel %vm1143, %v5438, %v5439
        %v5453 = vsel %vm1143, %v5445, %v5438
        %v5454 = vmul.f32 %v5453, %v649
        %v5455 = vmul.f32 %v5452, %v650
        %v5456 = vmul.f32 %v5451, %v651
        %v5457 = vmul.f32 %v5450, %v652
        %v5458 = vmul.f32 %v5449, %v653
        %v5459 = vmul.f32 %v5448, %v654
        %v5460 = vmul.f32 %v5447, %v655
        %v5461 = vmul.f32 %v5446, %v656
        %v5462 = vpack.c.bf16 %v5455, %v5454
        %v5463 = vpack.c.bf16 %v5457, %v5456
        %v5464 = vpack.c.bf16 %v5459, %v5458
        %v5465 = vpack.c.bf16 %v5461, %v5460
        %s5466 = scalar_lea.vmem %s4, 256
        %v5467 = vld [vmem:[%s5466] sm:$0xf]
        %v5468 = vld [vmem:[%s5466 + $0x4] sm:$0xf]
        %v5469 = vld [vmem:[%s5466 + $0x8] sm:$0xf]
        %v5470 = vld [vmem:[%s5466 + $0xc] sm:$0xf]
        %v5471 = vld [vmem:[%s5466 + $0x10] sm:$0xf]
        %v5472 = vld [vmem:[%s5466 + $0x14] sm:$0xf]
        %v5473 = vld [vmem:[%s5466 + $0x18] sm:$0xf]
        %v5474 = vld [vmem:[%s5466 + $0x1c] sm:$0xf]
        %v5483 = vunpack.c.l.b16 %v5467
        %v5484 = vunpack.c.l.b16 %v5468
        %v5485 = vunpack.c.l.b16 %v5469
        %v5486 = vunpack.c.l.b16 %v5470
        %v5487 = vunpack.c.l.b16 %v5471
        %v5488 = vunpack.c.l.b16 %v5472
        %v5489 = vunpack.c.l.b16 %v5473
        %v5490 = vunpack.c.l.b16 %v5474
        %v5491 = vpack.c.b16 %v5484, %v5483
        %v5492 = vpack.c.b16 %v5486, %v5485
        %v5493 = vpack.c.b16 %v5488, %v5487
        %v5494 = vpack.c.b16 %v5490, %v5489
        %v5500 = vsel %vm956, %v5462, 0
        %v5503 = vsel %vm956, %v5463, 0
        %v5506 = vsel %vm956, %v5464, 0
        %v5509 = vsel %vm956, %v5465, 0
        %5511 = vmatprep.subr.bf16.mxu0 0
        %5512 = vmatpush1.bf16.msra.mxu0 %v5491
        %5513 = vmatprep.subr.bf16.mxu0 0
        %5514 = vmatpush1.bf16.msra.mxu0 %v5492
        %5515 = vmatprep.subr.bf16.mxu0 0
        %5516 = vmatpush1.bf16.msra.mxu0 %v5493
        %5517 = vmatprep.subr.bf16.mxu0 0
        %5518 = vmatpush1.bf16.msra.mxu0 %v5494
        %5519 = vmatprep.subr.bf16.mxu0 0
        %5520 = vmatpush1.bf16.msra.mxu0 0
        %5521 = vmatprep.subr.bf16.mxu0 0
        %5522 = vmatpush1.bf16.msra.mxu0 0
        %5523 = vmatprep.subr.bf16.mxu0 0
        %5524 = vmatpush1.bf16.msra.mxu0 0
        %5525 = vmatprep.subr.bf16.mxu0 0
        %5526 = vmatpush1.bf16.msra.mxu0 0
        %5527 = vmatprep.subr.bf16.mxu0 0
        %5528 = vmatpush1.bf16.msra.mxu0 0
        %5529 = vmatprep.subr.bf16.mxu0 0
        %5530 = vmatpush1.bf16.msra.mxu0 0
        %5531 = vmatprep.subr.bf16.mxu0 0
        %5532 = vmatpush1.bf16.msra.mxu0 0
        %5533 = vmatprep.subr.bf16.mxu0 0
        %5534 = vmatpush1.bf16.msra.mxu0 0
        %5535 = vmatprep.subr.bf16.mxu0 0
        %5536 = vmatpush1.bf16.msra.mxu0 0
        %5537 = vmatprep.subr.bf16.mxu0 0
        %5538 = vmatpush1.bf16.msra.mxu0 0
        %5539 = vmatprep.subr.bf16.mxu0 0
        %5540 = vmatpush1.bf16.msra.mxu0 0
        %5541 = vmatprep.subr.bf16.mxu0 0
        %5542 = vmatpush1.bf16.msra.mxu0 0
        %5543 = vmatprep.mubr.bf16.mxu0 0
        %5544 = vmatmul.mubr.bf16.gmra.mrb[0].mxu0 %v5500
        %v5545 = vpop.f32.mrb[0].mxu0
        %v5546 = vadd.f32 0.0, %v5545
        %v5547 = vpop.f32.mrb[0].mxu0
        %v5548 = vpop.f32.mrb[0].mxu0
        %v5549 = vadd.f32 0.0, %v5548
        %v5550 = vpop.f32.mrb[0].mxu0
        %5551 = vmatprep.mubr.bf16.mxu0 0
        %5552 = vmatmul.mubr.bf16.gmra.mrb[0].mxu0 %v5503
        %v5553 = vpop.f32.mrb[0].mxu0
        %v5554 = vadd.f32 0.0, %v5553
        %v5555 = vpop.f32.mrb[0].mxu0
        %v5556 = vpop.f32.mrb[0].mxu0
        %v5557 = vadd.f32 0.0, %v5556
        %v5558 = vpop.f32.mrb[0].mxu0
        %5559 = vmatprep.mubr.bf16.mxu0 0
        %5560 = vmatmul.mubr.bf16.gmra.mrb[0].mxu0 %v5506
        %v5561 = vpop.f32.mrb[0].mxu0
        %v5562 = vadd.f32 0.0, %v5561
        %v5563 = vpop.f32.mrb[0].mxu0
        %v5564 = vpop.f32.mrb[0].mxu0
        %v5565 = vadd.f32 0.0, %v5564
        %v5566 = vpop.f32.mrb[0].mxu0
        %5567 = vmatprep.mubr.bf16.mxu0 0
        %5568 = vmatmul.mubr.bf16.gmra.mrb[0].mxu0 %v5509
        %v5569 = vpop.f32.mrb[0].mxu0
        %v5570 = vadd.f32 0.0, %v5569
        %v5571 = vpop.f32.mrb[0].mxu0
        %v5572 = vpop.f32.mrb[0].mxu0
        %v5573 = vadd.f32 0.0, %v5572
        %v5574 = vpop.f32.mrb[0].mxu0
        %5575 = vdwg.mxu0
        %v5576 = vadd.f32 %v5408, %v5546
        %v5577 = vadd.f32 %v5411, %v5549
        %v5578 = vadd.f32 %v5416, %v5554
        %v5579 = vadd.f32 %v5419, %v5557
        %v5580 = vadd.f32 %v5424, %v5562
        %v5581 = vadd.f32 %v5427, %v5565
        %v5582 = vadd.f32 %v5432, %v5570
        %v5583 = vadd.f32 %v5435, %v5573
        %v5584 = vmul.f32 %v5193, %v705
        %v5585 = vmul.f32 %v5192, %v706
        %v5586 = vmul.f32 %v5191, %v707
        %v5587 = vmul.f32 %v5190, %v708
        %v5588 = vmul.f32 %v5189, %v709
        %v5589 = vmul.f32 %v5188, %v710
        %v5590 = vmul.f32 %v5187, %v711
        %v5591 = vmul.f32 %v5186, %v712
        %v5592 = vpack.c.bf16 %v5585, %v5584
        %v5593 = vpack.c.bf16 %v5587, %v5586
        %v5594 = vpack.c.bf16 %v5589, %v5588
        %v5595 = vpack.c.bf16 %v5591, %v5590
        %s5596 = scalar_lea.vmem %s4, 288
        %v5597 = vld [vmem:[%s5596] sm:$0xf]
        %v5598 = vld [vmem:[%s5596 + $0x4] sm:$0xf]
        %v5599 = vld [vmem:[%s5596 + $0x8] sm:$0xf]
        %v5600 = vld [vmem:[%s5596 + $0xc] sm:$0xf]
        %v5601 = vld [vmem:[%s5596 + $0x10] sm:$0xf]
        %v5602 = vld [vmem:[%s5596 + $0x14] sm:$0xf]
        %v5603 = vld [vmem:[%s5596 + $0x18] sm:$0xf]
        %v5604 = vld [vmem:[%s5596 + $0x1c] sm:$0xf]
        %v5613 = vunpack.c.l.b16 %v5597
        %v5614 = vunpack.c.l.b16 %v5598
        %v5615 = vunpack.c.l.b16 %v5599
        %v5616 = vunpack.c.l.b16 %v5600
        %v5617 = vunpack.c.l.b16 %v5601
        %v5618 = vunpack.c.l.b16 %v5602
        %v5619 = vunpack.c.l.b16 %v5603
        %v5620 = vunpack.c.l.b16 %v5604
        %v5621 = vpack.c.b16 %v5614, %v5613
        %v5622 = vpack.c.b16 %v5616, %v5615
        %v5623 = vpack.c.b16 %v5618, %v5617
        %v5624 = vpack.c.b16 %v5620, %v5619
        %v5630 = vsel %vm956, %v5592, 0
        %v5633 = vsel %vm956, %v5593, 0
        %v5636 = vsel %vm956, %v5594, 0
        %v5639 = vsel %vm956, %v5595, 0
        %5641 = vmatprep.subr.bf16.mxu0 0
        %5642 = vmatpush1.bf16.msra.mxu0 %v5621
        %5643 = vmatprep.subr.bf16.mxu0 0
        %5644 = vmatpush1.bf16.msra.mxu0 %v5622
        %5645 = vmatprep.subr.bf16.mxu0 0
        %5646 = vmatpush1.bf16.msra.mxu0 %v5623
        %5647 = vmatprep.subr.bf16.mxu0 0
        %5648 = vmatpush1.bf16.msra.mxu0 %v5624
        %5649 = vmatprep.subr.bf16.mxu0 0
        %5650 = vmatpush1.bf16.msra.mxu0 0
        %5651 = vmatprep.subr.bf16.mxu0 0
        %5652 = vmatpush1.bf16.msra.mxu0 0
        %5653 = vmatprep.subr.bf16.mxu0 0
        %5654 = vmatpush1.bf16.msra.mxu0 0
        %5655 = vmatprep.subr.bf16.mxu0 0
        %5656 = vmatpush1.bf16.msra.mxu0 0
        %5657 = vmatprep.subr.bf16.mxu0 0
        %5658 = vmatpush1.bf16.msra.mxu0 0
        %5659 = vmatprep.subr.bf16.mxu0 0
        %5660 = vmatpush1.bf16.msra.mxu0 0
        %5661 = vmatprep.subr.bf16.mxu0 0
        %5662 = vmatpush1.bf16.msra.mxu0 0
        %5663 = vmatprep.subr.bf16.mxu0 0
        %5664 = vmatpush1.bf16.msra.mxu0 0
        %5665 = vmatprep.subr.bf16.mxu0 0
        %5666 = vmatpush1.bf16.msra.mxu0 0
        %5667 = vmatprep.subr.bf16.mxu0 0
        %5668 = vmatpush1.bf16.msra.mxu0 0
        %5669 = vmatprep.subr.bf16.mxu0 0
        %5670 = vmatpush1.bf16.msra.mxu0 0
        %5671 = vmatprep.subr.bf16.mxu0 0
        %5672 = vmatpush1.bf16.msra.mxu0 0
        %5673 = vmatprep.mubr.bf16.mxu0 0
        %5674 = vmatmul.mubr.bf16.gmra.mrb[0].mxu0 %v5630
        %v5675 = vpop.f32.mrb[0].mxu0
        %v5676 = vadd.f32 0.0, %v5675
        %v5677 = vpop.f32.mrb[0].mxu0
        %v5678 = vpop.f32.mrb[0].mxu0
        %v5679 = vadd.f32 0.0, %v5678
        %v5680 = vpop.f32.mrb[0].mxu0
        %5681 = vmatprep.mubr.bf16.mxu0 0
        %5682 = vmatmul.mubr.bf16.gmra.mrb[0].mxu0 %v5633
        %v5683 = vpop.f32.mrb[0].mxu0
        %v5684 = vadd.f32 0.0, %v5683
        %v5685 = vpop.f32.mrb[0].mxu0
        %v5686 = vpop.f32.mrb[0].mxu0
        %v5687 = vadd.f32 0.0, %v5686
        %v5688 = vpop.f32.mrb[0].mxu0
        %5689 = vmatprep.mubr.bf16.mxu0 0
        %5690 = vmatmul.mubr.bf16.gmra.mrb[0].mxu0 %v5636
        %v5691 = vpop.f32.mrb[0].mxu0
        %v5692 = vadd.f32 0.0, %v5691
        %v5693 = vpop.f32.mrb[0].mxu0
        %v5694 = vpop.f32.mrb[0].mxu0
        %v5695 = vadd.f32 0.0, %v5694
        %v5696 = vpop.f32.mrb[0].mxu0
        %5697 = vmatprep.mubr.bf16.mxu0 0
        %5698 = vmatmul.mubr.bf16.gmra.mrb[0].mxu0 %v5639
        %v5699 = vpop.f32.mrb[0].mxu0
        %v5700 = vadd.f32 0.0, %v5699
        %v5701 = vpop.f32.mrb[0].mxu0
        %v5702 = vpop.f32.mrb[0].mxu0
        %v5703 = vadd.f32 0.0, %v5702
        %v5704 = vpop.f32.mrb[0].mxu0
        %5705 = vdwg.mxu0
        %v5706 = vadd.f32 %v5576, %v5676
        %v5707 = vadd.f32 %v5577, %v5679
        %v5708 = vadd.f32 %v5578, %v5684
        %v5709 = vadd.f32 %v5579, %v5687
        %v5710 = vadd.f32 %v5580, %v5692
        %v5711 = vadd.f32 %v5581, %v5695
        %v5712 = vadd.f32 %v5582, %v5700
        %v5713 = vadd.f32 %v5583, %v5703
        %v5714 = vpack.c.bf16 %v5171, %v5170
        %v5715 = vpack.c.bf16 %v5173, %v5172
        %v5716 = vpack.c.bf16 %v5175, %v5174
        %v5717 = vpack.c.bf16 %v5177, %v5176
        %s5718 = scalar_lea.vmem %s4, 320
        %v5719 = vld [vmem:[%s5718] sm:$0xf]
        %v5720 = vld [vmem:[%s5718 + $0x4] sm:$0xf]
        %v5721 = vld [vmem:[%s5718 + $0x8] sm:$0xf]
        %v5722 = vld [vmem:[%s5718 + $0xc] sm:$0xf]
        %v5723 = vld [vmem:[%s5718 + $0x10] sm:$0xf]
        %v5724 = vld [vmem:[%s5718 + $0x14] sm:$0xf]
        %v5725 = vld [vmem:[%s5718 + $0x18] sm:$0xf]
        %v5726 = vld [vmem:[%s5718 + $0x1c] sm:$0xf]
        %v5735 = vunpack.c.l.b16 %v5719
        %v5736 = vunpack.c.l.b16 %v5720
        %v5737 = vunpack.c.l.b16 %v5721
        %v5738 = vunpack.c.l.b16 %v5722
        %v5739 = vunpack.c.l.b16 %v5723
        %v5740 = vunpack.c.l.b16 %v5724
        %v5741 = vunpack.c.l.b16 %v5725
        %v5742 = vunpack.c.l.b16 %v5726
        %v5743 = vpack.c.b16 %v5736, %v5735
        %v5744 = vpack.c.b16 %v5738, %v5737
        %v5745 = vpack.c.b16 %v5740, %v5739
        %v5746 = vpack.c.b16 %v5742, %v5741
        %v5752 = vsel %vm956, %v5714, 0
        %v5755 = vsel %vm956, %v5715, 0
        %v5758 = vsel %vm956, %v5716, 0
        %v5761 = vsel %vm956, %v5717, 0
        %5763 = vmatprep.subr.bf16.mxu0 0
        %5764 = vmatpush1.bf16.msra.mxu0 %v5743
        %5765 = vmatprep.subr.bf16.mxu0 0
        %5766 = vmatpush1.bf16.msra.mxu0 %v5744
        %5767 = vmatprep.subr.bf16.mxu0 0
        %5768 = vmatpush1.bf16.msra.mxu0 %v5745
        %5769 = vmatprep.subr.bf16.mxu0 0
        %5770 = vmatpush1.bf16.msra.mxu0 %v5746
        %5771 = vmatprep.subr.bf16.mxu0 0
        %5772 = vmatpush1.bf16.msra.mxu0 0
        %5773 = vmatprep.subr.bf16.mxu0 0
        %5774 = vmatpush1.bf16.msra.mxu0 0
        %5775 = vmatprep.subr.bf16.mxu0 0
        %5776 = vmatpush1.bf16.msra.mxu0 0
        %5777 = vmatprep.subr.bf16.mxu0 0
        %5778 = vmatpush1.bf16.msra.mxu0 0
        %5779 = vmatprep.subr.bf16.mxu0 0
        %5780 = vmatpush1.bf16.msra.mxu0 0
        %5781 = vmatprep.subr.bf16.mxu0 0
        %5782 = vmatpush1.bf16.msra.mxu0 0
        %5783 = vmatprep.subr.bf16.mxu0 0
        %5784 = vmatpush1.bf16.msra.mxu0 0
        %5785 = vmatprep.subr.bf16.mxu0 0
        %5786 = vmatpush1.bf16.msra.mxu0 0
        %5787 = vmatprep.subr.bf16.mxu0 0
        %5788 = vmatpush1.bf16.msra.mxu0 0
        %5789 = vmatprep.subr.bf16.mxu0 0
        %5790 = vmatpush1.bf16.msra.mxu0 0
        %5791 = vmatprep.subr.bf16.mxu0 0
        %5792 = vmatpush1.bf16.msra.mxu0 0
        %5793 = vmatprep.subr.bf16.mxu0 0
        %5794 = vmatpush1.bf16.msra.mxu0 0
        %5795 = vmatprep.mubr.bf16.mxu0 0
        %5796 = vmatmul.mubr.bf16.gmra.mrb[0].mxu0 %v5752
        %v5797 = vpop.f32.mrb[0].mxu0
        %v5798 = vadd.f32 0.0, %v5797
        %v5799 = vpop.f32.mrb[0].mxu0
        %v5800 = vpop.f32.mrb[0].mxu0
        %v5801 = vadd.f32 0.0, %v5800
        %v5802 = vpop.f32.mrb[0].mxu0
        %5803 = vmatprep.mubr.bf16.mxu0 0
        %5804 = vmatmul.mubr.bf16.gmra.mrb[0].mxu0 %v5755
        %v5805 = vpop.f32.mrb[0].mxu0
        %v5806 = vadd.f32 0.0, %v5805
        %v5807 = vpop.f32.mrb[0].mxu0
        %v5808 = vpop.f32.mrb[0].mxu0
        %v5809 = vadd.f32 0.0, %v5808
        %v5810 = vpop.f32.mrb[0].mxu0
        %5811 = vmatprep.mubr.bf16.mxu0 0
        %5812 = vmatmul.mubr.bf16.gmra.mrb[0].mxu0 %v5758
        %v5813 = vpop.f32.mrb[0].mxu0
        %v5814 = vadd.f32 0.0, %v5813
        %v5815 = vpop.f32.mrb[0].mxu0
        %v5816 = vpop.f32.mrb[0].mxu0
        %v5817 = vadd.f32 0.0, %v5816
        %v5818 = vpop.f32.mrb[0].mxu0
        %5819 = vmatprep.mubr.bf16.mxu0 0
        %5820 = vmatmul.mubr.bf16.gmra.mrb[0].mxu0 %v5761
        %v5821 = vpop.f32.mrb[0].mxu0
        %v5822 = vadd.f32 0.0, %v5821
        %v5823 = vpop.f32.mrb[0].mxu0
        %v5824 = vpop.f32.mrb[0].mxu0
        %v5825 = vadd.f32 0.0, %v5824
        %v5826 = vpop.f32.mrb[0].mxu0
        %5827 = vdwg.mxu0
        %v5828 = vadd.f32 %v5706, %v5798
        %v5829 = vadd.f32 %v5707, %v5801
        %v5830 = vadd.f32 %v5708, %v5806
        %v5831 = vadd.f32 %v5709, %v5809
        %v5832 = vadd.f32 %v5710, %v5814
        %v5833 = vadd.f32 %v5711, %v5817
        %v5834 = vadd.f32 %v5712, %v5822
        %v5835 = vadd.f32 %v5713, %v5825
        %v5836 = vmul.f32 %v5452, %v737
        %v5837 = vmul.f32 %v5451, %v738
        %v5838 = vmul.f32 %v5450, %v739
        %v5839 = vmul.f32 %v5449, %v740
        %v5840 = vmul.f32 %v5448, %v741
        %v5841 = vmul.f32 %v5447, %v742
        %v5842 = vmul.f32 %v5446, %v743
        %v5843 = vmul.f32 %v5453, %v744
        %v5844 = vpack.c.bf16 %v5837, %v5836
        %v5845 = vpack.c.bf16 %v5839, %v5838
        %v5846 = vpack.c.bf16 %v5841, %v5840
        %v5847 = vpack.c.bf16 %v5843, %v5842
        %s5848 = scalar_lea.vmem %s4, 352
        %v5849 = vld [vmem:[%s5848] sm:$0xf]
        %v5850 = vld [vmem:[%s5848 + $0x4] sm:$0xf]
        %v5851 = vld [vmem:[%s5848 + $0x8] sm:$0xf]
        %v5852 = vld [vmem:[%s5848 + $0xc] sm:$0xf]
        %v5853 = vld [vmem:[%s5848 + $0x10] sm:$0xf]
        %v5854 = vld [vmem:[%s5848 + $0x14] sm:$0xf]
        %v5855 = vld [vmem:[%s5848 + $0x18] sm:$0xf]
        %v5856 = vld [vmem:[%s5848 + $0x1c] sm:$0xf]
        %v5865 = vunpack.c.l.b16 %v5849
        %v5866 = vunpack.c.l.b16 %v5850
        %v5867 = vunpack.c.l.b16 %v5851
        %v5868 = vunpack.c.l.b16 %v5852
        %v5869 = vunpack.c.l.b16 %v5853
        %v5870 = vunpack.c.l.b16 %v5854
        %v5871 = vunpack.c.l.b16 %v5855
        %v5872 = vunpack.c.l.b16 %v5856
        %v5873 = vpack.c.b16 %v5866, %v5865
        %v5874 = vpack.c.b16 %v5868, %v5867
        %v5875 = vpack.c.b16 %v5870, %v5869
        %v5876 = vpack.c.b16 %v5872, %v5871
        %v5882 = vsel %vm956, %v5844, 0
        %v5885 = vsel %vm956, %v5845, 0
        %v5888 = vsel %vm956, %v5846, 0
        %v5891 = vsel %vm956, %v5847, 0
        %5893 = vmatprep.subr.bf16.mxu0 0
        %5894 = vmatpush1.bf16.msra.mxu0 %v5873
        %5895 = vmatprep.subr.bf16.mxu0 0
        %5896 = vmatpush1.bf16.msra.mxu0 %v5874
        %5897 = vmatprep.subr.bf16.mxu0 0
        %5898 = vmatpush1.bf16.msra.mxu0 %v5875
        %5899 = vmatprep.subr.bf16.mxu0 0
        %5900 = vmatpush1.bf16.msra.mxu0 %v5876
        %5901 = vmatprep.subr.bf16.mxu0 0
        %5902 = vmatpush1.bf16.msra.mxu0 0
        %5903 = vmatprep.subr.bf16.mxu0 0
        %5904 = vmatpush1.bf16.msra.mxu0 0
        %5905 = vmatprep.subr.bf16.mxu0 0
        %5906 = vmatpush1.bf16.msra.mxu0 0
        %5907 = vmatprep.subr.bf16.mxu0 0
        %5908 = vmatpush1.bf16.msra.mxu0 0
        %5909 = vmatprep.subr.bf16.mxu0 0
        %5910 = vmatpush1.bf16.msra.mxu0 0
        %5911 = vmatprep.subr.bf16.mxu0 0
        %5912 = vmatpush1.bf16.msra.mxu0 0
        %5913 = vmatprep.subr.bf16.mxu0 0
        %5914 = vmatpush1.bf16.msra.mxu0 0
        %5915 = vmatprep.subr.bf16.mxu0 0
        %5916 = vmatpush1.bf16.msra.mxu0 0
        %5917 = vmatprep.subr.bf16.mxu0 0
        %5918 = vmatpush1.bf16.msra.mxu0 0
        %5919 = vmatprep.subr.bf16.mxu0 0
        %5920 = vmatpush1.bf16.msra.mxu0 0
        %5921 = vmatprep.subr.bf16.mxu0 0
        %5922 = vmatpush1.bf16.msra.mxu0 0
        %5923 = vmatprep.subr.bf16.mxu0 0
        %5924 = vmatpush1.bf16.msra.mxu0 0
        %5925 = vmatprep.mubr.bf16.mxu0 0
        %5926 = vmatmul.mubr.bf16.gmra.mrb[0].mxu0 %v5882
        %v5927 = vpop.f32.mrb[0].mxu0
        %v5928 = vadd.f32 0.0, %v5927
        %v5929 = vpop.f32.mrb[0].mxu0
        %v5930 = vpop.f32.mrb[0].mxu0
        %v5931 = vadd.f32 0.0, %v5930
        %v5932 = vpop.f32.mrb[0].mxu0
        %5933 = vmatprep.mubr.bf16.mxu0 0
        %5934 = vmatmul.mubr.bf16.gmra.mrb[0].mxu0 %v5885
        %v5935 = vpop.f32.mrb[0].mxu0
        %v5936 = vadd.f32 0.0, %v5935
        %v5937 = vpop.f32.mrb[0].mxu0
        %v5938 = vpop.f32.mrb[0].mxu0
        %v5939 = vadd.f32 0.0, %v5938
        %v5940 = vpop.f32.mrb[0].mxu0
        %5941 = vmatprep.mubr.bf16.mxu0 0
        %5942 = vmatmul.mubr.bf16.gmra.mrb[0].mxu0 %v5888
        %v5943 = vpop.f32.mrb[0].mxu0
        %v5944 = vadd.f32 0.0, %v5943
        %v5945 = vpop.f32.mrb[0].mxu0
        %v5946 = vpop.f32.mrb[0].mxu0
        %v5947 = vadd.f32 0.0, %v5946
        %v5948 = vpop.f32.mrb[0].mxu0
        %5949 = vmatprep.mubr.bf16.mxu0 0
        %5950 = vmatmul.mubr.bf16.gmra.mrb[0].mxu0 %v5891
        %v5951 = vpop.f32.mrb[0].mxu0
        %v5952 = vadd.f32 0.0, %v5951
        %v5953 = vpop.f32.mrb[0].mxu0
        %v5954 = vpop.f32.mrb[0].mxu0
        %v5955 = vadd.f32 0.0, %v5954
        %v5956 = vpop.f32.mrb[0].mxu0
        %5957 = vdwg.mxu0
        %v5958 = vadd.f32 %v5828, %v5928
        %v5959 = vadd.f32 %v5829, %v5931
        %v5960 = vadd.f32 %v5830, %v5936
        %v5961 = vadd.f32 %v5831, %v5939
        %v5962 = vadd.f32 %v5832, %v5944
        %v5963 = vadd.f32 %v5833, %v5947
        %v5964 = vadd.f32 %v5834, %v5952
        %v5965 = vadd.f32 %v5835, %v5955
        %s5966 = scalar_lea.vmem %s5, 1
        %v5967 = vld [vmem:[%s5966] sm:$0x1]
        %v5969 = vlaneseq
        %v5970 = vshrl.u32 %v5969, 7
        %v5971 = vsub.s32 0, %v5970
        %v5972 = vrot.slane %v5967, %v5971
        %v5974 = vadd.f32 %v5958, %v5972
        %v5975 = vadd.f32 %v5959, %v5972
        %v5976 = vadd.f32 %v5960, %v5972
        %v5977 = vadd.f32 %v5961, %v5972
        %v5978 = vadd.f32 %v5962, %v5972
        %v5979 = vadd.f32 %v5963, %v5972
        %v5980 = vadd.f32 %v5964, %v5972
        %v5981 = vadd.f32 %v5965, %v5972
        %v5982 = vsub.f32 0.0, %v5974
        %v5983 = vsub.f32 0.0, %v5975
        %v5984 = vsub.f32 0.0, %v5976
        %v5985 = vsub.f32 0.0, %v5977
        %v5986 = vsub.f32 0.0, %v5978
        %v5987 = vsub.f32 0.0, %v5979
        %v5988 = vsub.f32 0.0, %v5980
        %v5989 = vsub.f32 0.0, %v5981
        %v5990 = vmul.f32 %v5982, 1.442695
        %v5991 = vpow.pop %v5990
        %v5992 = vmul.f32 %v5983, 1.442695
        %v5993 = vpow.pop %v5992
        %v5994 = vmul.f32 %v5984, 1.442695
        %v5995 = vpow.pop %v5994
        %v5996 = vmul.f32 %v5985, 1.442695
        %v5997 = vpow.pop %v5996
        %v5998 = vmul.f32 %v5986, 1.442695
        %v5999 = vpow.pop %v5998
        %v6000 = vmul.f32 %v5987, 1.442695
        %v6001 = vpow.pop %v6000
        %v6002 = vmul.f32 %v5988, 1.442695
        %v6003 = vpow.pop %v6002
        %v6004 = vmul.f32 %v5989, 1.442695
        %v6005 = vpow.pop %v6004
        %v6006 = vadd.f32 %v5991, 1.0
        %v6007 = vadd.f32 %v5993, 1.0
        %v6008 = vadd.f32 %v5995, 1.0
        %v6009 = vadd.f32 %v5997, 1.0
        %v6010 = vadd.f32 %v5999, 1.0
        %v6011 = vadd.f32 %v6001, 1.0
        %v6012 = vadd.f32 %v6003, 1.0
        %v6013 = vadd.f32 %v6005, 1.0
        %v6014 = vrcp.pop %v6006
        %v6015 = vrcp.pop %v6007
        %v6016 = vrcp.pop %v6008
        %v6017 = vrcp.pop %v6009
        %v6018 = vrcp.pop %v6010
        %v6019 = vrcp.pop %v6011
        %v6020 = vrcp.pop %v6012
        %v6021 = vrcp.pop %v6013
        %6030 = vrot.lane.b32.xlu0 %v6014, 96
        %v6031 = vpop.permute.xlu0 %6030
        %6032 = vrot.lane.b32.xlu0 %v6015, 96
        %v6033 = vpop.permute.xlu0 %6032
        %6034 = vrot.lane.b32.xlu0 %v6016, 96
        %v6035 = vpop.permute.xlu0 %6034
        %6036 = vrot.lane.b32.xlu0 %v6017, 96
        %v6037 = vpop.permute.xlu0 %6036
        %6038 = vrot.lane.b32.xlu0 %v6018, 96
        %v6039 = vpop.permute.xlu0 %6038
        %6040 = vrot.lane.b32.xlu0 %v6019, 96
        %v6041 = vpop.permute.xlu0 %6040
        %6042 = vrot.lane.b32.xlu0 %v6020, 96
        %v6043 = vpop.permute.xlu0 %6042
        %6044 = vrot.lane.b32.xlu0 %v6021, 96
        %v6045 = vpop.permute.xlu0 %6044
        %v6054 = vmul.f32 %v5974, %v6031
        %v6055 = vmul.f32 %v5975, %v6033
        %v6056 = vmul.f32 %v5976, %v6035
        %v6057 = vmul.f32 %v5977, %v6037
        %v6058 = vmul.f32 %v5978, %v6039
        %v6059 = vmul.f32 %v5979, %v6041
        %v6060 = vmul.f32 %v5980, %v6043
        %v6061 = vmul.f32 %v5981, %v6045
        %v6062 = vadd.f32 %v2673, %v6054
        %v6063 = vadd.f32 %v2674, %v6055
        %v6064 = vadd.f32 %v2675, %v6056
        %v6065 = vadd.f32 %v2676, %v6057
        %v6066 = vadd.f32 %v2677, %v6058
        %v6067 = vadd.f32 %v2678, %v6059
        %v6068 = vadd.f32 %v2679, %v6060
        %v6069 = vadd.f32 %v2680, %v6061
        %v6070 = vand.u32 2147483647, %v6062
        %v6071 = vand.u32 2147483647, %v6063
        %v6072 = vand.u32 2147483647, %v6064
        %v6073 = vand.u32 2147483647, %v6065
        %v6074 = vand.u32 2147483647, %v6066
        %v6075 = vand.u32 2147483647, %v6067
        %v6076 = vand.u32 2147483647, %v6068
        %v6077 = vand.u32 2147483647, %v6069
        %v6078 = vsub.f32 0.0, %v6070
        %v6079 = vsub.f32 0.0, %v6071
        %v6080 = vsub.f32 0.0, %v6072
        %v6081 = vsub.f32 0.0, %v6073
        %v6082 = vsub.f32 0.0, %v6074
        %v6083 = vsub.f32 0.0, %v6075
        %v6084 = vsub.f32 0.0, %v6076
        %v6085 = vsub.f32 0.0, %v6077
        %v6086 = vmul.f32 %v6078, 1.442695
        %v6087 = vpow.pop %v6086
        %v6088 = vmul.f32 %v6079, 1.442695
        %v6089 = vpow.pop %v6088
        %v6090 = vmul.f32 %v6080, 1.442695
        %v6091 = vpow.pop %v6090
        %v6092 = vmul.f32 %v6081, 1.442695
        %v6093 = vpow.pop %v6092
        %v6094 = vmul.f32 %v6082, 1.442695
        %v6095 = vpow.pop %v6094
        %v6096 = vmul.f32 %v6083, 1.442695
        %v6097 = vpow.pop %v6096
        %v6098 = vmul.f32 %v6084, 1.442695
        %v6099 = vpow.pop %v6098
        %v6100 = vmul.f32 %v6085, 1.442695
        %v6101 = vpow.pop %v6100
        %v6102 = vsub.f32 %v6087, 1.0
        %v6103 = vsub.f32 %v6089, 1.0
        %v6104 = vsub.f32 %v6091, 1.0
        %v6105 = vsub.f32 %v6093, 1.0
        %v6106 = vsub.f32 %v6095, 1.0
        %v6107 = vsub.f32 %v6097, 1.0
        %v6108 = vsub.f32 %v6099, 1.0
        %v6109 = vsub.f32 %v6101, 1.0
        %vm6110 = vcmp.gt.f32.partialorder %v6062, 0.0
        %vm6111 = vcmp.gt.f32.partialorder %v6063, 0.0
        %vm6112 = vcmp.gt.f32.partialorder %v6064, 0.0
        %vm6113 = vcmp.gt.f32.partialorder %v6065, 0.0
        %vm6114 = vcmp.gt.f32.partialorder %v6066, 0.0
        %vm6115 = vcmp.gt.f32.partialorder %v6067, 0.0
        %vm6116 = vcmp.gt.f32.partialorder %v6068, 0.0
        %vm6117 = vcmp.gt.f32.partialorder %v6069, 0.0
        %v6118 = vsel %vm6110, %v6062, %v6102
        %v6119 = vsel %vm6111, %v6063, %v6103
        %v6120 = vsel %vm6112, %v6064, %v6104
        %v6121 = vsel %vm6113, %v6065, %v6105
        %v6122 = vsel %vm6114, %v6066, %v6106
        %v6123 = vsel %vm6115, %v6067, %v6107
        %v6124 = vsel %vm6116, %v6068, %v6108
        %v6125 = vsel %vm6117, %v6069, %v6109
        %v6126 = vsub.f32 0.0, %v6062
        %v6127 = vsub.f32 0.0, %v6063
        %v6128 = vsub.f32 0.0, %v6064
        %v6129 = vsub.f32 0.0, %v6065
        %v6130 = vsub.f32 0.0, %v6066
        %v6131 = vsub.f32 0.0, %v6067
        %v6132 = vsub.f32 0.0, %v6068
        %v6133 = vsub.f32 0.0, %v6069
        %v6134 = vsel %vm6110, %v6102, %v6126
        %v6135 = vsel %vm6111, %v6103, %v6127
        %v6136 = vsel %vm6112, %v6104, %v6128
        %v6137 = vsel %vm6113, %v6105, %v6129
        %v6138 = vsel %vm6114, %v6106, %v6130
        %v6139 = vsel %vm6115, %v6107, %v6131
        %v6140 = vsel %vm6116, %v6108, %v6132
        %v6141 = vsel %vm6117, %v6109, %v6133
        %6150 = vrot.lane.b32.xlu0 %v6134, 32
        %v6151 = vpop.permute.xlu0 %6150
        %6152 = vrot.lane.b32.xlu0 %v6135, 32
        %v6153 = vpop.permute.xlu0 %6152
        %6154 = vrot.lane.b32.xlu0 %v6136, 32
        %v6155 = vpop.permute.xlu0 %6154
        %6156 = vrot.lane.b32.xlu0 %v6137, 32
        %v6157 = vpop.permute.xlu0 %6156
        %6158 = vrot.lane.b32.xlu0 %v6138, 32
        %v6159 = vpop.permute.xlu0 %6158
        %6160 = vrot.lane.b32.xlu0 %v6139, 32
        %v6161 = vpop.permute.xlu0 %6160
        %6162 = vrot.lane.b32.xlu0 %v6140, 32
        %v6163 = vpop.permute.xlu0 %6162
        %6164 = vrot.lane.b32.xlu0 %v6141, 32
        %v6165 = vpop.permute.xlu0 %6164
        %v6174 = vsel %vm865, %v6118, %v6151
        %v6175 = vsel %vm865, %v6119, %v6153
        %v6176 = vsel %vm865, %v6120, %v6155
        %v6177 = vsel %vm865, %v6121, %v6157
        %v6178 = vsel %vm865, %v6122, %v6159
        %v6179 = vsel %vm865, %v6123, %v6161
        %v6180 = vsel %vm865, %v6124, %v6163
        %v6181 = vsel %vm865, %v6125, %v6165
        %v6182 = vand.u32 2147483647, %v4270
        %v6183 = vand.u32 2147483647, %v4271
        %v6184 = vand.u32 2147483647, %v4272
        %v6185 = vand.u32 2147483647, %v4273
        %v6186 = vand.u32 2147483647, %v4274
        %v6187 = vand.u32 2147483647, %v4275
        %v6188 = vand.u32 2147483647, %v4276
        %v6189 = vand.u32 2147483647, %v4277
        %v6190 = vsub.f32 0.0, %v6182
        %v6191 = vsub.f32 0.0, %v6183
        %v6192 = vsub.f32 0.0, %v6184
        %v6193 = vsub.f32 0.0, %v6185
        %v6194 = vsub.f32 0.0, %v6186
        %v6195 = vsub.f32 0.0, %v6187
        %v6196 = vsub.f32 0.0, %v6188
        %v6197 = vsub.f32 0.0, %v6189
        %v6198 = vmul.f32 %v6190, 1.442695
        %v6199 = vpow.pop %v6198
        %v6200 = vmul.f32 %v6191, 1.442695
        %v6201 = vpow.pop %v6200
        %v6202 = vmul.f32 %v6192, 1.442695
        %v6203 = vpow.pop %v6202
        %v6204 = vmul.f32 %v6193, 1.442695
        %v6205 = vpow.pop %v6204
        %v6206 = vmul.f32 %v6194, 1.442695
        %v6207 = vpow.pop %v6206
        %v6208 = vmul.f32 %v6195, 1.442695
        %v6209 = vpow.pop %v6208
        %v6210 = vmul.f32 %v6196, 1.442695
        %v6211 = vpow.pop %v6210
        %v6212 = vmul.f32 %v6197, 1.442695
        %v6213 = vpow.pop %v6212
        %v6214 = vsub.f32 %v6199, 1.0
        %v6215 = vsub.f32 %v6201, 1.0
        %v6216 = vsub.f32 %v6203, 1.0
        %v6217 = vsub.f32 %v6205, 1.0
        %v6218 = vsub.f32 %v6207, 1.0
        %v6219 = vsub.f32 %v6209, 1.0
        %v6220 = vsub.f32 %v6211, 1.0
        %v6221 = vsub.f32 %v6213, 1.0
        %vm6222 = vcmp.gt.f32.partialorder %v4270, 0.0
        %vm6223 = vcmp.gt.f32.partialorder %v4271, 0.0
        %vm6224 = vcmp.gt.f32.partialorder %v4272, 0.0
        %vm6225 = vcmp.gt.f32.partialorder %v4273, 0.0
        %vm6226 = vcmp.gt.f32.partialorder %v4274, 0.0
        %vm6227 = vcmp.gt.f32.partialorder %v4275, 0.0
        %vm6228 = vcmp.gt.f32.partialorder %v4276, 0.0
        %vm6229 = vcmp.gt.f32.partialorder %v4277, 0.0
        %v6230 = vsel %vm6222, %v4270, %v6214
        %v6231 = vsel %vm6223, %v4271, %v6215
        %v6232 = vsel %vm6224, %v4272, %v6216
        %v6233 = vsel %vm6225, %v4273, %v6217
        %v6234 = vsel %vm6226, %v4274, %v6218
        %v6235 = vsel %vm6227, %v4275, %v6219
        %v6236 = vsel %vm6228, %v4276, %v6220
        %v6237 = vsel %vm6229, %v4277, %v6221
        %v6238 = vsub.f32 0.0, %v4270
        %v6239 = vsub.f32 0.0, %v4271
        %v6240 = vsub.f32 0.0, %v4272
        %v6241 = vsub.f32 0.0, %v4273
        %v6242 = vsub.f32 0.0, %v4274
        %v6243 = vsub.f32 0.0, %v4275
        %v6244 = vsub.f32 0.0, %v4276
        %v6245 = vsub.f32 0.0, %v4277
        %v6246 = vsel %vm6222, %v6214, %v6238
        %v6247 = vsel %vm6223, %v6215, %v6239
        %v6248 = vsel %vm6224, %v6216, %v6240
        %v6249 = vsel %vm6225, %v6217, %v6241
        %v6250 = vsel %vm6226, %v6218, %v6242
        %v6251 = vsel %vm6227, %v6219, %v6243
        %v6252 = vsel %vm6228, %v6220, %v6244
        %v6253 = vsel %vm6229, %v6221, %v6245
        %6262 = vrot.lane.b32.xlu0 %v6246, 32
        %v6263 = vpop.permute.xlu0 %6262
        %6264 = vrot.lane.b32.xlu0 %v6247, 32
        %v6265 = vpop.permute.xlu0 %6264
        %6266 = vrot.lane.b32.xlu0 %v6248, 32
        %v6267 = vpop.permute.xlu0 %6266
        %6268 = vrot.lane.b32.xlu0 %v6249, 32
        %v6269 = vpop.permute.xlu0 %6268
        %6270 = vrot.lane.b32.xlu0 %v6250, 32
        %v6271 = vpop.permute.xlu0 %6270
        %6272 = vrot.lane.b32.xlu0 %v6251, 32
        %v6273 = vpop.permute.xlu0 %6272
        %6274 = vrot.lane.b32.xlu0 %v6252, 32
        %v6275 = vpop.permute.xlu0 %6274
        %6276 = vrot.lane.b32.xlu0 %v6253, 32
        %v6277 = vpop.permute.xlu0 %6276
        %v6286 = vsel %vm865, %v6230, %v6263
        %v6287 = vsel %vm865, %v6231, %v6265
        %v6288 = vsel %vm865, %v6232, %v6267
        %v6289 = vsel %vm865, %v6233, %v6269
        %v6290 = vsel %vm865, %v6234, %v6271
        %v6291 = vsel %vm865, %v6235, %v6273
        %v6292 = vsel %vm865, %v6236, %v6275
        %v6293 = vsel %vm865, %v6237, %v6277
        %v6294 = vrot.slane %v6286, 7
        %v6295 = vrot.slane %v6287, 7
        %v6296 = vrot.slane %v6288, 7
        %v6297 = vrot.slane %v6289, 7
        %v6298 = vrot.slane %v6290, 7
        %v6299 = vrot.slane %v6291, 7
        %v6300 = vrot.slane %v6292, 7
        %v6301 = vrot.slane %v6293, 7
        %v6302 = vsel %vm882, %v6300, %v6301
        %v6303 = vsel %vm882, %v6299, %v6300
        %v6304 = vsel %vm882, %v6298, %v6299
        %v6305 = vsel %vm882, %v6297, %v6298
        %v6306 = vsel %vm882, %v6296, %v6297
        %v6307 = vsel %vm882, %v6295, %v6296
        %v6308 = vsel %vm882, %v6294, %v6295
        %v6309 = vsel %vm882, %v6301, %v6294
        %v6310 = vmul.f32 %v6302, %v545
        %v6311 = vmul.f32 %v6309, %v546
        %v6312 = vmul.f32 %v6308, %v547
        %v6313 = vmul.f32 %v6307, %v548
        %v6314 = vmul.f32 %v6306, %v549
        %v6315 = vmul.f32 %v6305, %v550
        %v6316 = vmul.f32 %v6304, %v551
        %v6317 = vmul.f32 %v6303, %v552
        %v6318 = vpack.c.bf16 %v6311, %v6310
        %v6319 = vpack.c.bf16 %v6313, %v6312
        %v6320 = vpack.c.bf16 %v6315, %v6314
        %v6321 = vpack.c.bf16 %v6317, %v6316
        %s6322 = scalar_lea.vmem %s6, 128
        %v6323 = vld [vmem:[%s6322] sm:$0xf]
        %v6324 = vld [vmem:[%s6322 + $0x4] sm:$0xf]
        %v6325 = vld [vmem:[%s6322 + $0x8] sm:$0xf]
        %v6326 = vld [vmem:[%s6322 + $0xc] sm:$0xf]
        %v6327 = vld [vmem:[%s6322 + $0x10] sm:$0xf]
        %v6328 = vld [vmem:[%s6322 + $0x14] sm:$0xf]
        %v6329 = vld [vmem:[%s6322 + $0x18] sm:$0xf]
        %v6330 = vld [vmem:[%s6322 + $0x1c] sm:$0xf]
        %v6331 = vmul.f32 %v6293, %v593
        %v6332 = vmul.f32 %v6286, %v594
        %v6333 = vmul.f32 %v6287, %v595
        %v6334 = vmul.f32 %v6288, %v596
        %v6335 = vmul.f32 %v6289, %v597
        %v6336 = vmul.f32 %v6290, %v598
        %v6337 = vmul.f32 %v6291, %v599
        %v6338 = vmul.f32 %v6292, %v600
        %v6339 = vpack.c.bf16 %v6332, %v6331
        %v6340 = vpack.c.bf16 %v6334, %v6333
        %v6341 = vpack.c.bf16 %v6336, %v6335
        %v6342 = vpack.c.bf16 %v6338, %v6337
        %s6343 = scalar_lea.vmem %s6, 160
        %v6344 = vld [vmem:[%s6343] sm:$0xf]
        %v6345 = vld [vmem:[%s6343 + $0x4] sm:$0xf]
        %v6346 = vld [vmem:[%s6343 + $0x8] sm:$0xf]
        %v6347 = vld [vmem:[%s6343 + $0xc] sm:$0xf]
        %v6348 = vld [vmem:[%s6343 + $0x10] sm:$0xf]
        %v6349 = vld [vmem:[%s6343 + $0x14] sm:$0xf]
        %v6350 = vld [vmem:[%s6343 + $0x18] sm:$0xf]
        %v6351 = vld [vmem:[%s6343 + $0x1c] sm:$0xf]
        %v6360 = vunpack.c.l.b16 %v6344
        %v6361 = vunpack.c.l.b16 %v6345
        %v6362 = vunpack.c.l.b16 %v6346
        %v6363 = vunpack.c.l.b16 %v6347
        %v6364 = vunpack.c.l.b16 %v6348
        %v6365 = vunpack.c.l.b16 %v6349
        %v6366 = vunpack.c.l.b16 %v6350
        %v6367 = vunpack.c.l.b16 %v6351
        %v6368 = vpack.c.b16 %v6361, %v6360
        %v6369 = vpack.c.b16 %v6363, %v6362
        %v6370 = vpack.c.b16 %v6365, %v6364
        %v6371 = vpack.c.b16 %v6367, %v6366
        %v6377 = vsel %vm956, %v6339, 0
        %v6380 = vsel %vm956, %v6340, 0
        %v6383 = vsel %vm956, %v6341, 0
        %v6386 = vsel %vm956, %v6342, 0
        %6388 = vmatprep.subr.bf16.mxu0 0
        %6389 = vmatpush1.bf16.msra.mxu0 %v6368
        %6390 = vmatprep.subr.bf16.mxu0 0
        %6391 = vmatpush1.bf16.msra.mxu0 %v6369
        %6392 = vmatprep.subr.bf16.mxu0 0
        %6393 = vmatpush1.bf16.msra.mxu0 %v6370
        %6394 = vmatprep.subr.bf16.mxu0 0
        %6395 = vmatpush1.bf16.msra.mxu0 %v6371
        %6396 = vmatprep.subr.bf16.mxu0 0
        %6397 = vmatpush1.bf16.msra.mxu0 0
        %6398 = vmatprep.subr.bf16.mxu0 0
        %6399 = vmatpush1.bf16.msra.mxu0 0
        %6400 = vmatprep.subr.bf16.mxu0 0
        %6401 = vmatpush1.bf16.msra.mxu0 0
        %6402 = vmatprep.subr.bf16.mxu0 0
        %6403 = vmatpush1.bf16.msra.mxu0 0
        %6404 = vmatprep.subr.bf16.mxu0 0
        %6405 = vmatpush1.bf16.msra.mxu0 0
        %6406 = vmatprep.subr.bf16.mxu0 0
        %6407 = vmatpush1.bf16.msra.mxu0 0
        %6408 = vmatprep.subr.bf16.mxu0 0
        %6409 = vmatpush1.bf16.msra.mxu0 0
        %6410 = vmatprep.subr.bf16.mxu0 0
        %6411 = vmatpush1.bf16.msra.mxu0 0
        %6412 = vmatprep.subr.bf16.mxu0 0
        %6413 = vmatpush1.bf16.msra.mxu0 0
        %6414 = vmatprep.subr.bf16.mxu0 0
        %6415 = vmatpush1.bf16.msra.mxu0 0
        %6416 = vmatprep.subr.bf16.mxu0 0
        %6417 = vmatpush1.bf16.msra.mxu0 0
        %6418 = vmatprep.subr.bf16.mxu0 0
        %6419 = vmatpush1.bf16.msra.mxu0 0
        %6420 = vmatprep.mubr.bf16.mxu0 0
        %6421 = vmatmul.mubr.bf16.gmra.mrb[0].mxu0 %v6377
        %v6422 = vpop.f32.mrb[0].mxu0
        %v6423 = vadd.f32 0.0, %v6422
        %v6424 = vpop.f32.mrb[0].mxu0
        %v6425 = vpop.f32.mrb[0].mxu0
        %v6426 = vadd.f32 0.0, %v6425
        %v6427 = vpop.f32.mrb[0].mxu0
        %6428 = vmatprep.mubr.bf16.mxu0 0
        %6429 = vmatmul.mubr.bf16.gmra.mrb[0].mxu0 %v6380
        %v6430 = vpop.f32.mrb[0].mxu0
        %v6431 = vadd.f32 0.0, %v6430
        %v6432 = vpop.f32.mrb[0].mxu0
        %v6433 = vpop.f32.mrb[0].mxu0
        %v6434 = vadd.f32 0.0, %v6433
        %v6435 = vpop.f32.mrb[0].mxu0
        %6436 = vmatprep.mubr.bf16.mxu0 0
        %6437 = vmatmul.mubr.bf16.gmra.mrb[0].mxu0 %v6383
        %v6438 = vpop.f32.mrb[0].mxu0
        %v6439 = vadd.f32 0.0, %v6438
        %v6440 = vpop.f32.mrb[0].mxu0
        %v6441 = vpop.f32.mrb[0].mxu0
        %v6442 = vadd.f32 0.0, %v6441
        %v6443 = vpop.f32.mrb[0].mxu0
        %6444 = vmatprep.mubr.bf16.mxu0 0
        %6445 = vmatmul.mubr.bf16.gmra.mrb[0].mxu0 %v6386
        %v6446 = vpop.f32.mrb[0].mxu0
        %v6447 = vadd.f32 0.0, %v6446
        %v6448 = vpop.f32.mrb[0].mxu0
        %v6449 = vpop.f32.mrb[0].mxu0
        %v6450 = vadd.f32 0.0, %v6449
        %v6451 = vpop.f32.mrb[0].mxu0
        %6452 = vdwg.mxu0
        %v6461 = vunpack.c.l.b16 %v6323
        %v6462 = vunpack.c.l.b16 %v6324
        %v6463 = vunpack.c.l.b16 %v6325
        %v6464 = vunpack.c.l.b16 %v6326
        %v6465 = vunpack.c.l.b16 %v6327
        %v6466 = vunpack.c.l.b16 %v6328
        %v6467 = vunpack.c.l.b16 %v6329
        %v6468 = vunpack.c.l.b16 %v6330
        %v6469 = vpack.c.b16 %v6462, %v6461
        %v6470 = vpack.c.b16 %v6464, %v6463
        %v6471 = vpack.c.b16 %v6466, %v6465
        %v6472 = vpack.c.b16 %v6468, %v6467
        %v6478 = vsel %vm956, %v6318, 0
        %v6481 = vsel %vm956, %v6319, 0
        %v6484 = vsel %vm956, %v6320, 0
        %v6487 = vsel %vm956, %v6321, 0
        %6489 = vmatprep.subr.bf16.mxu0 0
        %6490 = vmatpush1.bf16.msra.mxu0 %v6469
        %6491 = vmatprep.subr.bf16.mxu0 0
        %6492 = vmatpush1.bf16.msra.mxu0 %v6470
        %6493 = vmatprep.subr.bf16.mxu0 0
        %6494 = vmatpush1.bf16.msra.mxu0 %v6471
        %6495 = vmatprep.subr.bf16.mxu0 0
        %6496 = vmatpush1.bf16.msra.mxu0 %v6472
        %6497 = vmatprep.subr.bf16.mxu0 0
        %6498 = vmatpush1.bf16.msra.mxu0 0
        %6499 = vmatprep.subr.bf16.mxu0 0
        %6500 = vmatpush1.bf16.msra.mxu0 0
        %6501 = vmatprep.subr.bf16.mxu0 0
        %6502 = vmatpush1.bf16.msra.mxu0 0
        %6503 = vmatprep.subr.bf16.mxu0 0
        %6504 = vmatpush1.bf16.msra.mxu0 0
        %6505 = vmatprep.subr.bf16.mxu0 0
        %6506 = vmatpush1.bf16.msra.mxu0 0
        %6507 = vmatprep.subr.bf16.mxu0 0
        %6508 = vmatpush1.bf16.msra.mxu0 0
        %6509 = vmatprep.subr.bf16.mxu0 0
        %6510 = vmatpush1.bf16.msra.mxu0 0
        %6511 = vmatprep.subr.bf16.mxu0 0
        %6512 = vmatpush1.bf16.msra.mxu0 0
        %6513 = vmatprep.subr.bf16.mxu0 0
        %6514 = vmatpush1.bf16.msra.mxu0 0
        %6515 = vmatprep.subr.bf16.mxu0 0
        %6516 = vmatpush1.bf16.msra.mxu0 0
        %6517 = vmatprep.subr.bf16.mxu0 0
        %6518 = vmatpush1.bf16.msra.mxu0 0
        %6519 = vmatprep.subr.bf16.mxu0 0
        %6520 = vmatpush1.bf16.msra.mxu0 0
        %6521 = vmatprep.mubr.bf16.mxu0 0
        %6522 = vmatmul.mubr.bf16.gmra.mrb[0].mxu0 %v6478
        %v6523 = vpop.f32.mrb[0].mxu0
        %v6524 = vadd.f32 %v6423, %v6523
        %v6525 = vpop.f32.mrb[0].mxu0
        %v6526 = vpop.f32.mrb[0].mxu0
        %v6527 = vadd.f32 %v6426, %v6526
        %v6528 = vpop.f32.mrb[0].mxu0
        %6529 = vmatprep.mubr.bf16.mxu0 0
        %6530 = vmatmul.mubr.bf16.gmra.mrb[0].mxu0 %v6481
        %v6531 = vpop.f32.mrb[0].mxu0
        %v6532 = vadd.f32 %v6431, %v6531
        %v6533 = vpop.f32.mrb[0].mxu0
        %v6534 = vpop.f32.mrb[0].mxu0
        %v6535 = vadd.f32 %v6434, %v6534
        %v6536 = vpop.f32.mrb[0].mxu0
        %6537 = vmatprep.mubr.bf16.mxu0 0
        %6538 = vmatmul.mubr.bf16.gmra.mrb[0].mxu0 %v6484
        %v6539 = vpop.f32.mrb[0].mxu0
        %v6540 = vadd.f32 %v6439, %v6539
        %v6541 = vpop.f32.mrb[0].mxu0
        %v6542 = vpop.f32.mrb[0].mxu0
        %v6543 = vadd.f32 %v6442, %v6542
        %v6544 = vpop.f32.mrb[0].mxu0
        %6545 = vmatprep.mubr.bf16.mxu0 0
        %6546 = vmatmul.mubr.bf16.gmra.mrb[0].mxu0 %v6487
        %v6547 = vpop.f32.mrb[0].mxu0
        %v6548 = vadd.f32 %v6447, %v6547
        %v6549 = vpop.f32.mrb[0].mxu0
        %v6550 = vpop.f32.mrb[0].mxu0
        %v6551 = vadd.f32 %v6450, %v6550
        %v6552 = vpop.f32.mrb[0].mxu0
        %6553 = vdwg.mxu0
        %v6554 = vmul.f32 %v6309, %v705
        %v6555 = vmul.f32 %v6308, %v706
        %v6556 = vmul.f32 %v6307, %v707
        %v6557 = vmul.f32 %v6306, %v708
        %v6558 = vmul.f32 %v6305, %v709
        %v6559 = vmul.f32 %v6304, %v710
        %v6560 = vmul.f32 %v6303, %v711
        %v6561 = vmul.f32 %v6302, %v712
        %v6562 = vpack.c.bf16 %v6555, %v6554
        %v6563 = vpack.c.bf16 %v6557, %v6556
        %v6564 = vpack.c.bf16 %v6559, %v6558
        %v6565 = vpack.c.bf16 %v6561, %v6560
        %s6566 = scalar_lea.vmem %s6, 192
        %v6567 = vld [vmem:[%s6566] sm:$0xf]
        %v6568 = vld [vmem:[%s6566 + $0x4] sm:$0xf]
        %v6569 = vld [vmem:[%s6566 + $0x8] sm:$0xf]
        %v6570 = vld [vmem:[%s6566 + $0xc] sm:$0xf]
        %v6571 = vld [vmem:[%s6566 + $0x10] sm:$0xf]
        %v6572 = vld [vmem:[%s6566 + $0x14] sm:$0xf]
        %v6573 = vld [vmem:[%s6566 + $0x18] sm:$0xf]
        %v6574 = vld [vmem:[%s6566 + $0x1c] sm:$0xf]
        %v6583 = vunpack.c.l.b16 %v6567
        %v6584 = vunpack.c.l.b16 %v6568
        %v6585 = vunpack.c.l.b16 %v6569
        %v6586 = vunpack.c.l.b16 %v6570
        %v6587 = vunpack.c.l.b16 %v6571
        %v6588 = vunpack.c.l.b16 %v6572
        %v6589 = vunpack.c.l.b16 %v6573
        %v6590 = vunpack.c.l.b16 %v6574
        %v6591 = vpack.c.b16 %v6584, %v6583
        %v6592 = vpack.c.b16 %v6586, %v6585
        %v6593 = vpack.c.b16 %v6588, %v6587
        %v6594 = vpack.c.b16 %v6590, %v6589
        %v6600 = vsel %vm956, %v6562, 0
        %v6603 = vsel %vm956, %v6563, 0
        %v6606 = vsel %vm956, %v6564, 0
        %v6609 = vsel %vm956, %v6565, 0
        %6611 = vmatprep.subr.bf16.mxu0 0
        %6612 = vmatpush1.bf16.msra.mxu0 %v6591
        %6613 = vmatprep.subr.bf16.mxu0 0
        %6614 = vmatpush1.bf16.msra.mxu0 %v6592
        %6615 = vmatprep.subr.bf16.mxu0 0
        %6616 = vmatpush1.bf16.msra.mxu0 %v6593
        %6617 = vmatprep.subr.bf16.mxu0 0
        %6618 = vmatpush1.bf16.msra.mxu0 %v6594
        %6619 = vmatprep.subr.bf16.mxu0 0
        %6620 = vmatpush1.bf16.msra.mxu0 0
        %6621 = vmatprep.subr.bf16.mxu0 0
        %6622 = vmatpush1.bf16.msra.mxu0 0
        %6623 = vmatprep.subr.bf16.mxu0 0
        %6624 = vmatpush1.bf16.msra.mxu0 0
        %6625 = vmatprep.subr.bf16.mxu0 0
        %6626 = vmatpush1.bf16.msra.mxu0 0
        %6627 = vmatprep.subr.bf16.mxu0 0
        %6628 = vmatpush1.bf16.msra.mxu0 0
        %6629 = vmatprep.subr.bf16.mxu0 0
        %6630 = vmatpush1.bf16.msra.mxu0 0
        %6631 = vmatprep.subr.bf16.mxu0 0
        %6632 = vmatpush1.bf16.msra.mxu0 0
        %6633 = vmatprep.subr.bf16.mxu0 0
        %6634 = vmatpush1.bf16.msra.mxu0 0
        %6635 = vmatprep.subr.bf16.mxu0 0
        %6636 = vmatpush1.bf16.msra.mxu0 0
        %6637 = vmatprep.subr.bf16.mxu0 0
        %6638 = vmatpush1.bf16.msra.mxu0 0
        %6639 = vmatprep.subr.bf16.mxu0 0
        %6640 = vmatpush1.bf16.msra.mxu0 0
        %6641 = vmatprep.subr.bf16.mxu0 0
        %6642 = vmatpush1.bf16.msra.mxu0 0
        %6643 = vmatprep.mubr.bf16.mxu0 0
        %6644 = vmatmul.mubr.bf16.gmra.mrb[0].mxu0 %v6600
        %v6645 = vpop.f32.mrb[0].mxu0
        %v6646 = vadd.f32 0.0, %v6645
        %v6647 = vpop.f32.mrb[0].mxu0
        %v6648 = vpop.f32.mrb[0].mxu0
        %v6649 = vadd.f32 0.0, %v6648
        %v6650 = vpop.f32.mrb[0].mxu0
        %6651 = vmatprep.mubr.bf16.mxu0 0
        %6652 = vmatmul.mubr.bf16.gmra.mrb[0].mxu0 %v6603
        %v6653 = vpop.f32.mrb[0].mxu0
        %v6654 = vadd.f32 0.0, %v6653
        %v6655 = vpop.f32.mrb[0].mxu0
        %v6656 = vpop.f32.mrb[0].mxu0
        %v6657 = vadd.f32 0.0, %v6656
        %v6658 = vpop.f32.mrb[0].mxu0
        %6659 = vmatprep.mubr.bf16.mxu0 0
        %6660 = vmatmul.mubr.bf16.gmra.mrb[0].mxu0 %v6606
        %v6661 = vpop.f32.mrb[0].mxu0
        %v6662 = vadd.f32 0.0, %v6661
        %v6663 = vpop.f32.mrb[0].mxu0
        %v6664 = vpop.f32.mrb[0].mxu0
        %v6665 = vadd.f32 0.0, %v6664
        %v6666 = vpop.f32.mrb[0].mxu0
        %6667 = vmatprep.mubr.bf16.mxu0 0
        %6668 = vmatmul.mubr.bf16.gmra.mrb[0].mxu0 %v6609
        %v6669 = vpop.f32.mrb[0].mxu0
        %v6670 = vadd.f32 0.0, %v6669
        %v6671 = vpop.f32.mrb[0].mxu0
        %v6672 = vpop.f32.mrb[0].mxu0
        %v6673 = vadd.f32 0.0, %v6672
        %v6674 = vpop.f32.mrb[0].mxu0
        %6675 = vdwg.mxu0
        %v6676 = vadd.f32 %v6524, %v6646
        %v6677 = vadd.f32 %v6527, %v6649
        %v6678 = vadd.f32 %v6532, %v6654
        %v6679 = vadd.f32 %v6535, %v6657
        %v6680 = vadd.f32 %v6540, %v6662
        %v6681 = vadd.f32 %v6543, %v6665
        %v6682 = vadd.f32 %v6548, %v6670
        %v6683 = vadd.f32 %v6551, %v6673
        %v6684 = vpack.c.bf16 %v6287, %v6286
        %v6685 = vpack.c.bf16 %v6289, %v6288
        %v6686 = vpack.c.bf16 %v6291, %v6290
        %v6687 = vpack.c.bf16 %v6293, %v6292
        %s6688 = scalar_lea.vmem %s6, 224
        %v6689 = vld [vmem:[%s6688] sm:$0xf]
        %v6690 = vld [vmem:[%s6688 + $0x4] sm:$0xf]
        %v6691 = vld [vmem:[%s6688 + $0x8] sm:$0xf]
        %v6692 = vld [vmem:[%s6688 + $0xc] sm:$0xf]
        %v6693 = vld [vmem:[%s6688 + $0x10] sm:$0xf]
        %v6694 = vld [vmem:[%s6688 + $0x14] sm:$0xf]
        %v6695 = vld [vmem:[%s6688 + $0x18] sm:$0xf]
        %v6696 = vld [vmem:[%s6688 + $0x1c] sm:$0xf]
        %v6705 = vunpack.c.l.b16 %v6689
        %v6706 = vunpack.c.l.b16 %v6690
        %v6707 = vunpack.c.l.b16 %v6691
        %v6708 = vunpack.c.l.b16 %v6692
        %v6709 = vunpack.c.l.b16 %v6693
        %v6710 = vunpack.c.l.b16 %v6694
        %v6711 = vunpack.c.l.b16 %v6695
        %v6712 = vunpack.c.l.b16 %v6696
        %v6713 = vpack.c.b16 %v6706, %v6705
        %v6714 = vpack.c.b16 %v6708, %v6707
        %v6715 = vpack.c.b16 %v6710, %v6709
        %v6716 = vpack.c.b16 %v6712, %v6711
        %v6722 = vsel %vm956, %v6684, 0
        %v6725 = vsel %vm956, %v6685, 0
        %v6728 = vsel %vm956, %v6686, 0
        %v6731 = vsel %vm956, %v6687, 0
        %6733 = vmatprep.subr.bf16.mxu0 0
        %6734 = vmatpush1.bf16.msra.mxu0 %v6713
        %6735 = vmatprep.subr.bf16.mxu0 0
        %6736 = vmatpush1.bf16.msra.mxu0 %v6714
        %6737 = vmatprep.subr.bf16.mxu0 0
        %6738 = vmatpush1.bf16.msra.mxu0 %v6715
        %6739 = vmatprep.subr.bf16.mxu0 0
        %6740 = vmatpush1.bf16.msra.mxu0 %v6716
        %6741 = vmatprep.subr.bf16.mxu0 0
        %6742 = vmatpush1.bf16.msra.mxu0 0
        %6743 = vmatprep.subr.bf16.mxu0 0
        %6744 = vmatpush1.bf16.msra.mxu0 0
        %6745 = vmatprep.subr.bf16.mxu0 0
        %6746 = vmatpush1.bf16.msra.mxu0 0
        %6747 = vmatprep.subr.bf16.mxu0 0
        %6748 = vmatpush1.bf16.msra.mxu0 0
        %6749 = vmatprep.subr.bf16.mxu0 0
        %6750 = vmatpush1.bf16.msra.mxu0 0
        %6751 = vmatprep.subr.bf16.mxu0 0
        %6752 = vmatpush1.bf16.msra.mxu0 0
        %6753 = vmatprep.subr.bf16.mxu0 0
        %6754 = vmatpush1.bf16.msra.mxu0 0
        %6755 = vmatprep.subr.bf16.mxu0 0
        %6756 = vmatpush1.bf16.msra.mxu0 0
        %6757 = vmatprep.subr.bf16.mxu0 0
        %6758 = vmatpush1.bf16.msra.mxu0 0
        %6759 = vmatprep.subr.bf16.mxu0 0
        %6760 = vmatpush1.bf16.msra.mxu0 0
        %6761 = vmatprep.subr.bf16.mxu0 0
        %6762 = vmatpush1.bf16.msra.mxu0 0
        %6763 = vmatprep.subr.bf16.mxu0 0
        %6764 = vmatpush1.bf16.msra.mxu0 0
        %6765 = vmatprep.mubr.bf16.mxu0 0
        %6766 = vmatmul.mubr.bf16.gmra.mrb[0].mxu0 %v6722
        %v6767 = vpop.f32.mrb[0].mxu0
        %v6768 = vadd.f32 0.0, %v6767
        %v6769 = vpop.f32.mrb[0].mxu0
        %v6770 = vpop.f32.mrb[0].mxu0
        %v6771 = vadd.f32 0.0, %v6770
        %v6772 = vpop.f32.mrb[0].mxu0
        %6773 = vmatprep.mubr.bf16.mxu0 0
        %6774 = vmatmul.mubr.bf16.gmra.mrb[0].mxu0 %v6725
        %v6775 = vpop.f32.mrb[0].mxu0
        %v6776 = vadd.f32 0.0, %v6775
        %v6777 = vpop.f32.mrb[0].mxu0
        %v6778 = vpop.f32.mrb[0].mxu0
        %v6779 = vadd.f32 0.0, %v6778
        %v6780 = vpop.f32.mrb[0].mxu0
        %6781 = vmatprep.mubr.bf16.mxu0 0
        %6782 = vmatmul.mubr.bf16.gmra.mrb[0].mxu0 %v6728
        %v6783 = vpop.f32.mrb[0].mxu0
        %v6784 = vadd.f32 0.0, %v6783
        %v6785 = vpop.f32.mrb[0].mxu0
        %v6786 = vpop.f32.mrb[0].mxu0
        %v6787 = vadd.f32 0.0, %v6786
        %v6788 = vpop.f32.mrb[0].mxu0
        %6789 = vmatprep.mubr.bf16.mxu0 0
        %6790 = vmatmul.mubr.bf16.gmra.mrb[0].mxu0 %v6731
        %v6791 = vpop.f32.mrb[0].mxu0
        %v6792 = vadd.f32 0.0, %v6791
        %v6793 = vpop.f32.mrb[0].mxu0
        %v6794 = vpop.f32.mrb[0].mxu0
        %v6795 = vadd.f32 0.0, %v6794
        %v6796 = vpop.f32.mrb[0].mxu0
        %6797 = vdwg.mxu0
        %v6798 = vadd.f32 %v6676, %v6768
        %v6799 = vadd.f32 %v6677, %v6771
        %v6800 = vadd.f32 %v6678, %v6776
        %v6801 = vadd.f32 %v6679, %v6779
        %v6802 = vadd.f32 %v6680, %v6784
        %v6803 = vadd.f32 %v6681, %v6787
        %v6804 = vadd.f32 %v6682, %v6792
        %v6805 = vadd.f32 %v6683, %v6795
        %s6806 = scalar_lea.vmem %s8, 1
        %v6807 = vld [vmem:[%s6806] sm:$0x1]
        %v6809 = vlaneseq
        %v6810 = vshrl.u32 %v6809, 7
        %v6811 = vsub.s32 0, %v6810
        %v6812 = vrot.slane %v6807, %v6811
        %v6814 = vadd.f32 %v6798, %v6812
        %v6815 = vadd.f32 %v6799, %v6812
        %v6816 = vadd.f32 %v6800, %v6812
        %v6817 = vadd.f32 %v6801, %v6812
        %v6818 = vadd.f32 %v6802, %v6812
        %v6819 = vadd.f32 %v6803, %v6812
        %v6820 = vadd.f32 %v6804, %v6812
        %v6821 = vadd.f32 %v6805, %v6812
        %v6822 = vpack.c.bf16 %v6175, %v6174
        %v6823 = vpack.c.bf16 %v6177, %v6176
        %v6824 = vpack.c.bf16 %v6179, %v6178
        %v6825 = vpack.c.bf16 %v6181, %v6180
        %s6826 = scalar_lea.vmem %s7, 32
        %v6827 = vld [vmem:[%s6826] sm:$0xf]
        %v6828 = vld [vmem:[%s6826 + $0x4] sm:$0xf]
        %v6829 = vld [vmem:[%s6826 + $0x8] sm:$0xf]
        %v6830 = vld [vmem:[%s6826 + $0xc] sm:$0xf]
        %v6831 = vld [vmem:[%s6826 + $0x10] sm:$0xf]
        %v6832 = vld [vmem:[%s6826 + $0x14] sm:$0xf]
        %v6833 = vld [vmem:[%s6826 + $0x18] sm:$0xf]
        %v6834 = vld [vmem:[%s6826 + $0x1c] sm:$0xf]
        %v6843 = vunpack.c.l.b16 %v6827
        %v6844 = vunpack.c.l.b16 %v6828
        %v6845 = vunpack.c.l.b16 %v6829
        %v6846 = vunpack.c.l.b16 %v6830
        %v6847 = vunpack.c.l.b16 %v6831
        %v6848 = vunpack.c.l.b16 %v6832
        %v6849 = vunpack.c.l.b16 %v6833
        %v6850 = vunpack.c.l.b16 %v6834
        %v6851 = vpack.c.b16 %v6844, %v6843
        %v6852 = vpack.c.b16 %v6846, %v6845
        %v6853 = vpack.c.b16 %v6848, %v6847
        %v6854 = vpack.c.b16 %v6850, %v6849
        %v6860 = vsel %vm956, %v6822, 0
        %v6863 = vsel %vm956, %v6823, 0
        %v6866 = vsel %vm956, %v6824, 0
        %v6869 = vsel %vm956, %v6825, 0
        %6871 = vmatprep.subr.bf16.mxu0 0
        %6872 = vmatpush1.bf16.msra.mxu0 %v6851
        %6873 = vmatprep.subr.bf16.mxu0 0
        %6874 = vmatpush1.bf16.msra.mxu0 %v6852
        %6875 = vmatprep.subr.bf16.mxu0 0
        %6876 = vmatpush1.bf16.msra.mxu0 %v6853
        %6877 = vmatprep.subr.bf16.mxu0 0
        %6878 = vmatpush1.bf16.msra.mxu0 %v6854
        %6879 = vmatprep.subr.bf16.mxu0 0
        %6880 = vmatpush1.bf16.msra.mxu0 0
        %6881 = vmatprep.subr.bf16.mxu0 0
        %6882 = vmatpush1.bf16.msra.mxu0 0
        %6883 = vmatprep.subr.bf16.mxu0 0
        %6884 = vmatpush1.bf16.msra.mxu0 0
        %6885 = vmatprep.subr.bf16.mxu0 0
        %6886 = vmatpush1.bf16.msra.mxu0 0
        %6887 = vmatprep.subr.bf16.mxu0 0
        %6888 = vmatpush1.bf16.msra.mxu0 0
        %6889 = vmatprep.subr.bf16.mxu0 0
        %6890 = vmatpush1.bf16.msra.mxu0 0
        %6891 = vmatprep.subr.bf16.mxu0 0
        %6892 = vmatpush1.bf16.msra.mxu0 0
        %6893 = vmatprep.subr.bf16.mxu0 0
        %6894 = vmatpush1.bf16.msra.mxu0 0
        %6895 = vmatprep.subr.bf16.mxu0 0
        %6896 = vmatpush1.bf16.msra.mxu0 0
        %6897 = vmatprep.subr.bf16.mxu0 0
        %6898 = vmatpush1.bf16.msra.mxu0 0
        %6899 = vmatprep.subr.bf16.mxu0 0
        %6900 = vmatpush1.bf16.msra.mxu0 0
        %6901 = vmatprep.subr.bf16.mxu0 0
        %6902 = vmatpush1.bf16.msra.mxu0 0
        %6903 = vmatprep.mubr.bf16.mxu0 0
        %6904 = vmatmul.mubr.bf16.gmra.mrb[0].mxu0 %v6860
        %v6905 = vpop.f32.mrb[0].mxu0
        %v6906 = vadd.f32 0.0, %v6905
        %v6907 = vpop.f32.mrb[0].mxu0
        %v6908 = vpop.f32.mrb[0].mxu0
        %v6909 = vadd.f32 0.0, %v6908
        %v6910 = vpop.f32.mrb[0].mxu0
        %6911 = vmatprep.mubr.bf16.mxu0 0
        %6912 = vmatmul.mubr.bf16.gmra.mrb[0].mxu0 %v6863
        %v6913 = vpop.f32.mrb[0].mxu0
        %v6914 = vadd.f32 0.0, %v6913
        %v6915 = vpop.f32.mrb[0].mxu0
        %v6916 = vpop.f32.mrb[0].mxu0
        %v6917 = vadd.f32 0.0, %v6916
        %v6918 = vpop.f32.mrb[0].mxu0
        %6919 = vmatprep.mubr.bf16.mxu0 0
        %6920 = vmatmul.mubr.bf16.gmra.mrb[0].mxu0 %v6866
        %v6921 = vpop.f32.mrb[0].mxu0
        %v6922 = vadd.f32 0.0, %v6921
        %v6923 = vpop.f32.mrb[0].mxu0
        %v6924 = vpop.f32.mrb[0].mxu0
        %v6925 = vadd.f32 0.0, %v6924
        %v6926 = vpop.f32.mrb[0].mxu0
        %6927 = vmatprep.mubr.bf16.mxu0 0
        %6928 = vmatmul.mubr.bf16.gmra.mrb[0].mxu0 %v6869
        %v6929 = vpop.f32.mrb[0].mxu0
        %v6930 = vadd.f32 0.0, %v6929
        %v6931 = vpop.f32.mrb[0].mxu0
        %v6932 = vpop.f32.mrb[0].mxu0
        %v6933 = vadd.f32 0.0, %v6932
        %v6934 = vpop.f32.mrb[0].mxu0
        %6935 = vdwg.mxu0
        %v6936 = vadd.f32 %v6814, %v6906
        %v6937 = vadd.f32 %v6815, %v6909
        %v6938 = vadd.f32 %v6816, %v6914
        %v6939 = vadd.f32 %v6817, %v6917
        %v6940 = vadd.f32 %v6818, %v6922
        %v6941 = vadd.f32 %v6819, %v6925
        %v6942 = vadd.f32 %v6820, %v6930
        %v6943 = vadd.f32 %v6821, %v6933
        %v6944 = vand.u32 2147483647, %v6936
        %v6945 = vand.u32 2147483647, %v6937
        %v6946 = vand.u32 2147483647, %v6938
        %v6947 = vand.u32 2147483647, %v6939
        %v6948 = vand.u32 2147483647, %v6940
        %v6949 = vand.u32 2147483647, %v6941
        %v6950 = vand.u32 2147483647, %v6942
        %v6951 = vand.u32 2147483647, %v6943
        %v6952 = vsub.f32 0.0, %v6944
        %v6953 = vsub.f32 0.0, %v6945
        %v6954 = vsub.f32 0.0, %v6946
        %v6955 = vsub.f32 0.0, %v6947
        %v6956 = vsub.f32 0.0, %v6948
        %v6957 = vsub.f32 0.0, %v6949
        %v6958 = vsub.f32 0.0, %v6950
        %v6959 = vsub.f32 0.0, %v6951
        %v6960 = vmul.f32 %v6952, 1.442695
        %v6961 = vpow.pop %v6960
        %v6962 = vmul.f32 %v6953, 1.442695
        %v6963 = vpow.pop %v6962
        %v6964 = vmul.f32 %v6954, 1.442695
        %v6965 = vpow.pop %v6964
        %v6966 = vmul.f32 %v6955, 1.442695
        %v6967 = vpow.pop %v6966
        %v6968 = vmul.f32 %v6956, 1.442695
        %v6969 = vpow.pop %v6968
        %v6970 = vmul.f32 %v6957, 1.442695
        %v6971 = vpow.pop %v6970
        %v6972 = vmul.f32 %v6958, 1.442695
        %v6973 = vpow.pop %v6972
        %v6974 = vmul.f32 %v6959, 1.442695
        %v6975 = vpow.pop %v6974
        %v6976 = vsub.f32 %v6961, 1.0
        %v6977 = vsub.f32 %v6963, 1.0
        %v6978 = vsub.f32 %v6965, 1.0
        %v6979 = vsub.f32 %v6967, 1.0
        %v6980 = vsub.f32 %v6969, 1.0
        %v6981 = vsub.f32 %v6971, 1.0
        %v6982 = vsub.f32 %v6973, 1.0
        %v6983 = vsub.f32 %v6975, 1.0
        %vm6984 = vcmp.gt.f32.partialorder %v6936, 0.0
        %vm6985 = vcmp.gt.f32.partialorder %v6937, 0.0
        %vm6986 = vcmp.gt.f32.partialorder %v6938, 0.0
        %vm6987 = vcmp.gt.f32.partialorder %v6939, 0.0
        %vm6988 = vcmp.gt.f32.partialorder %v6940, 0.0
        %vm6989 = vcmp.gt.f32.partialorder %v6941, 0.0
        %vm6990 = vcmp.gt.f32.partialorder %v6942, 0.0
        %vm6991 = vcmp.gt.f32.partialorder %v6943, 0.0
        %v6992 = vsel %vm6984, %v6936, %v6976
        %v6993 = vsel %vm6985, %v6937, %v6977
        %v6994 = vsel %vm6986, %v6938, %v6978
        %v6995 = vsel %vm6987, %v6939, %v6979
        %v6996 = vsel %vm6988, %v6940, %v6980
        %v6997 = vsel %vm6989, %v6941, %v6981
        %v6998 = vsel %vm6990, %v6942, %v6982
        %v6999 = vsel %vm6991, %v6943, %v6983
        %v7000 = vsub.f32 0.0, %v6936
        %v7001 = vsub.f32 0.0, %v6937
        %v7002 = vsub.f32 0.0, %v6938
        %v7003 = vsub.f32 0.0, %v6939
        %v7004 = vsub.f32 0.0, %v6940
        %v7005 = vsub.f32 0.0, %v6941
        %v7006 = vsub.f32 0.0, %v6942
        %v7007 = vsub.f32 0.0, %v6943
        %v7008 = vsel %vm6984, %v6976, %v7000
        %v7009 = vsel %vm6985, %v6977, %v7001
        %v7010 = vsel %vm6986, %v6978, %v7002
        %v7011 = vsel %vm6987, %v6979, %v7003
        %v7012 = vsel %vm6988, %v6980, %v7004
        %v7013 = vsel %vm6989, %v6981, %v7005
        %v7014 = vsel %vm6990, %v6982, %v7006
        %v7015 = vsel %vm6991, %v6983, %v7007
        %7024 = vrot.lane.b32.xlu0 %v7008, 32
        %v7025 = vpop.permute.xlu0 %7024
        %7026 = vrot.lane.b32.xlu0 %v7009, 32
        %v7027 = vpop.permute.xlu0 %7026
        %7028 = vrot.lane.b32.xlu0 %v7010, 32
        %v7029 = vpop.permute.xlu0 %7028
        %7030 = vrot.lane.b32.xlu0 %v7011, 32
        %v7031 = vpop.permute.xlu0 %7030
        %7032 = vrot.lane.b32.xlu0 %v7012, 32
        %v7033 = vpop.permute.xlu0 %7032
        %7034 = vrot.lane.b32.xlu0 %v7013, 32
        %v7035 = vpop.permute.xlu0 %7034
        %7036 = vrot.lane.b32.xlu0 %v7014, 32
        %v7037 = vpop.permute.xlu0 %7036
        %7038 = vrot.lane.b32.xlu0 %v7015, 32
        %v7039 = vpop.permute.xlu0 %7038
        %v7048 = vsel %vm865, %v6992, %v7025
        %v7049 = vsel %vm865, %v6993, %v7027
        %v7050 = vsel %vm865, %v6994, %v7029
        %v7051 = vsel %vm865, %v6995, %v7031
        %v7052 = vsel %vm865, %v6996, %v7033
        %v7053 = vsel %vm865, %v6997, %v7035
        %v7054 = vsel %vm865, %v6998, %v7037
        %v7055 = vsel %vm865, %v6999, %v7039
        %v7056 = vrot.slane %v7048, 7
        %v7057 = vrot.slane %v7049, 7
        %v7058 = vrot.slane %v7050, 7
        %v7059 = vrot.slane %v7051, 7
        %v7060 = vrot.slane %v7052, 7
        %v7061 = vrot.slane %v7053, 7
        %v7062 = vrot.slane %v7054, 7
        %v7063 = vrot.slane %v7055, 7
        %v7064 = vsel %vm882, %v7062, %v7063
        %v7065 = vsel %vm882, %v7061, %v7062
        %v7066 = vsel %vm882, %v7060, %v7061
        %v7067 = vsel %vm882, %v7059, %v7060
        %v7068 = vsel %vm882, %v7058, %v7059
        %v7069 = vsel %vm882, %v7057, %v7058
        %v7070 = vsel %vm882, %v7056, %v7057
        %v7071 = vsel %vm882, %v7063, %v7056
        %v7072 = vmul.f32 %v7064, %v545
        %v7073 = vmul.f32 %v7071, %v546
        %v7074 = vmul.f32 %v7070, %v547
        %v7075 = vmul.f32 %v7069, %v548
        %v7076 = vmul.f32 %v7068, %v549
        %v7077 = vmul.f32 %v7067, %v550
        %v7078 = vmul.f32 %v7066, %v551
        %v7079 = vmul.f32 %v7065, %v552
        %v7080 = vpack.c.bf16 %v7073, %v7072
        %v7081 = vpack.c.bf16 %v7075, %v7074
        %v7082 = vpack.c.bf16 %v7077, %v7076
        %v7083 = vpack.c.bf16 %v7079, %v7078
        %s7084 = scalar_lea.vmem %s9, 128
        %v7085 = vld [vmem:[%s7084] sm:$0xf]
        %v7086 = vld [vmem:[%s7084 + $0x4] sm:$0xf]
        %v7087 = vld [vmem:[%s7084 + $0x8] sm:$0xf]
        %v7088 = vld [vmem:[%s7084 + $0xc] sm:$0xf]
        %v7089 = vld [vmem:[%s7084 + $0x10] sm:$0xf]
        %v7090 = vld [vmem:[%s7084 + $0x14] sm:$0xf]
        %v7091 = vld [vmem:[%s7084 + $0x18] sm:$0xf]
        %v7092 = vld [vmem:[%s7084 + $0x1c] sm:$0xf]
        %v7093 = vmul.f32 %v7055, %v593
        %v7094 = vmul.f32 %v7048, %v594
        %v7095 = vmul.f32 %v7049, %v595
        %v7096 = vmul.f32 %v7050, %v596
        %v7097 = vmul.f32 %v7051, %v597
        %v7098 = vmul.f32 %v7052, %v598
        %v7099 = vmul.f32 %v7053, %v599
        %v7100 = vmul.f32 %v7054, %v600
        %v7101 = vpack.c.bf16 %v7094, %v7093
        %v7102 = vpack.c.bf16 %v7096, %v7095
        %v7103 = vpack.c.bf16 %v7098, %v7097
        %v7104 = vpack.c.bf16 %v7100, %v7099
        %s7105 = scalar_lea.vmem %s9, 160
        %v7106 = vld [vmem:[%s7105] sm:$0xf]
        %v7107 = vld [vmem:[%s7105 + $0x4] sm:$0xf]
        %v7108 = vld [vmem:[%s7105 + $0x8] sm:$0xf]
        %v7109 = vld [vmem:[%s7105 + $0xc] sm:$0xf]
        %v7110 = vld [vmem:[%s7105 + $0x10] sm:$0xf]
        %v7111 = vld [vmem:[%s7105 + $0x14] sm:$0xf]
        %v7112 = vld [vmem:[%s7105 + $0x18] sm:$0xf]
        %v7113 = vld [vmem:[%s7105 + $0x1c] sm:$0xf]
        %v7122 = vunpack.c.l.b16 %v7106
        %v7123 = vunpack.c.l.b16 %v7107
        %v7124 = vunpack.c.l.b16 %v7108
        %v7125 = vunpack.c.l.b16 %v7109
        %v7126 = vunpack.c.l.b16 %v7110
        %v7127 = vunpack.c.l.b16 %v7111
        %v7128 = vunpack.c.l.b16 %v7112
        %v7129 = vunpack.c.l.b16 %v7113
        %v7130 = vpack.c.b16 %v7123, %v7122
        %v7131 = vpack.c.b16 %v7125, %v7124
        %v7132 = vpack.c.b16 %v7127, %v7126
        %v7133 = vpack.c.b16 %v7129, %v7128
        %v7139 = vsel %vm956, %v7101, 0
        %v7142 = vsel %vm956, %v7102, 0
        %v7145 = vsel %vm956, %v7103, 0
        %v7148 = vsel %vm956, %v7104, 0
        %7150 = vmatprep.subr.bf16.mxu0 0
        %7151 = vmatpush1.bf16.msra.mxu0 %v7130
        %7152 = vmatprep.subr.bf16.mxu0 0
        %7153 = vmatpush1.bf16.msra.mxu0 %v7131
        %7154 = vmatprep.subr.bf16.mxu0 0
        %7155 = vmatpush1.bf16.msra.mxu0 %v7132
        %7156 = vmatprep.subr.bf16.mxu0 0
        %7157 = vmatpush1.bf16.msra.mxu0 %v7133
        %7158 = vmatprep.subr.bf16.mxu0 0
        %7159 = vmatpush1.bf16.msra.mxu0 0
        %7160 = vmatprep.subr.bf16.mxu0 0
        %7161 = vmatpush1.bf16.msra.mxu0 0
        %7162 = vmatprep.subr.bf16.mxu0 0
        %7163 = vmatpush1.bf16.msra.mxu0 0
        %7164 = vmatprep.subr.bf16.mxu0 0
        %7165 = vmatpush1.bf16.msra.mxu0 0
        %7166 = vmatprep.subr.bf16.mxu0 0
        %7167 = vmatpush1.bf16.msra.mxu0 0
        %7168 = vmatprep.subr.bf16.mxu0 0
        %7169 = vmatpush1.bf16.msra.mxu0 0
        %7170 = vmatprep.subr.bf16.mxu0 0
        %7171 = vmatpush1.bf16.msra.mxu0 0
        %7172 = vmatprep.subr.bf16.mxu0 0
        %7173 = vmatpush1.bf16.msra.mxu0 0
        %7174 = vmatprep.subr.bf16.mxu0 0
        %7175 = vmatpush1.bf16.msra.mxu0 0
        %7176 = vmatprep.subr.bf16.mxu0 0
        %7177 = vmatpush1.bf16.msra.mxu0 0
        %7178 = vmatprep.subr.bf16.mxu0 0
        %7179 = vmatpush1.bf16.msra.mxu0 0
        %7180 = vmatprep.subr.bf16.mxu0 0
        %7181 = vmatpush1.bf16.msra.mxu0 0
        %7182 = vmatprep.mubr.bf16.mxu0 0
        %7183 = vmatmul.mubr.bf16.gmra.mrb[0].mxu0 %v7139
        %v7184 = vpop.f32.mrb[0].mxu0
        %v7185 = vadd.f32 0.0, %v7184
        %v7186 = vpop.f32.mrb[0].mxu0
        %v7187 = vpop.f32.mrb[0].mxu0
        %v7188 = vadd.f32 0.0, %v7187
        %v7189 = vpop.f32.mrb[0].mxu0
        %7190 = vmatprep.mubr.bf16.mxu0 0
        %7191 = vmatmul.mubr.bf16.gmra.mrb[0].mxu0 %v7142
        %v7192 = vpop.f32.mrb[0].mxu0
        %v7193 = vadd.f32 0.0, %v7192
        %v7194 = vpop.f32.mrb[0].mxu0
        %v7195 = vpop.f32.mrb[0].mxu0
        %v7196 = vadd.f32 0.0, %v7195
        %v7197 = vpop.f32.mrb[0].mxu0
        %7198 = vmatprep.mubr.bf16.mxu0 0
        %7199 = vmatmul.mubr.bf16.gmra.mrb[0].mxu0 %v7145
        %v7200 = vpop.f32.mrb[0].mxu0
        %v7201 = vadd.f32 0.0, %v7200
        %v7202 = vpop.f32.mrb[0].mxu0
        %v7203 = vpop.f32.mrb[0].mxu0
        %v7204 = vadd.f32 0.0, %v7203
        %v7205 = vpop.f32.mrb[0].mxu0
        %7206 = vmatprep.mubr.bf16.mxu0 0
        %7207 = vmatmul.mubr.bf16.gmra.mrb[0].mxu0 %v7148
        %v7208 = vpop.f32.mrb[0].mxu0
        %v7209 = vadd.f32 0.0, %v7208
        %v7210 = vpop.f32.mrb[0].mxu0
        %v7211 = vpop.f32.mrb[0].mxu0
        %v7212 = vadd.f32 0.0, %v7211
        %v7213 = vpop.f32.mrb[0].mxu0
        %7214 = vdwg.mxu0
        %v7223 = vunpack.c.l.b16 %v7085
        %v7224 = vunpack.c.l.b16 %v7086
        %v7225 = vunpack.c.l.b16 %v7087
        %v7226 = vunpack.c.l.b16 %v7088
        %v7227 = vunpack.c.l.b16 %v7089
        %v7228 = vunpack.c.l.b16 %v7090
        %v7229 = vunpack.c.l.b16 %v7091
        %v7230 = vunpack.c.l.b16 %v7092
        %v7231 = vpack.c.b16 %v7224, %v7223
        %v7232 = vpack.c.b16 %v7226, %v7225
        %v7233 = vpack.c.b16 %v7228, %v7227
        %v7234 = vpack.c.b16 %v7230, %v7229
        %v7240 = vsel %vm956, %v7080, 0
        %v7243 = vsel %vm956, %v7081, 0
        %v7246 = vsel %vm956, %v7082, 0
        %v7249 = vsel %vm956, %v7083, 0
        %7251 = vmatprep.subr.bf16.mxu0 0
        %7252 = vmatpush1.bf16.msra.mxu0 %v7231
        %7253 = vmatprep.subr.bf16.mxu0 0
        %7254 = vmatpush1.bf16.msra.mxu0 %v7232
        %7255 = vmatprep.subr.bf16.mxu0 0
        %7256 = vmatpush1.bf16.msra.mxu0 %v7233
        %7257 = vmatprep.subr.bf16.mxu0 0
        %7258 = vmatpush1.bf16.msra.mxu0 %v7234
        %7259 = vmatprep.subr.bf16.mxu0 0
        %7260 = vmatpush1.bf16.msra.mxu0 0
        %7261 = vmatprep.subr.bf16.mxu0 0
        %7262 = vmatpush1.bf16.msra.mxu0 0
        %7263 = vmatprep.subr.bf16.mxu0 0
        %7264 = vmatpush1.bf16.msra.mxu0 0
        %7265 = vmatprep.subr.bf16.mxu0 0
        %7266 = vmatpush1.bf16.msra.mxu0 0
        %7267 = vmatprep.subr.bf16.mxu0 0
        %7268 = vmatpush1.bf16.msra.mxu0 0
        %7269 = vmatprep.subr.bf16.mxu0 0
        %7270 = vmatpush1.bf16.msra.mxu0 0
        %7271 = vmatprep.subr.bf16.mxu0 0
        %7272 = vmatpush1.bf16.msra.mxu0 0
        %7273 = vmatprep.subr.bf16.mxu0 0
        %7274 = vmatpush1.bf16.msra.mxu0 0
        %7275 = vmatprep.subr.bf16.mxu0 0
        %7276 = vmatpush1.bf16.msra.mxu0 0
        %7277 = vmatprep.subr.bf16.mxu0 0
        %7278 = vmatpush1.bf16.msra.mxu0 0
        %7279 = vmatprep.subr.bf16.mxu0 0
        %7280 = vmatpush1.bf16.msra.mxu0 0
        %7281 = vmatprep.subr.bf16.mxu0 0
        %7282 = vmatpush1.bf16.msra.mxu0 0
        %7283 = vmatprep.mubr.bf16.mxu0 0
        %7284 = vmatmul.mubr.bf16.gmra.mrb[0].mxu0 %v7240
        %v7285 = vpop.f32.mrb[0].mxu0
        %v7286 = vadd.f32 %v7185, %v7285
        %v7287 = vpop.f32.mrb[0].mxu0
        %v7288 = vpop.f32.mrb[0].mxu0
        %v7289 = vadd.f32 %v7188, %v7288
        %v7290 = vpop.f32.mrb[0].mxu0
        %7291 = vmatprep.mubr.bf16.mxu0 0
        %7292 = vmatmul.mubr.bf16.gmra.mrb[0].mxu0 %v7243
        %v7293 = vpop.f32.mrb[0].mxu0
        %v7294 = vadd.f32 %v7193, %v7293
        %v7295 = vpop.f32.mrb[0].mxu0
        %v7296 = vpop.f32.mrb[0].mxu0
        %v7297 = vadd.f32 %v7196, %v7296
        %v7298 = vpop.f32.mrb[0].mxu0
        %7299 = vmatprep.mubr.bf16.mxu0 0
        %7300 = vmatmul.mubr.bf16.gmra.mrb[0].mxu0 %v7246
        %v7301 = vpop.f32.mrb[0].mxu0
        %v7302 = vadd.f32 %v7201, %v7301
        %v7303 = vpop.f32.mrb[0].mxu0
        %v7304 = vpop.f32.mrb[0].mxu0
        %v7305 = vadd.f32 %v7204, %v7304
        %v7306 = vpop.f32.mrb[0].mxu0
        %7307 = vmatprep.mubr.bf16.mxu0 0
        %7308 = vmatmul.mubr.bf16.gmra.mrb[0].mxu0 %v7249
        %v7309 = vpop.f32.mrb[0].mxu0
        %v7310 = vadd.f32 %v7209, %v7309
        %v7311 = vpop.f32.mrb[0].mxu0
        %v7312 = vpop.f32.mrb[0].mxu0
        %v7313 = vadd.f32 %v7212, %v7312
        %v7314 = vpop.f32.mrb[0].mxu0
        %7315 = vdwg.mxu0
        %v7316 = vmul.f32 %v7071, %v705
        %v7317 = vmul.f32 %v7070, %v706
        %v7318 = vmul.f32 %v7069, %v707
        %v7319 = vmul.f32 %v7068, %v708
        %v7320 = vmul.f32 %v7067, %v709
        %v7321 = vmul.f32 %v7066, %v710
        %v7322 = vmul.f32 %v7065, %v711
        %v7323 = vmul.f32 %v7064, %v712
        %v7324 = vpack.c.bf16 %v7317, %v7316
        %v7325 = vpack.c.bf16 %v7319, %v7318
        %v7326 = vpack.c.bf16 %v7321, %v7320
        %v7327 = vpack.c.bf16 %v7323, %v7322
        %s7328 = scalar_lea.vmem %s9, 192
        %v7329 = vld [vmem:[%s7328] sm:$0xf]
        %v7330 = vld [vmem:[%s7328 + $0x4] sm:$0xf]
        %v7331 = vld [vmem:[%s7328 + $0x8] sm:$0xf]
        %v7332 = vld [vmem:[%s7328 + $0xc] sm:$0xf]
        %v7333 = vld [vmem:[%s7328 + $0x10] sm:$0xf]
        %v7334 = vld [vmem:[%s7328 + $0x14] sm:$0xf]
        %v7335 = vld [vmem:[%s7328 + $0x18] sm:$0xf]
        %v7336 = vld [vmem:[%s7328 + $0x1c] sm:$0xf]
        %v7345 = vunpack.c.l.b16 %v7329
        %v7346 = vunpack.c.l.b16 %v7330
        %v7347 = vunpack.c.l.b16 %v7331
        %v7348 = vunpack.c.l.b16 %v7332
        %v7349 = vunpack.c.l.b16 %v7333
        %v7350 = vunpack.c.l.b16 %v7334
        %v7351 = vunpack.c.l.b16 %v7335
        %v7352 = vunpack.c.l.b16 %v7336
        %v7353 = vpack.c.b16 %v7346, %v7345
        %v7354 = vpack.c.b16 %v7348, %v7347
        %v7355 = vpack.c.b16 %v7350, %v7349
        %v7356 = vpack.c.b16 %v7352, %v7351
        %v7362 = vsel %vm956, %v7324, 0
        %v7365 = vsel %vm956, %v7325, 0
        %v7368 = vsel %vm956, %v7326, 0
        %v7371 = vsel %vm956, %v7327, 0
        %7373 = vmatprep.subr.bf16.mxu0 0
        %7374 = vmatpush1.bf16.msra.mxu0 %v7353
        %7375 = vmatprep.subr.bf16.mxu0 0
        %7376 = vmatpush1.bf16.msra.mxu0 %v7354
        %7377 = vmatprep.subr.bf16.mxu0 0
        %7378 = vmatpush1.bf16.msra.mxu0 %v7355
        %7379 = vmatprep.subr.bf16.mxu0 0
        %7380 = vmatpush1.bf16.msra.mxu0 %v7356
        %7381 = vmatprep.subr.bf16.mxu0 0
        %7382 = vmatpush1.bf16.msra.mxu0 0
        %7383 = vmatprep.subr.bf16.mxu0 0
        %7384 = vmatpush1.bf16.msra.mxu0 0
        %7385 = vmatprep.subr.bf16.mxu0 0
        %7386 = vmatpush1.bf16.msra.mxu0 0
        %7387 = vmatprep.subr.bf16.mxu0 0
        %7388 = vmatpush1.bf16.msra.mxu0 0
        %7389 = vmatprep.subr.bf16.mxu0 0
        %7390 = vmatpush1.bf16.msra.mxu0 0
        %7391 = vmatprep.subr.bf16.mxu0 0
        %7392 = vmatpush1.bf16.msra.mxu0 0
        %7393 = vmatprep.subr.bf16.mxu0 0
        %7394 = vmatpush1.bf16.msra.mxu0 0
        %7395 = vmatprep.subr.bf16.mxu0 0
        %7396 = vmatpush1.bf16.msra.mxu0 0
        %7397 = vmatprep.subr.bf16.mxu0 0
        %7398 = vmatpush1.bf16.msra.mxu0 0
        %7399 = vmatprep.subr.bf16.mxu0 0
        %7400 = vmatpush1.bf16.msra.mxu0 0
        %7401 = vmatprep.subr.bf16.mxu0 0
        %7402 = vmatpush1.bf16.msra.mxu0 0
        %7403 = vmatprep.subr.bf16.mxu0 0
        %7404 = vmatpush1.bf16.msra.mxu0 0
        %7405 = vmatprep.mubr.bf16.mxu0 0
        %7406 = vmatmul.mubr.bf16.gmra.mrb[0].mxu0 %v7362
        %v7407 = vpop.f32.mrb[0].mxu0
        %v7408 = vadd.f32 0.0, %v7407
        %v7409 = vpop.f32.mrb[0].mxu0
        %v7410 = vpop.f32.mrb[0].mxu0
        %v7411 = vadd.f32 0.0, %v7410
        %v7412 = vpop.f32.mrb[0].mxu0
        %7413 = vmatprep.mubr.bf16.mxu0 0
        %7414 = vmatmul.mubr.bf16.gmra.mrb[0].mxu0 %v7365
        %v7415 = vpop.f32.mrb[0].mxu0
        %v7416 = vadd.f32 0.0, %v7415
        %v7417 = vpop.f32.mrb[0].mxu0
        %v7418 = vpop.f32.mrb[0].mxu0
        %v7419 = vadd.f32 0.0, %v7418
        %v7420 = vpop.f32.mrb[0].mxu0
        %7421 = vmatprep.mubr.bf16.mxu0 0
        %7422 = vmatmul.mubr.bf16.gmra.mrb[0].mxu0 %v7368
        %v7423 = vpop.f32.mrb[0].mxu0
        %v7424 = vadd.f32 0.0, %v7423
        %v7425 = vpop.f32.mrb[0].mxu0
        %v7426 = vpop.f32.mrb[0].mxu0
        %v7427 = vadd.f32 0.0, %v7426
        %v7428 = vpop.f32.mrb[0].mxu0
        %7429 = vmatprep.mubr.bf16.mxu0 0
        %7430 = vmatmul.mubr.bf16.gmra.mrb[0].mxu0 %v7371
        %v7431 = vpop.f32.mrb[0].mxu0
        %v7432 = vadd.f32 0.0, %v7431
        %v7433 = vpop.f32.mrb[0].mxu0
        %v7434 = vpop.f32.mrb[0].mxu0
        %v7435 = vadd.f32 0.0, %v7434
        %v7436 = vpop.f32.mrb[0].mxu0
        %7437 = vdwg.mxu0
        %v7438 = vadd.f32 %v7286, %v7408
        %v7439 = vadd.f32 %v7289, %v7411
        %v7440 = vadd.f32 %v7294, %v7416
        %v7441 = vadd.f32 %v7297, %v7419
        %v7442 = vadd.f32 %v7302, %v7424
        %v7443 = vadd.f32 %v7305, %v7427
        %v7444 = vadd.f32 %v7310, %v7432
        %v7445 = vadd.f32 %v7313, %v7435
        %v7446 = vpack.c.bf16 %v7049, %v7048
        %v7447 = vpack.c.bf16 %v7051, %v7050
        %v7448 = vpack.c.bf16 %v7053, %v7052
        %v7449 = vpack.c.bf16 %v7055, %v7054
        %s7450 = scalar_lea.vmem %s9, 224
        %v7451 = vld [vmem:[%s7450] sm:$0xf]
        %v7452 = vld [vmem:[%s7450 + $0x4] sm:$0xf]
        %v7453 = vld [vmem:[%s7450 + $0x8] sm:$0xf]
        %v7454 = vld [vmem:[%s7450 + $0xc] sm:$0xf]
        %v7455 = vld [vmem:[%s7450 + $0x10] sm:$0xf]
        %v7456 = vld [vmem:[%s7450 + $0x14] sm:$0xf]
        %v7457 = vld [vmem:[%s7450 + $0x18] sm:$0xf]
        %v7458 = vld [vmem:[%s7450 + $0x1c] sm:$0xf]
        %v7467 = vunpack.c.l.b16 %v7451
        %v7468 = vunpack.c.l.b16 %v7452
        %v7469 = vunpack.c.l.b16 %v7453
        %v7470 = vunpack.c.l.b16 %v7454
        %v7471 = vunpack.c.l.b16 %v7455
        %v7472 = vunpack.c.l.b16 %v7456
        %v7473 = vunpack.c.l.b16 %v7457
        %v7474 = vunpack.c.l.b16 %v7458
        %v7475 = vpack.c.b16 %v7468, %v7467
        %v7476 = vpack.c.b16 %v7470, %v7469
        %v7477 = vpack.c.b16 %v7472, %v7471
        %v7478 = vpack.c.b16 %v7474, %v7473
        %v7484 = vsel %vm956, %v7446, 0
        %v7487 = vsel %vm956, %v7447, 0
        %v7490 = vsel %vm956, %v7448, 0
        %v7493 = vsel %vm956, %v7449, 0
        %7495 = vmatprep.subr.bf16.mxu0 0
        %7496 = vmatpush1.bf16.msra.mxu0 %v7475
        %7497 = vmatprep.subr.bf16.mxu0 0
        %7498 = vmatpush1.bf16.msra.mxu0 %v7476
        %7499 = vmatprep.subr.bf16.mxu0 0
        %7500 = vmatpush1.bf16.msra.mxu0 %v7477
        %7501 = vmatprep.subr.bf16.mxu0 0
        %7502 = vmatpush1.bf16.msra.mxu0 %v7478
        %7503 = vmatprep.subr.bf16.mxu0 0
        %7504 = vmatpush1.bf16.msra.mxu0 0
        %7505 = vmatprep.subr.bf16.mxu0 0
        %7506 = vmatpush1.bf16.msra.mxu0 0
        %7507 = vmatprep.subr.bf16.mxu0 0
        %7508 = vmatpush1.bf16.msra.mxu0 0
        %7509 = vmatprep.subr.bf16.mxu0 0
        %7510 = vmatpush1.bf16.msra.mxu0 0
        %7511 = vmatprep.subr.bf16.mxu0 0
        %7512 = vmatpush1.bf16.msra.mxu0 0
        %7513 = vmatprep.subr.bf16.mxu0 0
        %7514 = vmatpush1.bf16.msra.mxu0 0
        %7515 = vmatprep.subr.bf16.mxu0 0
        %7516 = vmatpush1.bf16.msra.mxu0 0
        %7517 = vmatprep.subr.bf16.mxu0 0
        %7518 = vmatpush1.bf16.msra.mxu0 0
        %7519 = vmatprep.subr.bf16.mxu0 0
        %7520 = vmatpush1.bf16.msra.mxu0 0
        %7521 = vmatprep.subr.bf16.mxu0 0
        %7522 = vmatpush1.bf16.msra.mxu0 0
        %7523 = vmatprep.subr.bf16.mxu0 0
        %7524 = vmatpush1.bf16.msra.mxu0 0
        %7525 = vmatprep.subr.bf16.mxu0 0
        %7526 = vmatpush1.bf16.msra.mxu0 0
        %7527 = vmatprep.mubr.bf16.mxu0 0
        %7528 = vmatmul.mubr.bf16.gmra.mrb[0].mxu0 %v7484
        %v7529 = vpop.f32.mrb[0].mxu0
        %v7530 = vadd.f32 0.0, %v7529
        %v7531 = vpop.f32.mrb[0].mxu0
        %v7532 = vpop.f32.mrb[0].mxu0
        %v7533 = vadd.f32 0.0, %v7532
        %v7534 = vpop.f32.mrb[0].mxu0
        %7535 = vmatprep.mubr.bf16.mxu0 0
        %7536 = vmatmul.mubr.bf16.gmra.mrb[0].mxu0 %v7487
        %v7537 = vpop.f32.mrb[0].mxu0
        %v7538 = vadd.f32 0.0, %v7537
        %v7539 = vpop.f32.mrb[0].mxu0
        %v7540 = vpop.f32.mrb[0].mxu0
        %v7541 = vadd.f32 0.0, %v7540
        %v7542 = vpop.f32.mrb[0].mxu0
        %7543 = vmatprep.mubr.bf16.mxu0 0
        %7544 = vmatmul.mubr.bf16.gmra.mrb[0].mxu0 %v7490
        %v7545 = vpop.f32.mrb[0].mxu0
        %v7546 = vadd.f32 0.0, %v7545
        %v7547 = vpop.f32.mrb[0].mxu0
        %v7548 = vpop.f32.mrb[0].mxu0
        %v7549 = vadd.f32 0.0, %v7548
        %v7550 = vpop.f32.mrb[0].mxu0
        %7551 = vmatprep.mubr.bf16.mxu0 0
        %7552 = vmatmul.mubr.bf16.gmra.mrb[0].mxu0 %v7493
        %v7553 = vpop.f32.mrb[0].mxu0
        %v7554 = vadd.f32 0.0, %v7553
        %v7555 = vpop.f32.mrb[0].mxu0
        %v7556 = vpop.f32.mrb[0].mxu0
        %v7557 = vadd.f32 0.0, %v7556
        %v7558 = vpop.f32.mrb[0].mxu0
        %7559 = vdwg.mxu0
        %v7560 = vadd.f32 %v7438, %v7530
        %v7561 = vadd.f32 %v7439, %v7533
        %v7562 = vadd.f32 %v7440, %v7538
        %v7563 = vadd.f32 %v7441, %v7541
        %v7564 = vadd.f32 %v7442, %v7546
        %v7565 = vadd.f32 %v7443, %v7549
        %v7566 = vadd.f32 %v7444, %v7554
        %v7567 = vadd.f32 %v7445, %v7557
        %s7568 = scalar_lea.vmem %s10, 1
        %v7569 = vld [vmem:[%s7568] sm:$0x1]
        %v7571 = vlaneseq
        %v7572 = vshrl.u32 %v7571, 7
        %v7573 = vsub.s32 0, %v7572
        %v7574 = vrot.slane %v7569, %v7573
        %v7576 = vadd.f32 %v7560, %v7574
        %v7577 = vadd.f32 %v7561, %v7574
        %v7578 = vadd.f32 %v7562, %v7574
        %v7579 = vadd.f32 %v7563, %v7574
        %v7580 = vadd.f32 %v7564, %v7574
        %v7581 = vadd.f32 %v7565, %v7574
        %v7582 = vadd.f32 %v7566, %v7574
        %v7583 = vadd.f32 %v7567, %v7574
        %v7584 = vsub.f32 0.0, %v7576
        %v7585 = vsub.f32 0.0, %v7577
        %v7586 = vsub.f32 0.0, %v7578
        %v7587 = vsub.f32 0.0, %v7579
        %v7588 = vsub.f32 0.0, %v7580
        %v7589 = vsub.f32 0.0, %v7581
        %v7590 = vsub.f32 0.0, %v7582
        %v7591 = vsub.f32 0.0, %v7583
        %v7592 = vmul.f32 %v7584, 1.442695
        %v7593 = vpow.pop %v7592
        %v7594 = vmul.f32 %v7585, 1.442695
        %v7595 = vpow.pop %v7594
        %v7596 = vmul.f32 %v7586, 1.442695
        %v7597 = vpow.pop %v7596
        %v7598 = vmul.f32 %v7587, 1.442695
        %v7599 = vpow.pop %v7598
        %v7600 = vmul.f32 %v7588, 1.442695
        %v7601 = vpow.pop %v7600
        %v7602 = vmul.f32 %v7589, 1.442695
        %v7603 = vpow.pop %v7602
        %v7604 = vmul.f32 %v7590, 1.442695
        %v7605 = vpow.pop %v7604
        %v7606 = vmul.f32 %v7591, 1.442695
        %v7607 = vpow.pop %v7606
        %v7608 = vadd.f32 %v7593, 1.0
        %v7609 = vadd.f32 %v7595, 1.0
        %v7610 = vadd.f32 %v7597, 1.0
        %v7611 = vadd.f32 %v7599, 1.0
        %v7612 = vadd.f32 %v7601, 1.0
        %v7613 = vadd.f32 %v7603, 1.0
        %v7614 = vadd.f32 %v7605, 1.0
        %v7615 = vadd.f32 %v7607, 1.0
        %v7616 = vrcp.pop %v7608
        %v7617 = vrcp.pop %v7609
        %v7618 = vrcp.pop %v7610
        %v7619 = vrcp.pop %v7611
        %v7620 = vrcp.pop %v7612
        %v7621 = vrcp.pop %v7613
        %v7622 = vrcp.pop %v7614
        %v7623 = vrcp.pop %v7615
        %7632 = vrot.lane.b32.xlu0 %v7616, 96
        %v7633 = vpop.permute.xlu0 %7632
        %7634 = vrot.lane.b32.xlu0 %v7617, 96
        %v7635 = vpop.permute.xlu0 %7634
        %7636 = vrot.lane.b32.xlu0 %v7618, 96
        %v7637 = vpop.permute.xlu0 %7636
        %7638 = vrot.lane.b32.xlu0 %v7619, 96
        %v7639 = vpop.permute.xlu0 %7638
        %7640 = vrot.lane.b32.xlu0 %v7620, 96
        %v7641 = vpop.permute.xlu0 %7640
        %7642 = vrot.lane.b32.xlu0 %v7621, 96
        %v7643 = vpop.permute.xlu0 %7642
        %7644 = vrot.lane.b32.xlu0 %v7622, 96
        %v7645 = vpop.permute.xlu0 %7644
        %7646 = vrot.lane.b32.xlu0 %v7623, 96
        %v7647 = vpop.permute.xlu0 %7646
        %v7656 = vmul.f32 %v7576, %v7633
        %v7657 = vmul.f32 %v7577, %v7635
        %v7658 = vmul.f32 %v7578, %v7637
        %v7659 = vmul.f32 %v7579, %v7639
        %v7660 = vmul.f32 %v7580, %v7641
        %v7661 = vmul.f32 %v7581, %v7643
        %v7662 = vmul.f32 %v7582, %v7645
        %v7663 = vmul.f32 %v7583, %v7647
        %v7664 = vadd.f32 %v4270, %v7656
        %v7665 = vadd.f32 %v4271, %v7657
        %v7666 = vadd.f32 %v4272, %v7658
        %v7667 = vadd.f32 %v4273, %v7659
        %v7668 = vadd.f32 %v4274, %v7660
        %v7669 = vadd.f32 %v4275, %v7661
        %v7670 = vadd.f32 %v4276, %v7662
        %v7671 = vadd.f32 %v4277, %v7663
        %7680 = vrot.lane.b32.xlu0 %v4270, 32
        %v7681 = vpop.permute.xlu0 %7680
        %7682 = vrot.lane.b32.xlu0 %v4271, 32
        %v7683 = vpop.permute.xlu0 %7682
        %7684 = vrot.lane.b32.xlu0 %v4272, 32
        %v7685 = vpop.permute.xlu0 %7684
        %7686 = vrot.lane.b32.xlu0 %v4273, 32
        %v7687 = vpop.permute.xlu0 %7686
        %7688 = vrot.lane.b32.xlu0 %v4274, 32
        %v7689 = vpop.permute.xlu0 %7688
        %7690 = vrot.lane.b32.xlu0 %v4275, 32
        %v7691 = vpop.permute.xlu0 %7690
        %7692 = vrot.lane.b32.xlu0 %v4276, 32
        %v7693 = vpop.permute.xlu0 %7692
        %7694 = vrot.lane.b32.xlu0 %v4277, 32
        %v7695 = vpop.permute.xlu0 %7694
        %7712 = vrot.lane.b32.xlu0 %v6062, 64
        %v7713 = vpop.permute.xlu0 %7712
        %7714 = vrot.lane.b32.xlu0 %v6063, 64
        %v7715 = vpop.permute.xlu0 %7714
        %7716 = vrot.lane.b32.xlu0 %v6064, 64
        %v7717 = vpop.permute.xlu0 %7716
        %7718 = vrot.lane.b32.xlu0 %v6065, 64
        %v7719 = vpop.permute.xlu0 %7718
        %7720 = vrot.lane.b32.xlu0 %v6066, 64
        %v7721 = vpop.permute.xlu0 %7720
        %7722 = vrot.lane.b32.xlu0 %v6067, 64
        %v7723 = vpop.permute.xlu0 %7722
        %7724 = vrot.lane.b32.xlu0 %v6068, 64
        %v7725 = vpop.permute.xlu0 %7724
        %7726 = vrot.lane.b32.xlu0 %v6069, 64
        %v7727 = vpop.permute.xlu0 %7726
        %7744 = vrot.lane.b32.xlu0 %v7664, 96
        %v7745 = vpop.permute.xlu0 %7744
        %7746 = vrot.lane.b32.xlu0 %v7665, 96
        %v7747 = vpop.permute.xlu0 %7746
        %7748 = vrot.lane.b32.xlu0 %v7666, 96
        %v7749 = vpop.permute.xlu0 %7748
        %7750 = vrot.lane.b32.xlu0 %v7667, 96
        %v7751 = vpop.permute.xlu0 %7750
        %7752 = vrot.lane.b32.xlu0 %v7668, 96
        %v7753 = vpop.permute.xlu0 %7752
        %7754 = vrot.lane.b32.xlu0 %v7669, 96
        %v7755 = vpop.permute.xlu0 %7754
        %7756 = vrot.lane.b32.xlu0 %v7670, 96
        %v7757 = vpop.permute.xlu0 %7756
        %7758 = vrot.lane.b32.xlu0 %v7671, 96
        %v7759 = vpop.permute.xlu0 %7758
        %v7768 = vsel %vm865, %v2673, %v7681
        %v7769 = vsel %vm865, %v2674, %v7683
        %v7770 = vsel %vm865, %v2675, %v7685
        %v7771 = vsel %vm865, %v2676, %v7687
        %v7772 = vsel %vm865, %v2677, %v7689
        %v7773 = vsel %vm865, %v2678, %v7691
        %v7774 = vsel %vm865, %v2679, %v7693
        %v7775 = vsel %vm865, %v2680, %v7695
        %v7776 = vsel %vm956, %v7768, %v7713
        %v7777 = vsel %vm956, %v7769, %v7715
        %v7778 = vsel %vm956, %v7770, %v7717
        %v7779 = vsel %vm956, %v7771, %v7719
        %v7780 = vsel %vm956, %v7772, %v7721
        %v7781 = vsel %vm956, %v7773, %v7723
        %v7782 = vsel %vm956, %v7774, %v7725
        %v7783 = vsel %vm956, %v7775, %v7727
        %vm7784 = vcmask 785408
        %v7785 = vsel %vm7784, %v7776, %v7745
        %v7786 = vsel %vm7784, %v7777, %v7747
        %v7787 = vsel %vm7784, %v7778, %v7749
        %v7788 = vsel %vm7784, %v7779, %v7751
        %v7789 = vsel %vm7784, %v7780, %v7753
        %v7790 = vsel %vm7784, %v7781, %v7755
        %v7791 = vsel %vm7784, %v7782, %v7757
        %v7792 = vsel %vm7784, %v7783, %v7759
        %7793 = vst [vmem:[%s429] sm:$0xff] %v7785
        %7794 = vst [vmem:[%s429 + $0x8] sm:$0xff] %v7786
        %7795 = vst [vmem:[%s429 + $0x10] sm:$0xff] %v7787
        %7796 = vst [vmem:[%s429 + $0x18] sm:$0xff] %v7788
        %7797 = vst [vmem:[%s429 + $0x20] sm:$0xff] %v7789
        %7798 = vst [vmem:[%s429 + $0x28] sm:$0xff] %v7790
        %7799 = vst [vmem:[%s429 + $0x30] sm:$0xff] %v7791
        %7800 = vst [vmem:[%s429 + $0x38] sm:$0xff] %v7792
        %s7801 = smul.u32 8, %s25
        %p7802 = scmp.lt.s32.totalorder %s7801, 15
        %s7803 = scalar_select %p7802, %s7801, 15
        %s7804 = smul.addr %s7803, 8
        %s7805 = scalar_lea.vmem %s11, %s7804
        // Predicated region
        $region69: #{pixelcnn_layer_up.1} parent=63 // pred_check
          %p7806 = pneg %p284
        $region70: #{pixelcnn_layer_up.1} parent=63 // pred_check_branch
          %7808 = sbr.rel (%p7806) target = $region72
        $region71: #{pixelcnn_layer_up.1} parent=63 // pred_region
          %s7809 = smul.u32 8, %s25
        $region72: #{pixelcnn_layer_up.1} parent=63 // pred_fallthru
          _
      $region64: #{pixelcnn_layer_up.1} parent=5 // pred_fallthru
        _
      %p7810 = scmp.le.s32.totalorder 2, %s20
      // Predicated region
      $region73: #{pixelcnn_layer_up.1} parent=5 // pred_check
        %p7811 = pneg %p7810
      $region74: #{pixelcnn_layer_up.1} parent=5 // pred_check_branch
        %7813 = sbr.rel (%p7811) target = $region76
      $region75: #{pixelcnn_layer_up.1} parent=5 // pred_region
        %s7814 = ssub.s32 %s20, 2
        // Predicated region
        $region77: #{pixelcnn_layer_up.1} parent=75 // pred_check
          %p7815 = pneg %p290
        $region78: #{pixelcnn_layer_up.1} parent=75 // pred_check_branch
          %7817 = sbr.rel (%p7815) target = $region80
        $region79: #{pixelcnn_layer_up.1} parent=75 // pred_region
          %s7818 = smul.u32 8, %s26
          %p7819 = scmp.lt.s32.totalorder %s7818, 15
          %s7820 = scalar_select %p7819, %s7818, 15
          %s7821 = smul.addr %s7820, 8
          %s7822 = scalar_lea.vmem %s11, %s7821
        $region80: #{pixelcnn_layer_up.1} parent=75 // pred_fallthru
          _
      $region76: #{pixelcnn_layer_up.1} parent=5 // pred_fallthru
        _
    $region6: #{pixelcnn_layer_up.1} parent=1 // loop_footer
      %s24 = sadd.s32 1, %s20
    $region7: #{pixelcnn_layer_up.1} parent=1 // loop_footer_branch
      %19 = sbr.rel target = $region3
    $region8: #{pixelcnn_layer_up.1} parent=1 // loop_exit
      _
    %7823 = vsyncpa [#allocation3], 1
    %s7824 = scalar_lea.sflag [#allocation3], 1
    %7825 = vsyncpa %s7824, 1

</llo_original>
